<compile_context>
chip_gen: v7x
topology: tpu7x:2x2x1
jax: 0.10.0
libtpu: 0.0.40
codegen_flags: <defaults>
</compile_context>

<pallas_src>
import jax
import jax.numpy as jnp
from jax import lax
from jax.experimental import pallas as pl
from jax.experimental.pallas import tpu as pltpu


def bottleneck_kernel(x_ref, w1_ref, s1_ref, b1_ref,
                      w2_ref, s2_ref, b2_ref,
                      w3_ref, s3_ref, b3_ref, o_ref, acc_ref):
    nb, H, W, Cin = x_ref.shape          # x block: (nb, H, W, Cin), bf16
    P = w1_ref.shape[1]
    Cout = w3_ref.shape[1]
    M = nb * H * W

    # ---- conv1 (1x1, no bias) + BN1 + ReLU : bf16 MXU, f32 accumulate --------
    x_bf = x_ref[...].reshape(M, Cin)
    y1 = jnp.dot(x_bf, w1_ref[...], preferred_element_type=jnp.float32)
    y1 = jnp.maximum(y1 * s1_ref[...] + b1_ref[...], 0.0)            # (M, P) f32
    y1_bf = y1.astype(jnp.bfloat16)

    # ---- conv2 (3x3, stride 1, pad 1, no bias) + BN2 + ReLU ------------------
    # Channels on lanes, flattened (nb*H*W) spatial on sublanes.  The three
    # column (+-1) shifted bf16 operands are concatenated along K so ONE fat
    # (M,3P)x(3P,3P) matmul does all 9 taps; the row (+-1) shifts are applied on
    # the output side as sublane-aligned sliced accumulation into acc_ref.
    n_idx = lax.broadcasted_iota(jnp.int32, (M, 1), 0)
    w_loc = n_idx % W
    zero_row = jnp.zeros((1, P), jnp.bfloat16)
    zero = jnp.zeros((), jnp.bfloat16)
    # ox = -1 : b[n] = a[n-1], zeroed at the w == 0 border
    left = jnp.concatenate([zero_row, y1_bf[:M - 1]], axis=0)
    left = jnp.where(w_loc > 0, left, zero)
    # ox = +1 : b[n] = a[n+1], zeroed at the w == W-1 border
    right = jnp.concatenate([y1_bf[1:], zero_row], axis=0)
    right = jnp.where(w_loc < W - 1, right, zero)
    y_cat = jnp.concatenate([left, y1_bf, right], axis=1)            # (M, 3P) bf16

    r = jnp.dot(y_cat, w2_ref[...], preferred_element_type=jnp.float32)  # (M, 3P)
    t_m1 = r[:, :P]                      # oy = -1 group: out[n] += t_m1[n - W]
    t_p1 = r[:, 2 * P:]                  # oy = +1 group: out[n] += t_p1[n + W]
    if nb > 1:                           # do not leak rows across packed images
        h_loc = (n_idx // W) % H
        t_m1 = jnp.where(h_loc < H - 1, t_m1, 0.0)
        t_p1 = jnp.where(h_loc > 0, t_p1, 0.0)
    acc_ref[...] = r[:, P:2 * P]                       # oy = 0 (no shift)
    acc_ref[pl.ds(W, M - W), :] += t_m1[:M - W]        # aligned: W % 8 == 0
    acc_ref[pl.ds(0, M - W), :] += t_p1[W:]
    y2 = jnp.maximum(acc_ref[...] * s2_ref[...] + b2_ref[...], 0.0)  # (M, P) f32

    # ---- conv3 (1x1, no bias) + BN3 + residual + ReLU ------------------------
    y3 = jnp.dot(y2.astype(jnp.bfloat16), w3_ref[...],
                 preferred_element_type=jnp.float32)
    y3 = y3 * s3_ref[...] + b3_ref[...]
    y3 = y3 + x_ref[...].reshape(M, Cout).astype(jnp.float32)        # f32 residual
    o_ref[...] = jnp.maximum(y3, 0.0).astype(o_ref.dtype).reshape(nb, H, W, Cout)


def bottleneck_forward_nhwc(x_nhwc, params, *, images_per_block=None):
    """x_nhwc: (N, H, W, Cin) -> (N, H, W, Cout) bf16; Cout == Cin (4 * planes)."""
    w1, s1, b1, w2_fat, s2, b2, w3, s3, b3 = params
    N, H, W, Cin = x_nhwc.shape
    P = w1.shape[1]
    Cout = w3.shape[1]
    assert Cin == Cout, "identity residual requires inplanes == 4 * planes"
    assert W % 8 == 0, "W must be a multiple of 8 (sublane alignment)"
    # TODO(synk): pad W to a multiple of 8 in-kernel to cover 28/14/7 stages.

    # HBM I/O in bf16 (memory-bound kernel at realistic shapes).
    x = x_nhwc.astype(jnp.bfloat16)

    # Per-generation VMEM budget (v7x: 64 MiB physical, v5e/v6e: 128 MiB).
    try:
        phys_vmem = pltpu.get_tpu_info().vmem_capacity_bytes
    except Exception:
        phys_vmem = 64 * 1024 * 1024
    vmem_limit = int(min(100 * 1024 * 1024,
                         max(32 * 1024 * 1024, phys_vmem * 0.6)))

    def block_vmem_bytes(nb_):
        m = nb_ * H * W
        io = 2 * m * (Cin + Cout) * 2                     # double-buffered bf16 in/out
        inter = m * (3 * P * 2 + 3 * P * 4 + 3 * P * 4)   # y_cat bf16 + fat result + f32 temps
        return io + inter

    if images_per_block is None:
        # Keep the MXU M dimension >= 256 for small spatial sizes, but never
        # collapse the parallel grid below 2 (v7x dual TC) or exceed VMEM.
        nb = 1
        while (nb * H * W < 256 and N % (2 * nb) == 0 and N // (2 * nb) >= 2
               and block_vmem_bytes(2 * nb) < vmem_limit // 2):
            nb *= 2
    else:
        nb = images_per_block
    assert N % nb == 0
    grid = (N // nb,)

    flops = 2 * N * H * W * (Cin * P + 9 * P * P + P * Cout)
    bytes_accessed = (x.size * 2 + N * H * W * Cout * 2
                      + (w1.size + w2_fat.size + w3.size) * 2
                      + (s1.size + b1.size + s2.size + b2.size
                         + s3.size + b3.size) * 4)

    def run(single_buffer_invariants):
        def invariant(arr):              # grid-invariant weights / scale / bias
            if single_buffer_invariants:
                return pl.BlockSpec(arr.shape, lambda n: (0,) * arr.ndim,
                                    pipeline_mode=pl.Buffered(1))
            return pl.BlockSpec(arr.shape, lambda n: (0,) * arr.ndim)

        return pl.pallas_call(
            bottleneck_kernel,
            out_shape=jax.ShapeDtypeStruct((N, H, W, Cout), jnp.bfloat16),
            grid=grid,
            in_specs=[
                pl.BlockSpec((nb, H, W, Cin), lambda n: (n, 0, 0, 0)),
                invariant(w1), invariant(s1), invariant(b1),
                invariant(w2_fat), invariant(s2), invariant(b2),
                invariant(w3), invariant(s3), invariant(b3),
            ],
            out_specs=pl.BlockSpec((nb, H, W, Cout), lambda n: (n, 0, 0, 0)),
            scratch_shapes=[pltpu.VMEM((nb * H * W, P), jnp.float32)],
            compiler_params=pltpu.CompilerParams(
                dimension_semantics=("parallel",),
                vmem_limit_bytes=vmem_limit),
            cost_estimate=pl.CostEstimate(flops=flops, transcendentals=0,
                                          bytes_accessed=bytes_accessed),
        )(x, w1, s1, b1, w2_fat, s2, b2, w3, s3, b3)

    try:
        return run(True)        # single-buffer the grid-invariant operands
    except Exception:
        return run(False)       # fallback if Buffered(1) is rejected


def bottleneck_forward(x_nchw, params):
    """PyTorch-layout wrapper. In a full network keep NHWC/bf16 end-to-end."""
    x = jnp.transpose(x_nchw, (0, 2, 3, 1))
    out = bottleneck_forward_nhwc(x, params)
    return jnp.transpose(out, (0, 3, 1, 2))


def make_params(key, inplanes, planes):
    """Deterministic synthetic parameters; BN folded into (scale, bias); weights bf16."""
    eps = 1e-5
    ks = jax.random.split(key, 12)

    def bn_fold(kg, kb, km, kv, c):
        gamma = jax.random.uniform(kg, (c,), jnp.float32, 0.5, 1.5)
        beta = 0.1 * jax.random.normal(kb, (c,), jnp.float32)
        mean = 0.1 * jax.random.normal(km, (c,), jnp.float32)
        var = jax.random.uniform(kv, (c,), jnp.float32, 0.5, 1.5)
        scale = gamma / jnp.sqrt(var + eps)
        bias = beta - mean * scale
        return scale.reshape(1, c), bias.reshape(1, c)

    cout = planes * 4  # Bottleneck.expansion = 4
    w1 = (0.2 * jax.random.normal(ks[0], (inplanes, planes), jnp.float32)
          ).astype(jnp.bfloat16)                                   # 1x1: (Cin, P)
    w2_hwio = (0.2 * jax.random.normal(ks[1], (3, 3, planes, planes), jnp.float32)
               ).astype(jnp.bfloat16)                              # HWIO
    w3 = (0.2 * jax.random.normal(ks[2], (planes, cout), jnp.float32)
          ).astype(jnp.bfloat16)                                   # 1x1: (P, 4P)
    s1, b1 = bn_fold(ks[3], ks[4], ks[5], ks[6], planes)
    s2, b2 = bn_fold(ks[7], ks[8], ks[9], ks[10], planes)
    s3, b3 = bn_fold(ks[11], ks[0], ks[1], ks[2], cout)
    # Pack the 3x3 weights so K groups index ox (column shift of the operand)
    # and N groups index oy (output-side row shift):
    #   w2_fat[(ox+1)*P + ci, (oy+1)*P + co] = w2_hwio[oy+1, ox+1, ci, co]
    w2_fat = jnp.transpose(w2_hwio, (1, 2, 0, 3)).reshape(3 * planes, 3 * planes)
    params = (w1, s1, b1, w2_fat, s2, b2, w3, s3, b3)
    return params, w2_hwio


def reference_nhwc(x_bf16, params, w2_hwio):
    """Plain-JAX reference with the same bf16 quantization points as the kernel."""
    w1, s1, b1, _, s2, b2, w3, s3, b3 = params
    y = jnp.einsum('nhwc,cp->nhwp', x_bf16, w1, preferred_element_type=jnp.float32)
    y = jnp.maximum(y * s1 + b1, 0.0)
    y = lax.conv_general_dilated(y.astype(jnp.bfloat16), w2_hwio, (1, 1),
                                 ((1, 1), (1, 1)),
                                 dimension_numbers=('NHWC', 'HWIO', 'NHWC'),
                                 preferred_element_type=jnp.float32)
    y = jnp.maximum(y * s2 + b2, 0.0)
    y = jnp.einsum('nhwp,pc->nhwc', y.astype(jnp.bfloat16), w3,
                   preferred_element_type=jnp.float32)
    y = y * s3 + b3 + x_bf16.astype(jnp.float32)
    return jnp.maximum(y, 0.0).astype(jnp.bfloat16)


if __name__ == "__main__":
    key = jax.random.PRNGKey(0)
    kx, kp = jax.random.split(key)

    N, planes, H, W = 2, 4, 16, 16
    inplanes = planes * 4  # identity residual requires inplanes == planes * expansion

    x_nchw = jax.random.normal(kx, (N, inplanes, H, W), jnp.float32)
    params, w2_hwio = make_params(kp, inplanes, planes)

    out = jax.block_until_ready(bottleneck_forward(x_nchw, params))

    # Correctness vs. a plain-JAX reference with matching bf16 quantization.
    x_nhwc = jnp.transpose(x_nchw, (0, 2, 3, 1)).astype(jnp.bfloat16)
    ref_nhwc = reference_nhwc(x_nhwc, params, w2_hwio)
    ref_nchw = jnp.transpose(ref_nhwc, (0, 3, 1, 2))
    assert out.shape == (N, inplanes, H, W) and out.dtype == jnp.bfloat16
    err = float(jnp.max(jnp.abs(out.astype(jnp.float32) - ref_nchw.astype(jnp.float32))))
    assert jnp.allclose(out.astype(jnp.float32), ref_nchw.astype(jnp.float32),
                        atol=3e-2, rtol=3e-2), err

    # Also exercise the multi-image-per-block path (cross-image border masks).
    out2 = jax.block_until_ready(
        bottleneck_forward_nhwc(x_nhwc, params, images_per_block=2))
    assert jnp.allclose(out2.astype(jnp.float32), ref_nhwc.astype(jnp.float32),
                        atol=3e-2, rtol=3e-2)

    print("KERNEL_OK")
</pallas_src>

<mosaic_0001>
module attributes {stable_mosaic.version = 11 : i64} {
  func.func @bottleneck_kernel(%arg0: i32, %arg1: memref<1x16x16x16xbf16, #tpu.memory_space<vmem>>, %arg2: memref<16x4xbf16, #tpu.memory_space<vmem>>, %arg3: memref<1x4xf32, #tpu.memory_space<vmem>>, %arg4: memref<1x4xf32, #tpu.memory_space<vmem>>, %arg5: memref<12x12xbf16, #tpu.memory_space<vmem>>, %arg6: memref<1x4xf32, #tpu.memory_space<vmem>>, %arg7: memref<1x4xf32, #tpu.memory_space<vmem>>, %arg8: memref<4x16xbf16, #tpu.memory_space<vmem>>, %arg9: memref<1x16xf32, #tpu.memory_space<vmem>>, %arg10: memref<1x16xf32, #tpu.memory_space<vmem>>, %arg11: memref<1x16x16x16xbf16, #tpu.memory_space<vmem>>, %arg12: memref<256x4xf32, #tpu.memory_space<vmem>>) attributes {dimension_semantics = [#tpu.dimension_semantics<parallel>], iteration_bounds = array<i64: 2>, scalar_prefetch = 0 : i64, scratch_operands = 1 : i64, tpu.core_type = #tpu.core_type<tc>, window_params = [{transform_indices = @transform_0, window_bounds = array<i64: 1, 16, 16, 16>}, {pipeline_mode = #tpu.pipeline_mode<synchronous>, transform_indices = @transform_1, window_bounds = array<i64: 16, 4>}, {pipeline_mode = #tpu.pipeline_mode<synchronous>, transform_indices = @transform_2, window_bounds = array<i64: 1, 4>}, {pipeline_mode = #tpu.pipeline_mode<synchronous>, transform_indices = @transform_3, window_bounds = array<i64: 1, 4>}, {pipeline_mode = #tpu.pipeline_mode<synchronous>, transform_indices = @transform_4, window_bounds = array<i64: 12, 12>}, {pipeline_mode = #tpu.pipeline_mode<synchronous>, transform_indices = @transform_5, window_bounds = array<i64: 1, 4>}, {pipeline_mode = #tpu.pipeline_mode<synchronous>, transform_indices = @transform_6, window_bounds = array<i64: 1, 4>}, {pipeline_mode = #tpu.pipeline_mode<synchronous>, transform_indices = @transform_7, window_bounds = array<i64: 4, 16>}, {pipeline_mode = #tpu.pipeline_mode<synchronous>, transform_indices = @transform_8, window_bounds = array<i64: 1, 16>}, {pipeline_mode = #tpu.pipeline_mode<synchronous>, transform_indices = @transform_9, window_bounds = array<i64: 1, 16>}, {transform_indices = @transform_10, window_bounds = array<i64: 1, 16, 16, 16>}]} {
    %c0 = arith.constant 0 : index
    %c0_0 = arith.constant 0 : index
    %c0_1 = arith.constant 0 : index
    %c0_2 = arith.constant 0 : index
    %0 = vector.load %arg1[%c0, %c0_0, %c0_1, %c0_2] : memref<1x16x16x16xbf16, #tpu.memory_space<vmem>>, vector<1x16x16x16xbf16>
    %1 = vector.shape_cast %0 : vector<1x16x16x16xbf16> to vector<256x16xbf16>
    %c0_3 = arith.constant 0 : index
    %c0_4 = arith.constant 0 : index
    %2 = vector.load %arg2[%c0_3, %c0_4] : memref<16x4xbf16, #tpu.memory_space<vmem>>, vector<16x4xbf16>
    %cst = arith.constant dense<0.000000e+00> : vector<256x4xf32>
    %3 = tpu.matmul %1, %2, %cst {dimension_numbers = #tpu.dot_dimension_numbers<[1], [0], [0], [1], [0, 0, 1, 1], [], []>} : vector<256x16xbf16>, vector<16x4xbf16>, vector<256x4xf32> -> vector<256x4xf32>
    %c0_5 = arith.constant 0 : index
    %c0_6 = arith.constant 0 : index
    %4 = vector.load %arg3[%c0_5, %c0_6] : memref<1x4xf32, #tpu.memory_space<vmem>>, vector<1x4xf32>
    %5 = vector.broadcast %4 : vector<1x4xf32> to vector<256x4xf32>
    %6 = arith.mulf %3, %5 : vector<256x4xf32>
    %c0_7 = arith.constant 0 : index
    %c0_8 = arith.constant 0 : index
    %7 = vector.load %arg4[%c0_7, %c0_8] : memref<1x4xf32, #tpu.memory_space<vmem>>, vector<1x4xf32>
    %8 = vector.broadcast %7 : vector<1x4xf32> to vector<256x4xf32>
    %9 = arith.addf %6, %8 : vector<256x4xf32>
    %cst_9 = arith.constant 0.000000e+00 : f32
    %10 = vector.broadcast %cst_9 : f32 to vector<256x4xf32>
    %11 = arith.maximumf %9, %10 : vector<256x4xf32>
    %12 = arith.truncf %11 : vector<256x4xf32> to vector<256x4xbf16>
    %13 = tpu.iota {dimensions = array<i32: 0>} : vector<256x1xi32>
    %c16_i32 = arith.constant 16 : i32
    %c0_i32 = arith.constant 0 : i32
    %14 = arith.cmpi eq, %c16_i32, %c0_i32 : i32
    %c1_i32 = arith.constant 1 : i32
    %15 = arith.select %14, %c1_i32, %c16_i32 : i32
    %16 = vector.broadcast %15 : i32 to vector<256x1xi32>
    %17 = arith.remsi %13, %16 : vector<256x1xi32>
    %c0_i32_10 = arith.constant 0 : i32
    %18 = vector.broadcast %c0_i32_10 : i32 to vector<256x1xi32>
    %19 = arith.cmpi ne, %17, %18 : vector<256x1xi32>
    %c0_i32_11 = arith.constant 0 : i32
    %20 = vector.broadcast %c0_i32_11 : i32 to vector<256x1xi32>
    %21 = arith.cmpi slt, %17, %20 : vector<256x1xi32>
    %c0_i32_12 = arith.constant 0 : i32
    %22 = arith.cmpi slt, %15, %c0_i32_12 : i32
    %23 = vector.broadcast %22 : i1 to vector<256x1xi1>
    %24 = vector.broadcast %23 : vector<256x1xi1> to vector<256x1xi1>
    %25 = arith.xori %21, %24 : vector<256x1xi1>
    %26 = arith.andi %25, %19 : vector<256x1xi1>
    %27 = vector.broadcast %15 : i32 to vector<256x1xi32>
    %28 = arith.addi %17, %27 : vector<256x1xi32>
    %29 = arith.select %26, %28, %17 : vector<256x1xi1>, vector<256x1xi32>
    %cst_13 = arith.constant 0.000000e+00 : bf16
    %30 = vector.broadcast %cst_13 : bf16 to vector<1x4xbf16>
    %31 = vector.extract_strided_slice %12 {offsets = [0, 0], sizes = [255, 4], strides = [1, 1]} : vector<256x4xbf16> to vector<255x4xbf16>
    %32 = tpu.concatenate %30, %31 in 0 : vector<1x4xbf16>, vector<255x4xbf16> -> vector<256x4xbf16>
    %c0_i32_14 = arith.constant 0 : i32
    %33 = vector.broadcast %c0_i32_14 : i32 to vector<256x1xi32>
    %34 = arith.cmpi sgt, %29, %33 : vector<256x1xi32>
    %cst_15 = arith.constant 0.000000e+00 : bf16
    %35 = vector.shape_cast %34 : vector<256x1xi1> to vector<256x1xi1>
    %36 = vector.broadcast %35 : vector<256x1xi1> to vector<256x4xi1>
    %37 = vector.broadcast %cst_15 : bf16 to vector<256x4xbf16>
    %38 = arith.select %36, %32, %37 : vector<256x4xi1>, vector<256x4xbf16>
    %39 = vector.extract_strided_slice %12 {offsets = [1, 0], sizes = [255, 4], strides = [1, 1]} : vector<256x4xbf16> to vector<255x4xbf16>
    %40 = tpu.concatenate %39, %30 in 0 : vector<255x4xbf16>, vector<1x4xbf16> -> vector<256x4xbf16>
    %c15_i32 = arith.constant 15 : i32
    %41 = vector.broadcast %c15_i32 : i32 to vector<256x1xi32>
    %42 = arith.cmpi slt, %29, %41 : vector<256x1xi32>
    %cst_16 = arith.constant 0.000000e+00 : bf16
    %43 = vector.shape_cast %42 : vector<256x1xi1> to vector<256x1xi1>
    %44 = vector.broadcast %43 : vector<256x1xi1> to vector<256x4xi1>
    %45 = vector.broadcast %cst_16 : bf16 to vector<256x4xbf16>
    %46 = arith.select %44, %40, %45 : vector<256x4xi1>, vector<256x4xbf16>
    %47 = tpu.concatenate %38, %12, %46 in 1 : vector<256x4xbf16>, vector<256x4xbf16>, vector<256x4xbf16> -> vector<256x12xbf16>
    %c0_17 = arith.constant 0 : index
    %c0_18 = arith.constant 0 : index
    %48 = vector.load %arg5[%c0_17, %c0_18] : memref<12x12xbf16, #tpu.memory_space<vmem>>, vector<12x12xbf16>
    %cst_19 = arith.constant dense<0.000000e+00> : vector<256x12xf32>
    %49 = tpu.matmul %47, %48, %cst_19 {dimension_numbers = #tpu.dot_dimension_numbers<[1], [0], [0], [1], [0, 0, 1, 1], [], []>} : vector<256x12xbf16>, vector<12x12xbf16>, vector<256x12xf32> -> vector<256x12xf32>
    %50 = vector.extract_strided_slice %49 {offsets = [0, 0], sizes = [256, 4], strides = [1, 1]} : vector<256x12xf32> to vector<256x4xf32>
    %51 = vector.extract_strided_slice %49 {offsets = [0, 8], sizes = [256, 4], strides = [1, 1]} : vector<256x12xf32> to vector<256x4xf32>
    %52 = vector.extract_strided_slice %49 {offsets = [0, 4], sizes = [256, 4], strides = [1, 1]} : vector<256x12xf32> to vector<256x4xf32>
    %c0_20 = arith.constant 0 : index
    %c0_21 = arith.constant 0 : index
    %53 = vector.load %arg12[%c0_20, %c0_21] : memref<256x4xf32, #tpu.memory_space<vmem>>, vector<256x4xf32>
    tpu.vector_store %arg12[%c0_20, %c0_21], %52 {strides = array<i32>} : memref<256x4xf32, #tpu.memory_space<vmem>>, vector<256x4xf32>,
    %c16 = arith.constant 16 : index
    %c0_22 = arith.constant 0 : index
    %54 = vector.load %arg12[%c16, %c0_22] : memref<256x4xf32, #tpu.memory_space<vmem>>, vector<240x4xf32>
    %55 = vector.extract_strided_slice %50 {offsets = [0, 0], sizes = [240, 4], strides = [1, 1]} : vector<256x4xf32> to vector<240x4xf32>
    %56 = arith.addf %54, %55 : vector<240x4xf32>
    %c16_23 = arith.constant 16 : index
    %c0_24 = arith.constant 0 : index
    %57 = vector.load %arg12[%c16_23, %c0_24] : memref<256x4xf32, #tpu.memory_space<vmem>>, vector<240x4xf32>
    tpu.vector_store %arg12[%c16_23, %c0_24], %56 {strides = array<i32>} : memref<256x4xf32, #tpu.memory_space<vmem>>, vector<240x4xf32>,
    %c0_25 = arith.constant 0 : index
    %c0_26 = arith.constant 0 : index
    %58 = vector.load %arg12[%c0_25, %c0_26] : memref<256x4xf32, #tpu.memory_space<vmem>>, vector<240x4xf32>
    %59 = vector.extract_strided_slice %51 {offsets = [16, 0], sizes = [240, 4], strides = [1, 1]} : vector<256x4xf32> to vector<240x4xf32>
    %60 = arith.addf %58, %59 : vector<240x4xf32>
    %c0_27 = arith.constant 0 : index
    %c0_28 = arith.constant 0 : index
    %61 = vector.load %arg12[%c0_27, %c0_28] : memref<256x4xf32, #tpu.memory_space<vmem>>, vector<240x4xf32>
    tpu.vector_store %arg12[%c0_27, %c0_28], %60 {strides = array<i32>} : memref<256x4xf32, #tpu.memory_space<vmem>>, vector<240x4xf32>,
    %c0_29 = arith.constant 0 : index
    %c0_30 = arith.constant 0 : index
    %62 = vector.load %arg12[%c0_29, %c0_30] : memref<256x4xf32, #tpu.memory_space<vmem>>, vector<256x4xf32>
    %c0_31 = arith.constant 0 : index
    %c0_32 = arith.constant 0 : index
    %63 = vector.load %arg6[%c0_31, %c0_32] : memref<1x4xf32, #tpu.memory_space<vmem>>, vector<1x4xf32>
    %64 = vector.broadcast %63 : vector<1x4xf32> to vector<256x4xf32>
    %65 = arith.mulf %62, %64 : vector<256x4xf32>
    %c0_33 = arith.constant 0 : index
    %c0_34 = arith.constant 0 : index
    %66 = vector.load %arg7[%c0_33, %c0_34] : memref<1x4xf32, #tpu.memory_space<vmem>>, vector<1x4xf32>
    %67 = vector.broadcast %66 : vector<1x4xf32> to vector<256x4xf32>
    %68 = arith.addf %65, %67 : vector<256x4xf32>
    %cst_35 = arith.constant 0.000000e+00 : f32
    %69 = vector.broadcast %cst_35 : f32 to vector<256x4xf32>
    %70 = arith.maximumf %68, %69 : vector<256x4xf32>
    %71 = arith.truncf %70 : vector<256x4xf32> to vector<256x4xbf16>
    %c0_36 = arith.constant 0 : index
    %c0_37 = arith.constant 0 : index
    %72 = vector.load %arg8[%c0_36, %c0_37] : memref<4x16xbf16, #tpu.memory_space<vmem>>, vector<4x16xbf16>
    %cst_38 = arith.constant dense<0.000000e+00> : vector<256x16xf32>
    %73 = tpu.matmul %71, %72, %cst_38 {dimension_numbers = #tpu.dot_dimension_numbers<[1], [0], [0], [1], [0, 0, 1, 1], [], []>} : vector<256x4xbf16>, vector<4x16xbf16>, vector<256x16xf32> -> vector<256x16xf32>
    %c0_39 = arith.constant 0 : index
    %c0_40 = arith.constant 0 : index
    %74 = vector.load %arg9[%c0_39, %c0_40] : memref<1x16xf32, #tpu.memory_space<vmem>>, vector<1x16xf32>
    %75 = vector.broadcast %74 : vector<1x16xf32> to vector<256x16xf32>
    %76 = arith.mulf %73, %75 : vector<256x16xf32>
    %c0_41 = arith.constant 0 : index
    %c0_42 = arith.constant 0 : index
    %77 = vector.load %arg10[%c0_41, %c0_42] : memref<1x16xf32, #tpu.memory_space<vmem>>, vector<1x16xf32>
    %78 = vector.broadcast %77 : vector<1x16xf32> to vector<256x16xf32>
    %79 = arith.addf %76, %78 : vector<256x16xf32>
    %c0_43 = arith.constant 0 : index
    %c0_44 = arith.constant 0 : index
    %c0_45 = arith.constant 0 : index
    %c0_46 = arith.constant 0 : index
    %80 = vector.load %arg1[%c0_43, %c0_44, %c0_45, %c0_46] : memref<1x16x16x16xbf16, #tpu.memory_space<vmem>>, vector<1x16x16x16xbf16>
    %81 = vector.shape_cast %80 : vector<1x16x16x16xbf16> to vector<256x16xbf16>
    %82 = arith.extf %81 : vector<256x16xbf16> to vector<256x16xf32>
    %83 = arith.addf %79, %82 : vector<256x16xf32>
    %cst_47 = arith.constant 0.000000e+00 : f32
    %84 = vector.broadcast %cst_47 : f32 to vector<256x16xf32>
    %85 = arith.maximumf %83, %84 : vector<256x16xf32>
    %86 = arith.truncf %85 : vector<256x16xf32> to vector<256x16xbf16>
    %87 = vector.shape_cast %86 : vector<256x16xbf16> to vector<1x16x16x16xbf16>
    %c0_48 = arith.constant 0 : index
    %c0_49 = arith.constant 0 : index
    %c0_50 = arith.constant 0 : index
    %c0_51 = arith.constant 0 : index
    %88 = vector.load %arg11[%c0_48, %c0_49, %c0_50, %c0_51] : memref<1x16x16x16xbf16, #tpu.memory_space<vmem>>, vector<1x16x16x16xbf16>
    tpu.vector_store %arg11[%c0_48, %c0_49, %c0_50, %c0_51], %87 {strides = array<i32>} : memref<1x16x16x16xbf16, #tpu.memory_space<vmem>>, vector<1x16x16x16xbf16>,
    return
  }
  func.func @transform_0(%arg0: i32) -> (i32, i32, i32, i32) {
    %c0_i32 = arith.constant 0 : i32
    %c0_i32_0 = arith.constant 0 : i32
    %c0_i32_1 = arith.constant 0 : i32
    %c0_i32_2 = arith.constant 0 : i32
    return %arg0, %c0_i32, %c0_i32_0, %c0_i32_1 : i32, i32, i32, i32
  }
  func.func @transform_1(%arg0: i32) -> (i32, i32) {
    %c0_i32 = arith.constant 0 : i32
    %c0_i32_0 = arith.constant 0 : i32
    %c0_i32_1 = arith.constant 0 : i32
    return %c0_i32, %c0_i32_0 : i32, i32
  }
  func.func @transform_2(%arg0: i32) -> (i32, i32) {
    %c0_i32 = arith.constant 0 : i32
    %c0_i32_0 = arith.constant 0 : i32
    %c0_i32_1 = arith.constant 0 : i32
    return %c0_i32, %c0_i32_0 : i32, i32
  }
  func.func @transform_3(%arg0: i32) -> (i32, i32) {
    %c0_i32 = arith.constant 0 : i32
    %c0_i32_0 = arith.constant 0 : i32
    %c0_i32_1 = arith.constant 0 : i32
    return %c0_i32, %c0_i32_0 : i32, i32
  }
  func.func @transform_4(%arg0: i32) -> (i32, i32) {
    %c0_i32 = arith.constant 0 : i32
    %c0_i32_0 = arith.constant 0 : i32
    %c0_i32_1 = arith.constant 0 : i32
    return %c0_i32, %c0_i32_0 : i32, i32
  }
  func.func @transform_5(%arg0: i32) -> (i32, i32) {
    %c0_i32 = arith.constant 0 : i32
    %c0_i32_0 = arith.constant 0 : i32
    %c0_i32_1 = arith.constant 0 : i32
    return %c0_i32, %c0_i32_0 : i32, i32
  }
  func.func @transform_6(%arg0: i32) -> (i32, i32) {
    %c0_i32 = arith.constant 0 : i32
    %c0_i32_0 = arith.constant 0 : i32
    %c0_i32_1 = arith.constant 0 : i32
    return %c0_i32, %c0_i32_0 : i32, i32
  }
  func.func @transform_7(%arg0: i32) -> (i32, i32) {
    %c0_i32 = arith.constant 0 : i32
    %c0_i32_0 = arith.constant 0 : i32
    %c0_i32_1 = arith.constant 0 : i32
    return %c0_i32, %c0_i32_0 : i32, i32
  }
  func.func @transform_8(%arg0: i32) -> (i32, i32) {
    %c0_i32 = arith.constant 0 : i32
    %c0_i32_0 = arith.constant 0 : i32
    %c0_i32_1 = arith.constant 0 : i32
    return %c0_i32, %c0_i32_0 : i32, i32
  }
  func.func @transform_9(%arg0: i32) -> (i32, i32) {
    %c0_i32 = arith.constant 0 : i32
    %c0_i32_0 = arith.constant 0 : i32
    %c0_i32_1 = arith.constant 0 : i32
    return %c0_i32, %c0_i32_0 : i32, i32
  }
  func.func @transform_10(%arg0: i32) -> (i32, i32, i32, i32) {
    %c0_i32 = arith.constant 0 : i32
    %c0_i32_0 = arith.constant 0 : i32
    %c0_i32_1 = arith.constant 0 : i32
    %c0_i32_2 = arith.constant 0 : i32
    return %arg0, %c0_i32, %c0_i32_0, %c0_i32_1 : i32, i32, i32, i32
  }
}

module attributes {stable_mosaic.version = 11 : i64} {
  func.func @bottleneck_kernel(%arg0: i32, %arg1: memref<1x16x16x16xbf16, #tpu.memory_space<vmem>>, %arg2: memref<16x4xbf16, #tpu.memory_space<vmem>>, %arg3: memref<1x4xf32, #tpu.memory_space<vmem>>, %arg4: memref<1x4xf32, #tpu.memory_space<vmem>>, %arg5: memref<12x12xbf16, #tpu.memory_space<vmem>>, %arg6: memref<1x4xf32, #tpu.memory_space<vmem>>, %arg7: memref<1x4xf32, #tpu.memory_space<vmem>>, %arg8: memref<4x16xbf16, #tpu.memory_space<vmem>>, %arg9: memref<1x16xf32, #tpu.memory_space<vmem>>, %arg10: memref<1x16xf32, #tpu.memory_space<vmem>>, %arg11: memref<1x16x16x16xbf16, #tpu.memory_space<vmem>>, %arg12: memref<256x4xf32, #tpu.memory_space<vmem>>) attributes {dimension_semantics = [#tpu.dimension_semantics<parallel>], iteration_bounds = array<i64: 2>, scalar_prefetch = 0 : i64, scratch_operands = 1 : i64, tpu.core_type = #tpu.core_type<tc>, window_params = [{transform_indices = @transform_0, window_bounds = array<i64: 1, 16, 16, 16>}, {pipeline_mode = #tpu.pipeline_mode<synchronous>, transform_indices = @transform_1, window_bounds = array<i64: 16, 4>}, {pipeline_mode = #tpu.pipeline_mode<synchronous>, transform_indices = @transform_2, window_bounds = array<i64: 1, 4>}, {pipeline_mode = #tpu.pipeline_mode<synchronous>, transform_indices = @transform_3, window_bounds = array<i64: 1, 4>}, {pipeline_mode = #tpu.pipeline_mode<synchronous>, transform_indices = @transform_4, window_bounds = array<i64: 12, 12>}, {pipeline_mode = #tpu.pipeline_mode<synchronous>, transform_indices = @transform_5, window_bounds = array<i64: 1, 4>}, {pipeline_mode = #tpu.pipeline_mode<synchronous>, transform_indices = @transform_6, window_bounds = array<i64: 1, 4>}, {pipeline_mode = #tpu.pipeline_mode<synchronous>, transform_indices = @transform_7, window_bounds = array<i64: 4, 16>}, {pipeline_mode = #tpu.pipeline_mode<synchronous>, transform_indices = @transform_8, window_bounds = array<i64: 1, 16>}, {pipeline_mode = #tpu.pipeline_mode<synchronous>, transform_indices = @transform_9, window_bounds = array<i64: 1, 16>}, {transform_indices = @transform_10, window_bounds = array<i64: 1, 16, 16, 16>}]} {
    %c0 = arith.constant 0 : index
    %c0_0 = arith.constant 0 : index
    %c0_1 = arith.constant 0 : index
    %c0_2 = arith.constant 0 : index
    %0 = vector.load %arg1[%c0, %c0_0, %c0_1, %c0_2] : memref<1x16x16x16xbf16, #tpu.memory_space<vmem>>, vector<1x16x16x16xbf16>
    %1 = vector.shape_cast %0 : vector<1x16x16x16xbf16> to vector<256x16xbf16>
    %c0_3 = arith.constant 0 : index
    %c0_4 = arith.constant 0 : index
    %2 = vector.load %arg2[%c0_3, %c0_4] : memref<16x4xbf16, #tpu.memory_space<vmem>>, vector<16x4xbf16>
    %cst = arith.constant dense<0.000000e+00> : vector<256x4xf32>
    %3 = tpu.matmul %1, %2, %cst {dimension_numbers = #tpu.dot_dimension_numbers<[1], [0], [0], [1], [0, 0, 1, 1], [], []>} : vector<256x16xbf16>, vector<16x4xbf16>, vector<256x4xf32> -> vector<256x4xf32>
    %c0_5 = arith.constant 0 : index
    %c0_6 = arith.constant 0 : index
    %4 = vector.load %arg3[%c0_5, %c0_6] : memref<1x4xf32, #tpu.memory_space<vmem>>, vector<1x4xf32>
    %5 = vector.broadcast %4 : vector<1x4xf32> to vector<256x4xf32>
    %6 = arith.mulf %3, %5 : vector<256x4xf32>
    %c0_7 = arith.constant 0 : index
    %c0_8 = arith.constant 0 : index
    %7 = vector.load %arg4[%c0_7, %c0_8] : memref<1x4xf32, #tpu.memory_space<vmem>>, vector<1x4xf32>
    %8 = vector.broadcast %7 : vector<1x4xf32> to vector<256x4xf32>
    %9 = arith.addf %6, %8 : vector<256x4xf32>
    %cst_9 = arith.constant 0.000000e+00 : f32
    %10 = vector.broadcast %cst_9 : f32 to vector<256x4xf32>
    %11 = arith.maximumf %9, %10 : vector<256x4xf32>
    %12 = arith.truncf %11 : vector<256x4xf32> to vector<256x4xbf16>
    %13 = tpu.iota {dimensions = array<i32: 0>} : vector<256x1xi32>
    %c16_i32 = arith.constant 16 : i32
    %c0_i32 = arith.constant 0 : i32
    %14 = arith.cmpi eq, %c16_i32, %c0_i32 : i32
    %c1_i32 = arith.constant 1 : i32
    %15 = arith.select %14, %c1_i32, %c16_i32 : i32
    %16 = vector.broadcast %15 : i32 to vector<256x1xi32>
    %17 = arith.remsi %13, %16 : vector<256x1xi32>
    %c0_i32_10 = arith.constant 0 : i32
    %18 = vector.broadcast %c0_i32_10 : i32 to vector<256x1xi32>
    %19 = arith.cmpi ne, %17, %18 : vector<256x1xi32>
    %c0_i32_11 = arith.constant 0 : i32
    %20 = vector.broadcast %c0_i32_11 : i32 to vector<256x1xi32>
    %21 = arith.cmpi slt, %17, %20 : vector<256x1xi32>
    %c0_i32_12 = arith.constant 0 : i32
    %22 = arith.cmpi slt, %15, %c0_i32_12 : i32
    %23 = vector.broadcast %22 : i1 to vector<256x1xi1>
    %24 = vector.broadcast %23 : vector<256x1xi1> to vector<256x1xi1>
    %25 = arith.xori %21, %24 : vector<256x1xi1>
    %26 = arith.andi %25, %19 : vector<256x1xi1>
    %27 = vector.broadcast %15 : i32 to vector<256x1xi32>
    %28 = arith.addi %17, %27 : vector<256x1xi32>
    %29 = arith.select %26, %28, %17 : vector<256x1xi1>, vector<256x1xi32>
    %cst_13 = arith.constant 0.000000e+00 : bf16
    %30 = vector.broadcast %cst_13 : bf16 to vector<1x4xbf16>
    %31 = vector.extract_strided_slice %12 {offsets = [0, 0], sizes = [255, 4], strides = [1, 1]} : vector<256x4xbf16> to vector<255x4xbf16>
    %32 = tpu.concatenate %30, %31 in 0 : vector<1x4xbf16>, vector<255x4xbf16> -> vector<256x4xbf16>
    %c0_i32_14 = arith.constant 0 : i32
    %33 = vector.broadcast %c0_i32_14 : i32 to vector<256x1xi32>
    %34 = arith.cmpi sgt, %29, %33 : vector<256x1xi32>
    %cst_15 = arith.constant 0.000000e+00 : bf16
    %35 = vector.shape_cast %34 : vector<256x1xi1> to vector<256x1xi1>
    %36 = vector.broadcast %35 : vector<256x1xi1> to vector<256x4xi1>
    %37 = vector.broadcast %cst_15 : bf16 to vector<256x4xbf16>
    %38 = arith.select %36, %32, %37 : vector<256x4xi1>, vector<256x4xbf16>
    %39 = vector.extract_strided_slice %12 {offsets = [1, 0], sizes = [255, 4], strides = [1, 1]} : vector<256x4xbf16> to vector<255x4xbf16>
    %40 = tpu.concatenate %39, %30 in 0 : vector<255x4xbf16>, vector<1x4xbf16> -> vector<256x4xbf16>
    %c15_i32 = arith.constant 15 : i32
    %41 = vector.broadcast %c15_i32 : i32 to vector<256x1xi32>
    %42 = arith.cmpi slt, %29, %41 : vector<256x1xi32>
    %cst_16 = arith.constant 0.000000e+00 : bf16
    %43 = vector.shape_cast %42 : vector<256x1xi1> to vector<256x1xi1>
    %44 = vector.broadcast %43 : vector<256x1xi1> to vector<256x4xi1>
    %45 = vector.broadcast %cst_16 : bf16 to vector<256x4xbf16>
    %46 = arith.select %44, %40, %45 : vector<256x4xi1>, vector<256x4xbf16>
    %47 = tpu.concatenate %38, %12, %46 in 1 : vector<256x4xbf16>, vector<256x4xbf16>, vector<256x4xbf16> -> vector<256x12xbf16>
    %c0_17 = arith.constant 0 : index
    %c0_18 = arith.constant 0 : index
    %48 = vector.load %arg5[%c0_17, %c0_18] : memref<12x12xbf16, #tpu.memory_space<vmem>>, vector<12x12xbf16>
    %cst_19 = arith.constant dense<0.000000e+00> : vector<256x12xf32>
    %49 = tpu.matmul %47, %48, %cst_19 {dimension_numbers = #tpu.dot_dimension_numbers<[1], [0], [0], [1], [0, 0, 1, 1], [], []>} : vector<256x12xbf16>, vector<12x12xbf16>, vector<256x12xf32> -> vector<256x12xf32>
    %50 = vector.extract_strided_slice %49 {offsets = [0, 0], sizes = [256, 4], strides = [1, 1]} : vector<256x12xf32> to vector<256x4xf32>
    %51 = vector.extract_strided_slice %49 {offsets = [0, 8], sizes = [256, 4], strides = [1, 1]} : vector<256x12xf32> to vector<256x4xf32>
    %52 = vector.extract_strided_slice %49 {offsets = [0, 4], sizes = [256, 4], strides = [1, 1]} : vector<256x12xf32> to vector<256x4xf32>
    %c0_20 = arith.constant 0 : index
    %c0_21 = arith.constant 0 : index
    %53 = vector.load %arg12[%c0_20, %c0_21] : memref<256x4xf32, #tpu.memory_space<vmem>>, vector<256x4xf32>
    tpu.vector_store %arg12[%c0_20, %c0_21], %52 {strides = array<i32>} : memref<256x4xf32, #tpu.memory_space<vmem>>, vector<256x4xf32>,
    %c16 = arith.constant 16 : index
    %c0_22 = arith.constant 0 : index
    %54 = vector.load %arg12[%c16, %c0_22] : memref<256x4xf32, #tpu.memory_space<vmem>>, vector<240x4xf32>
    %55 = vector.extract_strided_slice %50 {offsets = [0, 0], sizes = [240, 4], strides = [1, 1]} : vector<256x4xf32> to vector<240x4xf32>
    %56 = arith.addf %54, %55 : vector<240x4xf32>
    %c16_23 = arith.constant 16 : index
    %c0_24 = arith.constant 0 : index
    %57 = vector.load %arg12[%c16_23, %c0_24] : memref<256x4xf32, #tpu.memory_space<vmem>>, vector<240x4xf32>
    tpu.vector_store %arg12[%c16_23, %c0_24], %56 {strides = array<i32>} : memref<256x4xf32, #tpu.memory_space<vmem>>, vector<240x4xf32>,
    %c0_25 = arith.constant 0 : index
    %c0_26 = arith.constant 0 : index
    %58 = vector.load %arg12[%c0_25, %c0_26] : memref<256x4xf32, #tpu.memory_space<vmem>>, vector<240x4xf32>
    %59 = vector.extract_strided_slice %51 {offsets = [16, 0], sizes = [240, 4], strides = [1, 1]} : vector<256x4xf32> to vector<240x4xf32>
    %60 = arith.addf %58, %59 : vector<240x4xf32>
    %c0_27 = arith.constant 0 : index
    %c0_28 = arith.constant 0 : index
    %61 = vector.load %arg12[%c0_27, %c0_28] : memref<256x4xf32, #tpu.memory_space<vmem>>, vector<240x4xf32>
    tpu.vector_store %arg12[%c0_27, %c0_28], %60 {strides = array<i32>} : memref<256x4xf32, #tpu.memory_space<vmem>>, vector<240x4xf32>,
    %c0_29 = arith.constant 0 : index
    %c0_30 = arith.constant 0 : index
    %62 = vector.load %arg12[%c0_29, %c0_30] : memref<256x4xf32, #tpu.memory_space<vmem>>, vector<256x4xf32>
    %c0_31 = arith.constant 0 : index
    %c0_32 = arith.constant 0 : index
    %63 = vector.load %arg6[%c0_31, %c0_32] : memref<1x4xf32, #tpu.memory_space<vmem>>, vector<1x4xf32>
    %64 = vector.broadcast %63 : vector<1x4xf32> to vector<256x4xf32>
    %65 = arith.mulf %62, %64 : vector<256x4xf32>
    %c0_33 = arith.constant 0 : index
    %c0_34 = arith.constant 0 : index
    %66 = vector.load %arg7[%c0_33, %c0_34] : memref<1x4xf32, #tpu.memory_space<vmem>>, vector<1x4xf32>
    %67 = vector.broadcast %66 : vector<1x4xf32> to vector<256x4xf32>
    %68 = arith.addf %65, %67 : vector<256x4xf32>
    %cst_35 = arith.constant 0.000000e+00 : f32
    %69 = vector.broadcast %cst_35 : f32 to vector<256x4xf32>
    %70 = arith.maximumf %68, %69 : vector<256x4xf32>
    %71 = arith.truncf %70 : vector<256x4xf32> to vector<256x4xbf16>
    %c0_36 = arith.constant 0 : index
    %c0_37 = arith.constant 0 : index
    %72 = vector.load %arg8[%c0_36, %c0_37] : memref<4x16xbf16, #tpu.memory_space<vmem>>, vector<4x16xbf16>
    %cst_38 = arith.constant dense<0.000000e+00> : vector<256x16xf32>
    %73 = tpu.matmul %71, %72, %cst_38 {dimension_numbers = #tpu.dot_dimension_numbers<[1], [0], [0], [1], [0, 0, 1, 1], [], []>} : vector<256x4xbf16>, vector<4x16xbf16>, vector<256x16xf32> -> vector<256x16xf32>
    %c0_39 = arith.constant 0 : index
    %c0_40 = arith.constant 0 : index
    %74 = vector.load %arg9[%c0_39, %c0_40] : memref<1x16xf32, #tpu.memory_space<vmem>>, vector<1x16xf32>
    %75 = vector.broadcast %74 : vector<1x16xf32> to vector<256x16xf32>
    %76 = arith.mulf %73, %75 : vector<256x16xf32>
    %c0_41 = arith.constant 0 : index
    %c0_42 = arith.constant 0 : index
    %77 = vector.load %arg10[%c0_41, %c0_42] : memref<1x16xf32, #tpu.memory_space<vmem>>, vector<1x16xf32>
    %78 = vector.broadcast %77 : vector<1x16xf32> to vector<256x16xf32>
    %79 = arith.addf %76, %78 : vector<256x16xf32>
    %c0_43 = arith.constant 0 : index
    %c0_44 = arith.constant 0 : index
    %c0_45 = arith.constant 0 : index
    %c0_46 = arith.constant 0 : index
    %80 = vector.load %arg1[%c0_43, %c0_44, %c0_45, %c0_46] : memref<1x16x16x16xbf16, #tpu.memory_space<vmem>>, vector<1x16x16x16xbf16>
    %81 = vector.shape_cast %80 : vector<1x16x16x16xbf16> to vector<256x16xbf16>
    %82 = arith.extf %81 : vector<256x16xbf16> to vector<256x16xf32>
    %83 = arith.addf %79, %82 : vector<256x16xf32>
    %cst_47 = arith.constant 0.000000e+00 : f32
    %84 = vector.broadcast %cst_47 : f32 to vector<256x16xf32>
    %85 = arith.maximumf %83, %84 : vector<256x16xf32>
    %86 = arith.truncf %85 : vector<256x16xf32> to vector<256x16xbf16>
    %87 = vector.shape_cast %86 : vector<256x16xbf16> to vector<1x16x16x16xbf16>
    %c0_48 = arith.constant 0 : index
    %c0_49 = arith.constant 0 : index
    %c0_50 = arith.constant 0 : index
    %c0_51 = arith.constant 0 : index
    %88 = vector.load %arg11[%c0_48, %c0_49, %c0_50, %c0_51] : memref<1x16x16x16xbf16, #tpu.memory_space<vmem>>, vector<1x16x16x16xbf16>
    tpu.vector_store %arg11[%c0_48, %c0_49, %c0_50, %c0_51], %87 {strides = array<i32>} : memref<1x16x16x16xbf16, #tpu.memory_space<vmem>>, vector<1x16x16x16xbf16>,
    return
  }
  func.func @transform_0(%arg0: i32) -> (i32, i32, i32, i32) {
    %c0_i32 = arith.constant 0 : i32
    %c0_i32_0 = arith.constant 0 : i32
    %c0_i32_1 = arith.constant 0 : i32
    %c0_i32_2 = arith.constant 0 : i32
    return %arg0, %c0_i32, %c0_i32_0, %c0_i32_1 : i32, i32, i32, i32
  }
  func.func @transform_1(%arg0: i32) -> (i32, i32) {
    %c0_i32 = arith.constant 0 : i32
    %c0_i32_0 = arith.constant 0 : i32
    %c0_i32_1 = arith.constant 0 : i32
    return %c0_i32, %c0_i32_0 : i32, i32
  }
  func.func @transform_2(%arg0: i32) -> (i32, i32) {
    %c0_i32 = arith.constant 0 : i32
    %c0_i32_0 = arith.constant 0 : i32
    %c0_i32_1 = arith.constant 0 : i32
    return %c0_i32, %c0_i32_0 : i32, i32
  }
  func.func @transform_3(%arg0: i32) -> (i32, i32) {
    %c0_i32 = arith.constant 0 : i32
    %c0_i32_0 = arith.constant 0 : i32
    %c0_i32_1 = arith.constant 0 : i32
    return %c0_i32, %c0_i32_0 : i32, i32
  }
  func.func @transform_4(%arg0: i32) -> (i32, i32) {
    %c0_i32 = arith.constant 0 : i32
    %c0_i32_0 = arith.constant 0 : i32
    %c0_i32_1 = arith.constant 0 : i32
    return %c0_i32, %c0_i32_0 : i32, i32
  }
  func.func @transform_5(%arg0: i32) -> (i32, i32) {
    %c0_i32 = arith.constant 0 : i32
    %c0_i32_0 = arith.constant 0 : i32
    %c0_i32_1 = arith.constant 0 : i32
    return %c0_i32, %c0_i32_0 : i32, i32
  }
  func.func @transform_6(%arg0: i32) -> (i32, i32) {
    %c0_i32 = arith.constant 0 : i32
    %c0_i32_0 = arith.constant 0 : i32
    %c0_i32_1 = arith.constant 0 : i32
    return %c0_i32, %c0_i32_0 : i32, i32
  }
  func.func @transform_7(%arg0: i32) -> (i32, i32) {
    %c0_i32 = arith.constant 0 : i32
    %c0_i32_0 = arith.constant 0 : i32
    %c0_i32_1 = arith.constant 0 : i32
    return %c0_i32, %c0_i32_0 : i32, i32
  }
  func.func @transform_8(%arg0: i32) -> (i32, i32) {
    %c0_i32 = arith.constant 0 : i32
    %c0_i32_0 = arith.constant 0 : i32
    %c0_i32_1 = arith.constant 0 : i32
    return %c0_i32, %c0_i32_0 : i32, i32
  }
  func.func @transform_9(%arg0: i32) -> (i32, i32) {
    %c0_i32 = arith.constant 0 : i32
    %c0_i32_0 = arith.constant 0 : i32
    %c0_i32_1 = arith.constant 0 : i32
    return %c0_i32, %c0_i32_0 : i32, i32
  }
  func.func @transform_10(%arg0: i32) -> (i32, i32, i32, i32) {
    %c0_i32 = arith.constant 0 : i32
    %c0_i32_0 = arith.constant 0 : i32
    %c0_i32_1 = arith.constant 0 : i32
    %c0_i32_2 = arith.constant 0 : i32
    return %arg0, %c0_i32, %c0_i32_0, %c0_i32_1 : i32, i32, i32, i32
  }
}

</mosaic_0001>

<llo_original>
// kernel: tpu_custom_call.1
$region0: #{tpu_custom_call.1}
  #allocation0 [shape = 'u32[]', space=smem, size = 0x4, offset = 0x4, fixed_abs, tag = 'smem constant byte address 0x4 - core index']
  #allocation1 [shape = 'u32[144,128]{1,0:T(1,128)}', space=vmem, size = 0x12000, scoped, tag = 'internal scratch']
  #allocation2 [shape = 'f32[256,4]{1,0:T(8,128)}', space=vmem, size = 0x20000, scoped, tag = 'scratch operand']
  %s0 = inlined_call_operand.hbm [shape: bf16[2,16,16,16], index: 0, kind: input, shape index: {}]
  %s1 = inlined_call_operand.vmem [shape: bf16[16,4], index: 1, kind: input, shape index: {}]
  %s2 = inlined_call_operand.vmem [shape: f32[1,4], index: 2, kind: input, shape index: {}]
  %s3 = inlined_call_operand.vmem [shape: f32[1,4], index: 3, kind: input, shape index: {}]
  %s4 = inlined_call_operand.vmem [shape: bf16[12,12], index: 4, kind: input, shape index: {}]
  %s5 = inlined_call_operand.vmem [shape: f32[1,4], index: 5, kind: input, shape index: {}]
  %s6 = inlined_call_operand.vmem [shape: f32[1,4], index: 6, kind: input, shape index: {}]
  %s7 = inlined_call_operand.vmem [shape: bf16[4,16], index: 7, kind: input, shape index: {}]
  %s8 = inlined_call_operand.vmem [shape: f32[1,16], index: 8, kind: input, shape index: {}]
  %s9 = inlined_call_operand.vmem [shape: f32[1,16], index: 9, kind: input, shape index: {}]
  %s10 = inlined_call_operand.hbm [shape: bf16[2,16,16,16], index: 10, kind: output, shape index: {}]
  %s11 = sld [smem:[#allocation0]]
  $region77: #{tpu_custom_call.1} parent=0
    _
  %s13 = ssub.s32 1, %s11
  %s14 = scalar_select 0, %s13, %s11
  $region1: #{tpu_custom_call.1} parent=0
    #allocation3 [shape = 'u8[131072]{0}', space=vmem, size = 0x20000, scoped, tag = 'input window, operand 0']
    #allocation4 [shape = 's32[2]{0}', space=sflag, size = 0x8, scoped, tag = 'scoped memory for tpu_custom_call.1']
    #allocation5 [shape = 's32[2]{0}', space=sflag, size = 0x8, scoped, tag = 'scoped memory for tpu_custom_call.1']
    #allocation6 [shape = 'u8[131072]{0}', space=vmem, size = 0x20000, scoped, tag = 'output window, operand 0']
    %15 = vsyncpa [#allocation4], 0
    %s16 = scalar_lea.sflag [#allocation4], 1
    %17 = vsyncpa %s16, 0
    %18 = vsyncpa [#allocation5], 0
    %s19 = scalar_lea.sflag [#allocation5], 1
    %20 = vsyncpa %s19, 0
    loop: start=0, step=1, limit=4
    $region2: #{tpu_custom_call.1} parent=1 // loop_pre_header
      _
    $region3: #{tpu_custom_call.1} parent=1 // loop_header
      %s22 = sphi 0, %s26
      %p23 = scmp.ge.s32.totalorder %s22, 4
      %s32 = sphi 0, %s34
      %s35 = sphi 0, %s32
      %s36 = sphi 0, %s35
      %s52 = sphi 0, %s36
      %s56 = sphi 0, %s56
      %s58 = sphi 0, %s56
      %s59 = sphi 0, %s58
      %s73 = sphi 0, %s59
      %s77 = sphi 0, %s77
      %s79 = sphi 0, %s77
      %s80 = sphi 0, %s79
      %s94 = sphi 0, %s80
      %s98 = sphi 0, %s98
      %s100 = sphi 0, %s98
      %s101 = sphi 0, %s100
      %s115 = sphi 0, %s101
      %s119 = sphi 0, %s119
      %s121 = sphi 0, %s119
      %s122 = sphi 0, %s121
      %s136 = sphi 0, %s122
      %s140 = sphi 0, %s140
      %s142 = sphi 0, %s140
      %s143 = sphi 0, %s142
      %s157 = sphi 0, %s143
      %s161 = sphi 0, %s161
      %s163 = sphi 0, %s161
      %s164 = sphi 0, %s163
      %s178 = sphi 0, %s164
      %s182 = sphi 0, %s182
      %s184 = sphi 0, %s182
      %s185 = sphi 0, %s184
      %s199 = sphi 0, %s185
      %s203 = sphi 0, %s203
      %s205 = sphi 0, %s203
      %s206 = sphi 0, %s205
      %s220 = sphi 0, %s206
      %s224 = sphi 0, %s224
      %s226 = sphi 0, %s224
      %s227 = sphi 0, %s226
      %s241 = sphi 0, %s227
      %s247 = sphi 0, %s249
      %s250 = sphi 0, %s247
      %s251 = sphi 0, %s250
      %s267 = sphi 0, %s251
    $region4: #{tpu_custom_call.1} parent=1 // loop_header_branch
      %25 = sbr.rel (%p23) target = $region8
    $region5: #{tpu_custom_call.1} parent=1 // loop_body
      %s27 = ssub.s32 %s22, 1
      %s28 = ssub.s32 %s22, 2
      %s29 = sadd.s32 %s22, 1
      %s30 = ssub.s32 %s22, %s29
      %p31 = scmp.eq.s32.totalorder %s30, 0
      %s33 = sadd.s32 %s32, 1
      %s34 = scalar_select %p31, %s32, %s33
      %p37 = pneg %p31
      %p38 = scmp.eq.s32.totalorder %s22, 1
      %p39 = por %p37, %p38
      %p40 = scmp.ne.s32.totalorder %s32, %s35
      %p41 = scmp.eq.s32.totalorder %s22, 0
      %p42 = por %p40, %p41
      %p43 = scmp.ne.s32.totalorder %s32, %s35
      %p44 = scmp.eq.s32.totalorder %s27, 1
      %p45 = por %p43, %p44
      %p46 = scmp.ne.s32.totalorder %s35, %s36
      %p47 = scmp.eq.s32.totalorder %s27, 0
      %p48 = por %p46, %p47
      %p49 = scmp.ne.s32.totalorder %s35, %s36
      %p50 = scmp.eq.s32.totalorder %s28, 1
      %p51 = por %p49, %p50
      %p53 = scmp.ne.s32.totalorder %s36, %s52
      %p54 = scmp.eq.s32.totalorder %s28, 0
      %p55 = por %p53, %p54
      %s57 = sadd.s32 %s56, 1
      %p60 = scmp.eq.s32.totalorder %s22, 1
      %p61 = scmp.ne.s32.totalorder %s56, %s58
      %p62 = scmp.eq.s32.totalorder %s22, 0
      %p63 = por %p61, %p62
      %p64 = scmp.ne.s32.totalorder %s56, %s58
      %p65 = scmp.eq.s32.totalorder %s27, 1
      %p66 = por %p64, %p65
      %p67 = scmp.ne.s32.totalorder %s58, %s59
      %p68 = scmp.eq.s32.totalorder %s27, 0
      %p69 = por %p67, %p68
      %p70 = scmp.ne.s32.totalorder %s58, %s59
      %p71 = scmp.eq.s32.totalorder %s28, 1
      %p72 = por %p70, %p71
      %p74 = scmp.ne.s32.totalorder %s59, %s73
      %p75 = scmp.eq.s32.totalorder %s28, 0
      %p76 = por %p74, %p75
      %s78 = sadd.s32 %s77, 1
      %p81 = scmp.eq.s32.totalorder %s22, 1
      %p82 = scmp.ne.s32.totalorder %s77, %s79
      %p83 = scmp.eq.s32.totalorder %s22, 0
      %p84 = por %p82, %p83
      %p85 = scmp.ne.s32.totalorder %s77, %s79
      %p86 = scmp.eq.s32.totalorder %s27, 1
      %p87 = por %p85, %p86
      %p88 = scmp.ne.s32.totalorder %s79, %s80
      %p89 = scmp.eq.s32.totalorder %s27, 0
      %p90 = por %p88, %p89
      %p91 = scmp.ne.s32.totalorder %s79, %s80
      %p92 = scmp.eq.s32.totalorder %s28, 1
      %p93 = por %p91, %p92
      %p95 = scmp.ne.s32.totalorder %s80, %s94
      %p96 = scmp.eq.s32.totalorder %s28, 0
      %p97 = por %p95, %p96
      %s99 = sadd.s32 %s98, 1
      %p102 = scmp.eq.s32.totalorder %s22, 1
      %p103 = scmp.ne.s32.totalorder %s98, %s100
      %p104 = scmp.eq.s32.totalorder %s22, 0
      %p105 = por %p103, %p104
      %p106 = scmp.ne.s32.totalorder %s98, %s100
      %p107 = scmp.eq.s32.totalorder %s27, 1
      %p108 = por %p106, %p107
      %p109 = scmp.ne.s32.totalorder %s100, %s101
      %p110 = scmp.eq.s32.totalorder %s27, 0
      %p111 = por %p109, %p110
      %p112 = scmp.ne.s32.totalorder %s100, %s101
      %p113 = scmp.eq.s32.totalorder %s28, 1
      %p114 = por %p112, %p113
      %p116 = scmp.ne.s32.totalorder %s101, %s115
      %p117 = scmp.eq.s32.totalorder %s28, 0
      %p118 = por %p116, %p117
      %s120 = sadd.s32 %s119, 1
      %p123 = scmp.eq.s32.totalorder %s22, 1
      %p124 = scmp.ne.s32.totalorder %s119, %s121
      %p125 = scmp.eq.s32.totalorder %s22, 0
      %p126 = por %p124, %p125
      %p127 = scmp.ne.s32.totalorder %s119, %s121
      %p128 = scmp.eq.s32.totalorder %s27, 1
      %p129 = por %p127, %p128
      %p130 = scmp.ne.s32.totalorder %s121, %s122
      %p131 = scmp.eq.s32.totalorder %s27, 0
      %p132 = por %p130, %p131
      %p133 = scmp.ne.s32.totalorder %s121, %s122
      %p134 = scmp.eq.s32.totalorder %s28, 1
      %p135 = por %p133, %p134
      %p137 = scmp.ne.s32.totalorder %s122, %s136
      %p138 = scmp.eq.s32.totalorder %s28, 0
      %p139 = por %p137, %p138
      %s141 = sadd.s32 %s140, 1
      %p144 = scmp.eq.s32.totalorder %s22, 1
      %p145 = scmp.ne.s32.totalorder %s140, %s142
      %p146 = scmp.eq.s32.totalorder %s22, 0
      %p147 = por %p145, %p146
      %p148 = scmp.ne.s32.totalorder %s140, %s142
      %p149 = scmp.eq.s32.totalorder %s27, 1
      %p150 = por %p148, %p149
      %p151 = scmp.ne.s32.totalorder %s142, %s143
      %p152 = scmp.eq.s32.totalorder %s27, 0
      %p153 = por %p151, %p152
      %p154 = scmp.ne.s32.totalorder %s142, %s143
      %p155 = scmp.eq.s32.totalorder %s28, 1
      %p156 = por %p154, %p155
      %p158 = scmp.ne.s32.totalorder %s143, %s157
      %p159 = scmp.eq.s32.totalorder %s28, 0
      %p160 = por %p158, %p159
      %s162 = sadd.s32 %s161, 1
      %p165 = scmp.eq.s32.totalorder %s22, 1
      %p166 = scmp.ne.s32.totalorder %s161, %s163
      %p167 = scmp.eq.s32.totalorder %s22, 0
      %p168 = por %p166, %p167
      %p169 = scmp.ne.s32.totalorder %s161, %s163
      %p170 = scmp.eq.s32.totalorder %s27, 1
      %p171 = por %p169, %p170
      %p172 = scmp.ne.s32.totalorder %s163, %s164
      %p173 = scmp.eq.s32.totalorder %s27, 0
      %p174 = por %p172, %p173
      %p175 = scmp.ne.s32.totalorder %s163, %s164
      %p176 = scmp.eq.s32.totalorder %s28, 1
      %p177 = por %p175, %p176
      %p179 = scmp.ne.s32.totalorder %s164, %s178
      %p180 = scmp.eq.s32.totalorder %s28, 0
      %p181 = por %p179, %p180
      %s183 = sadd.s32 %s182, 1
      %p186 = scmp.eq.s32.totalorder %s22, 1
      %p187 = scmp.ne.s32.totalorder %s182, %s184
      %p188 = scmp.eq.s32.totalorder %s22, 0
      %p189 = por %p187, %p188
      %p190 = scmp.ne.s32.totalorder %s182, %s184
      %p191 = scmp.eq.s32.totalorder %s27, 1
      %p192 = por %p190, %p191
      %p193 = scmp.ne.s32.totalorder %s184, %s185
      %p194 = scmp.eq.s32.totalorder %s27, 0
      %p195 = por %p193, %p194
      %p196 = scmp.ne.s32.totalorder %s184, %s185
      %p197 = scmp.eq.s32.totalorder %s28, 1
      %p198 = por %p196, %p197
      %p200 = scmp.ne.s32.totalorder %s185, %s199
      %p201 = scmp.eq.s32.totalorder %s28, 0
      %p202 = por %p200, %p201
      %s204 = sadd.s32 %s203, 1
      %p207 = scmp.eq.s32.totalorder %s22, 1
      %p208 = scmp.ne.s32.totalorder %s203, %s205
      %p209 = scmp.eq.s32.totalorder %s22, 0
      %p210 = por %p208, %p209
      %p211 = scmp.ne.s32.totalorder %s203, %s205
      %p212 = scmp.eq.s32.totalorder %s27, 1
      %p213 = por %p211, %p212
      %p214 = scmp.ne.s32.totalorder %s205, %s206
      %p215 = scmp.eq.s32.totalorder %s27, 0
      %p216 = por %p214, %p215
      %p217 = scmp.ne.s32.totalorder %s205, %s206
      %p218 = scmp.eq.s32.totalorder %s28, 1
      %p219 = por %p217, %p218
      %p221 = scmp.ne.s32.totalorder %s206, %s220
      %p222 = scmp.eq.s32.totalorder %s28, 0
      %p223 = por %p221, %p222
      %s225 = sadd.s32 %s224, 1
      %p228 = scmp.eq.s32.totalorder %s22, 1
      %p229 = scmp.ne.s32.totalorder %s224, %s226
      %p230 = scmp.eq.s32.totalorder %s22, 0
      %p231 = por %p229, %p230
      %p232 = scmp.ne.s32.totalorder %s224, %s226
      %p233 = scmp.eq.s32.totalorder %s27, 1
      %p234 = por %p232, %p233
      %p235 = scmp.ne.s32.totalorder %s226, %s227
      %p236 = scmp.eq.s32.totalorder %s27, 0
      %p237 = por %p235, %p236
      %p238 = scmp.ne.s32.totalorder %s226, %s227
      %p239 = scmp.eq.s32.totalorder %s28, 1
      %p240 = por %p238, %p239
      %p242 = scmp.ne.s32.totalorder %s227, %s241
      %p243 = scmp.eq.s32.totalorder %s28, 0
      %p244 = por %p242, %p243
      %s245 = ssub.s32 %s22, %s29
      %p246 = scmp.eq.s32.totalorder %s245, 0
      %s248 = sadd.s32 %s247, 1
      %s249 = scalar_select %p246, %s247, %s248
      %p252 = pneg %p246
      %p253 = scmp.eq.s32.totalorder %s22, 1
      %p254 = por %p252, %p253
      %p255 = scmp.ne.s32.totalorder %s247, %s250
      %p256 = scmp.eq.s32.totalorder %s22, 0
      %p257 = por %p255, %p256
      %p258 = scmp.ne.s32.totalorder %s247, %s250
      %p259 = scmp.eq.s32.totalorder %s27, 1
      %p260 = por %p258, %p259
      %p261 = scmp.ne.s32.totalorder %s250, %s251
      %p262 = scmp.eq.s32.totalorder %s27, 0
      %p263 = por %p261, %p262
      %p264 = scmp.ne.s32.totalorder %s250, %s251
      %p265 = scmp.eq.s32.totalorder %s28, 1
      %p266 = por %p264, %p265
      %p268 = scmp.ne.s32.totalorder %s251, %s267
      %p269 = scmp.eq.s32.totalorder %s28, 0
      %p270 = por %p268, %p269
      %p271 = scmp.le.s32.totalorder 1, %s22
      %p272 = scmp.lt.s32.totalorder %s22, 3
      %p273 = pnand %p271, %p272
      %p274 = pneg %p273
      // Predicated region
      $region9: #{tpu_custom_call.1} parent=5 // pred_check
        _
      $region10: #{tpu_custom_call.1} parent=5 // pred_check_branch
        %276 = sbr.rel (%p273) target = $region12
      $region11: #{tpu_custom_call.1} parent=5 // pred_region
        %s277 = ssub.s32 %s22, 1
        // Predicated region
        $region13: #{tpu_custom_call.1} parent=11 // pred_check
          %p278 = pneg %p69
        $region14: #{tpu_custom_call.1} parent=11 // pred_check_branch
          %280 = sbr.rel (%p278) target = $region16
        $region15: #{tpu_custom_call.1} parent=11 // pred_region
          _
        $region16: #{tpu_custom_call.1} parent=11 // pred_fallthru
          _
        // Predicated region
        $region17: #{tpu_custom_call.1} parent=11 // pred_check
          %p281 = pneg %p90
        $region18: #{tpu_custom_call.1} parent=11 // pred_check_branch
          %283 = sbr.rel (%p281) target = $region20
        $region19: #{tpu_custom_call.1} parent=11 // pred_region
          _
        $region20: #{tpu_custom_call.1} parent=11 // pred_fallthru
          _
        // Predicated region
        $region21: #{tpu_custom_call.1} parent=11 // pred_check
          %p284 = pneg %p111
        $region22: #{tpu_custom_call.1} parent=11 // pred_check_branch
          %286 = sbr.rel (%p284) target = $region24
        $region23: #{tpu_custom_call.1} parent=11 // pred_region
          _
        $region24: #{tpu_custom_call.1} parent=11 // pred_fallthru
          _
        // Predicated region
        $region25: #{tpu_custom_call.1} parent=11 // pred_check
          %p287 = pneg %p132
        $region26: #{tpu_custom_call.1} parent=11 // pred_check_branch
          %289 = sbr.rel (%p287) target = $region28
        $region27: #{tpu_custom_call.1} parent=11 // pred_region
          _
        $region28: #{tpu_custom_call.1} parent=11 // pred_fallthru
          _
        // Predicated region
        $region29: #{tpu_custom_call.1} parent=11 // pred_check
          %p290 = pneg %p153
        $region30: #{tpu_custom_call.1} parent=11 // pred_check_branch
          %292 = sbr.rel (%p290) target = $region32
        $region31: #{tpu_custom_call.1} parent=11 // pred_region
          _
        $region32: #{tpu_custom_call.1} parent=11 // pred_fallthru
          _
        // Predicated region
        $region33: #{tpu_custom_call.1} parent=11 // pred_check
          %p293 = pneg %p174
        $region34: #{tpu_custom_call.1} parent=11 // pred_check_branch
          %295 = sbr.rel (%p293) target = $region36
        $region35: #{tpu_custom_call.1} parent=11 // pred_region
          _
        $region36: #{tpu_custom_call.1} parent=11 // pred_fallthru
          _
        // Predicated region
        $region37: #{tpu_custom_call.1} parent=11 // pred_check
          %p296 = pneg %p195
        $region38: #{tpu_custom_call.1} parent=11 // pred_check_branch
          %298 = sbr.rel (%p296) target = $region40
        $region39: #{tpu_custom_call.1} parent=11 // pred_region
          _
        $region40: #{tpu_custom_call.1} parent=11 // pred_fallthru
          _
        // Predicated region
        $region41: #{tpu_custom_call.1} parent=11 // pred_check
          %p299 = pneg %p216
        $region42: #{tpu_custom_call.1} parent=11 // pred_check_branch
          %301 = sbr.rel (%p299) target = $region44
        $region43: #{tpu_custom_call.1} parent=11 // pred_region
          _
        $region44: #{tpu_custom_call.1} parent=11 // pred_fallthru
          _
        // Predicated region
        $region45: #{tpu_custom_call.1} parent=11 // pred_check
          %p302 = pneg %p237
        $region46: #{tpu_custom_call.1} parent=11 // pred_check_branch
          %304 = sbr.rel (%p302) target = $region48
        $region47: #{tpu_custom_call.1} parent=11 // pred_region
          _
        $region48: #{tpu_custom_call.1} parent=11 // pred_fallthru
          _
      $region12: #{tpu_custom_call.1} parent=5 // pred_fallthru
        _
      %p305 = scmp.lt.s32.totalorder %s22, 2
      // Predicated region
      $region49: #{tpu_custom_call.1} parent=5 // pred_check
        %p306 = pneg %p305
      $region50: #{tpu_custom_call.1} parent=5 // pred_check_branch
        %308 = sbr.rel (%p306) target = $region52
      $region51: #{tpu_custom_call.1} parent=5 // pred_region
        // Predicated region
        $region53: #{tpu_custom_call.1} parent=51 // pred_check
          %p309 = pneg %p42
        $region54: #{tpu_custom_call.1} parent=51 // pred_check_branch
          %311 = sbr.rel (%p309) target = $region56
        $region55: #{tpu_custom_call.1} parent=51 // pred_region
          %s312 = sand.u32 %s32, 1
          %s313 = scalar_lea.sflag [#allocation4], %s312
          %s314 = sand.u32 %s32, 1
          %s315 = smul.addr %s314, 128
          %s316 = scalar_lea.vmem [#allocation3], %s315
          %s318 = ssub.s32 2048, 2048
          %319 = vsyncadd %s313, %s318
          %s320 = smul.addr %s22, 32
          %s321 = smul.addr %s320, 64
          %s322 = scalar_lea.hbm %s0, %s321
          %s323 = sshll.u32 %s316, 4
          %s324 = int_to_ptr.vmem [resolvable:$true] %s323
          %329 = dma.hbm_to_vmem [thread:$0]  %s322, 2048, %s324, %s313, 64, 64, 4
        $region56: #{tpu_custom_call.1} parent=51 // pred_fallthru
          _
      $region52: #{tpu_custom_call.1} parent=5 // pred_fallthru
        _
      %p330 = scmp.le.s32.totalorder 1, %s22
      %p331 = scmp.lt.s32.totalorder %s22, 3
      %p332 = pnand %p330, %p331
      %p333 = pneg %p332
      // Predicated region
      $region57: #{tpu_custom_call.1} parent=5 // pred_check
        _
      $region58: #{tpu_custom_call.1} parent=5 // pred_check_branch
        %335 = sbr.rel (%p332) target = $region60
      $region59: #{tpu_custom_call.1} parent=5 // pred_region
        %s336 = ssub.s32 %s22, 1
        %s337 = sand.u32 %s35, 1
        %s338 = scalar_lea.sflag [#allocation4], %s337
        %s339 = sand.u32 %s35, 1
        %s340 = smul.addr %s339, 128
        %s341 = scalar_lea.vmem [#allocation3], %s340
        // Predicated region
        $region61: #{tpu_custom_call.1} parent=59 // pred_check
          %p342 = pneg %p48
        $region62: #{tpu_custom_call.1} parent=59 // pred_check_branch
          %344 = sbr.rel (%p342) target = $region64
        $region63: #{tpu_custom_call.1} parent=59 // pred_region
          %345 = dma.done %s338, 2048
        $region64: #{tpu_custom_call.1} parent=59 // pred_fallthru
          _
        %s346 = sand.u32 %s35, 1
        %s347 = scalar_lea.sflag [#allocation4], %s346
        %s348 = sand.u32 %s35, 1
        %s349 = smul.addr %s348, 128
        %s350 = scalar_lea.vmem [#allocation3], %s349
        %p351 = pneg %p48
        %p352 = pneg %p45
        %p353 = pneg %p69
        %p354 = pneg %p66
        %p355 = pneg %p90
        %p356 = pneg %p87
        %p357 = pneg %p111
        %p358 = pneg %p108
        %p359 = pneg %p132
        %p360 = pneg %p129
        %p361 = pneg %p153
        %p362 = pneg %p150
        %p363 = pneg %p174
        %p364 = pneg %p171
        %p365 = pneg %p195
        %p366 = pneg %p192
        %p367 = pneg %p216
        %p368 = pneg %p213
        %p369 = pneg %p237
        %p370 = pneg %p234
        %p371 = pneg %p263
        %p372 = pneg %p260
        %s373 = sand.u32 %s250, 1
        %s374 = scalar_lea.sflag [#allocation5], %s373
        %s375 = sand.u32 %s250, 1
        %s376 = smul.addr %s375, 128
        %s377 = scalar_lea.vmem [#allocation6], %s376
        %v381 = vld [vmem:[%s341] sm:$0xf]
        %v382 = vld [vmem:[%s341 + $0x4] sm:$0xf]
        %v383 = vld [vmem:[%s341 + $0x8] sm:$0xf]
        %v384 = vld [vmem:[%s341 + $0xc] sm:$0xf]
        %v385 = vld [vmem:[%s341 + $0x10] sm:$0xf]
        %v386 = vld [vmem:[%s341 + $0x14] sm:$0xf]
        %v387 = vld [vmem:[%s341 + $0x18] sm:$0xf]
        %v388 = vld [vmem:[%s341 + $0x1c] sm:$0xf]
        %v389 = vld [vmem:[%s341 + $0x20] sm:$0xf]
        %v390 = vld [vmem:[%s341 + $0x24] sm:$0xf]
        %v391 = vld [vmem:[%s341 + $0x28] sm:$0xf]
        %v392 = vld [vmem:[%s341 + $0x2c] sm:$0xf]
        %v393 = vld [vmem:[%s341 + $0x30] sm:$0xf]
        %v394 = vld [vmem:[%s341 + $0x34] sm:$0xf]
        %v395 = vld [vmem:[%s341 + $0x38] sm:$0xf]
        %v396 = vld [vmem:[%s341 + $0x3c] sm:$0xf]
        %v397 = vld [vmem:[%s341 + $0x40] sm:$0xf]
        %v398 = vld [vmem:[%s341 + $0x44] sm:$0xf]
        %v399 = vld [vmem:[%s341 + $0x48] sm:$0xf]
        %v400 = vld [vmem:[%s341 + $0x4c] sm:$0xf]
        %v401 = vld [vmem:[%s341 + $0x50] sm:$0xf]
        %v402 = vld [vmem:[%s341 + $0x54] sm:$0xf]
        %v403 = vld [vmem:[%s341 + $0x58] sm:$0xf]
        %v404 = vld [vmem:[%s341 + $0x5c] sm:$0xf]
        %v405 = vld [vmem:[%s341 + $0x60] sm:$0xf]
        %v406 = vld [vmem:[%s341 + $0x64] sm:$0xf]
        %v407 = vld [vmem:[%s341 + $0x68] sm:$0xf]
        %v408 = vld [vmem:[%s341 + $0x6c] sm:$0xf]
        %v409 = vld [vmem:[%s341 + $0x70] sm:$0xf]
        %v410 = vld [vmem:[%s341 + $0x74] sm:$0xf]
        %v411 = vld [vmem:[%s341 + $0x78] sm:$0xf]
        %v412 = vld [vmem:[%s341 + $0x7c] sm:$0xf]
        %v413 = vld [vmem:[%s1] sm:$0xf]
        %v414 = vld [vmem:[%s1 + $0x4] sm:$0xf]
        %v447 = vunpack.c.l.b16 %v381
        %v448 = vunpack.c.l.b16 %v382
        %v449 = vunpack.c.l.b16 %v383
        %v450 = vunpack.c.l.b16 %v384
        %v451 = vunpack.c.l.b16 %v385
        %v452 = vunpack.c.l.b16 %v386
        %v453 = vunpack.c.l.b16 %v387
        %v454 = vunpack.c.l.b16 %v388
        %v455 = vunpack.c.l.b16 %v389
        %v456 = vunpack.c.l.b16 %v390
        %v457 = vunpack.c.l.b16 %v391
        %v458 = vunpack.c.l.b16 %v392
        %v459 = vunpack.c.l.b16 %v393
        %v460 = vunpack.c.l.b16 %v394
        %v461 = vunpack.c.l.b16 %v395
        %v462 = vunpack.c.l.b16 %v396
        %v463 = vunpack.c.l.b16 %v397
        %v464 = vunpack.c.l.b16 %v398
        %v465 = vunpack.c.l.b16 %v399
        %v466 = vunpack.c.l.b16 %v400
        %v467 = vunpack.c.l.b16 %v401
        %v468 = vunpack.c.l.b16 %v402
        %v469 = vunpack.c.l.b16 %v403
        %v470 = vunpack.c.l.b16 %v404
        %v471 = vunpack.c.l.b16 %v405
        %v472 = vunpack.c.l.b16 %v406
        %v473 = vunpack.c.l.b16 %v407
        %v474 = vunpack.c.l.b16 %v408
        %v475 = vunpack.c.l.b16 %v409
        %v476 = vunpack.c.l.b16 %v410
        %v477 = vunpack.c.l.b16 %v411
        %v478 = vunpack.c.l.b16 %v412
        %v479 = vpack.c.b16 %v448, %v447
        %v480 = vpack.c.b16 %v450, %v449
        %v481 = vpack.c.b16 %v452, %v451
        %v482 = vpack.c.b16 %v454, %v453
        %v483 = vpack.c.b16 %v456, %v455
        %v484 = vpack.c.b16 %v458, %v457
        %v485 = vpack.c.b16 %v460, %v459
        %v486 = vpack.c.b16 %v462, %v461
        %v487 = vpack.c.b16 %v464, %v463
        %v488 = vpack.c.b16 %v466, %v465
        %v489 = vpack.c.b16 %v468, %v467
        %v490 = vpack.c.b16 %v470, %v469
        %v491 = vpack.c.b16 %v472, %v471
        %v492 = vpack.c.b16 %v474, %v473
        %v493 = vpack.c.b16 %v476, %v475
        %v494 = vpack.c.b16 %v478, %v477
        %v497 = vunpack.c.l.b16 %v413
        %v498 = vunpack.c.l.b16 %v414
        %v499 = vpack.c.b16 %v498, %v497
        %vm501 = vcmask 130048
        %v503 = vsel %vm501, %v479, 0
        %v506 = vsel %vm501, %v480, 0
        %v509 = vsel %vm501, %v481, 0
        %v512 = vsel %vm501, %v482, 0
        %v515 = vsel %vm501, %v483, 0
        %v518 = vsel %vm501, %v484, 0
        %v521 = vsel %vm501, %v485, 0
        %v524 = vsel %vm501, %v486, 0
        %v527 = vsel %vm501, %v487, 0
        %v530 = vsel %vm501, %v488, 0
        %v533 = vsel %vm501, %v489, 0
        %v536 = vsel %vm501, %v490, 0
        %v539 = vsel %vm501, %v491, 0
        %v542 = vsel %vm501, %v492, 0
        %v545 = vsel %vm501, %v493, 0
        %v548 = vsel %vm501, %v494, 0
        %550 = vmatprep.subr.bf16.mxu0 0
        %551 = vmatpush1.bf16.msra.mxu0 %v499
        %552 = vmatprep.subr.bf16.mxu0 0
        %553 = vmatpush1.bf16.msra.mxu0 0
        %554 = vmatprep.subr.bf16.mxu0 0
        %555 = vmatpush1.bf16.msra.mxu0 0
        %556 = vmatprep.subr.bf16.mxu0 0
        %557 = vmatpush1.bf16.msra.mxu0 0
        %558 = vmatprep.subr.bf16.mxu0 0
        %559 = vmatpush1.bf16.msra.mxu0 0
        %560 = vmatprep.subr.bf16.mxu0 0
        %561 = vmatpush1.bf16.msra.mxu0 0
        %562 = vmatprep.subr.bf16.mxu0 0
        %563 = vmatpush1.bf16.msra.mxu0 0
        %564 = vmatprep.subr.bf16.mxu0 0
        %565 = vmatpush1.bf16.msra.mxu0 0
        %566 = vmatprep.subr.bf16.mxu0 0
        %567 = vmatpush1.bf16.msra.mxu0 0
        %568 = vmatprep.subr.bf16.mxu0 0
        %569 = vmatpush1.bf16.msra.mxu0 0
        %570 = vmatprep.subr.bf16.mxu0 0
        %571 = vmatpush1.bf16.msra.mxu0 0
        %572 = vmatprep.subr.bf16.mxu0 0
        %573 = vmatpush1.bf16.msra.mxu0 0
        %574 = vmatprep.subr.bf16.mxu0 0
        %575 = vmatpush1.bf16.msra.mxu0 0
        %576 = vmatprep.subr.bf16.mxu0 0
        %577 = vmatpush1.bf16.msra.mxu0 0
        %578 = vmatprep.subr.bf16.mxu0 0
        %579 = vmatpush1.bf16.msra.mxu0 0
        %580 = vmatprep.subr.bf16.mxu0 0
        %581 = vmatpush1.bf16.msra.mxu0 0
        %582 = vmatprep.mubr.bf16.mxu0 0
        %583 = vmatmul.mubr.bf16.gmra.mrb[0].mxu0 %v503
        %v584 = vpop.f32.mrb[0].mxu0
        %v585 = vadd.f32 0.0, %v584
        %v586 = vpop.f32.mrb[0].mxu0
        %v587 = vpop.f32.mrb[0].mxu0
        %v588 = vadd.f32 0.0, %v587
        %v589 = vpop.f32.mrb[0].mxu0
        %590 = vmatprep.mubr.bf16.mxu0 0
        %591 = vmatmul.mubr.bf16.gmra.mrb[0].mxu0 %v506
        %v592 = vpop.f32.mrb[0].mxu0
        %v593 = vadd.f32 0.0, %v592
        %v594 = vpop.f32.mrb[0].mxu0
        %v595 = vpop.f32.mrb[0].mxu0
        %v596 = vadd.f32 0.0, %v595
        %v597 = vpop.f32.mrb[0].mxu0
        %598 = vmatprep.mubr.bf16.mxu0 0
        %599 = vmatmul.mubr.bf16.gmra.mrb[0].mxu0 %v509
        %v600 = vpop.f32.mrb[0].mxu0
        %v601 = vadd.f32 0.0, %v600
        %v602 = vpop.f32.mrb[0].mxu0
        %v603 = vpop.f32.mrb[0].mxu0
        %v604 = vadd.f32 0.0, %v603
        %v605 = vpop.f32.mrb[0].mxu0
        %606 = vmatprep.mubr.bf16.mxu0 0
        %607 = vmatmul.mubr.bf16.gmra.mrb[0].mxu0 %v512
        %v608 = vpop.f32.mrb[0].mxu0
        %v609 = vadd.f32 0.0, %v608
        %v610 = vpop.f32.mrb[0].mxu0
        %v611 = vpop.f32.mrb[0].mxu0
        %v612 = vadd.f32 0.0, %v611
        %v613 = vpop.f32.mrb[0].mxu0
        %614 = vmatprep.mubr.bf16.mxu0 0
        %615 = vmatmul.mubr.bf16.gmra.mrb[0].mxu0 %v515
        %v616 = vpop.f32.mrb[0].mxu0
        %v617 = vadd.f32 0.0, %v616
        %v618 = vpop.f32.mrb[0].mxu0
        %v619 = vpop.f32.mrb[0].mxu0
        %v620 = vadd.f32 0.0, %v619
        %v621 = vpop.f32.mrb[0].mxu0
        %622 = vmatprep.mubr.bf16.mxu0 0
        %623 = vmatmul.mubr.bf16.gmra.mrb[0].mxu0 %v518
        %v624 = vpop.f32.mrb[0].mxu0
        %v625 = vadd.f32 0.0, %v624
        %v626 = vpop.f32.mrb[0].mxu0
        %v627 = vpop.f32.mrb[0].mxu0
        %v628 = vadd.f32 0.0, %v627
        %v629 = vpop.f32.mrb[0].mxu0
        %630 = vmatprep.mubr.bf16.mxu0 0
        %631 = vmatmul.mubr.bf16.gmra.mrb[0].mxu0 %v521
        %v632 = vpop.f32.mrb[0].mxu0
        %v633 = vadd.f32 0.0, %v632
        %v634 = vpop.f32.mrb[0].mxu0
        %v635 = vpop.f32.mrb[0].mxu0
        %v636 = vadd.f32 0.0, %v635
        %v637 = vpop.f32.mrb[0].mxu0
        %638 = vmatprep.mubr.bf16.mxu0 0
        %639 = vmatmul.mubr.bf16.gmra.mrb[0].mxu0 %v524
        %v640 = vpop.f32.mrb[0].mxu0
        %v641 = vadd.f32 0.0, %v640
        %v642 = vpop.f32.mrb[0].mxu0
        %v643 = vpop.f32.mrb[0].mxu0
        %v644 = vadd.f32 0.0, %v643
        %v645 = vpop.f32.mrb[0].mxu0
        %646 = vmatprep.mubr.bf16.mxu0 0
        %647 = vmatmul.mubr.bf16.gmra.mrb[0].mxu0 %v527
        %v648 = vpop.f32.mrb[0].mxu0
        %v649 = vadd.f32 0.0, %v648
        %v650 = vpop.f32.mrb[0].mxu0
        %v651 = vpop.f32.mrb[0].mxu0
        %v652 = vadd.f32 0.0, %v651
        %v653 = vpop.f32.mrb[0].mxu0
        %654 = vmatprep.mubr.bf16.mxu0 0
        %655 = vmatmul.mubr.bf16.gmra.mrb[0].mxu0 %v530
        %v656 = vpop.f32.mrb[0].mxu0
        %v657 = vadd.f32 0.0, %v656
        %v658 = vpop.f32.mrb[0].mxu0
        %v659 = vpop.f32.mrb[0].mxu0
        %v660 = vadd.f32 0.0, %v659
        %v661 = vpop.f32.mrb[0].mxu0
        %662 = vmatprep.mubr.bf16.mxu0 0
        %663 = vmatmul.mubr.bf16.gmra.mrb[0].mxu0 %v533
        %v664 = vpop.f32.mrb[0].mxu0
        %v665 = vadd.f32 0.0, %v664
        %v666 = vpop.f32.mrb[0].mxu0
        %v667 = vpop.f32.mrb[0].mxu0
        %v668 = vadd.f32 0.0, %v667
        %v669 = vpop.f32.mrb[0].mxu0
        %670 = vmatprep.mubr.bf16.mxu0 0
        %671 = vmatmul.mubr.bf16.gmra.mrb[0].mxu0 %v536
        %v672 = vpop.f32.mrb[0].mxu0
        %v673 = vadd.f32 0.0, %v672
        %v674 = vpop.f32.mrb[0].mxu0
        %v675 = vpop.f32.mrb[0].mxu0
        %v676 = vadd.f32 0.0, %v675
        %v677 = vpop.f32.mrb[0].mxu0
        %678 = vmatprep.mubr.bf16.mxu0 0
        %679 = vmatmul.mubr.bf16.gmra.mrb[0].mxu0 %v539
        %v680 = vpop.f32.mrb[0].mxu0
        %v681 = vadd.f32 0.0, %v680
        %v682 = vpop.f32.mrb[0].mxu0
        %v683 = vpop.f32.mrb[0].mxu0
        %v684 = vadd.f32 0.0, %v683
        %v685 = vpop.f32.mrb[0].mxu0
        %686 = vmatprep.mubr.bf16.mxu0 0
        %687 = vmatmul.mubr.bf16.gmra.mrb[0].mxu0 %v542
        %v688 = vpop.f32.mrb[0].mxu0
        %v689 = vadd.f32 0.0, %v688
        %v690 = vpop.f32.mrb[0].mxu0
        %v691 = vpop.f32.mrb[0].mxu0
        %v692 = vadd.f32 0.0, %v691
        %v693 = vpop.f32.mrb[0].mxu0
        %694 = vmatprep.mubr.bf16.mxu0 0
        %695 = vmatmul.mubr.bf16.gmra.mrb[0].mxu0 %v545
        %v696 = vpop.f32.mrb[0].mxu0
        %v697 = vadd.f32 0.0, %v696
        %v698 = vpop.f32.mrb[0].mxu0
        %v699 = vpop.f32.mrb[0].mxu0
        %v700 = vadd.f32 0.0, %v699
        %v701 = vpop.f32.mrb[0].mxu0
        %702 = vmatprep.mubr.bf16.mxu0 0
        %703 = vmatmul.mubr.bf16.gmra.mrb[0].mxu0 %v548
        %v704 = vpop.f32.mrb[0].mxu0
        %v705 = vadd.f32 0.0, %v704
        %v706 = vpop.f32.mrb[0].mxu0
        %v707 = vpop.f32.mrb[0].mxu0
        %v708 = vadd.f32 0.0, %v707
        %v709 = vpop.f32.mrb[0].mxu0
        %710 = vdwg.mxu0
        %v711 = vld [vmem:[%s2] sm:$0x1]
        %v713 = vlaneseq
        %v714 = vshrl.u32 %v713, 7
        %v715 = vsub.s32 0, %v714
        %v716 = vrot.slane %v711, %v715
        %v718 = vmul.f32 %v585, %v716
        %v719 = vmul.f32 %v588, %v716
        %v720 = vmul.f32 %v593, %v716
        %v721 = vmul.f32 %v596, %v716
        %v722 = vmul.f32 %v601, %v716
        %v723 = vmul.f32 %v604, %v716
        %v724 = vmul.f32 %v609, %v716
        %v725 = vmul.f32 %v612, %v716
        %v726 = vmul.f32 %v617, %v716
        %v727 = vmul.f32 %v620, %v716
        %v728 = vmul.f32 %v625, %v716
        %v729 = vmul.f32 %v628, %v716
        %v730 = vmul.f32 %v633, %v716
        %v731 = vmul.f32 %v636, %v716
        %v732 = vmul.f32 %v641, %v716
        %v733 = vmul.f32 %v644, %v716
        %v734 = vmul.f32 %v649, %v716
        %v735 = vmul.f32 %v652, %v716
        %v736 = vmul.f32 %v657, %v716
        %v737 = vmul.f32 %v660, %v716
        %v738 = vmul.f32 %v665, %v716
        %v739 = vmul.f32 %v668, %v716
        %v740 = vmul.f32 %v673, %v716
        %v741 = vmul.f32 %v676, %v716
        %v742 = vmul.f32 %v681, %v716
        %v743 = vmul.f32 %v684, %v716
        %v744 = vmul.f32 %v689, %v716
        %v745 = vmul.f32 %v692, %v716
        %v746 = vmul.f32 %v697, %v716
        %v747 = vmul.f32 %v700, %v716
        %v748 = vmul.f32 %v705, %v716
        %v749 = vmul.f32 %v708, %v716
        %v750 = vld [vmem:[%s3] sm:$0x1]
        %v752 = vlaneseq
        %v753 = vshrl.u32 %v752, 7
        %v754 = vsub.s32 0, %v753
        %v755 = vrot.slane %v750, %v754
        %v757 = vadd.f32 %v718, %v755
        %v758 = vadd.f32 %v719, %v755
        %v759 = vadd.f32 %v720, %v755
        %v760 = vadd.f32 %v721, %v755
        %v761 = vadd.f32 %v722, %v755
        %v762 = vadd.f32 %v723, %v755
        %v763 = vadd.f32 %v724, %v755
        %v764 = vadd.f32 %v725, %v755
        %v765 = vadd.f32 %v726, %v755
        %v766 = vadd.f32 %v727, %v755
        %v767 = vadd.f32 %v728, %v755
        %v768 = vadd.f32 %v729, %v755
        %v769 = vadd.f32 %v730, %v755
        %v770 = vadd.f32 %v731, %v755
        %v771 = vadd.f32 %v732, %v755
        %v772 = vadd.f32 %v733, %v755
        %v773 = vadd.f32 %v734, %v755
        %v774 = vadd.f32 %v735, %v755
        %v775 = vadd.f32 %v736, %v755
        %v776 = vadd.f32 %v737, %v755
        %v777 = vadd.f32 %v738, %v755
        %v778 = vadd.f32 %v739, %v755
        %v779 = vadd.f32 %v740, %v755
        %v780 = vadd.f32 %v741, %v755
        %v781 = vadd.f32 %v742, %v755
        %v782 = vadd.f32 %v743, %v755
        %v783 = vadd.f32 %v744, %v755
        %v784 = vadd.f32 %v745, %v755
        %v785 = vadd.f32 %v746, %v755
        %v786 = vadd.f32 %v747, %v755
        %v787 = vadd.f32 %v748, %v755
        %v788 = vadd.f32 %v749, %v755
        %v789 = vmax.f32 %v757, 0.0
        %v790 = vmax.f32 %v758, 0.0
        %v791 = vmax.f32 %v759, 0.0
        %v792 = vmax.f32 %v760, 0.0
        %v793 = vmax.f32 %v761, 0.0
        %v794 = vmax.f32 %v762, 0.0
        %v795 = vmax.f32 %v763, 0.0
        %v796 = vmax.f32 %v764, 0.0
        %v797 = vmax.f32 %v765, 0.0
        %v798 = vmax.f32 %v766, 0.0
        %v799 = vmax.f32 %v767, 0.0
        %v800 = vmax.f32 %v768, 0.0
        %v801 = vmax.f32 %v769, 0.0
        %v802 = vmax.f32 %v770, 0.0
        %v803 = vmax.f32 %v771, 0.0
        %v804 = vmax.f32 %v772, 0.0
        %v805 = vmax.f32 %v773, 0.0
        %v806 = vmax.f32 %v774, 0.0
        %v807 = vmax.f32 %v775, 0.0
        %v808 = vmax.f32 %v776, 0.0
        %v809 = vmax.f32 %v777, 0.0
        %v810 = vmax.f32 %v778, 0.0
        %v811 = vmax.f32 %v779, 0.0
        %v812 = vmax.f32 %v780, 0.0
        %v813 = vmax.f32 %v781, 0.0
        %v814 = vmax.f32 %v782, 0.0
        %v815 = vmax.f32 %v783, 0.0
        %v816 = vmax.f32 %v784, 0.0
        %v817 = vmax.f32 %v785, 0.0
        %v818 = vmax.f32 %v786, 0.0
        %v819 = vmax.f32 %v787, 0.0
        %v820 = vmax.f32 %v788, 0.0
        %v821 = vpack.c.bf16 %v790, %v789
        %v822 = vpack.c.bf16 %v792, %v791
        %v823 = vpack.c.bf16 %v794, %v793
        %v824 = vpack.c.bf16 %v796, %v795
        %v825 = vpack.c.bf16 %v798, %v797
        %v826 = vpack.c.bf16 %v800, %v799
        %v827 = vpack.c.bf16 %v802, %v801
        %v828 = vpack.c.bf16 %v804, %v803
        %v829 = vpack.c.bf16 %v806, %v805
        %v830 = vpack.c.bf16 %v808, %v807
        %v831 = vpack.c.bf16 %v810, %v809
        %v832 = vpack.c.bf16 %v812, %v811
        %v833 = vpack.c.bf16 %v814, %v813
        %v834 = vpack.c.bf16 %v816, %v815
        %v835 = vpack.c.bf16 %v818, %v817
        %v836 = vpack.c.bf16 %v820, %v819
        %v837 = vlaneseq
        %v838 = vshrl.u32 %v837, 7
        %v839 = vadd.s32 %v838, 8
        %v840 = vadd.s32 %v838, 16
        %v841 = vadd.s32 %v838, 24
        %v842 = vadd.s32 %v838, 32
        %v843 = vadd.s32 %v838, 40
        %v844 = vadd.s32 %v838, 48
        %v845 = vadd.s32 %v838, 56
        %v846 = vadd.s32 %v838, 64
        %v847 = vadd.s32 %v838, 72
        %v848 = vadd.s32 %v838, 80
        %v849 = vadd.s32 %v838, 88
        %v850 = vadd.s32 %v838, 96
        %v851 = vadd.s32 %v838, 104
        %v852 = vadd.s32 %v838, 112
        %v853 = vadd.s32 %v838, 120
        %v854 = vadd.s32 %v838, 128
        %v855 = vadd.s32 %v838, 136
        %v856 = vadd.s32 %v838, 144
        %v857 = vadd.s32 %v838, 152
        %v858 = vadd.s32 %v838, 160
        %v859 = vadd.s32 %v838, 168
        %v860 = vadd.s32 %v838, 176
        %v861 = vadd.s32 %v838, 184
        %v862 = vadd.s32 %v838, 192
        %v863 = vadd.s32 %v838, 200
        %v864 = vadd.s32 %v838, 208
        %v865 = vadd.s32 %v838, 216
        %v866 = vadd.s32 %v838, 224
        %v867 = vadd.s32 %v838, 232
        %v868 = vadd.s32 %v838, 240
        %v869 = vadd.s32 %v838, 248
        %vm870 = vcmp.lt.s32.totalorder %v838, 0
        %v871 = vsub.s32 0, %v838
        %v872 = vsel %vm870, %v871, %v838
        %v873 = vshrl.u32 %v872, 4
        %v874 = vand.u32 %v872, 15
        %v875 = vsub.s32 0, %v874
        %v876 = vsel %vm870, %v875, %v874
        %vm877 = vcmp.lt.s32.totalorder %v839, 0
        %v878 = vsub.s32 0, %v839
        %v879 = vsel %vm877, %v878, %v839
        %v880 = vshrl.u32 %v879, 4
        %v881 = vand.u32 %v879, 15
        %v882 = vsub.s32 0, %v881
        %v883 = vsel %vm877, %v882, %v881
        %vm884 = vcmp.lt.s32.totalorder %v840, 0
        %v885 = vsub.s32 0, %v840
        %v886 = vsel %vm884, %v885, %v840
        %v887 = vshrl.u32 %v886, 4
        %v888 = vand.u32 %v886, 15
        %v889 = vsub.s32 0, %v888
        %v890 = vsel %vm884, %v889, %v888
        %vm891 = vcmp.lt.s32.totalorder %v841, 0
        %v892 = vsub.s32 0, %v841
        %v893 = vsel %vm891, %v892, %v841
        %v894 = vshrl.u32 %v893, 4
        %v895 = vand.u32 %v893, 15
        %v896 = vsub.s32 0, %v895
        %v897 = vsel %vm891, %v896, %v895
        %vm898 = vcmp.lt.s32.totalorder %v842, 0
        %v899 = vsub.s32 0, %v842
        %v900 = vsel %vm898, %v899, %v842
        %v901 = vshrl.u32 %v900, 4
        %v902 = vand.u32 %v900, 15
        %v903 = vsub.s32 0, %v902
        %v904 = vsel %vm898, %v903, %v902
        %vm905 = vcmp.lt.s32.totalorder %v843, 0
        %v906 = vsub.s32 0, %v843
        %v907 = vsel %vm905, %v906, %v843
        %v908 = vshrl.u32 %v907, 4
        %v909 = vand.u32 %v907, 15
        %v910 = vsub.s32 0, %v909
        %v911 = vsel %vm905, %v910, %v909
        %vm912 = vcmp.lt.s32.totalorder %v844, 0
        %v913 = vsub.s32 0, %v844
        %v914 = vsel %vm912, %v913, %v844
        %v915 = vshrl.u32 %v914, 4
        %v916 = vand.u32 %v914, 15
        %v917 = vsub.s32 0, %v916
        %v918 = vsel %vm912, %v917, %v916
        %vm919 = vcmp.lt.s32.totalorder %v845, 0
        %v920 = vsub.s32 0, %v845
        %v921 = vsel %vm919, %v920, %v845
        %v922 = vshrl.u32 %v921, 4
        %v923 = vand.u32 %v921, 15
        %v924 = vsub.s32 0, %v923
        %v925 = vsel %vm919, %v924, %v923
        %vm926 = vcmp.lt.s32.totalorder %v846, 0
        %v927 = vsub.s32 0, %v846
        %v928 = vsel %vm926, %v927, %v846
        %v929 = vshrl.u32 %v928, 4
        %v930 = vand.u32 %v928, 15
        %v931 = vsub.s32 0, %v930
        %v932 = vsel %vm926, %v931, %v930
        %vm933 = vcmp.lt.s32.totalorder %v847, 0
        %v934 = vsub.s32 0, %v847
        %v935 = vsel %vm933, %v934, %v847
        %v936 = vshrl.u32 %v935, 4
        %v937 = vand.u32 %v935, 15
        %v938 = vsub.s32 0, %v937
        %v939 = vsel %vm933, %v938, %v937
        %vm940 = vcmp.lt.s32.totalorder %v848, 0
        %v941 = vsub.s32 0, %v848
        %v942 = vsel %vm940, %v941, %v848
        %v943 = vshrl.u32 %v942, 4
        %v944 = vand.u32 %v942, 15
        %v945 = vsub.s32 0, %v944
        %v946 = vsel %vm940, %v945, %v944
        %vm947 = vcmp.lt.s32.totalorder %v849, 0
        %v948 = vsub.s32 0, %v849
        %v949 = vsel %vm947, %v948, %v849
        %v950 = vshrl.u32 %v949, 4
        %v951 = vand.u32 %v949, 15
        %v952 = vsub.s32 0, %v951
        %v953 = vsel %vm947, %v952, %v951
        %vm954 = vcmp.lt.s32.totalorder %v850, 0
        %v955 = vsub.s32 0, %v850
        %v956 = vsel %vm954, %v955, %v850
        %v957 = vshrl.u32 %v956, 4
        %v958 = vand.u32 %v956, 15
        %v959 = vsub.s32 0, %v958
        %v960 = vsel %vm954, %v959, %v958
        %vm961 = vcmp.lt.s32.totalorder %v851, 0
        %v962 = vsub.s32 0, %v851
        %v963 = vsel %vm961, %v962, %v851
        %v964 = vshrl.u32 %v963, 4
        %v965 = vand.u32 %v963, 15
        %v966 = vsub.s32 0, %v965
        %v967 = vsel %vm961, %v966, %v965
        %vm968 = vcmp.lt.s32.totalorder %v852, 0
        %v969 = vsub.s32 0, %v852
        %v970 = vsel %vm968, %v969, %v852
        %v971 = vshrl.u32 %v970, 4
        %v972 = vand.u32 %v970, 15
        %v973 = vsub.s32 0, %v972
        %v974 = vsel %vm968, %v973, %v972
        %vm975 = vcmp.lt.s32.totalorder %v853, 0
        %v976 = vsub.s32 0, %v853
        %v977 = vsel %vm975, %v976, %v853
        %v978 = vshrl.u32 %v977, 4
        %v979 = vand.u32 %v977, 15
        %v980 = vsub.s32 0, %v979
        %v981 = vsel %vm975, %v980, %v979
        %vm982 = vcmp.lt.s32.totalorder %v854, 0
        %v983 = vsub.s32 0, %v854
        %v984 = vsel %vm982, %v983, %v854
        %v985 = vshrl.u32 %v984, 4
        %v986 = vand.u32 %v984, 15
        %v987 = vsub.s32 0, %v986
        %v988 = vsel %vm982, %v987, %v986
        %vm989 = vcmp.lt.s32.totalorder %v855, 0
        %v990 = vsub.s32 0, %v855
        %v991 = vsel %vm989, %v990, %v855
        %v992 = vshrl.u32 %v991, 4
        %v993 = vand.u32 %v991, 15
        %v994 = vsub.s32 0, %v993
        %v995 = vsel %vm989, %v994, %v993
        %vm996 = vcmp.lt.s32.totalorder %v856, 0
        %v997 = vsub.s32 0, %v856
        %v998 = vsel %vm996, %v997, %v856
        %v999 = vshrl.u32 %v998, 4
        %v1000 = vand.u32 %v998, 15
        %v1001 = vsub.s32 0, %v1000
        %v1002 = vsel %vm996, %v1001, %v1000
        %vm1003 = vcmp.lt.s32.totalorder %v857, 0
        %v1004 = vsub.s32 0, %v857
        %v1005 = vsel %vm1003, %v1004, %v857
        %v1006 = vshrl.u32 %v1005, 4
        %v1007 = vand.u32 %v1005, 15
        %v1008 = vsub.s32 0, %v1007
        %v1009 = vsel %vm1003, %v1008, %v1007
        %vm1010 = vcmp.lt.s32.totalorder %v858, 0
        %v1011 = vsub.s32 0, %v858
        %v1012 = vsel %vm1010, %v1011, %v858
        %v1013 = vshrl.u32 %v1012, 4
        %v1014 = vand.u32 %v1012, 15
        %v1015 = vsub.s32 0, %v1014
        %v1016 = vsel %vm1010, %v1015, %v1014
        %vm1017 = vcmp.lt.s32.totalorder %v859, 0
        %v1018 = vsub.s32 0, %v859
        %v1019 = vsel %vm1017, %v1018, %v859
        %v1020 = vshrl.u32 %v1019, 4
        %v1021 = vand.u32 %v1019, 15
        %v1022 = vsub.s32 0, %v1021
        %v1023 = vsel %vm1017, %v1022, %v1021
        %vm1024 = vcmp.lt.s32.totalorder %v860, 0
        %v1025 = vsub.s32 0, %v860
        %v1026 = vsel %vm1024, %v1025, %v860
        %v1027 = vshrl.u32 %v1026, 4
        %v1028 = vand.u32 %v1026, 15
        %v1029 = vsub.s32 0, %v1028
        %v1030 = vsel %vm1024, %v1029, %v1028
        %vm1031 = vcmp.lt.s32.totalorder %v861, 0
        %v1032 = vsub.s32 0, %v861
        %v1033 = vsel %vm1031, %v1032, %v861
        %v1034 = vshrl.u32 %v1033, 4
        %v1035 = vand.u32 %v1033, 15
        %v1036 = vsub.s32 0, %v1035
        %v1037 = vsel %vm1031, %v1036, %v1035
        %vm1038 = vcmp.lt.s32.totalorder %v862, 0
        %v1039 = vsub.s32 0, %v862
        %v1040 = vsel %vm1038, %v1039, %v862
        %v1041 = vshrl.u32 %v1040, 4
        %v1042 = vand.u32 %v1040, 15
        %v1043 = vsub.s32 0, %v1042
        %v1044 = vsel %vm1038, %v1043, %v1042
        %vm1045 = vcmp.lt.s32.totalorder %v863, 0
        %v1046 = vsub.s32 0, %v863
        %v1047 = vsel %vm1045, %v1046, %v863
        %v1048 = vshrl.u32 %v1047, 4
        %v1049 = vand.u32 %v1047, 15
        %v1050 = vsub.s32 0, %v1049
        %v1051 = vsel %vm1045, %v1050, %v1049
        %vm1052 = vcmp.lt.s32.totalorder %v864, 0
        %v1053 = vsub.s32 0, %v864
        %v1054 = vsel %vm1052, %v1053, %v864
        %v1055 = vshrl.u32 %v1054, 4
        %v1056 = vand.u32 %v1054, 15
        %v1057 = vsub.s32 0, %v1056
        %v1058 = vsel %vm1052, %v1057, %v1056
        %vm1059 = vcmp.lt.s32.totalorder %v865, 0
        %v1060 = vsub.s32 0, %v865
        %v1061 = vsel %vm1059, %v1060, %v865
        %v1062 = vshrl.u32 %v1061, 4
        %v1063 = vand.u32 %v1061, 15
        %v1064 = vsub.s32 0, %v1063
        %v1065 = vsel %vm1059, %v1064, %v1063
        %vm1066 = vcmp.lt.s32.totalorder %v866, 0
        %v1067 = vsub.s32 0, %v866
        %v1068 = vsel %vm1066, %v1067, %v866
        %v1069 = vshrl.u32 %v1068, 4
        %v1070 = vand.u32 %v1068, 15
        %v1071 = vsub.s32 0, %v1070
        %v1072 = vsel %vm1066, %v1071, %v1070
        %vm1073 = vcmp.lt.s32.totalorder %v867, 0
        %v1074 = vsub.s32 0, %v867
        %v1075 = vsel %vm1073, %v1074, %v867
        %v1076 = vshrl.u32 %v1075, 4
        %v1077 = vand.u32 %v1075, 15
        %v1078 = vsub.s32 0, %v1077
        %v1079 = vsel %vm1073, %v1078, %v1077
        %vm1080 = vcmp.lt.s32.totalorder %v868, 0
        %v1081 = vsub.s32 0, %v868
        %v1082 = vsel %vm1080, %v1081, %v868
        %v1083 = vshrl.u32 %v1082, 4
        %v1084 = vand.u32 %v1082, 15
        %v1085 = vsub.s32 0, %v1084
        %v1086 = vsel %vm1080, %v1085, %v1084
        %vm1087 = vcmp.lt.s32.totalorder %v869, 0
        %v1088 = vsub.s32 0, %v869
        %v1089 = vsel %vm1087, %v1088, %v869
        %v1090 = vshrl.u32 %v1089, 4
        %v1091 = vand.u32 %v1089, 15
        %v1092 = vsub.s32 0, %v1091
        %v1093 = vsel %vm1087, %v1092, %v1091
        %vm1094 = vcmp.ne.s32.totalorder %v876, 0
        %vm1095 = vcmp.ne.s32.totalorder %v883, 0
        %vm1096 = vcmp.ne.s32.totalorder %v890, 0
        %vm1097 = vcmp.ne.s32.totalorder %v897, 0
        %vm1098 = vcmp.ne.s32.totalorder %v904, 0
        %vm1099 = vcmp.ne.s32.totalorder %v911, 0
        %vm1100 = vcmp.ne.s32.totalorder %v918, 0
        %vm1101 = vcmp.ne.s32.totalorder %v925, 0
        %vm1102 = vcmp.ne.s32.totalorder %v932, 0
        %vm1103 = vcmp.ne.s32.totalorder %v939, 0
        %vm1104 = vcmp.ne.s32.totalorder %v946, 0
        %vm1105 = vcmp.ne.s32.totalorder %v953, 0
        %vm1106 = vcmp.ne.s32.totalorder %v960, 0
        %vm1107 = vcmp.ne.s32.totalorder %v967, 0
        %vm1108 = vcmp.ne.s32.totalorder %v974, 0
        %vm1109 = vcmp.ne.s32.totalorder %v981, 0
        %vm1110 = vcmp.ne.s32.totalorder %v988, 0
        %vm1111 = vcmp.ne.s32.totalorder %v995, 0
        %vm1112 = vcmp.ne.s32.totalorder %v1002, 0
        %vm1113 = vcmp.ne.s32.totalorder %v1009, 0
        %vm1114 = vcmp.ne.s32.totalorder %v1016, 0
        %vm1115 = vcmp.ne.s32.totalorder %v1023, 0
        %vm1116 = vcmp.ne.s32.totalorder %v1030, 0
        %vm1117 = vcmp.ne.s32.totalorder %v1037, 0
        %vm1118 = vcmp.ne.s32.totalorder %v1044, 0
        %vm1119 = vcmp.ne.s32.totalorder %v1051, 0
        %vm1120 = vcmp.ne.s32.totalorder %v1058, 0
        %vm1121 = vcmp.ne.s32.totalorder %v1065, 0
        %vm1122 = vcmp.ne.s32.totalorder %v1072, 0
        %vm1123 = vcmp.ne.s32.totalorder %v1079, 0
        %vm1124 = vcmp.ne.s32.totalorder %v1086, 0
        %vm1125 = vcmp.ne.s32.totalorder %v1093, 0
        %vm1126 = vcmp.lt.s32.totalorder %v876, 0
        %vm1127 = vcmp.lt.s32.totalorder %v883, 0
        %vm1128 = vcmp.lt.s32.totalorder %v890, 0
        %vm1129 = vcmp.lt.s32.totalorder %v897, 0
        %vm1130 = vcmp.lt.s32.totalorder %v904, 0
        %vm1131 = vcmp.lt.s32.totalorder %v911, 0
        %vm1132 = vcmp.lt.s32.totalorder %v918, 0
        %vm1133 = vcmp.lt.s32.totalorder %v925, 0
        %vm1134 = vcmp.lt.s32.totalorder %v932, 0
        %vm1135 = vcmp.lt.s32.totalorder %v939, 0
        %vm1136 = vcmp.lt.s32.totalorder %v946, 0
        %vm1137 = vcmp.lt.s32.totalorder %v953, 0
        %vm1138 = vcmp.lt.s32.totalorder %v960, 0
        %vm1139 = vcmp.lt.s32.totalorder %v967, 0
        %vm1140 = vcmp.lt.s32.totalorder %v974, 0
        %vm1141 = vcmp.lt.s32.totalorder %v981, 0
        %vm1142 = vcmp.lt.s32.totalorder %v988, 0
        %vm1143 = vcmp.lt.s32.totalorder %v995, 0
        %vm1144 = vcmp.lt.s32.totalorder %v1002, 0
        %vm1145 = vcmp.lt.s32.totalorder %v1009, 0
        %vm1146 = vcmp.lt.s32.totalorder %v1016, 0
        %vm1147 = vcmp.lt.s32.totalorder %v1023, 0
        %vm1148 = vcmp.lt.s32.totalorder %v1030, 0
        %vm1149 = vcmp.lt.s32.totalorder %v1037, 0
        %vm1150 = vcmp.lt.s32.totalorder %v1044, 0
        %vm1151 = vcmp.lt.s32.totalorder %v1051, 0
        %vm1152 = vcmp.lt.s32.totalorder %v1058, 0
        %vm1153 = vcmp.lt.s32.totalorder %v1065, 0
        %vm1154 = vcmp.lt.s32.totalorder %v1072, 0
        %vm1155 = vcmp.lt.s32.totalorder %v1079, 0
        %vm1156 = vcmp.lt.s32.totalorder %v1086, 0
        %vm1157 = vcmp.lt.s32.totalorder %v1093, 0
        %vm1158 = vmand %vm1126, %vm1094
        %vm1159 = vmand %vm1127, %vm1095
        %vm1160 = vmand %vm1128, %vm1096
        %vm1161 = vmand %vm1129, %vm1097
        %vm1162 = vmand %vm1130, %vm1098
        %vm1163 = vmand %vm1131, %vm1099
        %vm1164 = vmand %vm1132, %vm1100
        %vm1165 = vmand %vm1133, %vm1101
        %vm1166 = vmand %vm1134, %vm1102
        %vm1167 = vmand %vm1135, %vm1103
        %vm1168 = vmand %vm1136, %vm1104
        %vm1169 = vmand %vm1137, %vm1105
        %vm1170 = vmand %vm1138, %vm1106
        %vm1171 = vmand %vm1139, %vm1107
        %vm1172 = vmand %vm1140, %vm1108
        %vm1173 = vmand %vm1141, %vm1109
        %vm1174 = vmand %vm1142, %vm1110
        %vm1175 = vmand %vm1143, %vm1111
        %vm1176 = vmand %vm1144, %vm1112
        %vm1177 = vmand %vm1145, %vm1113
        %vm1178 = vmand %vm1146, %vm1114
        %vm1179 = vmand %vm1147, %vm1115
        %vm1180 = vmand %vm1148, %vm1116
        %vm1181 = vmand %vm1149, %vm1117
        %vm1182 = vmand %vm1150, %vm1118
        %vm1183 = vmand %vm1151, %vm1119
        %vm1184 = vmand %vm1152, %vm1120
        %vm1185 = vmand %vm1153, %vm1121
        %vm1186 = vmand %vm1154, %vm1122
        %vm1187 = vmand %vm1155, %vm1123
        %vm1188 = vmand %vm1156, %vm1124
        %vm1189 = vmand %vm1157, %vm1125
        %v1190 = vadd.s32 %v876, 16
        %v1191 = vadd.s32 %v883, 16
        %v1192 = vadd.s32 %v890, 16
        %v1193 = vadd.s32 %v897, 16
        %v1194 = vadd.s32 %v904, 16
        %v1195 = vadd.s32 %v911, 16
        %v1196 = vadd.s32 %v918, 16
        %v1197 = vadd.s32 %v925, 16
        %v1198 = vadd.s32 %v932, 16
        %v1199 = vadd.s32 %v939, 16
        %v1200 = vadd.s32 %v946, 16
        %v1201 = vadd.s32 %v953, 16
        %v1202 = vadd.s32 %v960, 16
        %v1203 = vadd.s32 %v967, 16
        %v1204 = vadd.s32 %v974, 16
        %v1205 = vadd.s32 %v981, 16
        %v1206 = vadd.s32 %v988, 16
        %v1207 = vadd.s32 %v995, 16
        %v1208 = vadd.s32 %v1002, 16
        %v1209 = vadd.s32 %v1009, 16
        %v1210 = vadd.s32 %v1016, 16
        %v1211 = vadd.s32 %v1023, 16
        %v1212 = vadd.s32 %v1030, 16
        %v1213 = vadd.s32 %v1037, 16
        %v1214 = vadd.s32 %v1044, 16
        %v1215 = vadd.s32 %v1051, 16
        %v1216 = vadd.s32 %v1058, 16
        %v1217 = vadd.s32 %v1065, 16
        %v1218 = vadd.s32 %v1072, 16
        %v1219 = vadd.s32 %v1079, 16
        %v1220 = vadd.s32 %v1086, 16
        %v1221 = vadd.s32 %v1093, 16
        %v1222 = vsel %vm1158, %v1190, %v876
        %v1223 = vsel %vm1159, %v1191, %v883
        %v1224 = vsel %vm1160, %v1192, %v890
        %v1225 = vsel %vm1161, %v1193, %v897
        %v1226 = vsel %vm1162, %v1194, %v904
        %v1227 = vsel %vm1163, %v1195, %v911
        %v1228 = vsel %vm1164, %v1196, %v918
        %v1229 = vsel %vm1165, %v1197, %v925
        %v1230 = vsel %vm1166, %v1198, %v932
        %v1231 = vsel %vm1167, %v1199, %v939
        %v1232 = vsel %vm1168, %v1200, %v946
        %v1233 = vsel %vm1169, %v1201, %v953
        %v1234 = vsel %vm1170, %v1202, %v960
        %v1235 = vsel %vm1171, %v1203, %v967
        %v1236 = vsel %vm1172, %v1204, %v974
        %v1237 = vsel %vm1173, %v1205, %v981
        %v1238 = vsel %vm1174, %v1206, %v988
        %v1239 = vsel %vm1175, %v1207, %v995
        %v1240 = vsel %vm1176, %v1208, %v1002
        %v1241 = vsel %vm1177, %v1209, %v1009
        %v1242 = vsel %vm1178, %v1210, %v1016
        %v1243 = vsel %vm1179, %v1211, %v1023
        %v1244 = vsel %vm1180, %v1212, %v1030
        %v1245 = vsel %vm1181, %v1213, %v1037
        %v1246 = vsel %vm1182, %v1214, %v1044
        %v1247 = vsel %vm1183, %v1215, %v1051
        %v1248 = vsel %vm1184, %v1216, %v1058
        %v1249 = vsel %vm1185, %v1217, %v1065
        %v1250 = vsel %vm1186, %v1218, %v1072
        %v1251 = vsel %vm1187, %v1219, %v1079
        %v1252 = vsel %vm1188, %v1220, %v1086
        %v1253 = vsel %vm1189, %v1221, %v1093
        %vm1254 = vsmask.f32 256
        %v1256 = vshrl.u32 %v821, 16
        %v1258 = vrot.slane %v1256, 7
        %v1259 = vshll.u32 %v821, 16
        %v1261 = vor.u32 %v1258, %v1259
        %v1263 = vshrl.u32 %v822, 16
        %v1265 = vrot.slane %v1263, 7
        %v1266 = vshll.u32 %v822, 16
        %v1268 = vor.u32 %v1265, %v1266
        %v1269 = vsel %vm1254, %v1258, %v1268
        %v1271 = vshrl.u32 %v823, 16
        %v1273 = vrot.slane %v1271, 7
        %v1274 = vshll.u32 %v823, 16
        %v1276 = vor.u32 %v1273, %v1274
        %v1277 = vsel %vm1254, %v1265, %v1276
        %v1279 = vshrl.u32 %v824, 16
        %v1281 = vrot.slane %v1279, 7
        %v1282 = vshll.u32 %v824, 16
        %v1284 = vor.u32 %v1281, %v1282
        %v1285 = vsel %vm1254, %v1273, %v1284
        %v1287 = vshrl.u32 %v825, 16
        %v1289 = vrot.slane %v1287, 7
        %v1290 = vshll.u32 %v825, 16
        %v1292 = vor.u32 %v1289, %v1290
        %v1293 = vsel %vm1254, %v1281, %v1292
        %v1295 = vshrl.u32 %v826, 16
        %v1297 = vrot.slane %v1295, 7
        %v1298 = vshll.u32 %v826, 16
        %v1300 = vor.u32 %v1297, %v1298
        %v1301 = vsel %vm1254, %v1289, %v1300
        %v1303 = vshrl.u32 %v827, 16
        %v1305 = vrot.slane %v1303, 7
        %v1306 = vshll.u32 %v827, 16
        %v1308 = vor.u32 %v1305, %v1306
        %v1309 = vsel %vm1254, %v1297, %v1308
        %v1311 = vshrl.u32 %v828, 16
        %v1313 = vrot.slane %v1311, 7
        %v1314 = vshll.u32 %v828, 16
        %v1316 = vor.u32 %v1313, %v1314
        %v1317 = vsel %vm1254, %v1305, %v1316
        %v1319 = vshrl.u32 %v829, 16
        %v1321 = vrot.slane %v1319, 7
        %v1322 = vshll.u32 %v829, 16
        %v1324 = vor.u32 %v1321, %v1322
        %v1325 = vsel %vm1254, %v1313, %v1324
        %v1327 = vshrl.u32 %v830, 16
        %v1329 = vrot.slane %v1327, 7
        %v1330 = vshll.u32 %v830, 16
        %v1332 = vor.u32 %v1329, %v1330
        %v1333 = vsel %vm1254, %v1321, %v1332
        %v1335 = vshrl.u32 %v831, 16
        %v1337 = vrot.slane %v1335, 7
        %v1338 = vshll.u32 %v831, 16
        %v1340 = vor.u32 %v1337, %v1338
        %v1341 = vsel %vm1254, %v1329, %v1340
        %v1343 = vshrl.u32 %v832, 16
        %v1345 = vrot.slane %v1343, 7
        %v1346 = vshll.u32 %v832, 16
        %v1348 = vor.u32 %v1345, %v1346
        %v1349 = vsel %vm1254, %v1337, %v1348
        %v1351 = vshrl.u32 %v833, 16
        %v1353 = vrot.slane %v1351, 7
        %v1354 = vshll.u32 %v833, 16
        %v1356 = vor.u32 %v1353, %v1354
        %v1357 = vsel %vm1254, %v1345, %v1356
        %v1359 = vshrl.u32 %v834, 16
        %v1361 = vrot.slane %v1359, 7
        %v1362 = vshll.u32 %v834, 16
        %v1364 = vor.u32 %v1361, %v1362
        %v1365 = vsel %vm1254, %v1353, %v1364
        %v1367 = vshrl.u32 %v835, 16
        %v1369 = vrot.slane %v1367, 7
        %v1370 = vshll.u32 %v835, 16
        %v1372 = vor.u32 %v1369, %v1370
        %v1373 = vsel %vm1254, %v1361, %v1372
        %v1375 = vshrl.u32 %v836, 16
        %v1377 = vrot.slane %v1375, 7
        %v1378 = vshll.u32 %v836, 16
        %v1380 = vor.u32 %v1377, %v1378
        %v1381 = vsel %vm1254, %v1369, %v1380
        %vm1398 = vcmask 1040384
        %vm1399 = vmand %vm1398, %vm1254
        %v1400 = vsel %vm1399, 0, %v1261
        %vm1401 = vcmp.gt.s32.totalorder %v1222, 0
        %vm1402 = vcmp.gt.s32.totalorder %v1223, 0
        %vm1403 = vcmp.gt.s32.totalorder %v1224, 0
        %vm1404 = vcmp.gt.s32.totalorder %v1225, 0
        %vm1405 = vcmp.gt.s32.totalorder %v1226, 0
        %vm1406 = vcmp.gt.s32.totalorder %v1227, 0
        %vm1407 = vcmp.gt.s32.totalorder %v1228, 0
        %vm1408 = vcmp.gt.s32.totalorder %v1229, 0
        %vm1409 = vcmp.gt.s32.totalorder %v1230, 0
        %vm1410 = vcmp.gt.s32.totalorder %v1231, 0
        %vm1411 = vcmp.gt.s32.totalorder %v1232, 0
        %vm1412 = vcmp.gt.s32.totalorder %v1233, 0
        %vm1413 = vcmp.gt.s32.totalorder %v1234, 0
        %vm1414 = vcmp.gt.s32.totalorder %v1235, 0
        %vm1415 = vcmp.gt.s32.totalorder %v1236, 0
        %vm1416 = vcmp.gt.s32.totalorder %v1237, 0
        %vm1417 = vcmp.gt.s32.totalorder %v1238, 0
        %vm1418 = vcmp.gt.s32.totalorder %v1239, 0
        %vm1419 = vcmp.gt.s32.totalorder %v1240, 0
        %vm1420 = vcmp.gt.s32.totalorder %v1241, 0
        %vm1421 = vcmp.gt.s32.totalorder %v1242, 0
        %vm1422 = vcmp.gt.s32.totalorder %v1243, 0
        %vm1423 = vcmp.gt.s32.totalorder %v1244, 0
        %vm1424 = vcmp.gt.s32.totalorder %v1245, 0
        %vm1425 = vcmp.gt.s32.totalorder %v1246, 0
        %vm1426 = vcmp.gt.s32.totalorder %v1247, 0
        %vm1427 = vcmp.gt.s32.totalorder %v1248, 0
        %vm1428 = vcmp.gt.s32.totalorder %v1249, 0
        %vm1429 = vcmp.gt.s32.totalorder %v1250, 0
        %vm1430 = vcmp.gt.s32.totalorder %v1251, 0
        %vm1431 = vcmp.gt.s32.totalorder %v1252, 0
        %vm1432 = vcmp.gt.s32.totalorder %v1253, 0
        %v1433 = vsel %vm1401, 1, 0
        %v1434 = vsel %vm1402, 1, 0
        %v1435 = vsel %vm1403, 1, 0
        %v1436 = vsel %vm1404, 1, 0
        %v1437 = vsel %vm1405, 1, 0
        %v1438 = vsel %vm1406, 1, 0
        %v1439 = vsel %vm1407, 1, 0
        %v1440 = vsel %vm1408, 1, 0
        %v1441 = vsel %vm1409, 1, 0
        %v1442 = vsel %vm1410, 1, 0
        %v1443 = vsel %vm1411, 1, 0
        %v1444 = vsel %vm1412, 1, 0
        %v1445 = vsel %vm1413, 1, 0
        %v1446 = vsel %vm1414, 1, 0
        %v1447 = vsel %vm1415, 1, 0
        %v1448 = vsel %vm1416, 1, 0
        %v1449 = vsel %vm1417, 1, 0
        %v1450 = vsel %vm1418, 1, 0
        %v1451 = vsel %vm1419, 1, 0
        %v1452 = vsel %vm1420, 1, 0
        %v1453 = vsel %vm1421, 1, 0
        %v1454 = vsel %vm1422, 1, 0
        %v1455 = vsel %vm1423, 1, 0
        %v1456 = vsel %vm1424, 1, 0
        %v1457 = vsel %vm1425, 1, 0
        %v1458 = vsel %vm1426, 1, 0
        %v1459 = vsel %vm1427, 1, 0
        %v1460 = vsel %vm1428, 1, 0
        %v1461 = vsel %vm1429, 1, 0
        %v1462 = vsel %vm1430, 1, 0
        %v1463 = vsel %vm1431, 1, 0
        %v1464 = vsel %vm1432, 1, 0
        %vm1465 = vcmp.eq.s32.totalorder %v1433, 1
        %vm1466 = vcmp.eq.s32.totalorder %v1434, 1
        %vm1467 = vcmp.eq.s32.totalorder %v1435, 1
        %vm1468 = vcmp.eq.s32.totalorder %v1436, 1
        %vm1469 = vcmp.eq.s32.totalorder %v1437, 1
        %vm1470 = vcmp.eq.s32.totalorder %v1438, 1
        %vm1471 = vcmp.eq.s32.totalorder %v1439, 1
        %vm1472 = vcmp.eq.s32.totalorder %v1440, 1
        %vm1473 = vcmp.eq.s32.totalorder %v1441, 1
        %vm1474 = vcmp.eq.s32.totalorder %v1442, 1
        %vm1475 = vcmp.eq.s32.totalorder %v1443, 1
        %vm1476 = vcmp.eq.s32.totalorder %v1444, 1
        %vm1477 = vcmp.eq.s32.totalorder %v1445, 1
        %vm1478 = vcmp.eq.s32.totalorder %v1446, 1
        %vm1479 = vcmp.eq.s32.totalorder %v1447, 1
        %vm1480 = vcmp.eq.s32.totalorder %v1448, 1
        %vm1481 = vcmp.eq.s32.totalorder %v1449, 1
        %vm1482 = vcmp.eq.s32.totalorder %v1450, 1
        %vm1483 = vcmp.eq.s32.totalorder %v1451, 1
        %vm1484 = vcmp.eq.s32.totalorder %v1452, 1
        %vm1485 = vcmp.eq.s32.totalorder %v1453, 1
        %vm1486 = vcmp.eq.s32.totalorder %v1454, 1
        %vm1487 = vcmp.eq.s32.totalorder %v1455, 1
        %vm1488 = vcmp.eq.s32.totalorder %v1456, 1
        %vm1489 = vcmp.eq.s32.totalorder %v1457, 1
        %vm1490 = vcmp.eq.s32.totalorder %v1458, 1
        %vm1491 = vcmp.eq.s32.totalorder %v1459, 1
        %vm1492 = vcmp.eq.s32.totalorder %v1460, 1
        %vm1493 = vcmp.eq.s32.totalorder %v1461, 1
        %vm1494 = vcmp.eq.s32.totalorder %v1462, 1
        %vm1495 = vcmp.eq.s32.totalorder %v1463, 1
        %vm1496 = vcmp.eq.s32.totalorder %v1464, 1
        %vm1497 = vmpackc.low %vm1465, %vm1465
        %vm1498 = vmpackc.low %vm1466, %vm1466
        %vm1499 = vmpackc.low %vm1467, %vm1467
        %vm1500 = vmpackc.low %vm1468, %vm1468
        %vm1501 = vmpackc.low %vm1469, %vm1469
        %vm1502 = vmpackc.low %vm1470, %vm1470
        %vm1503 = vmpackc.low %vm1471, %vm1471
        %vm1504 = vmpackc.low %vm1472, %vm1472
        %vm1505 = vmpackc.low %vm1473, %vm1473
        %vm1506 = vmpackc.low %vm1474, %vm1474
        %vm1507 = vmpackc.low %vm1475, %vm1475
        %vm1508 = vmpackc.low %vm1476, %vm1476
        %vm1509 = vmpackc.low %vm1477, %vm1477
        %vm1510 = vmpackc.low %vm1478, %vm1478
        %vm1511 = vmpackc.low %vm1479, %vm1479
        %vm1512 = vmpackc.low %vm1480, %vm1480
        %vm1513 = vmpackc.low %vm1481, %vm1481
        %vm1514 = vmpackc.low %vm1482, %vm1482
        %vm1515 = vmpackc.low %vm1483, %vm1483
        %vm1516 = vmpackc.low %vm1484, %vm1484
        %vm1517 = vmpackc.low %vm1485, %vm1485
        %vm1518 = vmpackc.low %vm1486, %vm1486
        %vm1519 = vmpackc.low %vm1487, %vm1487
        %vm1520 = vmpackc.low %vm1488, %vm1488
        %vm1521 = vmpackc.low %vm1489, %vm1489
        %vm1522 = vmpackc.low %vm1490, %vm1490
        %vm1523 = vmpackc.low %vm1491, %vm1491
        %vm1524 = vmpackc.low %vm1492, %vm1492
        %vm1525 = vmpackc.low %vm1493, %vm1493
        %vm1526 = vmpackc.low %vm1494, %vm1494
        %vm1527 = vmpackc.low %vm1495, %vm1495
        %vm1528 = vmpackc.low %vm1496, %vm1496
        %v1529 = vsel %vm1497, 65537, 0
        %v1530 = vsel %vm1498, 65537, 0
        %v1531 = vsel %vm1499, 65537, 0
        %v1532 = vsel %vm1500, 65537, 0
        %v1533 = vsel %vm1501, 65537, 0
        %v1534 = vsel %vm1502, 65537, 0
        %v1535 = vsel %vm1503, 65537, 0
        %v1536 = vsel %vm1504, 65537, 0
        %v1537 = vsel %vm1505, 65537, 0
        %v1538 = vsel %vm1506, 65537, 0
        %v1539 = vsel %vm1507, 65537, 0
        %v1540 = vsel %vm1508, 65537, 0
        %v1541 = vsel %vm1509, 65537, 0
        %v1542 = vsel %vm1510, 65537, 0
        %v1543 = vsel %vm1511, 65537, 0
        %v1544 = vsel %vm1512, 65537, 0
        %v1545 = vsel %vm1513, 65537, 0
        %v1546 = vsel %vm1514, 65537, 0
        %v1547 = vsel %vm1515, 65537, 0
        %v1548 = vsel %vm1516, 65537, 0
        %v1549 = vsel %vm1517, 65537, 0
        %v1550 = vsel %vm1518, 65537, 0
        %v1551 = vsel %vm1519, 65537, 0
        %v1552 = vsel %vm1520, 65537, 0
        %v1553 = vsel %vm1521, 65537, 0
        %v1554 = vsel %vm1522, 65537, 0
        %v1555 = vsel %vm1523, 65537, 0
        %v1556 = vsel %vm1524, 65537, 0
        %v1557 = vsel %vm1525, 65537, 0
        %v1558 = vsel %vm1526, 65537, 0
        %v1559 = vsel %vm1527, 65537, 0
        %v1560 = vsel %vm1528, 65537, 0
        %v1561 = vunpack.c.l.b16 %v1529
        %v1562 = vunpack.c.l.b16 %v1530
        %v1563 = vunpack.c.l.b16 %v1531
        %v1564 = vunpack.c.l.b16 %v1532
        %v1565 = vunpack.c.l.b16 %v1533
        %v1566 = vunpack.c.l.b16 %v1534
        %v1567 = vunpack.c.l.b16 %v1535
        %v1568 = vunpack.c.l.b16 %v1536
        %v1569 = vunpack.c.l.b16 %v1537
        %v1570 = vunpack.c.l.b16 %v1538
        %v1571 = vunpack.c.l.b16 %v1539
        %v1572 = vunpack.c.l.b16 %v1540
        %v1573 = vunpack.c.l.b16 %v1541
        %v1574 = vunpack.c.l.b16 %v1542
        %v1575 = vunpack.c.l.b16 %v1543
        %v1576 = vunpack.c.l.b16 %v1544
        %v1577 = vunpack.c.l.b16 %v1545
        %v1578 = vunpack.c.l.b16 %v1546
        %v1579 = vunpack.c.l.b16 %v1547
        %v1580 = vunpack.c.l.b16 %v1548
        %v1581 = vunpack.c.l.b16 %v1549
        %v1582 = vunpack.c.l.b16 %v1550
        %v1583 = vunpack.c.l.b16 %v1551
        %v1584 = vunpack.c.l.b16 %v1552
        %v1585 = vunpack.c.l.b16 %v1553
        %v1586 = vunpack.c.l.b16 %v1554
        %v1587 = vunpack.c.l.b16 %v1555
        %v1588 = vunpack.c.l.b16 %v1556
        %v1589 = vunpack.c.l.b16 %v1557
        %v1590 = vunpack.c.l.b16 %v1558
        %v1591 = vunpack.c.l.b16 %v1559
        %v1592 = vunpack.c.l.b16 %v1560
        %v1593 = vpack.c.b16 %v1562, %v1561
        %v1594 = vpack.c.b16 %v1564, %v1563
        %v1595 = vpack.c.b16 %v1566, %v1565
        %v1596 = vpack.c.b16 %v1568, %v1567
        %v1597 = vpack.c.b16 %v1570, %v1569
        %v1598 = vpack.c.b16 %v1572, %v1571
        %v1599 = vpack.c.b16 %v1574, %v1573
        %v1600 = vpack.c.b16 %v1576, %v1575
        %v1601 = vpack.c.b16 %v1578, %v1577
        %v1602 = vpack.c.b16 %v1580, %v1579
        %v1603 = vpack.c.b16 %v1582, %v1581
        %v1604 = vpack.c.b16 %v1584, %v1583
        %v1605 = vpack.c.b16 %v1586, %v1585
        %v1606 = vpack.c.b16 %v1588, %v1587
        %v1607 = vpack.c.b16 %v1590, %v1589
        %v1608 = vpack.c.b16 %v1592, %v1591
        %vm1609 = vcmp.ne.s16.totalorder %v1593, 0
        %vm1610 = vcmp.ne.s16.totalorder %v1594, 0
        %vm1611 = vcmp.ne.s16.totalorder %v1595, 0
        %vm1612 = vcmp.ne.s16.totalorder %v1596, 0
        %vm1613 = vcmp.ne.s16.totalorder %v1597, 0
        %vm1614 = vcmp.ne.s16.totalorder %v1598, 0
        %vm1615 = vcmp.ne.s16.totalorder %v1599, 0
        %vm1616 = vcmp.ne.s16.totalorder %v1600, 0
        %vm1617 = vcmp.ne.s16.totalorder %v1601, 0
        %vm1618 = vcmp.ne.s16.totalorder %v1602, 0
        %vm1619 = vcmp.ne.s16.totalorder %v1603, 0
        %vm1620 = vcmp.ne.s16.totalorder %v1604, 0
        %vm1621 = vcmp.ne.s16.totalorder %v1605, 0
        %vm1622 = vcmp.ne.s16.totalorder %v1606, 0
        %vm1623 = vcmp.ne.s16.totalorder %v1607, 0
        %vm1624 = vcmp.ne.s16.totalorder %v1608, 0
        %v1625 = vsel %vm1609, %v1400, 0
        %v1626 = vsel %vm1610, %v1269, 0
        %v1627 = vsel %vm1611, %v1277, 0
        %v1628 = vsel %vm1612, %v1285, 0
        %v1629 = vsel %vm1613, %v1293, 0
        %v1630 = vsel %vm1614, %v1301, 0
        %v1631 = vsel %vm1615, %v1309, 0
        %v1632 = vsel %vm1616, %v1317, 0
        %v1633 = vsel %vm1617, %v1325, 0
        %v1634 = vsel %vm1618, %v1333, 0
        %v1635 = vsel %vm1619, %v1341, 0
        %v1636 = vsel %vm1620, %v1349, 0
        %v1637 = vsel %vm1621, %v1357, 0
        %v1638 = vsel %vm1622, %v1365, 0
        %v1639 = vsel %vm1623, %v1373, 0
        %v1640 = vsel %vm1624, %v1381, 0
        %vm1641 = vsmask.f32 7424
        %v1642 = vrot.slane %v1259, 1
        %v1643 = vor.u32 %v1256, %v1642
        %v1644 = vrot.slane %v1266, 1
        %v1645 = vsel %vm1641, %v1643, %v1644
        %v1646 = vor.u32 %v1263, %v1644
        %v1647 = vrot.slane %v1274, 1
        %v1648 = vsel %vm1641, %v1646, %v1647
        %v1649 = vor.u32 %v1271, %v1647
        %v1650 = vrot.slane %v1282, 1
        %v1651 = vsel %vm1641, %v1649, %v1650
        %v1652 = vor.u32 %v1279, %v1650
        %v1653 = vrot.slane %v1290, 1
        %v1654 = vsel %vm1641, %v1652, %v1653
        %v1655 = vor.u32 %v1287, %v1653
        %v1656 = vrot.slane %v1298, 1
        %v1657 = vsel %vm1641, %v1655, %v1656
        %v1658 = vor.u32 %v1295, %v1656
        %v1659 = vrot.slane %v1306, 1
        %v1660 = vsel %vm1641, %v1658, %v1659
        %v1661 = vor.u32 %v1303, %v1659
        %v1662 = vrot.slane %v1314, 1
        %v1663 = vsel %vm1641, %v1661, %v1662
        %v1664 = vor.u32 %v1311, %v1662
        %v1665 = vrot.slane %v1322, 1
        %v1666 = vsel %vm1641, %v1664, %v1665
        %v1667 = vor.u32 %v1319, %v1665
        %v1668 = vrot.slane %v1330, 1
        %v1669 = vsel %vm1641, %v1667, %v1668
        %v1670 = vor.u32 %v1327, %v1668
        %v1671 = vrot.slane %v1338, 1
        %v1672 = vsel %vm1641, %v1670, %v1671
        %v1673 = vor.u32 %v1335, %v1671
        %v1674 = vrot.slane %v1346, 1
        %v1675 = vsel %vm1641, %v1673, %v1674
        %v1676 = vor.u32 %v1343, %v1674
        %v1677 = vrot.slane %v1354, 1
        %v1678 = vsel %vm1641, %v1676, %v1677
        %v1679 = vor.u32 %v1351, %v1677
        %v1680 = vrot.slane %v1362, 1
        %v1681 = vsel %vm1641, %v1679, %v1680
        %v1682 = vor.u32 %v1359, %v1680
        %v1683 = vrot.slane %v1370, 1
        %v1684 = vsel %vm1641, %v1682, %v1683
        %v1685 = vor.u32 %v1367, %v1683
        %v1686 = vrot.slane %v1378, 1
        %v1687 = vsel %vm1641, %v1685, %v1686
        %v1688 = vor.u32 %v1375, %v1686
        %vm1705 = vcmask 1047552
        %vm1706 = vmand %vm1705, %vm1641
        %v1707 = vsel %vm1706, %v1688, 0
        %vm1708 = vcmp.lt.s32.totalorder %v1222, 15
        %vm1709 = vcmp.lt.s32.totalorder %v1223, 15
        %vm1710 = vcmp.lt.s32.totalorder %v1224, 15
        %vm1711 = vcmp.lt.s32.totalorder %v1225, 15
        %vm1712 = vcmp.lt.s32.totalorder %v1226, 15
        %vm1713 = vcmp.lt.s32.totalorder %v1227, 15
        %vm1714 = vcmp.lt.s32.totalorder %v1228, 15
        %vm1715 = vcmp.lt.s32.totalorder %v1229, 15
        %vm1716 = vcmp.lt.s32.totalorder %v1230, 15
        %vm1717 = vcmp.lt.s32.totalorder %v1231, 15
        %vm1718 = vcmp.lt.s32.totalorder %v1232, 15
        %vm1719 = vcmp.lt.s32.totalorder %v1233, 15
        %vm1720 = vcmp.lt.s32.totalorder %v1234, 15
        %vm1721 = vcmp.lt.s32.totalorder %v1235, 15
        %vm1722 = vcmp.lt.s32.totalorder %v1236, 15
        %vm1723 = vcmp.lt.s32.totalorder %v1237, 15
        %vm1724 = vcmp.lt.s32.totalorder %v1238, 15
        %vm1725 = vcmp.lt.s32.totalorder %v1239, 15
        %vm1726 = vcmp.lt.s32.totalorder %v1240, 15
        %vm1727 = vcmp.lt.s32.totalorder %v1241, 15
        %vm1728 = vcmp.lt.s32.totalorder %v1242, 15
        %vm1729 = vcmp.lt.s32.totalorder %v1243, 15
        %vm1730 = vcmp.lt.s32.totalorder %v1244, 15
        %vm1731 = vcmp.lt.s32.totalorder %v1245, 15
        %vm1732 = vcmp.lt.s32.totalorder %v1246, 15
        %vm1733 = vcmp.lt.s32.totalorder %v1247, 15
        %vm1734 = vcmp.lt.s32.totalorder %v1248, 15
        %vm1735 = vcmp.lt.s32.totalorder %v1249, 15
        %vm1736 = vcmp.lt.s32.totalorder %v1250, 15
        %vm1737 = vcmp.lt.s32.totalorder %v1251, 15
        %vm1738 = vcmp.lt.s32.totalorder %v1252, 15
        %vm1739 = vcmp.lt.s32.totalorder %v1253, 15
        %v1740 = vsel %vm1708, 1, 0
        %v1741 = vsel %vm1709, 1, 0
        %v1742 = vsel %vm1710, 1, 0
        %v1743 = vsel %vm1711, 1, 0
        %v1744 = vsel %vm1712, 1, 0
        %v1745 = vsel %vm1713, 1, 0
        %v1746 = vsel %vm1714, 1, 0
        %v1747 = vsel %vm1715, 1, 0
        %v1748 = vsel %vm1716, 1, 0
        %v1749 = vsel %vm1717, 1, 0
        %v1750 = vsel %vm1718, 1, 0
        %v1751 = vsel %vm1719, 1, 0
        %v1752 = vsel %vm1720, 1, 0
        %v1753 = vsel %vm1721, 1, 0
        %v1754 = vsel %vm1722, 1, 0
        %v1755 = vsel %vm1723, 1, 0
        %v1756 = vsel %vm1724, 1, 0
        %v1757 = vsel %vm1725, 1, 0
        %v1758 = vsel %vm1726, 1, 0
        %v1759 = vsel %vm1727, 1, 0
        %v1760 = vsel %vm1728, 1, 0
        %v1761 = vsel %vm1729, 1, 0
        %v1762 = vsel %vm1730, 1, 0
        %v1763 = vsel %vm1731, 1, 0
        %v1764 = vsel %vm1732, 1, 0
        %v1765 = vsel %vm1733, 1, 0
        %v1766 = vsel %vm1734, 1, 0
        %v1767 = vsel %vm1735, 1, 0
        %v1768 = vsel %vm1736, 1, 0
        %v1769 = vsel %vm1737, 1, 0
        %v1770 = vsel %vm1738, 1, 0
        %v1771 = vsel %vm1739, 1, 0
        %vm1772 = vcmp.eq.s32.totalorder %v1740, 1
        %vm1773 = vcmp.eq.s32.totalorder %v1741, 1
        %vm1774 = vcmp.eq.s32.totalorder %v1742, 1
        %vm1775 = vcmp.eq.s32.totalorder %v1743, 1
        %vm1776 = vcmp.eq.s32.totalorder %v1744, 1
        %vm1777 = vcmp.eq.s32.totalorder %v1745, 1
        %vm1778 = vcmp.eq.s32.totalorder %v1746, 1
        %vm1779 = vcmp.eq.s32.totalorder %v1747, 1
        %vm1780 = vcmp.eq.s32.totalorder %v1748, 1
        %vm1781 = vcmp.eq.s32.totalorder %v1749, 1
        %vm1782 = vcmp.eq.s32.totalorder %v1750, 1
        %vm1783 = vcmp.eq.s32.totalorder %v1751, 1
        %vm1784 = vcmp.eq.s32.totalorder %v1752, 1
        %vm1785 = vcmp.eq.s32.totalorder %v1753, 1
        %vm1786 = vcmp.eq.s32.totalorder %v1754, 1
        %vm1787 = vcmp.eq.s32.totalorder %v1755, 1
        %vm1788 = vcmp.eq.s32.totalorder %v1756, 1
        %vm1789 = vcmp.eq.s32.totalorder %v1757, 1
        %vm1790 = vcmp.eq.s32.totalorder %v1758, 1
        %vm1791 = vcmp.eq.s32.totalorder %v1759, 1
        %vm1792 = vcmp.eq.s32.totalorder %v1760, 1
        %vm1793 = vcmp.eq.s32.totalorder %v1761, 1
        %vm1794 = vcmp.eq.s32.totalorder %v1762, 1
        %vm1795 = vcmp.eq.s32.totalorder %v1763, 1
        %vm1796 = vcmp.eq.s32.totalorder %v1764, 1
        %vm1797 = vcmp.eq.s32.totalorder %v1765, 1
        %vm1798 = vcmp.eq.s32.totalorder %v1766, 1
        %vm1799 = vcmp.eq.s32.totalorder %v1767, 1
        %vm1800 = vcmp.eq.s32.totalorder %v1768, 1
        %vm1801 = vcmp.eq.s32.totalorder %v1769, 1
        %vm1802 = vcmp.eq.s32.totalorder %v1770, 1
        %vm1803 = vcmp.eq.s32.totalorder %v1771, 1
        %vm1804 = vmpackc.low %vm1772, %vm1772
        %vm1805 = vmpackc.low %vm1773, %vm1773
        %vm1806 = vmpackc.low %vm1774, %vm1774
        %vm1807 = vmpackc.low %vm1775, %vm1775
        %vm1808 = vmpackc.low %vm1776, %vm1776
        %vm1809 = vmpackc.low %vm1777, %vm1777
        %vm1810 = vmpackc.low %vm1778, %vm1778
        %vm1811 = vmpackc.low %vm1779, %vm1779
        %vm1812 = vmpackc.low %vm1780, %vm1780
        %vm1813 = vmpackc.low %vm1781, %vm1781
        %vm1814 = vmpackc.low %vm1782, %vm1782
        %vm1815 = vmpackc.low %vm1783, %vm1783
        %vm1816 = vmpackc.low %vm1784, %vm1784
        %vm1817 = vmpackc.low %vm1785, %vm1785
        %vm1818 = vmpackc.low %vm1786, %vm1786
        %vm1819 = vmpackc.low %vm1787, %vm1787
        %vm1820 = vmpackc.low %vm1788, %vm1788
        %vm1821 = vmpackc.low %vm1789, %vm1789
        %vm1822 = vmpackc.low %vm1790, %vm1790
        %vm1823 = vmpackc.low %vm1791, %vm1791
        %vm1824 = vmpackc.low %vm1792, %vm1792
        %vm1825 = vmpackc.low %vm1793, %vm1793
        %vm1826 = vmpackc.low %vm1794, %vm1794
        %vm1827 = vmpackc.low %vm1795, %vm1795
        %vm1828 = vmpackc.low %vm1796, %vm1796
        %vm1829 = vmpackc.low %vm1797, %vm1797
        %vm1830 = vmpackc.low %vm1798, %vm1798
        %vm1831 = vmpackc.low %vm1799, %vm1799
        %vm1832 = vmpackc.low %vm1800, %vm1800
        %vm1833 = vmpackc.low %vm1801, %vm1801
        %vm1834 = vmpackc.low %vm1802, %vm1802
        %vm1835 = vmpackc.low %vm1803, %vm1803
        %v1836 = vsel %vm1804, 65537, 0
        %v1837 = vsel %vm1805, 65537, 0
        %v1838 = vsel %vm1806, 65537, 0
        %v1839 = vsel %vm1807, 65537, 0
        %v1840 = vsel %vm1808, 65537, 0
        %v1841 = vsel %vm1809, 65537, 0
        %v1842 = vsel %vm1810, 65537, 0
        %v1843 = vsel %vm1811, 65537, 0
        %v1844 = vsel %vm1812, 65537, 0
        %v1845 = vsel %vm1813, 65537, 0
        %v1846 = vsel %vm1814, 65537, 0
        %v1847 = vsel %vm1815, 65537, 0
        %v1848 = vsel %vm1816, 65537, 0
        %v1849 = vsel %vm1817, 65537, 0
        %v1850 = vsel %vm1818, 65537, 0
        %v1851 = vsel %vm1819, 65537, 0
        %v1852 = vsel %vm1820, 65537, 0
        %v1853 = vsel %vm1821, 65537, 0
        %v1854 = vsel %vm1822, 65537, 0
        %v1855 = vsel %vm1823, 65537, 0
        %v1856 = vsel %vm1824, 65537, 0
        %v1857 = vsel %vm1825, 65537, 0
        %v1858 = vsel %vm1826, 65537, 0
        %v1859 = vsel %vm1827, 65537, 0
        %v1860 = vsel %vm1828, 65537, 0
        %v1861 = vsel %vm1829, 65537, 0
        %v1862 = vsel %vm1830, 65537, 0
        %v1863 = vsel %vm1831, 65537, 0
        %v1864 = vsel %vm1832, 65537, 0
        %v1865 = vsel %vm1833, 65537, 0
        %v1866 = vsel %vm1834, 65537, 0
        %v1867 = vsel %vm1835, 65537, 0
        %v1868 = vunpack.c.l.b16 %v1836
        %v1869 = vunpack.c.l.b16 %v1837
        %v1870 = vunpack.c.l.b16 %v1838
        %v1871 = vunpack.c.l.b16 %v1839
        %v1872 = vunpack.c.l.b16 %v1840
        %v1873 = vunpack.c.l.b16 %v1841
        %v1874 = vunpack.c.l.b16 %v1842
        %v1875 = vunpack.c.l.b16 %v1843
        %v1876 = vunpack.c.l.b16 %v1844
        %v1877 = vunpack.c.l.b16 %v1845
        %v1878 = vunpack.c.l.b16 %v1846
        %v1879 = vunpack.c.l.b16 %v1847
        %v1880 = vunpack.c.l.b16 %v1848
        %v1881 = vunpack.c.l.b16 %v1849
        %v1882 = vunpack.c.l.b16 %v1850
        %v1883 = vunpack.c.l.b16 %v1851
        %v1884 = vunpack.c.l.b16 %v1852
        %v1885 = vunpack.c.l.b16 %v1853
        %v1886 = vunpack.c.l.b16 %v1854
        %v1887 = vunpack.c.l.b16 %v1855
        %v1888 = vunpack.c.l.b16 %v1856
        %v1889 = vunpack.c.l.b16 %v1857
        %v1890 = vunpack.c.l.b16 %v1858
        %v1891 = vunpack.c.l.b16 %v1859
        %v1892 = vunpack.c.l.b16 %v1860
        %v1893 = vunpack.c.l.b16 %v1861
        %v1894 = vunpack.c.l.b16 %v1862
        %v1895 = vunpack.c.l.b16 %v1863
        %v1896 = vunpack.c.l.b16 %v1864
        %v1897 = vunpack.c.l.b16 %v1865
        %v1898 = vunpack.c.l.b16 %v1866
        %v1899 = vunpack.c.l.b16 %v1867
        %v1900 = vpack.c.b16 %v1869, %v1868
        %v1901 = vpack.c.b16 %v1871, %v1870
        %v1902 = vpack.c.b16 %v1873, %v1872
        %v1903 = vpack.c.b16 %v1875, %v1874
        %v1904 = vpack.c.b16 %v1877, %v1876
        %v1905 = vpack.c.b16 %v1879, %v1878
        %v1906 = vpack.c.b16 %v1881, %v1880
        %v1907 = vpack.c.b16 %v1883, %v1882
        %v1908 = vpack.c.b16 %v1885, %v1884
        %v1909 = vpack.c.b16 %v1887, %v1886
        %v1910 = vpack.c.b16 %v1889, %v1888
        %v1911 = vpack.c.b16 %v1891, %v1890
        %v1912 = vpack.c.b16 %v1893, %v1892
        %v1913 = vpack.c.b16 %v1895, %v1894
        %v1914 = vpack.c.b16 %v1897, %v1896
        %v1915 = vpack.c.b16 %v1899, %v1898
        %vm1916 = vcmp.ne.s16.totalorder %v1900, 0
        %vm1917 = vcmp.ne.s16.totalorder %v1901, 0
        %vm1918 = vcmp.ne.s16.totalorder %v1902, 0
        %vm1919 = vcmp.ne.s16.totalorder %v1903, 0
        %vm1920 = vcmp.ne.s16.totalorder %v1904, 0
        %vm1921 = vcmp.ne.s16.totalorder %v1905, 0
        %vm1922 = vcmp.ne.s16.totalorder %v1906, 0
        %vm1923 = vcmp.ne.s16.totalorder %v1907, 0
        %vm1924 = vcmp.ne.s16.totalorder %v1908, 0
        %vm1925 = vcmp.ne.s16.totalorder %v1909, 0
        %vm1926 = vcmp.ne.s16.totalorder %v1910, 0
        %vm1927 = vcmp.ne.s16.totalorder %v1911, 0
        %vm1928 = vcmp.ne.s16.totalorder %v1912, 0
        %vm1929 = vcmp.ne.s16.totalorder %v1913, 0
        %vm1930 = vcmp.ne.s16.totalorder %v1914, 0
        %vm1931 = vcmp.ne.s16.totalorder %v1915, 0
        %v1932 = vsel %vm1916, %v1645, 0
        %v1933 = vsel %vm1917, %v1648, 0
        %v1934 = vsel %vm1918, %v1651, 0
        %v1935 = vsel %vm1919, %v1654, 0
        %v1936 = vsel %vm1920, %v1657, 0
        %v1937 = vsel %vm1921, %v1660, 0
        %v1938 = vsel %vm1922, %v1663, 0
        %v1939 = vsel %vm1923, %v1666, 0
        %v1940 = vsel %vm1924, %v1669, 0
        %v1941 = vsel %vm1925, %v1672, 0
        %v1942 = vsel %vm1926, %v1675, 0
        %v1943 = vsel %vm1927, %v1678, 0
        %v1944 = vsel %vm1928, %v1681, 0
        %v1945 = vsel %vm1929, %v1684, 0
        %v1946 = vsel %vm1930, %v1687, 0
        %v1947 = vsel %vm1931, %v1707, 0
        %1964 = vrot.lane.b32.xlu0 %v821, 4
        %v1965 = vpop.permute.xlu0 %1964
        %1966 = vrot.lane.b32.xlu0 %v822, 4
        %v1967 = vpop.permute.xlu0 %1966
        %1968 = vrot.lane.b32.xlu0 %v823, 4
        %v1969 = vpop.permute.xlu0 %1968
        %1970 = vrot.lane.b32.xlu0 %v824, 4
        %v1971 = vpop.permute.xlu0 %1970
        %1972 = vrot.lane.b32.xlu0 %v825, 4
        %v1973 = vpop.permute.xlu0 %1972
        %1974 = vrot.lane.b32.xlu0 %v826, 4
        %v1975 = vpop.permute.xlu0 %1974
        %1976 = vrot.lane.b32.xlu0 %v827, 4
        %v1977 = vpop.permute.xlu0 %1976
        %1978 = vrot.lane.b32.xlu0 %v828, 4
        %v1979 = vpop.permute.xlu0 %1978
        %1980 = vrot.lane.b32.xlu0 %v829, 4
        %v1981 = vpop.permute.xlu0 %1980
        %1982 = vrot.lane.b32.xlu0 %v830, 4
        %v1983 = vpop.permute.xlu0 %1982
        %1984 = vrot.lane.b32.xlu0 %v831, 4
        %v1985 = vpop.permute.xlu0 %1984
        %1986 = vrot.lane.b32.xlu0 %v832, 4
        %v1987 = vpop.permute.xlu0 %1986
        %1988 = vrot.lane.b32.xlu0 %v833, 4
        %v1989 = vpop.permute.xlu0 %1988
        %1990 = vrot.lane.b32.xlu0 %v834, 4
        %v1991 = vpop.permute.xlu0 %1990
        %1992 = vrot.lane.b32.xlu0 %v835, 4
        %v1993 = vpop.permute.xlu0 %1992
        %1994 = vrot.lane.b32.xlu0 %v836, 4
        %v1995 = vpop.permute.xlu0 %1994
        %2012 = vrot.lane.b32.xlu0 %v1932, 8
        %v2013 = vpop.permute.xlu0 %2012
        %2014 = vrot.lane.b32.xlu0 %v1933, 8
        %v2015 = vpop.permute.xlu0 %2014
        %2016 = vrot.lane.b32.xlu0 %v1934, 8
        %v2017 = vpop.permute.xlu0 %2016
        %2018 = vrot.lane.b32.xlu0 %v1935, 8
        %v2019 = vpop.permute.xlu0 %2018
        %2020 = vrot.lane.b32.xlu0 %v1936, 8
        %v2021 = vpop.permute.xlu0 %2020
        %2022 = vrot.lane.b32.xlu0 %v1937, 8
        %v2023 = vpop.permute.xlu0 %2022
        %2024 = vrot.lane.b32.xlu0 %v1938, 8
        %v2025 = vpop.permute.xlu0 %2024
        %2026 = vrot.lane.b32.xlu0 %v1939, 8
        %v2027 = vpop.permute.xlu0 %2026
        %2028 = vrot.lane.b32.xlu0 %v1940, 8
        %v2029 = vpop.permute.xlu0 %2028
        %2030 = vrot.lane.b32.xlu0 %v1941, 8
        %v2031 = vpop.permute.xlu0 %2030
        %2032 = vrot.lane.b32.xlu0 %v1942, 8
        %v2033 = vpop.permute.xlu0 %2032
        %2034 = vrot.lane.b32.xlu0 %v1943, 8
        %v2035 = vpop.permute.xlu0 %2034
        %2036 = vrot.lane.b32.xlu0 %v1944, 8
        %v2037 = vpop.permute.xlu0 %2036
        %2038 = vrot.lane.b32.xlu0 %v1945, 8
        %v2039 = vpop.permute.xlu0 %2038
        %2040 = vrot.lane.b32.xlu0 %v1946, 8
        %v2041 = vpop.permute.xlu0 %2040
        %2042 = vrot.lane.b32.xlu0 %v1947, 8
        %v2043 = vpop.permute.xlu0 %2042
        %vm2044 = vcmask 31744
        %v2047 = vsel %vm2044, %v1625, %v1965
        %v2050 = vsel %vm2044, %v1626, %v1967
        %v2053 = vsel %vm2044, %v1627, %v1969
        %v2056 = vsel %vm2044, %v1628, %v1971
        %v2059 = vsel %vm2044, %v1629, %v1973
        %v2062 = vsel %vm2044, %v1630, %v1975
        %v2065 = vsel %vm2044, %v1631, %v1977
        %v2068 = vsel %vm2044, %v1632, %v1979
        %v2071 = vsel %vm2044, %v1633, %v1981
        %v2074 = vsel %vm2044, %v1634, %v1983
        %v2077 = vsel %vm2044, %v1635, %v1985
        %v2080 = vsel %vm2044, %v1636, %v1987
        %v2083 = vsel %vm2044, %v1637, %v1989
        %v2086 = vsel %vm2044, %v1638, %v1991
        %v2089 = vsel %vm2044, %v1639, %v1993
        %v2092 = vsel %vm2044, %v1640, %v1995
        %vm2093 = vcmask 64512
        %v2095 = vsel %vm2093, %v2047, %v2013
        %v2097 = vsel %vm2093, %v2050, %v2015
        %v2099 = vsel %vm2093, %v2053, %v2017
        %v2101 = vsel %vm2093, %v2056, %v2019
        %v2103 = vsel %vm2093, %v2059, %v2021
        %v2105 = vsel %vm2093, %v2062, %v2023
        %v2107 = vsel %vm2093, %v2065, %v2025
        %v2109 = vsel %vm2093, %v2068, %v2027
        %v2111 = vsel %vm2093, %v2071, %v2029
        %v2113 = vsel %vm2093, %v2074, %v2031
        %v2115 = vsel %vm2093, %v2077, %v2033
        %v2117 = vsel %vm2093, %v2080, %v2035
        %v2119 = vsel %vm2093, %v2083, %v2037
        %v2121 = vsel %vm2093, %v2086, %v2039
        %v2123 = vsel %vm2093, %v2089, %v2041
        %v2125 = vsel %vm2093, %v2092, %v2043
        %v2126 = vld [vmem:[%s4] sm:$0xf]
        %v2127 = vld [vmem:[%s4 + $0x4] sm:$0x3]
        %v2130 = vunpack.c.l.b16 %v2126
        %v2131 = vunpack.c.l.b16 %v2127
        %v2132 = vpack.c.b16 %v2131, %v2130
        %vm2133 = vcmask 97280
        %v2134 = vsel %vm2133, %v2095, 0
        %v2136 = vsel %vm2133, %v2097, 0
        %v2138 = vsel %vm2133, %v2099, 0
        %v2140 = vsel %vm2133, %v2101, 0
        %v2142 = vsel %vm2133, %v2103, 0
        %v2144 = vsel %vm2133, %v2105, 0
        %v2146 = vsel %vm2133, %v2107, 0
        %v2148 = vsel %vm2133, %v2109, 0
        %v2150 = vsel %vm2133, %v2111, 0
        %v2152 = vsel %vm2133, %v2113, 0
        %v2154 = vsel %vm2133, %v2115, 0
        %v2156 = vsel %vm2133, %v2117, 0
        %v2158 = vsel %vm2133, %v2119, 0
        %v2160 = vsel %vm2133, %v2121, 0
        %v2162 = vsel %vm2133, %v2123, 0
        %v2164 = vsel %vm2133, %v2125, 0
        %vm2166 = vcmask 1045504
        %v2168 = vsel %vm2166, %v2132, 0
        %2170 = vmatprep.subr.bf16.mxu0 0
        %2171 = vmatpush1.bf16.msra.mxu0 %v2168
        %2172 = vmatprep.subr.bf16.mxu0 0
        %2173 = vmatpush1.bf16.msra.mxu0 0
        %2174 = vmatprep.subr.bf16.mxu0 0
        %2175 = vmatpush1.bf16.msra.mxu0 0
        %2176 = vmatprep.subr.bf16.mxu0 0
        %2177 = vmatpush1.bf16.msra.mxu0 0
        %2178 = vmatprep.subr.bf16.mxu0 0
        %2179 = vmatpush1.bf16.msra.mxu0 0
        %2180 = vmatprep.subr.bf16.mxu0 0
        %2181 = vmatpush1.bf16.msra.mxu0 0
        %2182 = vmatprep.subr.bf16.mxu0 0
        %2183 = vmatpush1.bf16.msra.mxu0 0
        %2184 = vmatprep.subr.bf16.mxu0 0
        %2185 = vmatpush1.bf16.msra.mxu0 0
        %2186 = vmatprep.subr.bf16.mxu0 0
        %2187 = vmatpush1.bf16.msra.mxu0 0
        %2188 = vmatprep.subr.bf16.mxu0 0
        %2189 = vmatpush1.bf16.msra.mxu0 0
        %2190 = vmatprep.subr.bf16.mxu0 0
        %2191 = vmatpush1.bf16.msra.mxu0 0
        %2192 = vmatprep.subr.bf16.mxu0 0
        %2193 = vmatpush1.bf16.msra.mxu0 0
        %2194 = vmatprep.subr.bf16.mxu0 0
        %2195 = vmatpush1.bf16.msra.mxu0 0
        %2196 = vmatprep.subr.bf16.mxu0 0
        %2197 = vmatpush1.bf16.msra.mxu0 0
        %2198 = vmatprep.subr.bf16.mxu0 0
        %2199 = vmatpush1.bf16.msra.mxu0 0
        %2200 = vmatprep.subr.bf16.mxu0 0
        %2201 = vmatpush1.bf16.msra.mxu0 0
        %2202 = vmatprep.mubr.bf16.mxu0 0
        %2203 = vmatmul.mubr.bf16.gmra.mrb[0].mxu0 %v2134
        %v2204 = vpop.f32.mrb[0].mxu0
        %v2205 = vadd.f32 0.0, %v2204
        %v2206 = vpop.f32.mrb[0].mxu0
        %v2207 = vpop.f32.mrb[0].mxu0
        %v2208 = vadd.f32 0.0, %v2207
        %v2209 = vpop.f32.mrb[0].mxu0
        %2210 = vmatprep.mubr.bf16.mxu0 0
        %2211 = vmatmul.mubr.bf16.gmra.mrb[0].mxu0 %v2136
        %v2212 = vpop.f32.mrb[0].mxu0
        %v2213 = vadd.f32 0.0, %v2212
        %v2214 = vpop.f32.mrb[0].mxu0
        %v2215 = vpop.f32.mrb[0].mxu0
        %v2216 = vadd.f32 0.0, %v2215
        %v2217 = vpop.f32.mrb[0].mxu0
        %2218 = vmatprep.mubr.bf16.mxu0 0
        %2219 = vmatmul.mubr.bf16.gmra.mrb[0].mxu0 %v2138
        %v2220 = vpop.f32.mrb[0].mxu0
        %v2221 = vadd.f32 0.0, %v2220
        %v2222 = vpop.f32.mrb[0].mxu0
        %v2223 = vpop.f32.mrb[0].mxu0
        %v2224 = vadd.f32 0.0, %v2223
        %v2225 = vpop.f32.mrb[0].mxu0
        %2226 = vmatprep.mubr.bf16.mxu0 0
        %2227 = vmatmul.mubr.bf16.gmra.mrb[0].mxu0 %v2140
        %v2228 = vpop.f32.mrb[0].mxu0
        %v2229 = vadd.f32 0.0, %v2228
        %v2230 = vpop.f32.mrb[0].mxu0
        %v2231 = vpop.f32.mrb[0].mxu0
        %v2232 = vadd.f32 0.0, %v2231
        %v2233 = vpop.f32.mrb[0].mxu0
        %2234 = vmatprep.mubr.bf16.mxu0 0
        %2235 = vmatmul.mubr.bf16.gmra.mrb[0].mxu0 %v2142
        %v2236 = vpop.f32.mrb[0].mxu0
        %v2237 = vadd.f32 0.0, %v2236
        %v2238 = vpop.f32.mrb[0].mxu0
        %v2239 = vpop.f32.mrb[0].mxu0
        %v2240 = vadd.f32 0.0, %v2239
        %v2241 = vpop.f32.mrb[0].mxu0
        %2242 = vmatprep.mubr.bf16.mxu0 0
        %2243 = vmatmul.mubr.bf16.gmra.mrb[0].mxu0 %v2144
        %v2244 = vpop.f32.mrb[0].mxu0
        %v2245 = vadd.f32 0.0, %v2244
        %v2246 = vpop.f32.mrb[0].mxu0
        %v2247 = vpop.f32.mrb[0].mxu0
        %v2248 = vadd.f32 0.0, %v2247
        %v2249 = vpop.f32.mrb[0].mxu0
        %2250 = vmatprep.mubr.bf16.mxu0 0
        %2251 = vmatmul.mubr.bf16.gmra.mrb[0].mxu0 %v2146
        %v2252 = vpop.f32.mrb[0].mxu0
        %v2253 = vadd.f32 0.0, %v2252
        %v2254 = vpop.f32.mrb[0].mxu0
        %v2255 = vpop.f32.mrb[0].mxu0
        %v2256 = vadd.f32 0.0, %v2255
        %v2257 = vpop.f32.mrb[0].mxu0
        %2258 = vmatprep.mubr.bf16.mxu0 0
        %2259 = vmatmul.mubr.bf16.gmra.mrb[0].mxu0 %v2148
        %v2260 = vpop.f32.mrb[0].mxu0
        %v2261 = vadd.f32 0.0, %v2260
        %v2262 = vpop.f32.mrb[0].mxu0
        %v2263 = vpop.f32.mrb[0].mxu0
        %v2264 = vadd.f32 0.0, %v2263
        %v2265 = vpop.f32.mrb[0].mxu0
        %2266 = vmatprep.mubr.bf16.mxu0 0
        %2267 = vmatmul.mubr.bf16.gmra.mrb[0].mxu0 %v2150
        %v2268 = vpop.f32.mrb[0].mxu0
        %v2269 = vadd.f32 0.0, %v2268
        %v2270 = vpop.f32.mrb[0].mxu0
        %v2271 = vpop.f32.mrb[0].mxu0
        %v2272 = vadd.f32 0.0, %v2271
        %v2273 = vpop.f32.mrb[0].mxu0
        %2274 = vmatprep.mubr.bf16.mxu0 0
        %2275 = vmatmul.mubr.bf16.gmra.mrb[0].mxu0 %v2152
        %v2276 = vpop.f32.mrb[0].mxu0
        %v2277 = vadd.f32 0.0, %v2276
        %v2278 = vpop.f32.mrb[0].mxu0
        %v2279 = vpop.f32.mrb[0].mxu0
        %v2280 = vadd.f32 0.0, %v2279
        %v2281 = vpop.f32.mrb[0].mxu0
        %2282 = vmatprep.mubr.bf16.mxu0 0
        %2283 = vmatmul.mubr.bf16.gmra.mrb[0].mxu0 %v2154
        %v2284 = vpop.f32.mrb[0].mxu0
        %v2285 = vadd.f32 0.0, %v2284
        %v2286 = vpop.f32.mrb[0].mxu0
        %v2287 = vpop.f32.mrb[0].mxu0
        %v2288 = vadd.f32 0.0, %v2287
        %v2289 = vpop.f32.mrb[0].mxu0
        %2290 = vmatprep.mubr.bf16.mxu0 0
        %2291 = vmatmul.mubr.bf16.gmra.mrb[0].mxu0 %v2156
        %v2292 = vpop.f32.mrb[0].mxu0
        %v2293 = vadd.f32 0.0, %v2292
        %v2294 = vpop.f32.mrb[0].mxu0
        %v2295 = vpop.f32.mrb[0].mxu0
        %v2296 = vadd.f32 0.0, %v2295
        %v2297 = vpop.f32.mrb[0].mxu0
        %2298 = vmatprep.mubr.bf16.mxu0 0
        %2299 = vmatmul.mubr.bf16.gmra.mrb[0].mxu0 %v2158
        %v2300 = vpop.f32.mrb[0].mxu0
        %v2301 = vadd.f32 0.0, %v2300
        %v2302 = vpop.f32.mrb[0].mxu0
        %v2303 = vpop.f32.mrb[0].mxu0
        %v2304 = vadd.f32 0.0, %v2303
        %v2305 = vpop.f32.mrb[0].mxu0
        %2306 = vmatprep.mubr.bf16.mxu0 0
        %2307 = vmatmul.mubr.bf16.gmra.mrb[0].mxu0 %v2160
        %v2308 = vpop.f32.mrb[0].mxu0
        %v2309 = vadd.f32 0.0, %v2308
        %v2310 = vpop.f32.mrb[0].mxu0
        %v2311 = vpop.f32.mrb[0].mxu0
        %v2312 = vadd.f32 0.0, %v2311
        %v2313 = vpop.f32.mrb[0].mxu0
        %2314 = vmatprep.mubr.bf16.mxu0 0
        %2315 = vmatmul.mubr.bf16.gmra.mrb[0].mxu0 %v2162
        %v2316 = vpop.f32.mrb[0].mxu0
        %v2317 = vadd.f32 0.0, %v2316
        %v2318 = vpop.f32.mrb[0].mxu0
        %v2319 = vpop.f32.mrb[0].mxu0
        %v2320 = vadd.f32 0.0, %v2319
        %v2321 = vpop.f32.mrb[0].mxu0
        %2322 = vmatprep.mubr.bf16.mxu0 0
        %2323 = vmatmul.mubr.bf16.gmra.mrb[0].mxu0 %v2164
        %v2324 = vpop.f32.mrb[0].mxu0
        %v2325 = vadd.f32 0.0, %v2324
        %v2326 = vpop.f32.mrb[0].mxu0
        %v2327 = vpop.f32.mrb[0].mxu0
        %v2328 = vadd.f32 0.0, %v2327
        %v2329 = vpop.f32.mrb[0].mxu0
        %2330 = vdwg.mxu0
        %2363 = vrot.lane.b32.xlu0 %v2205, 124
        %v2364 = vpop.permute.xlu0 %2363
        %2365 = vrot.lane.b32.xlu0 %v2208, 124
        %v2366 = vpop.permute.xlu0 %2365
        %2367 = vrot.lane.b32.xlu0 %v2213, 124
        %v2368 = vpop.permute.xlu0 %2367
        %2369 = vrot.lane.b32.xlu0 %v2216, 124
        %v2370 = vpop.permute.xlu0 %2369
        %2371 = vrot.lane.b32.xlu0 %v2221, 124
        %v2372 = vpop.permute.xlu0 %2371
        %2373 = vrot.lane.b32.xlu0 %v2224, 124
        %v2374 = vpop.permute.xlu0 %2373
        %2375 = vrot.lane.b32.xlu0 %v2229, 124
        %v2376 = vpop.permute.xlu0 %2375
        %2377 = vrot.lane.b32.xlu0 %v2232, 124
        %v2378 = vpop.permute.xlu0 %2377
        %2379 = vrot.lane.b32.xlu0 %v2237, 124
        %v2380 = vpop.permute.xlu0 %2379
        %2381 = vrot.lane.b32.xlu0 %v2240, 124
        %v2382 = vpop.permute.xlu0 %2381
        %2383 = vrot.lane.b32.xlu0 %v2245, 124
        %v2384 = vpop.permute.xlu0 %2383
        %2385 = vrot.lane.b32.xlu0 %v2248, 124
        %v2386 = vpop.permute.xlu0 %2385
        %2387 = vrot.lane.b32.xlu0 %v2253, 124
        %v2388 = vpop.permute.xlu0 %2387
        %2389 = vrot.lane.b32.xlu0 %v2256, 124
        %v2390 = vpop.permute.xlu0 %2389
        %2391 = vrot.lane.b32.xlu0 %v2261, 124
        %v2392 = vpop.permute.xlu0 %2391
        %2393 = vrot.lane.b32.xlu0 %v2264, 124
        %v2394 = vpop.permute.xlu0 %2393
        %2395 = vrot.lane.b32.xlu0 %v2269, 124
        %v2396 = vpop.permute.xlu0 %2395
        %2397 = vrot.lane.b32.xlu0 %v2272, 124
        %v2398 = vpop.permute.xlu0 %2397
        %2399 = vrot.lane.b32.xlu0 %v2277, 124
        %v2400 = vpop.permute.xlu0 %2399
        %2401 = vrot.lane.b32.xlu0 %v2280, 124
        %v2402 = vpop.permute.xlu0 %2401
        %2403 = vrot.lane.b32.xlu0 %v2285, 124
        %v2404 = vpop.permute.xlu0 %2403
        %2405 = vrot.lane.b32.xlu0 %v2288, 124
        %v2406 = vpop.permute.xlu0 %2405
        %2407 = vrot.lane.b32.xlu0 %v2293, 124
        %v2408 = vpop.permute.xlu0 %2407
        %2409 = vrot.lane.b32.xlu0 %v2296, 124
        %v2410 = vpop.permute.xlu0 %2409
        %2411 = vrot.lane.b32.xlu0 %v2301, 124
        %v2412 = vpop.permute.xlu0 %2411
        %2413 = vrot.lane.b32.xlu0 %v2304, 124
        %v2414 = vpop.permute.xlu0 %2413
        %2415 = vrot.lane.b32.xlu0 %v2309, 124
        %v2416 = vpop.permute.xlu0 %2415
        %2417 = vrot.lane.b32.xlu0 %v2312, 124
        %v2418 = vpop.permute.xlu0 %2417
        %2419 = vrot.lane.b32.xlu0 %v2317, 124
        %v2420 = vpop.permute.xlu0 %2419
        %2421 = vrot.lane.b32.xlu0 %v2320, 124
        %v2422 = vpop.permute.xlu0 %2421
        %2423 = vrot.lane.b32.xlu0 %v2325, 124
        %v2424 = vpop.permute.xlu0 %2423
        %2425 = vrot.lane.b32.xlu0 %v2328, 124
        %v2426 = vpop.permute.xlu0 %2425
        %2459 = vst.msk [vmem:[#allocation2] sm:$0xff] %vm2044, %v2364
        %2460 = vst.msk [vmem:[#allocation2 + $0x8] sm:$0xff] %vm2044, %v2366
        %2461 = vst.msk [vmem:[#allocation2 + $0x10] sm:$0xff] %vm2044, %v2368
        %2462 = vst.msk [vmem:[#allocation2 + $0x18] sm:$0xff] %vm2044, %v2370
        %2463 = vst.msk [vmem:[#allocation2 + $0x20] sm:$0xff] %vm2044, %v2372
        %2464 = vst.msk [vmem:[#allocation2 + $0x28] sm:$0xff] %vm2044, %v2374
        %2465 = vst.msk [vmem:[#allocation2 + $0x30] sm:$0xff] %vm2044, %v2376
        %2466 = vst.msk [vmem:[#allocation2 + $0x38] sm:$0xff] %vm2044, %v2378
        %2467 = vst.msk [vmem:[#allocation2 + $0x40] sm:$0xff] %vm2044, %v2380
        %2468 = vst.msk [vmem:[#allocation2 + $0x48] sm:$0xff] %vm2044, %v2382
        %2469 = vst.msk [vmem:[#allocation2 + $0x50] sm:$0xff] %vm2044, %v2384
        %2470 = vst.msk [vmem:[#allocation2 + $0x58] sm:$0xff] %vm2044, %v2386
        %2471 = vst.msk [vmem:[#allocation2 + $0x60] sm:$0xff] %vm2044, %v2388
        %2472 = vst.msk [vmem:[#allocation2 + $0x68] sm:$0xff] %vm2044, %v2390
        %2473 = vst.msk [vmem:[#allocation2 + $0x70] sm:$0xff] %vm2044, %v2392
        %2474 = vst.msk [vmem:[#allocation2 + $0x78] sm:$0xff] %vm2044, %v2394
        %2475 = vst.msk [vmem:[#allocation2 + $0x80] sm:$0xff] %vm2044, %v2396
        %2476 = vst.msk [vmem:[#allocation2 + $0x88] sm:$0xff] %vm2044, %v2398
        %2477 = vst.msk [vmem:[#allocation2 + $0x90] sm:$0xff] %vm2044, %v2400
        %2478 = vst.msk [vmem:[#allocation2 + $0x98] sm:$0xff] %vm2044, %v2402
        %2479 = vst.msk [vmem:[#allocation2 + $0xa0] sm:$0xff] %vm2044, %v2404
        %2480 = vst.msk [vmem:[#allocation2 + $0xa8] sm:$0xff] %vm2044, %v2406
        %2481 = vst.msk [vmem:[#allocation2 + $0xb0] sm:$0xff] %vm2044, %v2408
        %2482 = vst.msk [vmem:[#allocation2 + $0xb8] sm:$0xff] %vm2044, %v2410
        %2483 = vst.msk [vmem:[#allocation2 + $0xc0] sm:$0xff] %vm2044, %v2412
        %2484 = vst.msk [vmem:[#allocation2 + $0xc8] sm:$0xff] %vm2044, %v2414
        %2485 = vst.msk [vmem:[#allocation2 + $0xd0] sm:$0xff] %vm2044, %v2416
        %2486 = vst.msk [vmem:[#allocation2 + $0xd8] sm:$0xff] %vm2044, %v2418
        %2487 = vst.msk [vmem:[#allocation2 + $0xe0] sm:$0xff] %vm2044, %v2420
        %2488 = vst.msk [vmem:[#allocation2 + $0xe8] sm:$0xff] %vm2044, %v2422
        %2489 = vst.msk [vmem:[#allocation2 + $0xf0] sm:$0xff] %vm2044, %v2424
        %2490 = vst.msk [vmem:[#allocation2 + $0xf8] sm:$0xff] %vm2044, %v2426
        %v2491 = vld [vmem:[#allocation2 + $0x10] sm:$0xff]
        %v2492 = vld [vmem:[#allocation2 + $0x18] sm:$0xff]
        %v2493 = vld [vmem:[#allocation2 + $0x20] sm:$0xff]
        %v2494 = vld [vmem:[#allocation2 + $0x28] sm:$0xff]
        %v2495 = vld [vmem:[#allocation2 + $0x30] sm:$0xff]
        %v2496 = vld [vmem:[#allocation2 + $0x38] sm:$0xff]
        %v2497 = vld [vmem:[#allocation2 + $0x40] sm:$0xff]
        %v2498 = vld [vmem:[#allocation2 + $0x48] sm:$0xff]
        %v2499 = vld [vmem:[#allocation2 + $0x50] sm:$0xff]
        %v2500 = vld [vmem:[#allocation2 + $0x58] sm:$0xff]
        %v2501 = vld [vmem:[#allocation2 + $0x60] sm:$0xff]
        %v2502 = vld [vmem:[#allocation2 + $0x68] sm:$0xff]
        %v2503 = vld [vmem:[#allocation2 + $0x70] sm:$0xff]
        %v2504 = vld [vmem:[#allocation2 + $0x78] sm:$0xff]
        %v2505 = vld [vmem:[#allocation2 + $0x80] sm:$0xff]
        %v2506 = vld [vmem:[#allocation2 + $0x88] sm:$0xff]
        %v2507 = vld [vmem:[#allocation2 + $0x90] sm:$0xff]
        %v2508 = vld [vmem:[#allocation2 + $0x98] sm:$0xff]
        %v2509 = vld [vmem:[#allocation2 + $0xa0] sm:$0xff]
        %v2510 = vld [vmem:[#allocation2 + $0xa8] sm:$0xff]
        %v2511 = vld [vmem:[#allocation2 + $0xb0] sm:$0xff]
        %v2512 = vld [vmem:[#allocation2 + $0xb8] sm:$0xff]
        %v2513 = vld [vmem:[#allocation2 + $0xc0] sm:$0xff]
        %v2514 = vld [vmem:[#allocation2 + $0xc8] sm:$0xff]
        %v2515 = vld [vmem:[#allocation2 + $0xd0] sm:$0xff]
        %v2516 = vld [vmem:[#allocation2 + $0xd8] sm:$0xff]
        %v2517 = vld [vmem:[#allocation2 + $0xe0] sm:$0xff]
        %v2518 = vld [vmem:[#allocation2 + $0xe8] sm:$0xff]
        %v2519 = vld [vmem:[#allocation2 + $0xf0] sm:$0xff]
        %v2520 = vld [vmem:[#allocation2 + $0xf8] sm:$0xff]
        %v2521 = vadd.f32 %v2491, %v2205
        %v2522 = vadd.f32 %v2492, %v2208
        %v2523 = vadd.f32 %v2493, %v2213
        %v2524 = vadd.f32 %v2494, %v2216
        %v2525 = vadd.f32 %v2495, %v2221
        %v2526 = vadd.f32 %v2496, %v2224
        %v2527 = vadd.f32 %v2497, %v2229
        %v2528 = vadd.f32 %v2498, %v2232
        %v2529 = vadd.f32 %v2499, %v2237
        %v2530 = vadd.f32 %v2500, %v2240
        %v2531 = vadd.f32 %v2501, %v2245
        %v2532 = vadd.f32 %v2502, %v2248
        %v2533 = vadd.f32 %v2503, %v2253
        %v2534 = vadd.f32 %v2504, %v2256
        %v2535 = vadd.f32 %v2505, %v2261
        %v2536 = vadd.f32 %v2506, %v2264
        %v2537 = vadd.f32 %v2507, %v2269
        %v2538 = vadd.f32 %v2508, %v2272
        %v2539 = vadd.f32 %v2509, %v2277
        %v2540 = vadd.f32 %v2510, %v2280
        %v2541 = vadd.f32 %v2511, %v2285
        %v2542 = vadd.f32 %v2512, %v2288
        %v2543 = vadd.f32 %v2513, %v2293
        %v2544 = vadd.f32 %v2514, %v2296
        %v2545 = vadd.f32 %v2515, %v2301
        %v2546 = vadd.f32 %v2516, %v2304
        %v2547 = vadd.f32 %v2517, %v2309
        %v2548 = vadd.f32 %v2518, %v2312
        %v2549 = vadd.f32 %v2519, %v2317
        %v2550 = vadd.f32 %v2520, %v2320
        %2551 = vst.msk [vmem:[#allocation2 + $0x10] sm:$0xff] %vm2044, %v2521
        %2552 = vst.msk [vmem:[#allocation2 + $0x18] sm:$0xff] %vm2044, %v2522
        %2553 = vst.msk [vmem:[#allocation2 + $0x20] sm:$0xff] %vm2044, %v2523
        %2554 = vst.msk [vmem:[#allocation2 + $0x28] sm:$0xff] %vm2044, %v2524
        %2555 = vst.msk [vmem:[#allocation2 + $0x30] sm:$0xff] %vm2044, %v2525
        %2556 = vst.msk [vmem:[#allocation2 + $0x38] sm:$0xff] %vm2044, %v2526
        %2557 = vst.msk [vmem:[#allocation2 + $0x40] sm:$0xff] %vm2044, %v2527
        %2558 = vst.msk [vmem:[#allocation2 + $0x48] sm:$0xff] %vm2044, %v2528
        %2559 = vst.msk [vmem:[#allocation2 + $0x50] sm:$0xff] %vm2044, %v2529
        %2560 = vst.msk [vmem:[#allocation2 + $0x58] sm:$0xff] %vm2044, %v2530
        %2561 = vst.msk [vmem:[#allocation2 + $0x60] sm:$0xff] %vm2044, %v2531
        %2562 = vst.msk [vmem:[#allocation2 + $0x68] sm:$0xff] %vm2044, %v2532
        %2563 = vst.msk [vmem:[#allocation2 + $0x70] sm:$0xff] %vm2044, %v2533
        %2564 = vst.msk [vmem:[#allocation2 + $0x78] sm:$0xff] %vm2044, %v2534
        %2565 = vst.msk [vmem:[#allocation2 + $0x80] sm:$0xff] %vm2044, %v2535
        %2566 = vst.msk [vmem:[#allocation2 + $0x88] sm:$0xff] %vm2044, %v2536
        %2567 = vst.msk [vmem:[#allocation2 + $0x90] sm:$0xff] %vm2044, %v2537
        %2568 = vst.msk [vmem:[#allocation2 + $0x98] sm:$0xff] %vm2044, %v2538
        %2569 = vst.msk [vmem:[#allocation2 + $0xa0] sm:$0xff] %vm2044, %v2539
        %2570 = vst.msk [vmem:[#allocation2 + $0xa8] sm:$0xff] %vm2044, %v2540
        %2571 = vst.msk [vmem:[#allocation2 + $0xb0] sm:$0xff] %vm2044, %v2541
        %2572 = vst.msk [vmem:[#allocation2 + $0xb8] sm:$0xff] %vm2044, %v2542
        %2573 = vst.msk [vmem:[#allocation2 + $0xc0] sm:$0xff] %vm2044, %v2543
        %2574 = vst.msk [vmem:[#allocation2 + $0xc8] sm:$0xff] %vm2044, %v2544
        %2575 = vst.msk [vmem:[#allocation2 + $0xd0] sm:$0xff] %vm2044, %v2545
        %2576 = vst.msk [vmem:[#allocation2 + $0xd8] sm:$0xff] %vm2044, %v2546
        %2577 = vst.msk [vmem:[#allocation2 + $0xe0] sm:$0xff] %vm2044, %v2547
        %2578 = vst.msk [vmem:[#allocation2 + $0xe8] sm:$0xff] %vm2044, %v2548
        %2579 = vst.msk [vmem:[#allocation2 + $0xf0] sm:$0xff] %vm2044, %v2549
        %2580 = vst.msk [vmem:[#allocation2 + $0xf8] sm:$0xff] %vm2044, %v2550
        %v2581 = vld [vmem:[#allocation2] sm:$0xff]
        %v2582 = vld [vmem:[#allocation2 + $0x8] sm:$0xff]
        %v2583 = vld [vmem:[#allocation2 + $0x10] sm:$0xff]
        %v2584 = vld [vmem:[#allocation2 + $0x18] sm:$0xff]
        %v2585 = vld [vmem:[#allocation2 + $0x20] sm:$0xff]
        %v2586 = vld [vmem:[#allocation2 + $0x28] sm:$0xff]
        %v2587 = vld [vmem:[#allocation2 + $0x30] sm:$0xff]
        %v2588 = vld [vmem:[#allocation2 + $0x38] sm:$0xff]
        %v2589 = vld [vmem:[#allocation2 + $0x40] sm:$0xff]
        %v2590 = vld [vmem:[#allocation2 + $0x48] sm:$0xff]
        %v2591 = vld [vmem:[#allocation2 + $0x50] sm:$0xff]
        %v2592 = vld [vmem:[#allocation2 + $0x58] sm:$0xff]
        %v2593 = vld [vmem:[#allocation2 + $0x60] sm:$0xff]
        %v2594 = vld [vmem:[#allocation2 + $0x68] sm:$0xff]
        %v2595 = vld [vmem:[#allocation2 + $0x70] sm:$0xff]
        %v2596 = vld [vmem:[#allocation2 + $0x78] sm:$0xff]
        %v2597 = vld [vmem:[#allocation2 + $0x80] sm:$0xff]
        %v2598 = vld [vmem:[#allocation2 + $0x88] sm:$0xff]
        %v2599 = vld [vmem:[#allocation2 + $0x90] sm:$0xff]
        %v2600 = vld [vmem:[#allocation2 + $0x98] sm:$0xff]
        %v2601 = vld [vmem:[#allocation2 + $0xa0] sm:$0xff]
        %v2602 = vld [vmem:[#allocation2 + $0xa8] sm:$0xff]
        %v2603 = vld [vmem:[#allocation2 + $0xb0] sm:$0xff]
        %v2604 = vld [vmem:[#allocation2 + $0xb8] sm:$0xff]
        %v2605 = vld [vmem:[#allocation2 + $0xc0] sm:$0xff]
        %v2606 = vld [vmem:[#allocation2 + $0xc8] sm:$0xff]
        %v2607 = vld [vmem:[#allocation2 + $0xd0] sm:$0xff]
        %v2608 = vld [vmem:[#allocation2 + $0xd8] sm:$0xff]
        %v2609 = vld [vmem:[#allocation2 + $0xe0] sm:$0xff]
        %v2610 = vld [vmem:[#allocation2 + $0xe8] sm:$0xff]
        %2611 = vrot.lane.b32.xlu0 %v2213, 120
        %v2612 = vpop.permute.xlu0 %2611
        %2613 = vrot.lane.b32.xlu0 %v2216, 120
        %v2614 = vpop.permute.xlu0 %2613
        %2615 = vrot.lane.b32.xlu0 %v2221, 120
        %v2616 = vpop.permute.xlu0 %2615
        %2617 = vrot.lane.b32.xlu0 %v2224, 120
        %v2618 = vpop.permute.xlu0 %2617
        %2619 = vrot.lane.b32.xlu0 %v2229, 120
        %v2620 = vpop.permute.xlu0 %2619
        %2621 = vrot.lane.b32.xlu0 %v2232, 120
        %v2622 = vpop.permute.xlu0 %2621
        %2623 = vrot.lane.b32.xlu0 %v2237, 120
        %v2624 = vpop.permute.xlu0 %2623
        %2625 = vrot.lane.b32.xlu0 %v2240, 120
        %v2626 = vpop.permute.xlu0 %2625
        %2627 = vrot.lane.b32.xlu0 %v2245, 120
        %v2628 = vpop.permute.xlu0 %2627
        %2629 = vrot.lane.b32.xlu0 %v2248, 120
        %v2630 = vpop.permute.xlu0 %2629
        %2631 = vrot.lane.b32.xlu0 %v2253, 120
        %v2632 = vpop.permute.xlu0 %2631
        %2633 = vrot.lane.b32.xlu0 %v2256, 120
        %v2634 = vpop.permute.xlu0 %2633
        %2635 = vrot.lane.b32.xlu0 %v2261, 120
        %v2636 = vpop.permute.xlu0 %2635
        %2637 = vrot.lane.b32.xlu0 %v2264, 120
        %v2638 = vpop.permute.xlu0 %2637
        %2639 = vrot.lane.b32.xlu0 %v2269, 120
        %v2640 = vpop.permute.xlu0 %2639
        %2641 = vrot.lane.b32.xlu0 %v2272, 120
        %v2642 = vpop.permute.xlu0 %2641
        %2643 = vrot.lane.b32.xlu0 %v2277, 120
        %v2644 = vpop.permute.xlu0 %2643
        %2645 = vrot.lane.b32.xlu0 %v2280, 120
        %v2646 = vpop.permute.xlu0 %2645
        %2647 = vrot.lane.b32.xlu0 %v2285, 120
        %v2648 = vpop.permute.xlu0 %2647
        %2649 = vrot.lane.b32.xlu0 %v2288, 120
        %v2650 = vpop.permute.xlu0 %2649
        %2651 = vrot.lane.b32.xlu0 %v2293, 120
        %v2652 = vpop.permute.xlu0 %2651
        %2653 = vrot.lane.b32.xlu0 %v2296, 120
        %v2654 = vpop.permute.xlu0 %2653
        %2655 = vrot.lane.b32.xlu0 %v2301, 120
        %v2656 = vpop.permute.xlu0 %2655
        %2657 = vrot.lane.b32.xlu0 %v2304, 120
        %v2658 = vpop.permute.xlu0 %2657
        %2659 = vrot.lane.b32.xlu0 %v2309, 120
        %v2660 = vpop.permute.xlu0 %2659
        %2661 = vrot.lane.b32.xlu0 %v2312, 120
        %v2662 = vpop.permute.xlu0 %2661
        %2663 = vrot.lane.b32.xlu0 %v2317, 120
        %v2664 = vpop.permute.xlu0 %2663
        %2665 = vrot.lane.b32.xlu0 %v2320, 120
        %v2666 = vpop.permute.xlu0 %2665
        %2667 = vrot.lane.b32.xlu0 %v2325, 120
        %v2668 = vpop.permute.xlu0 %2667
        %2669 = vrot.lane.b32.xlu0 %v2328, 120
        %v2670 = vpop.permute.xlu0 %2669
        %v2701 = vadd.f32 %v2581, %v2612
        %v2702 = vadd.f32 %v2582, %v2614
        %v2703 = vadd.f32 %v2583, %v2616
        %v2704 = vadd.f32 %v2584, %v2618
        %v2705 = vadd.f32 %v2585, %v2620
        %v2706 = vadd.f32 %v2586, %v2622
        %v2707 = vadd.f32 %v2587, %v2624
        %v2708 = vadd.f32 %v2588, %v2626
        %v2709 = vadd.f32 %v2589, %v2628
        %v2710 = vadd.f32 %v2590, %v2630
        %v2711 = vadd.f32 %v2591, %v2632
        %v2712 = vadd.f32 %v2592, %v2634
        %v2713 = vadd.f32 %v2593, %v2636
        %v2714 = vadd.f32 %v2594, %v2638
        %v2715 = vadd.f32 %v2595, %v2640
        %v2716 = vadd.f32 %v2596, %v2642
        %v2717 = vadd.f32 %v2597, %v2644
        %v2718 = vadd.f32 %v2598, %v2646
        %v2719 = vadd.f32 %v2599, %v2648
        %v2720 = vadd.f32 %v2600, %v2650
        %v2721 = vadd.f32 %v2601, %v2652
        %v2722 = vadd.f32 %v2602, %v2654
        %v2723 = vadd.f32 %v2603, %v2656
        %v2724 = vadd.f32 %v2604, %v2658
        %v2725 = vadd.f32 %v2605, %v2660
        %v2726 = vadd.f32 %v2606, %v2662
        %v2727 = vadd.f32 %v2607, %v2664
        %v2728 = vadd.f32 %v2608, %v2666
        %v2729 = vadd.f32 %v2609, %v2668
        %v2730 = vadd.f32 %v2610, %v2670
        %2731 = vst.msk [vmem:[#allocation2] sm:$0xff] %vm2044, %v2701
        %2732 = vst.msk [vmem:[#allocation2 + $0x8] sm:$0xff] %vm2044, %v2702
        %2733 = vst.msk [vmem:[#allocation2 + $0x10] sm:$0xff] %vm2044, %v2703
        %2734 = vst.msk [vmem:[#allocation2 + $0x18] sm:$0xff] %vm2044, %v2704
        %2735 = vst.msk [vmem:[#allocation2 + $0x20] sm:$0xff] %vm2044, %v2705
        %2736 = vst.msk [vmem:[#allocation2 + $0x28] sm:$0xff] %vm2044, %v2706
        %2737 = vst.msk [vmem:[#allocation2 + $0x30] sm:$0xff] %vm2044, %v2707
        %2738 = vst.msk [vmem:[#allocation2 + $0x38] sm:$0xff] %vm2044, %v2708
        %2739 = vst.msk [vmem:[#allocation2 + $0x40] sm:$0xff] %vm2044, %v2709
        %2740 = vst.msk [vmem:[#allocation2 + $0x48] sm:$0xff] %vm2044, %v2710
        %2741 = vst.msk [vmem:[#allocation2 + $0x50] sm:$0xff] %vm2044, %v2711
        %2742 = vst.msk [vmem:[#allocation2 + $0x58] sm:$0xff] %vm2044, %v2712
        %2743 = vst.msk [vmem:[#allocation2 + $0x60] sm:$0xff] %vm2044, %v2713
        %2744 = vst.msk [vmem:[#allocation2 + $0x68] sm:$0xff] %vm2044, %v2714
        %2745 = vst.msk [vmem:[#allocation2 + $0x70] sm:$0xff] %vm2044, %v2715
        %2746 = vst.msk [vmem:[#allocation2 + $0x78] sm:$0xff] %vm2044, %v2716
        %2747 = vst.msk [vmem:[#allocation2 + $0x80] sm:$0xff] %vm2044, %v2717
        %2748 = vst.msk [vmem:[#allocation2 + $0x88] sm:$0xff] %vm2044, %v2718
        %2749 = vst.msk [vmem:[#allocation2 + $0x90] sm:$0xff] %vm2044, %v2719
        %2750 = vst.msk [vmem:[#allocation2 + $0x98] sm:$0xff] %vm2044, %v2720
        %2751 = vst.msk [vmem:[#allocation2 + $0xa0] sm:$0xff] %vm2044, %v2721
        %2752 = vst.msk [vmem:[#allocation2 + $0xa8] sm:$0xff] %vm2044, %v2722
        %2753 = vst.msk [vmem:[#allocation2 + $0xb0] sm:$0xff] %vm2044, %v2723
        %2754 = vst.msk [vmem:[#allocation2 + $0xb8] sm:$0xff] %vm2044, %v2724
        %2755 = vst.msk [vmem:[#allocation2 + $0xc0] sm:$0xff] %vm2044, %v2725
        %2756 = vst.msk [vmem:[#allocation2 + $0xc8] sm:$0xff] %vm2044, %v2726
        %2757 = vst.msk [vmem:[#allocation2 + $0xd0] sm:$0xff] %vm2044, %v2727
        %2758 = vst.msk [vmem:[#allocation2 + $0xd8] sm:$0xff] %vm2044, %v2728
        %2759 = vst.msk [vmem:[#allocation2 + $0xe0] sm:$0xff] %vm2044, %v2729
        %2760 = vst.msk [vmem:[#allocation2 + $0xe8] sm:$0xff] %vm2044, %v2730
        %v2761 = vld [vmem:[#allocation2] sm:$0xff]
        %v2762 = vld [vmem:[#allocation2 + $0x8] sm:$0xff]
        %v2763 = vld [vmem:[#allocation2 + $0x10] sm:$0xff]
        %v2764 = vld [vmem:[#allocation2 + $0x18] sm:$0xff]
        %v2765 = vld [vmem:[#allocation2 + $0x20] sm:$0xff]
        %v2766 = vld [vmem:[#allocation2 + $0x28] sm:$0xff]
        %v2767 = vld [vmem:[#allocation2 + $0x30] sm:$0xff]
        %v2768 = vld [vmem:[#allocation2 + $0x38] sm:$0xff]
        %v2769 = vld [vmem:[#allocation2 + $0x40] sm:$0xff]
        %v2770 = vld [vmem:[#allocation2 + $0x48] sm:$0xff]
        %v2771 = vld [vmem:[#allocation2 + $0x50] sm:$0xff]
        %v2772 = vld [vmem:[#allocation2 + $0x58] sm:$0xff]
        %v2773 = vld [vmem:[#allocation2 + $0x60] sm:$0xff]
        %v2774 = vld [vmem:[#allocation2 + $0x68] sm:$0xff]
        %v2775 = vld [vmem:[#allocation2 + $0x70] sm:$0xff]
        %v2776 = vld [vmem:[#allocation2 + $0x78] sm:$0xff]
        %v2777 = vld [vmem:[#allocation2 + $0x80] sm:$0xff]
        %v2778 = vld [vmem:[#allocation2 + $0x88] sm:$0xff]
        %v2779 = vld [vmem:[#allocation2 + $0x90] sm:$0xff]
        %v2780 = vld [vmem:[#allocation2 + $0x98] sm:$0xff]
        %v2781 = vld [vmem:[#allocation2 + $0xa0] sm:$0xff]
        %v2782 = vld [vmem:[#allocation2 + $0xa8] sm:$0xff]
        %v2783 = vld [vmem:[#allocation2 + $0xb0] sm:$0xff]
        %v2784 = vld [vmem:[#allocation2 + $0xb8] sm:$0xff]
        %v2785 = vld [vmem:[#allocation2 + $0xc0] sm:$0xff]
        %v2786 = vld [vmem:[#allocation2 + $0xc8] sm:$0xff]
        %v2787 = vld [vmem:[#allocation2 + $0xd0] sm:$0xff]
        %v2788 = vld [vmem:[#allocation2 + $0xd8] sm:$0xff]
        %v2789 = vld [vmem:[#allocation2 + $0xe0] sm:$0xff]
        %v2790 = vld [vmem:[#allocation2 + $0xe8] sm:$0xff]
        %v2791 = vld [vmem:[#allocation2 + $0xf0] sm:$0xff]
        %v2792 = vld [vmem:[#allocation2 + $0xf8] sm:$0xff]
        %v2793 = vld [vmem:[%s5] sm:$0x1]
        %v2795 = vlaneseq
        %v2796 = vshrl.u32 %v2795, 7
        %v2797 = vsub.s32 0, %v2796
        %v2798 = vrot.slane %v2793, %v2797
        %v2800 = vmul.f32 %v2761, %v2798
        %v2801 = vmul.f32 %v2762, %v2798
        %v2802 = vmul.f32 %v2763, %v2798
        %v2803 = vmul.f32 %v2764, %v2798
        %v2804 = vmul.f32 %v2765, %v2798
        %v2805 = vmul.f32 %v2766, %v2798
        %v2806 = vmul.f32 %v2767, %v2798
        %v2807 = vmul.f32 %v2768, %v2798
        %v2808 = vmul.f32 %v2769, %v2798
        %v2809 = vmul.f32 %v2770, %v2798
        %v2810 = vmul.f32 %v2771, %v2798
        %v2811 = vmul.f32 %v2772, %v2798
        %v2812 = vmul.f32 %v2773, %v2798
        %v2813 = vmul.f32 %v2774, %v2798
        %v2814 = vmul.f32 %v2775, %v2798
        %v2815 = vmul.f32 %v2776, %v2798
        %v2816 = vmul.f32 %v2777, %v2798
        %v2817 = vmul.f32 %v2778, %v2798
        %v2818 = vmul.f32 %v2779, %v2798
        %v2819 = vmul.f32 %v2780, %v2798
        %v2820 = vmul.f32 %v2781, %v2798
        %v2821 = vmul.f32 %v2782, %v2798
        %v2822 = vmul.f32 %v2783, %v2798
        %v2823 = vmul.f32 %v2784, %v2798
        %v2824 = vmul.f32 %v2785, %v2798
        %v2825 = vmul.f32 %v2786, %v2798
        %v2826 = vmul.f32 %v2787, %v2798
        %v2827 = vmul.f32 %v2788, %v2798
        %v2828 = vmul.f32 %v2789, %v2798
        %v2829 = vmul.f32 %v2790, %v2798
        %v2830 = vmul.f32 %v2791, %v2798
        %v2831 = vmul.f32 %v2792, %v2798
        %v2832 = vld [vmem:[%s6] sm:$0x1]
        %v2834 = vlaneseq
        %v2835 = vshrl.u32 %v2834, 7
        %v2836 = vsub.s32 0, %v2835
        %v2837 = vrot.slane %v2832, %v2836
        %v2839 = vadd.f32 %v2800, %v2837
        %v2840 = vadd.f32 %v2801, %v2837
        %v2841 = vadd.f32 %v2802, %v2837
        %v2842 = vadd.f32 %v2803, %v2837
        %v2843 = vadd.f32 %v2804, %v2837
        %v2844 = vadd.f32 %v2805, %v2837
        %v2845 = vadd.f32 %v2806, %v2837
        %v2846 = vadd.f32 %v2807, %v2837
        %v2847 = vadd.f32 %v2808, %v2837
        %v2848 = vadd.f32 %v2809, %v2837
        %v2849 = vadd.f32 %v2810, %v2837
        %v2850 = vadd.f32 %v2811, %v2837
        %v2851 = vadd.f32 %v2812, %v2837
        %v2852 = vadd.f32 %v2813, %v2837
        %v2853 = vadd.f32 %v2814, %v2837
        %v2854 = vadd.f32 %v2815, %v2837
        %v2855 = vadd.f32 %v2816, %v2837
        %v2856 = vadd.f32 %v2817, %v2837
        %v2857 = vadd.f32 %v2818, %v2837
        %v2858 = vadd.f32 %v2819, %v2837
        %v2859 = vadd.f32 %v2820, %v2837
        %v2860 = vadd.f32 %v2821, %v2837
        %v2861 = vadd.f32 %v2822, %v2837
        %v2862 = vadd.f32 %v2823, %v2837
        %v2863 = vadd.f32 %v2824, %v2837
        %v2864 = vadd.f32 %v2825, %v2837
        %v2865 = vadd.f32 %v2826, %v2837
        %v2866 = vadd.f32 %v2827, %v2837
        %v2867 = vadd.f32 %v2828, %v2837
        %v2868 = vadd.f32 %v2829, %v2837
        %v2869 = vadd.f32 %v2830, %v2837
        %v2870 = vadd.f32 %v2831, %v2837
        %v2871 = vmax.f32 %v2839, 0.0
        %v2872 = vmax.f32 %v2840, 0.0
        %v2873 = vmax.f32 %v2841, 0.0
        %v2874 = vmax.f32 %v2842, 0.0
        %v2875 = vmax.f32 %v2843, 0.0
        %v2876 = vmax.f32 %v2844, 0.0
        %v2877 = vmax.f32 %v2845, 0.0
        %v2878 = vmax.f32 %v2846, 0.0
        %v2879 = vmax.f32 %v2847, 0.0
        %v2880 = vmax.f32 %v2848, 0.0
        %v2881 = vmax.f32 %v2849, 0.0
        %v2882 = vmax.f32 %v2850, 0.0
        %v2883 = vmax.f32 %v2851, 0.0
        %v2884 = vmax.f32 %v2852, 0.0
        %v2885 = vmax.f32 %v2853, 0.0
        %v2886 = vmax.f32 %v2854, 0.0
        %v2887 = vmax.f32 %v2855, 0.0
        %v2888 = vmax.f32 %v2856, 0.0
        %v2889 = vmax.f32 %v2857, 0.0
        %v2890 = vmax.f32 %v2858, 0.0
        %v2891 = vmax.f32 %v2859, 0.0
        %v2892 = vmax.f32 %v2860, 0.0
        %v2893 = vmax.f32 %v2861, 0.0
        %v2894 = vmax.f32 %v2862, 0.0
        %v2895 = vmax.f32 %v2863, 0.0
        %v2896 = vmax.f32 %v2864, 0.0
        %v2897 = vmax.f32 %v2865, 0.0
        %v2898 = vmax.f32 %v2866, 0.0
        %v2899 = vmax.f32 %v2867, 0.0
        %v2900 = vmax.f32 %v2868, 0.0
        %v2901 = vmax.f32 %v2869, 0.0
        %v2902 = vmax.f32 %v2870, 0.0
        %v2903 = vpack.c.bf16 %v2872, %v2871
        %v2904 = vpack.c.bf16 %v2874, %v2873
        %v2905 = vpack.c.bf16 %v2876, %v2875
        %v2906 = vpack.c.bf16 %v2878, %v2877
        %v2907 = vpack.c.bf16 %v2880, %v2879
        %v2908 = vpack.c.bf16 %v2882, %v2881
        %v2909 = vpack.c.bf16 %v2884, %v2883
        %v2910 = vpack.c.bf16 %v2886, %v2885
        %v2911 = vpack.c.bf16 %v2888, %v2887
        %v2912 = vpack.c.bf16 %v2890, %v2889
        %v2913 = vpack.c.bf16 %v2892, %v2891
        %v2914 = vpack.c.bf16 %v2894, %v2893
        %v2915 = vpack.c.bf16 %v2896, %v2895
        %v2916 = vpack.c.bf16 %v2898, %v2897
        %v2917 = vpack.c.bf16 %v2900, %v2899
        %v2918 = vpack.c.bf16 %v2902, %v2901
        %v2919 = vld [vmem:[%s7] sm:$0x3]
        %v2921 = vsel %vm2044, %v2903, 0
        %v2924 = vsel %vm2044, %v2904, 0
        %v2927 = vsel %vm2044, %v2905, 0
        %v2930 = vsel %vm2044, %v2906, 0
        %v2933 = vsel %vm2044, %v2907, 0
        %v2936 = vsel %vm2044, %v2908, 0
        %v2939 = vsel %vm2044, %v2909, 0
        %v2942 = vsel %vm2044, %v2910, 0
        %v2945 = vsel %vm2044, %v2911, 0
        %v2948 = vsel %vm2044, %v2912, 0
        %v2951 = vsel %vm2044, %v2913, 0
        %v2954 = vsel %vm2044, %v2914, 0
        %v2957 = vsel %vm2044, %v2915, 0
        %v2960 = vsel %vm2044, %v2916, 0
        %v2963 = vsel %vm2044, %v2917, 0
        %v2966 = vsel %vm2044, %v2918, 0
        %vm2968 = vcmask 1041408
        %v2970 = vsel %vm2968, %v2919, 0
        %2972 = vmatprep.subr.bf16.mxu0 0
        %2973 = vmatpush1.bf16.msra.mxu0 %v2970
        %2974 = vmatprep.subr.bf16.mxu0 0
        %2975 = vmatpush1.bf16.msra.mxu0 0
        %2976 = vmatprep.subr.bf16.mxu0 0
        %2977 = vmatpush1.bf16.msra.mxu0 0
        %2978 = vmatprep.subr.bf16.mxu0 0
        %2979 = vmatpush1.bf16.msra.mxu0 0
        %2980 = vmatprep.subr.bf16.mxu0 0
        %2981 = vmatpush1.bf16.msra.mxu0 0
        %2982 = vmatprep.subr.bf16.mxu0 0
        %2983 = vmatpush1.bf16.msra.mxu0 0
        %2984 = vmatprep.subr.bf16.mxu0 0
        %2985 = vmatpush1.bf16.msra.mxu0 0
        %2986 = vmatprep.subr.bf16.mxu0 0
        %2987 = vmatpush1.bf16.msra.mxu0 0
        %2988 = vmatprep.subr.bf16.mxu0 0
        %2989 = vmatpush1.bf16.msra.mxu0 0
        %2990 = vmatprep.subr.bf16.mxu0 0
        %2991 = vmatpush1.bf16.msra.mxu0 0
        %2992 = vmatprep.subr.bf16.mxu0 0
        %2993 = vmatpush1.bf16.msra.mxu0 0
        %2994 = vmatprep.subr.bf16.mxu0 0
        %2995 = vmatpush1.bf16.msra.mxu0 0
        %2996 = vmatprep.subr.bf16.mxu0 0
        %2997 = vmatpush1.bf16.msra.mxu0 0
        %2998 = vmatprep.subr.bf16.mxu0 0
        %2999 = vmatpush1.bf16.msra.mxu0 0
        %3000 = vmatprep.subr.bf16.mxu0 0
        %3001 = vmatpush1.bf16.msra.mxu0 0
        %3002 = vmatprep.subr.bf16.mxu0 0
        %3003 = vmatpush1.bf16.msra.mxu0 0
        %3004 = vmatprep.mubr.bf16.mxu0 0
        %3005 = vmatmul.mubr.bf16.gmra.mrb[0].mxu0 %v2921
        %v3006 = vpop.f32.mrb[0].mxu0
        %v3007 = vadd.f32 0.0, %v3006
        %v3008 = vpop.f32.mrb[0].mxu0
        %v3009 = vpop.f32.mrb[0].mxu0
        %v3010 = vadd.f32 0.0, %v3009
        %v3011 = vpop.f32.mrb[0].mxu0
        %3012 = vmatprep.mubr.bf16.mxu0 0
        %3013 = vmatmul.mubr.bf16.gmra.mrb[0].mxu0 %v2924
        %v3014 = vpop.f32.mrb[0].mxu0
        %v3015 = vadd.f32 0.0, %v3014
        %v3016 = vpop.f32.mrb[0].mxu0
        %v3017 = vpop.f32.mrb[0].mxu0
        %v3018 = vadd.f32 0.0, %v3017
        %v3019 = vpop.f32.mrb[0].mxu0
        %3020 = vmatprep.mubr.bf16.mxu0 0
        %3021 = vmatmul.mubr.bf16.gmra.mrb[0].mxu0 %v2927
        %v3022 = vpop.f32.mrb[0].mxu0
        %v3023 = vadd.f32 0.0, %v3022
        %v3024 = vpop.f32.mrb[0].mxu0
        %v3025 = vpop.f32.mrb[0].mxu0
        %v3026 = vadd.f32 0.0, %v3025
        %v3027 = vpop.f32.mrb[0].mxu0
        %3028 = vmatprep.mubr.bf16.mxu0 0
        %3029 = vmatmul.mubr.bf16.gmra.mrb[0].mxu0 %v2930
        %v3030 = vpop.f32.mrb[0].mxu0
        %v3031 = vadd.f32 0.0, %v3030
        %v3032 = vpop.f32.mrb[0].mxu0
        %v3033 = vpop.f32.mrb[0].mxu0
        %v3034 = vadd.f32 0.0, %v3033
        %v3035 = vpop.f32.mrb[0].mxu0
        %3036 = vmatprep.mubr.bf16.mxu0 0
        %3037 = vmatmul.mubr.bf16.gmra.mrb[0].mxu0 %v2933
        %v3038 = vpop.f32.mrb[0].mxu0
        %v3039 = vadd.f32 0.0, %v3038
        %v3040 = vpop.f32.mrb[0].mxu0
        %v3041 = vpop.f32.mrb[0].mxu0
        %v3042 = vadd.f32 0.0, %v3041
        %v3043 = vpop.f32.mrb[0].mxu0
        %3044 = vmatprep.mubr.bf16.mxu0 0
        %3045 = vmatmul.mubr.bf16.gmra.mrb[0].mxu0 %v2936
        %v3046 = vpop.f32.mrb[0].mxu0
        %v3047 = vadd.f32 0.0, %v3046
        %v3048 = vpop.f32.mrb[0].mxu0
        %v3049 = vpop.f32.mrb[0].mxu0
        %v3050 = vadd.f32 0.0, %v3049
        %v3051 = vpop.f32.mrb[0].mxu0
        %3052 = vmatprep.mubr.bf16.mxu0 0
        %3053 = vmatmul.mubr.bf16.gmra.mrb[0].mxu0 %v2939
        %v3054 = vpop.f32.mrb[0].mxu0
        %v3055 = vadd.f32 0.0, %v3054
        %v3056 = vpop.f32.mrb[0].mxu0
        %v3057 = vpop.f32.mrb[0].mxu0
        %v3058 = vadd.f32 0.0, %v3057
        %v3059 = vpop.f32.mrb[0].mxu0
        %3060 = vmatprep.mubr.bf16.mxu0 0
        %3061 = vmatmul.mubr.bf16.gmra.mrb[0].mxu0 %v2942
        %v3062 = vpop.f32.mrb[0].mxu0
        %v3063 = vadd.f32 0.0, %v3062
        %v3064 = vpop.f32.mrb[0].mxu0
        %v3065 = vpop.f32.mrb[0].mxu0
        %v3066 = vadd.f32 0.0, %v3065
        %v3067 = vpop.f32.mrb[0].mxu0
        %3068 = vmatprep.mubr.bf16.mxu0 0
        %3069 = vmatmul.mubr.bf16.gmra.mrb[0].mxu0 %v2945
        %v3070 = vpop.f32.mrb[0].mxu0
        %v3071 = vadd.f32 0.0, %v3070
        %v3072 = vpop.f32.mrb[0].mxu0
        %v3073 = vpop.f32.mrb[0].mxu0
        %v3074 = vadd.f32 0.0, %v3073
        %v3075 = vpop.f32.mrb[0].mxu0
        %3076 = vmatprep.mubr.bf16.mxu0 0
        %3077 = vmatmul.mubr.bf16.gmra.mrb[0].mxu0 %v2948
        %v3078 = vpop.f32.mrb[0].mxu0
        %v3079 = vadd.f32 0.0, %v3078
        %v3080 = vpop.f32.mrb[0].mxu0
        %v3081 = vpop.f32.mrb[0].mxu0
        %v3082 = vadd.f32 0.0, %v3081
        %v3083 = vpop.f32.mrb[0].mxu0
        %3084 = vmatprep.mubr.bf16.mxu0 0
        %3085 = vmatmul.mubr.bf16.gmra.mrb[0].mxu0 %v2951
        %v3086 = vpop.f32.mrb[0].mxu0
        %v3087 = vadd.f32 0.0, %v3086
        %v3088 = vpop.f32.mrb[0].mxu0
        %v3089 = vpop.f32.mrb[0].mxu0
        %v3090 = vadd.f32 0.0, %v3089
        %v3091 = vpop.f32.mrb[0].mxu0
        %3092 = vmatprep.mubr.bf16.mxu0 0
        %3093 = vmatmul.mubr.bf16.gmra.mrb[0].mxu0 %v2954
        %v3094 = vpop.f32.mrb[0].mxu0
        %v3095 = vadd.f32 0.0, %v3094
        %v3096 = vpop.f32.mrb[0].mxu0
        %v3097 = vpop.f32.mrb[0].mxu0
        %v3098 = vadd.f32 0.0, %v3097
        %v3099 = vpop.f32.mrb[0].mxu0
        %3100 = vmatprep.mubr.bf16.mxu0 0
        %3101 = vmatmul.mubr.bf16.gmra.mrb[0].mxu0 %v2957
        %v3102 = vpop.f32.mrb[0].mxu0
        %v3103 = vadd.f32 0.0, %v3102
        %v3104 = vpop.f32.mrb[0].mxu0
        %v3105 = vpop.f32.mrb[0].mxu0
        %v3106 = vadd.f32 0.0, %v3105
        %v3107 = vpop.f32.mrb[0].mxu0
        %3108 = vmatprep.mubr.bf16.mxu0 0
        %3109 = vmatmul.mubr.bf16.gmra.mrb[0].mxu0 %v2960
        %v3110 = vpop.f32.mrb[0].mxu0
        %v3111 = vadd.f32 0.0, %v3110
        %v3112 = vpop.f32.mrb[0].mxu0
        %v3113 = vpop.f32.mrb[0].mxu0
        %v3114 = vadd.f32 0.0, %v3113
        %v3115 = vpop.f32.mrb[0].mxu0
        %3116 = vmatprep.mubr.bf16.mxu0 0
        %3117 = vmatmul.mubr.bf16.gmra.mrb[0].mxu0 %v2963
        %v3118 = vpop.f32.mrb[0].mxu0
        %v3119 = vadd.f32 0.0, %v3118
        %v3120 = vpop.f32.mrb[0].mxu0
        %v3121 = vpop.f32.mrb[0].mxu0
        %v3122 = vadd.f32 0.0, %v3121
        %v3123 = vpop.f32.mrb[0].mxu0
        %3124 = vmatprep.mubr.bf16.mxu0 0
        %3125 = vmatmul.mubr.bf16.gmra.mrb[0].mxu0 %v2966
        %v3126 = vpop.f32.mrb[0].mxu0
        %v3127 = vadd.f32 0.0, %v3126
        %v3128 = vpop.f32.mrb[0].mxu0
        %v3129 = vpop.f32.mrb[0].mxu0
        %v3130 = vadd.f32 0.0, %v3129
        %v3131 = vpop.f32.mrb[0].mxu0
        %3132 = vdwg.mxu0
        %v3133 = vld [vmem:[%s8] sm:$0x1]
        %v3135 = vlaneseq
        %v3136 = vshrl.u32 %v3135, 7
        %v3137 = vsub.s32 0, %v3136
        %v3138 = vrot.slane %v3133, %v3137
        %v3140 = vmul.f32 %v3007, %v3138
        %v3141 = vmul.f32 %v3010, %v3138
        %v3142 = vmul.f32 %v3015, %v3138
        %v3143 = vmul.f32 %v3018, %v3138
        %v3144 = vmul.f32 %v3023, %v3138
        %v3145 = vmul.f32 %v3026, %v3138
        %v3146 = vmul.f32 %v3031, %v3138
        %v3147 = vmul.f32 %v3034, %v3138
        %v3148 = vmul.f32 %v3039, %v3138
        %v3149 = vmul.f32 %v3042, %v3138
        %v3150 = vmul.f32 %v3047, %v3138
        %v3151 = vmul.f32 %v3050, %v3138
        %v3152 = vmul.f32 %v3055, %v3138
        %v3153 = vmul.f32 %v3058, %v3138
        %v3154 = vmul.f32 %v3063, %v3138
        %v3155 = vmul.f32 %v3066, %v3138
        %v3156 = vmul.f32 %v3071, %v3138
        %v3157 = vmul.f32 %v3074, %v3138
        %v3158 = vmul.f32 %v3079, %v3138
        %v3159 = vmul.f32 %v3082, %v3138
        %v3160 = vmul.f32 %v3087, %v3138
        %v3161 = vmul.f32 %v3090, %v3138
        %v3162 = vmul.f32 %v3095, %v3138
        %v3163 = vmul.f32 %v3098, %v3138
        %v3164 = vmul.f32 %v3103, %v3138
        %v3165 = vmul.f32 %v3106, %v3138
        %v3166 = vmul.f32 %v3111, %v3138
        %v3167 = vmul.f32 %v3114, %v3138
        %v3168 = vmul.f32 %v3119, %v3138
        %v3169 = vmul.f32 %v3122, %v3138
        %v3170 = vmul.f32 %v3127, %v3138
        %v3171 = vmul.f32 %v3130, %v3138
        %v3172 = vld [vmem:[%s9] sm:$0x1]
        %v3174 = vlaneseq
        %v3175 = vshrl.u32 %v3174, 7
        %v3176 = vsub.s32 0, %v3175
        %v3177 = vrot.slane %v3172, %v3176
        %v3179 = vadd.f32 %v3140, %v3177
        %v3180 = vadd.f32 %v3141, %v3177
        %v3181 = vadd.f32 %v3142, %v3177
        %v3182 = vadd.f32 %v3143, %v3177
        %v3183 = vadd.f32 %v3144, %v3177
        %v3184 = vadd.f32 %v3145, %v3177
        %v3185 = vadd.f32 %v3146, %v3177
        %v3186 = vadd.f32 %v3147, %v3177
        %v3187 = vadd.f32 %v3148, %v3177
        %v3188 = vadd.f32 %v3149, %v3177
        %v3189 = vadd.f32 %v3150, %v3177
        %v3190 = vadd.f32 %v3151, %v3177
        %v3191 = vadd.f32 %v3152, %v3177
        %v3192 = vadd.f32 %v3153, %v3177
        %v3193 = vadd.f32 %v3154, %v3177
        %v3194 = vadd.f32 %v3155, %v3177
        %v3195 = vadd.f32 %v3156, %v3177
        %v3196 = vadd.f32 %v3157, %v3177
        %v3197 = vadd.f32 %v3158, %v3177
        %v3198 = vadd.f32 %v3159, %v3177
        %v3199 = vadd.f32 %v3160, %v3177
        %v3200 = vadd.f32 %v3161, %v3177
        %v3201 = vadd.f32 %v3162, %v3177
        %v3202 = vadd.f32 %v3163, %v3177
        %v3203 = vadd.f32 %v3164, %v3177
        %v3204 = vadd.f32 %v3165, %v3177
        %v3205 = vadd.f32 %v3166, %v3177
        %v3206 = vadd.f32 %v3167, %v3177
        %v3207 = vadd.f32 %v3168, %v3177
        %v3208 = vadd.f32 %v3169, %v3177
        %v3209 = vadd.f32 %v3170, %v3177
        %v3210 = vadd.f32 %v3171, %v3177
        %v3211 = vld [vmem:[%s341] sm:$0xf]
        %v3212 = vld [vmem:[%s341 + $0x4] sm:$0xf]
        %v3213 = vld [vmem:[%s341 + $0x8] sm:$0xf]
        %v3214 = vld [vmem:[%s341 + $0xc] sm:$0xf]
        %v3215 = vld [vmem:[%s341 + $0x10] sm:$0xf]
        %v3216 = vld [vmem:[%s341 + $0x14] sm:$0xf]
        %v3217 = vld [vmem:[%s341 + $0x18] sm:$0xf]
        %v3218 = vld [vmem:[%s341 + $0x1c] sm:$0xf]
        %v3219 = vld [vmem:[%s341 + $0x20] sm:$0xf]
        %v3220 = vld [vmem:[%s341 + $0x24] sm:$0xf]
        %v3221 = vld [vmem:[%s341 + $0x28] sm:$0xf]
        %v3222 = vld [vmem:[%s341 + $0x2c] sm:$0xf]
        %v3223 = vld [vmem:[%s341 + $0x30] sm:$0xf]
        %v3224 = vld [vmem:[%s341 + $0x34] sm:$0xf]
        %v3225 = vld [vmem:[%s341 + $0x38] sm:$0xf]
        %v3226 = vld [vmem:[%s341 + $0x3c] sm:$0xf]
        %v3227 = vld [vmem:[%s341 + $0x40] sm:$0xf]
        %v3228 = vld [vmem:[%s341 + $0x44] sm:$0xf]
        %v3229 = vld [vmem:[%s341 + $0x48] sm:$0xf]
        %v3230 = vld [vmem:[%s341 + $0x4c] sm:$0xf]
        %v3231 = vld [vmem:[%s341 + $0x50] sm:$0xf]
        %v3232 = vld [vmem:[%s341 + $0x54] sm:$0xf]
        %v3233 = vld [vmem:[%s341 + $0x58] sm:$0xf]
        %v3234 = vld [vmem:[%s341 + $0x5c] sm:$0xf]
        %v3235 = vld [vmem:[%s341 + $0x60] sm:$0xf]
        %v3236 = vld [vmem:[%s341 + $0x64] sm:$0xf]
        %v3237 = vld [vmem:[%s341 + $0x68] sm:$0xf]
        %v3238 = vld [vmem:[%s341 + $0x6c] sm:$0xf]
        %v3239 = vld [vmem:[%s341 + $0x70] sm:$0xf]
        %v3240 = vld [vmem:[%s341 + $0x74] sm:$0xf]
        %v3241 = vld [vmem:[%s341 + $0x78] sm:$0xf]
        %v3242 = vld [vmem:[%s341 + $0x7c] sm:$0xf]
        %v3243 = vunpack.c.l.bf16 %v3211
        %v3244 = vunpack.c.l.bf16 %v3212
        %v3245 = vunpack.c.l.bf16 %v3213
        %v3246 = vunpack.c.l.bf16 %v3214
        %v3247 = vunpack.c.l.bf16 %v3215
        %v3248 = vunpack.c.l.bf16 %v3216
        %v3249 = vunpack.c.l.bf16 %v3217
        %v3250 = vunpack.c.l.bf16 %v3218
        %v3251 = vunpack.c.l.bf16 %v3219
        %v3252 = vunpack.c.l.bf16 %v3220
        %v3253 = vunpack.c.l.bf16 %v3221
        %v3254 = vunpack.c.l.bf16 %v3222
        %v3255 = vunpack.c.l.bf16 %v3223
        %v3256 = vunpack.c.l.bf16 %v3224
        %v3257 = vunpack.c.l.bf16 %v3225
        %v3258 = vunpack.c.l.bf16 %v3226
        %v3259 = vunpack.c.l.bf16 %v3227
        %v3260 = vunpack.c.l.bf16 %v3228
        %v3261 = vunpack.c.l.bf16 %v3229
        %v3262 = vunpack.c.l.bf16 %v3230
        %v3263 = vunpack.c.l.bf16 %v3231
        %v3264 = vunpack.c.l.bf16 %v3232
        %v3265 = vunpack.c.l.bf16 %v3233
        %v3266 = vunpack.c.l.bf16 %v3234
        %v3267 = vunpack.c.l.bf16 %v3235
        %v3268 = vunpack.c.l.bf16 %v3236
        %v3269 = vunpack.c.l.bf16 %v3237
        %v3270 = vunpack.c.l.bf16 %v3238
        %v3271 = vunpack.c.l.bf16 %v3239
        %v3272 = vunpack.c.l.bf16 %v3240
        %v3273 = vunpack.c.l.bf16 %v3241
        %v3274 = vunpack.c.l.bf16 %v3242
        %v3275 = vadd.f32 %v3179, %v3243
        %v3276 = vadd.f32 %v3180, %v3244
        %v3277 = vadd.f32 %v3181, %v3245
        %v3278 = vadd.f32 %v3182, %v3246
        %v3279 = vadd.f32 %v3183, %v3247
        %v3280 = vadd.f32 %v3184, %v3248
        %v3281 = vadd.f32 %v3185, %v3249
        %v3282 = vadd.f32 %v3186, %v3250
        %v3283 = vadd.f32 %v3187, %v3251
        %v3284 = vadd.f32 %v3188, %v3252
        %v3285 = vadd.f32 %v3189, %v3253
        %v3286 = vadd.f32 %v3190, %v3254
        %v3287 = vadd.f32 %v3191, %v3255
        %v3288 = vadd.f32 %v3192, %v3256
        %v3289 = vadd.f32 %v3193, %v3257
        %v3290 = vadd.f32 %v3194, %v3258
        %v3291 = vadd.f32 %v3195, %v3259
        %v3292 = vadd.f32 %v3196, %v3260
        %v3293 = vadd.f32 %v3197, %v3261
        %v3294 = vadd.f32 %v3198, %v3262
        %v3295 = vadd.f32 %v3199, %v3263
        %v3296 = vadd.f32 %v3200, %v3264
        %v3297 = vadd.f32 %v3201, %v3265
        %v3298 = vadd.f32 %v3202, %v3266
        %v3299 = vadd.f32 %v3203, %v3267
        %v3300 = vadd.f32 %v3204, %v3268
        %v3301 = vadd.f32 %v3205, %v3269
        %v3302 = vadd.f32 %v3206, %v3270
        %v3303 = vadd.f32 %v3207, %v3271
        %v3304 = vadd.f32 %v3208, %v3272
        %v3305 = vadd.f32 %v3209, %v3273
        %v3306 = vadd.f32 %v3210, %v3274
        %v3307 = vmax.f32 %v3275, 0.0
        %v3308 = vmax.f32 %v3276, 0.0
        %v3309 = vmax.f32 %v3277, 0.0
        %v3310 = vmax.f32 %v3278, 0.0
        %v3311 = vmax.f32 %v3279, 0.0
        %v3312 = vmax.f32 %v3280, 0.0
        %v3313 = vmax.f32 %v3281, 0.0
        %v3314 = vmax.f32 %v3282, 0.0
        %v3315 = vmax.f32 %v3283, 0.0
        %v3316 = vmax.f32 %v3284, 0.0
        %v3317 = vmax.f32 %v3285, 0.0
        %v3318 = vmax.f32 %v3286, 0.0
        %v3319 = vmax.f32 %v3287, 0.0
        %v3320 = vmax.f32 %v3288, 0.0
        %v3321 = vmax.f32 %v3289, 0.0
        %v3322 = vmax.f32 %v3290, 0.0
        %v3323 = vmax.f32 %v3291, 0.0
        %v3324 = vmax.f32 %v3292, 0.0
        %v3325 = vmax.f32 %v3293, 0.0
        %v3326 = vmax.f32 %v3294, 0.0
        %v3327 = vmax.f32 %v3295, 0.0
        %v3328 = vmax.f32 %v3296, 0.0
        %v3329 = vmax.f32 %v3297, 0.0
        %v3330 = vmax.f32 %v3298, 0.0
        %v3331 = vmax.f32 %v3299, 0.0
        %v3332 = vmax.f32 %v3300, 0.0
        %v3333 = vmax.f32 %v3301, 0.0
        %v3334 = vmax.f32 %v3302, 0.0
        %v3335 = vmax.f32 %v3303, 0.0
        %v3336 = vmax.f32 %v3304, 0.0
        %v3337 = vmax.f32 %v3305, 0.0
        %v3338 = vmax.f32 %v3306, 0.0
        %v3339 = vpack.c.bf16 %v3308, %v3307
        %v3340 = vpack.c.bf16 %v3310, %v3309
        %v3341 = vpack.c.bf16 %v3312, %v3311
        %v3342 = vpack.c.bf16 %v3314, %v3313
        %v3343 = vpack.c.bf16 %v3316, %v3315
        %v3344 = vpack.c.bf16 %v3318, %v3317
        %v3345 = vpack.c.bf16 %v3320, %v3319
        %v3346 = vpack.c.bf16 %v3322, %v3321
        %v3347 = vpack.c.bf16 %v3324, %v3323
        %v3348 = vpack.c.bf16 %v3326, %v3325
        %v3349 = vpack.c.bf16 %v3328, %v3327
        %v3350 = vpack.c.bf16 %v3330, %v3329
        %v3351 = vpack.c.bf16 %v3332, %v3331
        %v3352 = vpack.c.bf16 %v3334, %v3333
        %v3353 = vpack.c.bf16 %v3336, %v3335
        %v3354 = vpack.c.bf16 %v3338, %v3337
        %v3371 = vunpack.c.l.b16 %v3339
        %v3372 = vunpack.c.h.b16 %v3339
        %v3373 = vunpack.c.l.b16 %v3340
        %v3374 = vunpack.c.h.b16 %v3340
        %v3375 = vunpack.c.l.b16 %v3341
        %v3376 = vunpack.c.h.b16 %v3341
        %v3377 = vunpack.c.l.b16 %v3342
        %v3378 = vunpack.c.h.b16 %v3342
        %v3379 = vunpack.c.l.b16 %v3343
        %v3380 = vunpack.c.h.b16 %v3343
        %v3381 = vunpack.c.l.b16 %v3344
        %v3382 = vunpack.c.h.b16 %v3344
        %v3383 = vunpack.c.l.b16 %v3345
        %v3384 = vunpack.c.h.b16 %v3345
        %v3385 = vunpack.c.l.b16 %v3346
        %v3386 = vunpack.c.h.b16 %v3346
        %v3387 = vunpack.c.l.b16 %v3347
        %v3388 = vunpack.c.h.b16 %v3347
        %v3389 = vunpack.c.l.b16 %v3348
        %v3390 = vunpack.c.h.b16 %v3348
        %v3391 = vunpack.c.l.b16 %v3349
        %v3392 = vunpack.c.h.b16 %v3349
        %v3393 = vunpack.c.l.b16 %v3350
        %v3394 = vunpack.c.h.b16 %v3350
        %v3395 = vunpack.c.l.b16 %v3351
        %v3396 = vunpack.c.h.b16 %v3351
        %v3397 = vunpack.c.l.b16 %v3352
        %v3398 = vunpack.c.h.b16 %v3352
        %v3399 = vunpack.c.l.b16 %v3353
        %v3400 = vunpack.c.h.b16 %v3353
        %v3401 = vunpack.c.l.b16 %v3354
        %v3402 = vunpack.c.h.b16 %v3354
        %v3403 = vpack.c.b16 %v3371, %v3371
        %v3404 = vpack.c.b16 %v3372, %v3372
        %v3405 = vpack.c.b16 %v3373, %v3373
        %v3406 = vpack.c.b16 %v3374, %v3374
        %v3407 = vpack.c.b16 %v3375, %v3375
        %v3408 = vpack.c.b16 %v3376, %v3376
        %v3409 = vpack.c.b16 %v3377, %v3377
        %v3410 = vpack.c.b16 %v3378, %v3378
        %v3411 = vpack.c.b16 %v3379, %v3379
        %v3412 = vpack.c.b16 %v3380, %v3380
        %v3413 = vpack.c.b16 %v3381, %v3381
        %v3414 = vpack.c.b16 %v3382, %v3382
        %v3415 = vpack.c.b16 %v3383, %v3383
        %v3416 = vpack.c.b16 %v3384, %v3384
        %v3417 = vpack.c.b16 %v3385, %v3385
        %v3418 = vpack.c.b16 %v3386, %v3386
        %v3419 = vpack.c.b16 %v3387, %v3387
        %v3420 = vpack.c.b16 %v3388, %v3388
        %v3421 = vpack.c.b16 %v3389, %v3389
        %v3422 = vpack.c.b16 %v3390, %v3390
        %v3423 = vpack.c.b16 %v3391, %v3391
        %v3424 = vpack.c.b16 %v3392, %v3392
        %v3425 = vpack.c.b16 %v3393, %v3393
        %v3426 = vpack.c.b16 %v3394, %v3394
        %v3427 = vpack.c.b16 %v3395, %v3395
        %v3428 = vpack.c.b16 %v3396, %v3396
        %v3429 = vpack.c.b16 %v3397, %v3397
        %v3430 = vpack.c.b16 %v3398, %v3398
        %v3431 = vpack.c.b16 %v3399, %v3399
        %v3432 = vpack.c.b16 %v3400, %v3400
        %v3433 = vpack.c.b16 %v3401, %v3401
        %v3434 = vpack.c.b16 %v3402, %v3402
        %vm3467 = vcmask 125952
        %3468 = vst.msk [vmem:[%s377] sm:$0xf] %vm3467, %v3403
        %3469 = vst.msk [vmem:[%s377 + $0x4] sm:$0xf] %vm3467, %v3404
        %3470 = vst.msk [vmem:[%s377 + $0x8] sm:$0xf] %vm3467, %v3405
        %3471 = vst.msk [vmem:[%s377 + $0xc] sm:$0xf] %vm3467, %v3406
        %3472 = vst.msk [vmem:[%s377 + $0x10] sm:$0xf] %vm3467, %v3407
        %3473 = vst.msk [vmem:[%s377 + $0x14] sm:$0xf] %vm3467, %v3408
        %3474 = vst.msk [vmem:[%s377 + $0x18] sm:$0xf] %vm3467, %v3409
        %3475 = vst.msk [vmem:[%s377 + $0x1c] sm:$0xf] %vm3467, %v3410
        %3476 = vst.msk [vmem:[%s377 + $0x20] sm:$0xf] %vm3467, %v3411
        %3477 = vst.msk [vmem:[%s377 + $0x24] sm:$0xf] %vm3467, %v3412
        %3478 = vst.msk [vmem:[%s377 + $0x28] sm:$0xf] %vm3467, %v3413
        %3479 = vst.msk [vmem:[%s377 + $0x2c] sm:$0xf] %vm3467, %v3414
        %3480 = vst.msk [vmem:[%s377 + $0x30] sm:$0xf] %vm3467, %v3415
        %3481 = vst.msk [vmem:[%s377 + $0x34] sm:$0xf] %vm3467, %v3416
        %3482 = vst.msk [vmem:[%s377 + $0x38] sm:$0xf] %vm3467, %v3417
        %3483 = vst.msk [vmem:[%s377 + $0x3c] sm:$0xf] %vm3467, %v3418
        %3484 = vst.msk [vmem:[%s377 + $0x40] sm:$0xf] %vm3467, %v3419
        %3485 = vst.msk [vmem:[%s377 + $0x44] sm:$0xf] %vm3467, %v3420
        %3486 = vst.msk [vmem:[%s377 + $0x48] sm:$0xf] %vm3467, %v3421
        %3487 = vst.msk [vmem:[%s377 + $0x4c] sm:$0xf] %vm3467, %v3422
        %3488 = vst.msk [vmem:[%s377 + $0x50] sm:$0xf] %vm3467, %v3423
        %3489 = vst.msk [vmem:[%s377 + $0x54] sm:$0xf] %vm3467, %v3424
        %3490 = vst.msk [vmem:[%s377 + $0x58] sm:$0xf] %vm3467, %v3425
        %3491 = vst.msk [vmem:[%s377 + $0x5c] sm:$0xf] %vm3467, %v3426
        %3492 = vst.msk [vmem:[%s377 + $0x60] sm:$0xf] %vm3467, %v3427
        %3493 = vst.msk [vmem:[%s377 + $0x64] sm:$0xf] %vm3467, %v3428
        %3494 = vst.msk [vmem:[%s377 + $0x68] sm:$0xf] %vm3467, %v3429
        %3495 = vst.msk [vmem:[%s377 + $0x6c] sm:$0xf] %vm3467, %v3430
        %3496 = vst.msk [vmem:[%s377 + $0x70] sm:$0xf] %vm3467, %v3431
        %3497 = vst.msk [vmem:[%s377 + $0x74] sm:$0xf] %vm3467, %v3432
        %3498 = vst.msk [vmem:[%s377 + $0x78] sm:$0xf] %vm3467, %v3433
        %3499 = vst.msk [vmem:[%s377 + $0x7c] sm:$0xf] %vm3467, %v3434
        %s3500 = sand.u32 %s250, 1
        %s3501 = scalar_lea.sflag [#allocation5], %s3500
        %s3502 = sand.u32 %s250, 1
        %s3503 = smul.addr %s3502, 128
        %s3504 = scalar_lea.vmem [#allocation6], %s3503
        // Predicated region
        $region65: #{tpu_custom_call.1} parent=59 // pred_check
          %p3505 = pneg %p260
        $region66: #{tpu_custom_call.1} parent=59 // pred_check_branch
          %3507 = sbr.rel (%p3505) target = $region68
        $region67: #{tpu_custom_call.1} parent=59 // pred_region
          %s3509 = ssub.s32 2048, 2048
          %3510 = vsyncadd %s3501, %s3509
          %s3511 = smul.addr %s27, 32
          %s3512 = smul.addr %s3511, 64
          %s3513 = scalar_lea.hbm %s10, %s3512
          %s3514 = sshll.u32 %s3504, 4
          %s3515 = int_to_ptr.vmem [resolvable:$true] %s3514
          %3520 = dma.vmem_to_hbm [thread:$0]  %s3515, 2048, %s3513, %s3501, 64, 64, 4
        $region68: #{tpu_custom_call.1} parent=59 // pred_fallthru
          _
      $region60: #{tpu_custom_call.1} parent=5 // pred_fallthru
        _
      %p3521 = scmp.le.s32.totalorder 2, %s22
      // Predicated region
      $region69: #{tpu_custom_call.1} parent=5 // pred_check
        %p3522 = pneg %p3521
      $region70: #{tpu_custom_call.1} parent=5 // pred_check_branch
        %3524 = sbr.rel (%p3522) target = $region72
      $region71: #{tpu_custom_call.1} parent=5 // pred_region
        %s3525 = ssub.s32 %s22, 2
        // Predicated region
        $region73: #{tpu_custom_call.1} parent=71 // pred_check
          %p3526 = pneg %p266
        $region74: #{tpu_custom_call.1} parent=71 // pred_check_branch
          %3528 = sbr.rel (%p3526) target = $region76
        $region75: #{tpu_custom_call.1} parent=71 // pred_region
          %s3529 = sand.u32 %s251, 1
          %s3530 = scalar_lea.sflag [#allocation5], %s3529
          %s3531 = sand.u32 %s251, 1
          %s3532 = smul.addr %s3531, 128
          %s3533 = scalar_lea.vmem [#allocation6], %s3532
          %3534 = dma.done %s3530, 2048
        $region76: #{tpu_custom_call.1} parent=71 // pred_fallthru
          _
      $region72: #{tpu_custom_call.1} parent=5 // pred_fallthru
        _
    $region6: #{tpu_custom_call.1} parent=1 // loop_footer
      %s26 = sadd.s32 1, %s22
    $region7: #{tpu_custom_call.1} parent=1 // loop_footer_branch
      %21 = sbr.rel target = $region3
    $region8: #{tpu_custom_call.1} parent=1 // loop_exit
      _
    %3535 = vsyncpa [#allocation4], 1
    %s3536 = scalar_lea.sflag [#allocation4], 1
    %3537 = vsyncpa %s3536, 1
    %3538 = vsyncpa [#allocation5], 1
    %s3539 = scalar_lea.sflag [#allocation5], 1
    %3540 = vsyncpa %s3539, 1

// kernel: tpu_custom_call.1
$region0: #{tpu_custom_call.1}
  #allocation0 [shape = 'u32[]', space=smem, size = 0x4, offset = 0x4, fixed_abs, tag = 'smem constant byte address 0x4 - core index']
  #allocation1 [shape = 'u32[144,128]{1,0:T(1,128)}', space=vmem, size = 0x12000, scoped, tag = 'internal scratch']
  #allocation2 [shape = 'f32[256,4]{1,0:T(8,128)}', space=vmem, size = 0x20000, scoped, tag = 'scratch operand']
  %s0 = inlined_call_operand.hbm [shape: bf16[2,16,16,16], index: 0, kind: input, shape index: {}]
  %s1 = inlined_call_operand.vmem [shape: bf16[16,4], index: 1, kind: input, shape index: {}]
  %s2 = inlined_call_operand.vmem [shape: f32[1,4], index: 2, kind: input, shape index: {}]
  %s3 = inlined_call_operand.vmem [shape: f32[1,4], index: 3, kind: input, shape index: {}]
  %s4 = inlined_call_operand.vmem [shape: bf16[12,12], index: 4, kind: input, shape index: {}]
  %s5 = inlined_call_operand.vmem [shape: f32[1,4], index: 5, kind: input, shape index: {}]
  %s6 = inlined_call_operand.vmem [shape: f32[1,4], index: 6, kind: input, shape index: {}]
  %s7 = inlined_call_operand.vmem [shape: bf16[4,16], index: 7, kind: input, shape index: {}]
  %s8 = inlined_call_operand.vmem [shape: f32[1,16], index: 8, kind: input, shape index: {}]
  %s9 = inlined_call_operand.vmem [shape: f32[1,16], index: 9, kind: input, shape index: {}]
  %s10 = inlined_call_operand.hbm [shape: bf16[2,16,16,16], index: 10, kind: output, shape index: {}]
  %s11 = sld [smem:[#allocation0]]
  $region77: #{tpu_custom_call.1} parent=0
    _
  %s13 = ssub.s32 1, %s11
  %s14 = scalar_select 0, %s13, %s11
  $region1: #{tpu_custom_call.1} parent=0
    #allocation3 [shape = 'u8[131072]{0}', space=vmem, size = 0x20000, scoped, tag = 'input window, operand 0']
    #allocation4 [shape = 's32[2]{0}', space=sflag, size = 0x8, scoped, tag = 'scoped memory for tpu_custom_call.1']
    #allocation5 [shape = 's32[2]{0}', space=sflag, size = 0x8, scoped, tag = 'scoped memory for tpu_custom_call.1']
    #allocation6 [shape = 'u8[131072]{0}', space=vmem, size = 0x20000, scoped, tag = 'output window, operand 0']
    %15 = vsyncpa [#allocation4], 0
    %s16 = scalar_lea.sflag [#allocation4], 1
    %17 = vsyncpa %s16, 0
    %18 = vsyncpa [#allocation5], 0
    %s19 = scalar_lea.sflag [#allocation5], 1
    %20 = vsyncpa %s19, 0
    loop: start=0, step=1, limit=4
    $region2: #{tpu_custom_call.1} parent=1 // loop_pre_header
      _
    $region3: #{tpu_custom_call.1} parent=1 // loop_header
      %s22 = sphi 0, %s26
      %p23 = scmp.ge.s32.totalorder %s22, 4
      %s32 = sphi 0, %s34
      %s35 = sphi 0, %s32
      %s36 = sphi 0, %s35
      %s52 = sphi 0, %s36
      %s56 = sphi 0, %s56
      %s58 = sphi 0, %s56
      %s59 = sphi 0, %s58
      %s73 = sphi 0, %s59
      %s77 = sphi 0, %s77
      %s79 = sphi 0, %s77
      %s80 = sphi 0, %s79
      %s94 = sphi 0, %s80
      %s98 = sphi 0, %s98
      %s100 = sphi 0, %s98
      %s101 = sphi 0, %s100
      %s115 = sphi 0, %s101
      %s119 = sphi 0, %s119
      %s121 = sphi 0, %s119
      %s122 = sphi 0, %s121
      %s136 = sphi 0, %s122
      %s140 = sphi 0, %s140
      %s142 = sphi 0, %s140
      %s143 = sphi 0, %s142
      %s157 = sphi 0, %s143
      %s161 = sphi 0, %s161
      %s163 = sphi 0, %s161
      %s164 = sphi 0, %s163
      %s178 = sphi 0, %s164
      %s182 = sphi 0, %s182
      %s184 = sphi 0, %s182
      %s185 = sphi 0, %s184
      %s199 = sphi 0, %s185
      %s203 = sphi 0, %s203
      %s205 = sphi 0, %s203
      %s206 = sphi 0, %s205
      %s220 = sphi 0, %s206
      %s224 = sphi 0, %s224
      %s226 = sphi 0, %s224
      %s227 = sphi 0, %s226
      %s241 = sphi 0, %s227
      %s247 = sphi 0, %s249
      %s250 = sphi 0, %s247
      %s251 = sphi 0, %s250
      %s267 = sphi 0, %s251
    $region4: #{tpu_custom_call.1} parent=1 // loop_header_branch
      %25 = sbr.rel (%p23) target = $region8
    $region5: #{tpu_custom_call.1} parent=1 // loop_body
      %s27 = ssub.s32 %s22, 1
      %s28 = ssub.s32 %s22, 2
      %s29 = sadd.s32 %s22, 1
      %s30 = ssub.s32 %s22, %s29
      %p31 = scmp.eq.s32.totalorder %s30, 0
      %s33 = sadd.s32 %s32, 1
      %s34 = scalar_select %p31, %s32, %s33
      %p37 = pneg %p31
      %p38 = scmp.eq.s32.totalorder %s22, 1
      %p39 = por %p37, %p38
      %p40 = scmp.ne.s32.totalorder %s32, %s35
      %p41 = scmp.eq.s32.totalorder %s22, 0
      %p42 = por %p40, %p41
      %p43 = scmp.ne.s32.totalorder %s32, %s35
      %p44 = scmp.eq.s32.totalorder %s27, 1
      %p45 = por %p43, %p44
      %p46 = scmp.ne.s32.totalorder %s35, %s36
      %p47 = scmp.eq.s32.totalorder %s27, 0
      %p48 = por %p46, %p47
      %p49 = scmp.ne.s32.totalorder %s35, %s36
      %p50 = scmp.eq.s32.totalorder %s28, 1
      %p51 = por %p49, %p50
      %p53 = scmp.ne.s32.totalorder %s36, %s52
      %p54 = scmp.eq.s32.totalorder %s28, 0
      %p55 = por %p53, %p54
      %s57 = sadd.s32 %s56, 1
      %p60 = scmp.eq.s32.totalorder %s22, 1
      %p61 = scmp.ne.s32.totalorder %s56, %s58
      %p62 = scmp.eq.s32.totalorder %s22, 0
      %p63 = por %p61, %p62
      %p64 = scmp.ne.s32.totalorder %s56, %s58
      %p65 = scmp.eq.s32.totalorder %s27, 1
      %p66 = por %p64, %p65
      %p67 = scmp.ne.s32.totalorder %s58, %s59
      %p68 = scmp.eq.s32.totalorder %s27, 0
      %p69 = por %p67, %p68
      %p70 = scmp.ne.s32.totalorder %s58, %s59
      %p71 = scmp.eq.s32.totalorder %s28, 1
      %p72 = por %p70, %p71
      %p74 = scmp.ne.s32.totalorder %s59, %s73
      %p75 = scmp.eq.s32.totalorder %s28, 0
      %p76 = por %p74, %p75
      %s78 = sadd.s32 %s77, 1
      %p81 = scmp.eq.s32.totalorder %s22, 1
      %p82 = scmp.ne.s32.totalorder %s77, %s79
      %p83 = scmp.eq.s32.totalorder %s22, 0
      %p84 = por %p82, %p83
      %p85 = scmp.ne.s32.totalorder %s77, %s79
      %p86 = scmp.eq.s32.totalorder %s27, 1
      %p87 = por %p85, %p86
      %p88 = scmp.ne.s32.totalorder %s79, %s80
      %p89 = scmp.eq.s32.totalorder %s27, 0
      %p90 = por %p88, %p89
      %p91 = scmp.ne.s32.totalorder %s79, %s80
      %p92 = scmp.eq.s32.totalorder %s28, 1
      %p93 = por %p91, %p92
      %p95 = scmp.ne.s32.totalorder %s80, %s94
      %p96 = scmp.eq.s32.totalorder %s28, 0
      %p97 = por %p95, %p96
      %s99 = sadd.s32 %s98, 1
      %p102 = scmp.eq.s32.totalorder %s22, 1
      %p103 = scmp.ne.s32.totalorder %s98, %s100
      %p104 = scmp.eq.s32.totalorder %s22, 0
      %p105 = por %p103, %p104
      %p106 = scmp.ne.s32.totalorder %s98, %s100
      %p107 = scmp.eq.s32.totalorder %s27, 1
      %p108 = por %p106, %p107
      %p109 = scmp.ne.s32.totalorder %s100, %s101
      %p110 = scmp.eq.s32.totalorder %s27, 0
      %p111 = por %p109, %p110
      %p112 = scmp.ne.s32.totalorder %s100, %s101
      %p113 = scmp.eq.s32.totalorder %s28, 1
      %p114 = por %p112, %p113
      %p116 = scmp.ne.s32.totalorder %s101, %s115
      %p117 = scmp.eq.s32.totalorder %s28, 0
      %p118 = por %p116, %p117
      %s120 = sadd.s32 %s119, 1
      %p123 = scmp.eq.s32.totalorder %s22, 1
      %p124 = scmp.ne.s32.totalorder %s119, %s121
      %p125 = scmp.eq.s32.totalorder %s22, 0
      %p126 = por %p124, %p125
      %p127 = scmp.ne.s32.totalorder %s119, %s121
      %p128 = scmp.eq.s32.totalorder %s27, 1
      %p129 = por %p127, %p128
      %p130 = scmp.ne.s32.totalorder %s121, %s122
      %p131 = scmp.eq.s32.totalorder %s27, 0
      %p132 = por %p130, %p131
      %p133 = scmp.ne.s32.totalorder %s121, %s122
      %p134 = scmp.eq.s32.totalorder %s28, 1
      %p135 = por %p133, %p134
      %p137 = scmp.ne.s32.totalorder %s122, %s136
      %p138 = scmp.eq.s32.totalorder %s28, 0
      %p139 = por %p137, %p138
      %s141 = sadd.s32 %s140, 1
      %p144 = scmp.eq.s32.totalorder %s22, 1
      %p145 = scmp.ne.s32.totalorder %s140, %s142
      %p146 = scmp.eq.s32.totalorder %s22, 0
      %p147 = por %p145, %p146
      %p148 = scmp.ne.s32.totalorder %s140, %s142
      %p149 = scmp.eq.s32.totalorder %s27, 1
      %p150 = por %p148, %p149
      %p151 = scmp.ne.s32.totalorder %s142, %s143
      %p152 = scmp.eq.s32.totalorder %s27, 0
      %p153 = por %p151, %p152
      %p154 = scmp.ne.s32.totalorder %s142, %s143
      %p155 = scmp.eq.s32.totalorder %s28, 1
      %p156 = por %p154, %p155
      %p158 = scmp.ne.s32.totalorder %s143, %s157
      %p159 = scmp.eq.s32.totalorder %s28, 0
      %p160 = por %p158, %p159
      %s162 = sadd.s32 %s161, 1
      %p165 = scmp.eq.s32.totalorder %s22, 1
      %p166 = scmp.ne.s32.totalorder %s161, %s163
      %p167 = scmp.eq.s32.totalorder %s22, 0
      %p168 = por %p166, %p167
      %p169 = scmp.ne.s32.totalorder %s161, %s163
      %p170 = scmp.eq.s32.totalorder %s27, 1
      %p171 = por %p169, %p170
      %p172 = scmp.ne.s32.totalorder %s163, %s164
      %p173 = scmp.eq.s32.totalorder %s27, 0
      %p174 = por %p172, %p173
      %p175 = scmp.ne.s32.totalorder %s163, %s164
      %p176 = scmp.eq.s32.totalorder %s28, 1
      %p177 = por %p175, %p176
      %p179 = scmp.ne.s32.totalorder %s164, %s178
      %p180 = scmp.eq.s32.totalorder %s28, 0
      %p181 = por %p179, %p180
      %s183 = sadd.s32 %s182, 1
      %p186 = scmp.eq.s32.totalorder %s22, 1
      %p187 = scmp.ne.s32.totalorder %s182, %s184
      %p188 = scmp.eq.s32.totalorder %s22, 0
      %p189 = por %p187, %p188
      %p190 = scmp.ne.s32.totalorder %s182, %s184
      %p191 = scmp.eq.s32.totalorder %s27, 1
      %p192 = por %p190, %p191
      %p193 = scmp.ne.s32.totalorder %s184, %s185
      %p194 = scmp.eq.s32.totalorder %s27, 0
      %p195 = por %p193, %p194
      %p196 = scmp.ne.s32.totalorder %s184, %s185
      %p197 = scmp.eq.s32.totalorder %s28, 1
      %p198 = por %p196, %p197
      %p200 = scmp.ne.s32.totalorder %s185, %s199
      %p201 = scmp.eq.s32.totalorder %s28, 0
      %p202 = por %p200, %p201
      %s204 = sadd.s32 %s203, 1
      %p207 = scmp.eq.s32.totalorder %s22, 1
      %p208 = scmp.ne.s32.totalorder %s203, %s205
      %p209 = scmp.eq.s32.totalorder %s22, 0
      %p210 = por %p208, %p209
      %p211 = scmp.ne.s32.totalorder %s203, %s205
      %p212 = scmp.eq.s32.totalorder %s27, 1
      %p213 = por %p211, %p212
      %p214 = scmp.ne.s32.totalorder %s205, %s206
      %p215 = scmp.eq.s32.totalorder %s27, 0
      %p216 = por %p214, %p215
      %p217 = scmp.ne.s32.totalorder %s205, %s206
      %p218 = scmp.eq.s32.totalorder %s28, 1
      %p219 = por %p217, %p218
      %p221 = scmp.ne.s32.totalorder %s206, %s220
      %p222 = scmp.eq.s32.totalorder %s28, 0
      %p223 = por %p221, %p222
      %s225 = sadd.s32 %s224, 1
      %p228 = scmp.eq.s32.totalorder %s22, 1
      %p229 = scmp.ne.s32.totalorder %s224, %s226
      %p230 = scmp.eq.s32.totalorder %s22, 0
      %p231 = por %p229, %p230
      %p232 = scmp.ne.s32.totalorder %s224, %s226
      %p233 = scmp.eq.s32.totalorder %s27, 1
      %p234 = por %p232, %p233
      %p235 = scmp.ne.s32.totalorder %s226, %s227
      %p236 = scmp.eq.s32.totalorder %s27, 0
      %p237 = por %p235, %p236
      %p238 = scmp.ne.s32.totalorder %s226, %s227
      %p239 = scmp.eq.s32.totalorder %s28, 1
      %p240 = por %p238, %p239
      %p242 = scmp.ne.s32.totalorder %s227, %s241
      %p243 = scmp.eq.s32.totalorder %s28, 0
      %p244 = por %p242, %p243
      %s245 = ssub.s32 %s22, %s29
      %p246 = scmp.eq.s32.totalorder %s245, 0
      %s248 = sadd.s32 %s247, 1
      %s249 = scalar_select %p246, %s247, %s248
      %p252 = pneg %p246
      %p253 = scmp.eq.s32.totalorder %s22, 1
      %p254 = por %p252, %p253
      %p255 = scmp.ne.s32.totalorder %s247, %s250
      %p256 = scmp.eq.s32.totalorder %s22, 0
      %p257 = por %p255, %p256
      %p258 = scmp.ne.s32.totalorder %s247, %s250
      %p259 = scmp.eq.s32.totalorder %s27, 1
      %p260 = por %p258, %p259
      %p261 = scmp.ne.s32.totalorder %s250, %s251
      %p262 = scmp.eq.s32.totalorder %s27, 0
      %p263 = por %p261, %p262
      %p264 = scmp.ne.s32.totalorder %s250, %s251
      %p265 = scmp.eq.s32.totalorder %s28, 1
      %p266 = por %p264, %p265
      %p268 = scmp.ne.s32.totalorder %s251, %s267
      %p269 = scmp.eq.s32.totalorder %s28, 0
      %p270 = por %p268, %p269
      %p271 = scmp.le.s32.totalorder 1, %s22
      %p272 = scmp.lt.s32.totalorder %s22, 3
      %p273 = pnand %p271, %p272
      %p274 = pneg %p273
      // Predicated region
      $region9: #{tpu_custom_call.1} parent=5 // pred_check
        _
      $region10: #{tpu_custom_call.1} parent=5 // pred_check_branch
        %276 = sbr.rel (%p273) target = $region12
      $region11: #{tpu_custom_call.1} parent=5 // pred_region
        %s277 = ssub.s32 %s22, 1
        // Predicated region
        $region13: #{tpu_custom_call.1} parent=11 // pred_check
          %p278 = pneg %p69
        $region14: #{tpu_custom_call.1} parent=11 // pred_check_branch
          %280 = sbr.rel (%p278) target = $region16
        $region15: #{tpu_custom_call.1} parent=11 // pred_region
          _
        $region16: #{tpu_custom_call.1} parent=11 // pred_fallthru
          _
        // Predicated region
        $region17: #{tpu_custom_call.1} parent=11 // pred_check
          %p281 = pneg %p90
        $region18: #{tpu_custom_call.1} parent=11 // pred_check_branch
          %283 = sbr.rel (%p281) target = $region20
        $region19: #{tpu_custom_call.1} parent=11 // pred_region
          _
        $region20: #{tpu_custom_call.1} parent=11 // pred_fallthru
          _
        // Predicated region
        $region21: #{tpu_custom_call.1} parent=11 // pred_check
          %p284 = pneg %p111
        $region22: #{tpu_custom_call.1} parent=11 // pred_check_branch
          %286 = sbr.rel (%p284) target = $region24
        $region23: #{tpu_custom_call.1} parent=11 // pred_region
          _
        $region24: #{tpu_custom_call.1} parent=11 // pred_fallthru
          _
        // Predicated region
        $region25: #{tpu_custom_call.1} parent=11 // pred_check
          %p287 = pneg %p132
        $region26: #{tpu_custom_call.1} parent=11 // pred_check_branch
          %289 = sbr.rel (%p287) target = $region28
        $region27: #{tpu_custom_call.1} parent=11 // pred_region
          _
        $region28: #{tpu_custom_call.1} parent=11 // pred_fallthru
          _
        // Predicated region
        $region29: #{tpu_custom_call.1} parent=11 // pred_check
          %p290 = pneg %p153
        $region30: #{tpu_custom_call.1} parent=11 // pred_check_branch
          %292 = sbr.rel (%p290) target = $region32
        $region31: #{tpu_custom_call.1} parent=11 // pred_region
          _
        $region32: #{tpu_custom_call.1} parent=11 // pred_fallthru
          _
        // Predicated region
        $region33: #{tpu_custom_call.1} parent=11 // pred_check
          %p293 = pneg %p174
        $region34: #{tpu_custom_call.1} parent=11 // pred_check_branch
          %295 = sbr.rel (%p293) target = $region36
        $region35: #{tpu_custom_call.1} parent=11 // pred_region
          _
        $region36: #{tpu_custom_call.1} parent=11 // pred_fallthru
          _
        // Predicated region
        $region37: #{tpu_custom_call.1} parent=11 // pred_check
          %p296 = pneg %p195
        $region38: #{tpu_custom_call.1} parent=11 // pred_check_branch
          %298 = sbr.rel (%p296) target = $region40
        $region39: #{tpu_custom_call.1} parent=11 // pred_region
          _
        $region40: #{tpu_custom_call.1} parent=11 // pred_fallthru
          _
        // Predicated region
        $region41: #{tpu_custom_call.1} parent=11 // pred_check
          %p299 = pneg %p216
        $region42: #{tpu_custom_call.1} parent=11 // pred_check_branch
          %301 = sbr.rel (%p299) target = $region44
        $region43: #{tpu_custom_call.1} parent=11 // pred_region
          _
        $region44: #{tpu_custom_call.1} parent=11 // pred_fallthru
          _
        // Predicated region
        $region45: #{tpu_custom_call.1} parent=11 // pred_check
          %p302 = pneg %p237
        $region46: #{tpu_custom_call.1} parent=11 // pred_check_branch
          %304 = sbr.rel (%p302) target = $region48
        $region47: #{tpu_custom_call.1} parent=11 // pred_region
          _
        $region48: #{tpu_custom_call.1} parent=11 // pred_fallthru
          _
      $region12: #{tpu_custom_call.1} parent=5 // pred_fallthru
        _
      %p305 = scmp.lt.s32.totalorder %s22, 2
      // Predicated region
      $region49: #{tpu_custom_call.1} parent=5 // pred_check
        %p306 = pneg %p305
      $region50: #{tpu_custom_call.1} parent=5 // pred_check_branch
        %308 = sbr.rel (%p306) target = $region52
      $region51: #{tpu_custom_call.1} parent=5 // pred_region
        // Predicated region
        $region53: #{tpu_custom_call.1} parent=51 // pred_check
          %p309 = pneg %p42
        $region54: #{tpu_custom_call.1} parent=51 // pred_check_branch
          %311 = sbr.rel (%p309) target = $region56
        $region55: #{tpu_custom_call.1} parent=51 // pred_region
          %s312 = sand.u32 %s32, 1
          %s313 = scalar_lea.sflag [#allocation4], %s312
          %s314 = sand.u32 %s32, 1
          %s315 = smul.addr %s314, 128
          %s316 = scalar_lea.vmem [#allocation3], %s315
          %s318 = ssub.s32 2048, 2048
          %319 = vsyncadd %s313, %s318
          %s320 = smul.addr %s22, 32
          %s321 = smul.addr %s320, 64
          %s322 = scalar_lea.hbm %s0, %s321
          %s323 = sshll.u32 %s316, 4
          %s324 = int_to_ptr.vmem [resolvable:$true] %s323
          %329 = dma.hbm_to_vmem [thread:$0]  %s322, 2048, %s324, %s313, 64, 64, 4
        $region56: #{tpu_custom_call.1} parent=51 // pred_fallthru
          _
      $region52: #{tpu_custom_call.1} parent=5 // pred_fallthru
        _
      %p330 = scmp.le.s32.totalorder 1, %s22
      %p331 = scmp.lt.s32.totalorder %s22, 3
      %p332 = pnand %p330, %p331
      %p333 = pneg %p332
      // Predicated region
      $region57: #{tpu_custom_call.1} parent=5 // pred_check
        _
      $region58: #{tpu_custom_call.1} parent=5 // pred_check_branch
        %335 = sbr.rel (%p332) target = $region60
      $region59: #{tpu_custom_call.1} parent=5 // pred_region
        %s336 = ssub.s32 %s22, 1
        %s337 = sand.u32 %s35, 1
        %s338 = scalar_lea.sflag [#allocation4], %s337
        %s339 = sand.u32 %s35, 1
        %s340 = smul.addr %s339, 128
        %s341 = scalar_lea.vmem [#allocation3], %s340
        // Predicated region
        $region61: #{tpu_custom_call.1} parent=59 // pred_check
          %p342 = pneg %p48
        $region62: #{tpu_custom_call.1} parent=59 // pred_check_branch
          %344 = sbr.rel (%p342) target = $region64
        $region63: #{tpu_custom_call.1} parent=59 // pred_region
          %345 = dma.done %s338, 2048
        $region64: #{tpu_custom_call.1} parent=59 // pred_fallthru
          _
        %s346 = sand.u32 %s35, 1
        %s347 = scalar_lea.sflag [#allocation4], %s346
        %s348 = sand.u32 %s35, 1
        %s349 = smul.addr %s348, 128
        %s350 = scalar_lea.vmem [#allocation3], %s349
        %p351 = pneg %p48
        %p352 = pneg %p45
        %p353 = pneg %p69
        %p354 = pneg %p66
        %p355 = pneg %p90
        %p356 = pneg %p87
        %p357 = pneg %p111
        %p358 = pneg %p108
        %p359 = pneg %p132
        %p360 = pneg %p129
        %p361 = pneg %p153
        %p362 = pneg %p150
        %p363 = pneg %p174
        %p364 = pneg %p171
        %p365 = pneg %p195
        %p366 = pneg %p192
        %p367 = pneg %p216
        %p368 = pneg %p213
        %p369 = pneg %p237
        %p370 = pneg %p234
        %p371 = pneg %p263
        %p372 = pneg %p260
        %s373 = sand.u32 %s250, 1
        %s374 = scalar_lea.sflag [#allocation5], %s373
        %s375 = sand.u32 %s250, 1
        %s376 = smul.addr %s375, 128
        %s377 = scalar_lea.vmem [#allocation6], %s376
        %v381 = vld [vmem:[%s341] sm:$0xf]
        %v382 = vld [vmem:[%s341 + $0x4] sm:$0xf]
        %v383 = vld [vmem:[%s341 + $0x8] sm:$0xf]
        %v384 = vld [vmem:[%s341 + $0xc] sm:$0xf]
        %v385 = vld [vmem:[%s341 + $0x10] sm:$0xf]
        %v386 = vld [vmem:[%s341 + $0x14] sm:$0xf]
        %v387 = vld [vmem:[%s341 + $0x18] sm:$0xf]
        %v388 = vld [vmem:[%s341 + $0x1c] sm:$0xf]
        %v389 = vld [vmem:[%s341 + $0x20] sm:$0xf]
        %v390 = vld [vmem:[%s341 + $0x24] sm:$0xf]
        %v391 = vld [vmem:[%s341 + $0x28] sm:$0xf]
        %v392 = vld [vmem:[%s341 + $0x2c] sm:$0xf]
        %v393 = vld [vmem:[%s341 + $0x30] sm:$0xf]
        %v394 = vld [vmem:[%s341 + $0x34] sm:$0xf]
        %v395 = vld [vmem:[%s341 + $0x38] sm:$0xf]
        %v396 = vld [vmem:[%s341 + $0x3c] sm:$0xf]
        %v397 = vld [vmem:[%s341 + $0x40] sm:$0xf]
        %v398 = vld [vmem:[%s341 + $0x44] sm:$0xf]
        %v399 = vld [vmem:[%s341 + $0x48] sm:$0xf]
        %v400 = vld [vmem:[%s341 + $0x4c] sm:$0xf]
        %v401 = vld [vmem:[%s341 + $0x50] sm:$0xf]
        %v402 = vld [vmem:[%s341 + $0x54] sm:$0xf]
        %v403 = vld [vmem:[%s341 + $0x58] sm:$0xf]
        %v404 = vld [vmem:[%s341 + $0x5c] sm:$0xf]
        %v405 = vld [vmem:[%s341 + $0x60] sm:$0xf]
        %v406 = vld [vmem:[%s341 + $0x64] sm:$0xf]
        %v407 = vld [vmem:[%s341 + $0x68] sm:$0xf]
        %v408 = vld [vmem:[%s341 + $0x6c] sm:$0xf]
        %v409 = vld [vmem:[%s341 + $0x70] sm:$0xf]
        %v410 = vld [vmem:[%s341 + $0x74] sm:$0xf]
        %v411 = vld [vmem:[%s341 + $0x78] sm:$0xf]
        %v412 = vld [vmem:[%s341 + $0x7c] sm:$0xf]
        %v413 = vld [vmem:[%s1] sm:$0xf]
        %v414 = vld [vmem:[%s1 + $0x4] sm:$0xf]
        %v447 = vunpack.c.l.b16 %v381
        %v448 = vunpack.c.l.b16 %v382
        %v449 = vunpack.c.l.b16 %v383
        %v450 = vunpack.c.l.b16 %v384
        %v451 = vunpack.c.l.b16 %v385
        %v452 = vunpack.c.l.b16 %v386
        %v453 = vunpack.c.l.b16 %v387
        %v454 = vunpack.c.l.b16 %v388
        %v455 = vunpack.c.l.b16 %v389
        %v456 = vunpack.c.l.b16 %v390
        %v457 = vunpack.c.l.b16 %v391
        %v458 = vunpack.c.l.b16 %v392
        %v459 = vunpack.c.l.b16 %v393
        %v460 = vunpack.c.l.b16 %v394
        %v461 = vunpack.c.l.b16 %v395
        %v462 = vunpack.c.l.b16 %v396
        %v463 = vunpack.c.l.b16 %v397
        %v464 = vunpack.c.l.b16 %v398
        %v465 = vunpack.c.l.b16 %v399
        %v466 = vunpack.c.l.b16 %v400
        %v467 = vunpack.c.l.b16 %v401
        %v468 = vunpack.c.l.b16 %v402
        %v469 = vunpack.c.l.b16 %v403
        %v470 = vunpack.c.l.b16 %v404
        %v471 = vunpack.c.l.b16 %v405
        %v472 = vunpack.c.l.b16 %v406
        %v473 = vunpack.c.l.b16 %v407
        %v474 = vunpack.c.l.b16 %v408
        %v475 = vunpack.c.l.b16 %v409
        %v476 = vunpack.c.l.b16 %v410
        %v477 = vunpack.c.l.b16 %v411
        %v478 = vunpack.c.l.b16 %v412
        %v479 = vpack.c.b16 %v448, %v447
        %v480 = vpack.c.b16 %v450, %v449
        %v481 = vpack.c.b16 %v452, %v451
        %v482 = vpack.c.b16 %v454, %v453
        %v483 = vpack.c.b16 %v456, %v455
        %v484 = vpack.c.b16 %v458, %v457
        %v485 = vpack.c.b16 %v460, %v459
        %v486 = vpack.c.b16 %v462, %v461
        %v487 = vpack.c.b16 %v464, %v463
        %v488 = vpack.c.b16 %v466, %v465
        %v489 = vpack.c.b16 %v468, %v467
        %v490 = vpack.c.b16 %v470, %v469
        %v491 = vpack.c.b16 %v472, %v471
        %v492 = vpack.c.b16 %v474, %v473
        %v493 = vpack.c.b16 %v476, %v475
        %v494 = vpack.c.b16 %v478, %v477
        %v497 = vunpack.c.l.b16 %v413
        %v498 = vunpack.c.l.b16 %v414
        %v499 = vpack.c.b16 %v498, %v497
        %vm501 = vcmask 130048
        %v503 = vsel %vm501, %v479, 0
        %v506 = vsel %vm501, %v480, 0
        %v509 = vsel %vm501, %v481, 0
        %v512 = vsel %vm501, %v482, 0
        %v515 = vsel %vm501, %v483, 0
        %v518 = vsel %vm501, %v484, 0
        %v521 = vsel %vm501, %v485, 0
        %v524 = vsel %vm501, %v486, 0
        %v527 = vsel %vm501, %v487, 0
        %v530 = vsel %vm501, %v488, 0
        %v533 = vsel %vm501, %v489, 0
        %v536 = vsel %vm501, %v490, 0
        %v539 = vsel %vm501, %v491, 0
        %v542 = vsel %vm501, %v492, 0
        %v545 = vsel %vm501, %v493, 0
        %v548 = vsel %vm501, %v494, 0
        %550 = vmatprep.subr.bf16.mxu0 0
        %551 = vmatpush1.bf16.msra.mxu0 %v499
        %552 = vmatprep.subr.bf16.mxu0 0
        %553 = vmatpush1.bf16.msra.mxu0 0
        %554 = vmatprep.subr.bf16.mxu0 0
        %555 = vmatpush1.bf16.msra.mxu0 0
        %556 = vmatprep.subr.bf16.mxu0 0
        %557 = vmatpush1.bf16.msra.mxu0 0
        %558 = vmatprep.subr.bf16.mxu0 0
        %559 = vmatpush1.bf16.msra.mxu0 0
        %560 = vmatprep.subr.bf16.mxu0 0
        %561 = vmatpush1.bf16.msra.mxu0 0
        %562 = vmatprep.subr.bf16.mxu0 0
        %563 = vmatpush1.bf16.msra.mxu0 0
        %564 = vmatprep.subr.bf16.mxu0 0
        %565 = vmatpush1.bf16.msra.mxu0 0
        %566 = vmatprep.subr.bf16.mxu0 0
        %567 = vmatpush1.bf16.msra.mxu0 0
        %568 = vmatprep.subr.bf16.mxu0 0
        %569 = vmatpush1.bf16.msra.mxu0 0
        %570 = vmatprep.subr.bf16.mxu0 0
        %571 = vmatpush1.bf16.msra.mxu0 0
        %572 = vmatprep.subr.bf16.mxu0 0
        %573 = vmatpush1.bf16.msra.mxu0 0
        %574 = vmatprep.subr.bf16.mxu0 0
        %575 = vmatpush1.bf16.msra.mxu0 0
        %576 = vmatprep.subr.bf16.mxu0 0
        %577 = vmatpush1.bf16.msra.mxu0 0
        %578 = vmatprep.subr.bf16.mxu0 0
        %579 = vmatpush1.bf16.msra.mxu0 0
        %580 = vmatprep.subr.bf16.mxu0 0
        %581 = vmatpush1.bf16.msra.mxu0 0
        %582 = vmatprep.mubr.bf16.mxu0 0
        %583 = vmatmul.mubr.bf16.gmra.mrb[0].mxu0 %v503
        %v584 = vpop.f32.mrb[0].mxu0
        %v585 = vadd.f32 0.0, %v584
        %v586 = vpop.f32.mrb[0].mxu0
        %v587 = vpop.f32.mrb[0].mxu0
        %v588 = vadd.f32 0.0, %v587
        %v589 = vpop.f32.mrb[0].mxu0
        %590 = vmatprep.mubr.bf16.mxu0 0
        %591 = vmatmul.mubr.bf16.gmra.mrb[0].mxu0 %v506
        %v592 = vpop.f32.mrb[0].mxu0
        %v593 = vadd.f32 0.0, %v592
        %v594 = vpop.f32.mrb[0].mxu0
        %v595 = vpop.f32.mrb[0].mxu0
        %v596 = vadd.f32 0.0, %v595
        %v597 = vpop.f32.mrb[0].mxu0
        %598 = vmatprep.mubr.bf16.mxu0 0
        %599 = vmatmul.mubr.bf16.gmra.mrb[0].mxu0 %v509
        %v600 = vpop.f32.mrb[0].mxu0
        %v601 = vadd.f32 0.0, %v600
        %v602 = vpop.f32.mrb[0].mxu0
        %v603 = vpop.f32.mrb[0].mxu0
        %v604 = vadd.f32 0.0, %v603
        %v605 = vpop.f32.mrb[0].mxu0
        %606 = vmatprep.mubr.bf16.mxu0 0
        %607 = vmatmul.mubr.bf16.gmra.mrb[0].mxu0 %v512
        %v608 = vpop.f32.mrb[0].mxu0
        %v609 = vadd.f32 0.0, %v608
        %v610 = vpop.f32.mrb[0].mxu0
        %v611 = vpop.f32.mrb[0].mxu0
        %v612 = vadd.f32 0.0, %v611
        %v613 = vpop.f32.mrb[0].mxu0
        %614 = vmatprep.mubr.bf16.mxu0 0
        %615 = vmatmul.mubr.bf16.gmra.mrb[0].mxu0 %v515
        %v616 = vpop.f32.mrb[0].mxu0
        %v617 = vadd.f32 0.0, %v616
        %v618 = vpop.f32.mrb[0].mxu0
        %v619 = vpop.f32.mrb[0].mxu0
        %v620 = vadd.f32 0.0, %v619
        %v621 = vpop.f32.mrb[0].mxu0
        %622 = vmatprep.mubr.bf16.mxu0 0
        %623 = vmatmul.mubr.bf16.gmra.mrb[0].mxu0 %v518
        %v624 = vpop.f32.mrb[0].mxu0
        %v625 = vadd.f32 0.0, %v624
        %v626 = vpop.f32.mrb[0].mxu0
        %v627 = vpop.f32.mrb[0].mxu0
        %v628 = vadd.f32 0.0, %v627
        %v629 = vpop.f32.mrb[0].mxu0
        %630 = vmatprep.mubr.bf16.mxu0 0
        %631 = vmatmul.mubr.bf16.gmra.mrb[0].mxu0 %v521
        %v632 = vpop.f32.mrb[0].mxu0
        %v633 = vadd.f32 0.0, %v632
        %v634 = vpop.f32.mrb[0].mxu0
        %v635 = vpop.f32.mrb[0].mxu0
        %v636 = vadd.f32 0.0, %v635
        %v637 = vpop.f32.mrb[0].mxu0
        %638 = vmatprep.mubr.bf16.mxu0 0
        %639 = vmatmul.mubr.bf16.gmra.mrb[0].mxu0 %v524
        %v640 = vpop.f32.mrb[0].mxu0
        %v641 = vadd.f32 0.0, %v640
        %v642 = vpop.f32.mrb[0].mxu0
        %v643 = vpop.f32.mrb[0].mxu0
        %v644 = vadd.f32 0.0, %v643
        %v645 = vpop.f32.mrb[0].mxu0
        %646 = vmatprep.mubr.bf16.mxu0 0
        %647 = vmatmul.mubr.bf16.gmra.mrb[0].mxu0 %v527
        %v648 = vpop.f32.mrb[0].mxu0
        %v649 = vadd.f32 0.0, %v648
        %v650 = vpop.f32.mrb[0].mxu0
        %v651 = vpop.f32.mrb[0].mxu0
        %v652 = vadd.f32 0.0, %v651
        %v653 = vpop.f32.mrb[0].mxu0
        %654 = vmatprep.mubr.bf16.mxu0 0
        %655 = vmatmul.mubr.bf16.gmra.mrb[0].mxu0 %v530
        %v656 = vpop.f32.mrb[0].mxu0
        %v657 = vadd.f32 0.0, %v656
        %v658 = vpop.f32.mrb[0].mxu0
        %v659 = vpop.f32.mrb[0].mxu0
        %v660 = vadd.f32 0.0, %v659
        %v661 = vpop.f32.mrb[0].mxu0
        %662 = vmatprep.mubr.bf16.mxu0 0
        %663 = vmatmul.mubr.bf16.gmra.mrb[0].mxu0 %v533
        %v664 = vpop.f32.mrb[0].mxu0
        %v665 = vadd.f32 0.0, %v664
        %v666 = vpop.f32.mrb[0].mxu0
        %v667 = vpop.f32.mrb[0].mxu0
        %v668 = vadd.f32 0.0, %v667
        %v669 = vpop.f32.mrb[0].mxu0
        %670 = vmatprep.mubr.bf16.mxu0 0
        %671 = vmatmul.mubr.bf16.gmra.mrb[0].mxu0 %v536
        %v672 = vpop.f32.mrb[0].mxu0
        %v673 = vadd.f32 0.0, %v672
        %v674 = vpop.f32.mrb[0].mxu0
        %v675 = vpop.f32.mrb[0].mxu0
        %v676 = vadd.f32 0.0, %v675
        %v677 = vpop.f32.mrb[0].mxu0
        %678 = vmatprep.mubr.bf16.mxu0 0
        %679 = vmatmul.mubr.bf16.gmra.mrb[0].mxu0 %v539
        %v680 = vpop.f32.mrb[0].mxu0
        %v681 = vadd.f32 0.0, %v680
        %v682 = vpop.f32.mrb[0].mxu0
        %v683 = vpop.f32.mrb[0].mxu0
        %v684 = vadd.f32 0.0, %v683
        %v685 = vpop.f32.mrb[0].mxu0
        %686 = vmatprep.mubr.bf16.mxu0 0
        %687 = vmatmul.mubr.bf16.gmra.mrb[0].mxu0 %v542
        %v688 = vpop.f32.mrb[0].mxu0
        %v689 = vadd.f32 0.0, %v688
        %v690 = vpop.f32.mrb[0].mxu0
        %v691 = vpop.f32.mrb[0].mxu0
        %v692 = vadd.f32 0.0, %v691
        %v693 = vpop.f32.mrb[0].mxu0
        %694 = vmatprep.mubr.bf16.mxu0 0
        %695 = vmatmul.mubr.bf16.gmra.mrb[0].mxu0 %v545
        %v696 = vpop.f32.mrb[0].mxu0
        %v697 = vadd.f32 0.0, %v696
        %v698 = vpop.f32.mrb[0].mxu0
        %v699 = vpop.f32.mrb[0].mxu0
        %v700 = vadd.f32 0.0, %v699
        %v701 = vpop.f32.mrb[0].mxu0
        %702 = vmatprep.mubr.bf16.mxu0 0
        %703 = vmatmul.mubr.bf16.gmra.mrb[0].mxu0 %v548
        %v704 = vpop.f32.mrb[0].mxu0
        %v705 = vadd.f32 0.0, %v704
        %v706 = vpop.f32.mrb[0].mxu0
        %v707 = vpop.f32.mrb[0].mxu0
        %v708 = vadd.f32 0.0, %v707
        %v709 = vpop.f32.mrb[0].mxu0
        %710 = vdwg.mxu0
        %v711 = vld [vmem:[%s2] sm:$0x1]
        %v713 = vlaneseq
        %v714 = vshrl.u32 %v713, 7
        %v715 = vsub.s32 0, %v714
        %v716 = vrot.slane %v711, %v715
        %v718 = vmul.f32 %v585, %v716
        %v719 = vmul.f32 %v588, %v716
        %v720 = vmul.f32 %v593, %v716
        %v721 = vmul.f32 %v596, %v716
        %v722 = vmul.f32 %v601, %v716
        %v723 = vmul.f32 %v604, %v716
        %v724 = vmul.f32 %v609, %v716
        %v725 = vmul.f32 %v612, %v716
        %v726 = vmul.f32 %v617, %v716
        %v727 = vmul.f32 %v620, %v716
        %v728 = vmul.f32 %v625, %v716
        %v729 = vmul.f32 %v628, %v716
        %v730 = vmul.f32 %v633, %v716
        %v731 = vmul.f32 %v636, %v716
        %v732 = vmul.f32 %v641, %v716
        %v733 = vmul.f32 %v644, %v716
        %v734 = vmul.f32 %v649, %v716
        %v735 = vmul.f32 %v652, %v716
        %v736 = vmul.f32 %v657, %v716
        %v737 = vmul.f32 %v660, %v716
        %v738 = vmul.f32 %v665, %v716
        %v739 = vmul.f32 %v668, %v716
        %v740 = vmul.f32 %v673, %v716
        %v741 = vmul.f32 %v676, %v716
        %v742 = vmul.f32 %v681, %v716
        %v743 = vmul.f32 %v684, %v716
        %v744 = vmul.f32 %v689, %v716
        %v745 = vmul.f32 %v692, %v716
        %v746 = vmul.f32 %v697, %v716
        %v747 = vmul.f32 %v700, %v716
        %v748 = vmul.f32 %v705, %v716
        %v749 = vmul.f32 %v708, %v716
        %v750 = vld [vmem:[%s3] sm:$0x1]
        %v752 = vlaneseq
        %v753 = vshrl.u32 %v752, 7
        %v754 = vsub.s32 0, %v753
        %v755 = vrot.slane %v750, %v754
        %v757 = vadd.f32 %v718, %v755
        %v758 = vadd.f32 %v719, %v755
        %v759 = vadd.f32 %v720, %v755
        %v760 = vadd.f32 %v721, %v755
        %v761 = vadd.f32 %v722, %v755
        %v762 = vadd.f32 %v723, %v755
        %v763 = vadd.f32 %v724, %v755
        %v764 = vadd.f32 %v725, %v755
        %v765 = vadd.f32 %v726, %v755
        %v766 = vadd.f32 %v727, %v755
        %v767 = vadd.f32 %v728, %v755
        %v768 = vadd.f32 %v729, %v755
        %v769 = vadd.f32 %v730, %v755
        %v770 = vadd.f32 %v731, %v755
        %v771 = vadd.f32 %v732, %v755
        %v772 = vadd.f32 %v733, %v755
        %v773 = vadd.f32 %v734, %v755
        %v774 = vadd.f32 %v735, %v755
        %v775 = vadd.f32 %v736, %v755
        %v776 = vadd.f32 %v737, %v755
        %v777 = vadd.f32 %v738, %v755
        %v778 = vadd.f32 %v739, %v755
        %v779 = vadd.f32 %v740, %v755
        %v780 = vadd.f32 %v741, %v755
        %v781 = vadd.f32 %v742, %v755
        %v782 = vadd.f32 %v743, %v755
        %v783 = vadd.f32 %v744, %v755
        %v784 = vadd.f32 %v745, %v755
        %v785 = vadd.f32 %v746, %v755
        %v786 = vadd.f32 %v747, %v755
        %v787 = vadd.f32 %v748, %v755
        %v788 = vadd.f32 %v749, %v755
        %v789 = vmax.f32 %v757, 0.0
        %v790 = vmax.f32 %v758, 0.0
        %v791 = vmax.f32 %v759, 0.0
        %v792 = vmax.f32 %v760, 0.0
        %v793 = vmax.f32 %v761, 0.0
        %v794 = vmax.f32 %v762, 0.0
        %v795 = vmax.f32 %v763, 0.0
        %v796 = vmax.f32 %v764, 0.0
        %v797 = vmax.f32 %v765, 0.0
        %v798 = vmax.f32 %v766, 0.0
        %v799 = vmax.f32 %v767, 0.0
        %v800 = vmax.f32 %v768, 0.0
        %v801 = vmax.f32 %v769, 0.0
        %v802 = vmax.f32 %v770, 0.0
        %v803 = vmax.f32 %v771, 0.0
        %v804 = vmax.f32 %v772, 0.0
        %v805 = vmax.f32 %v773, 0.0
        %v806 = vmax.f32 %v774, 0.0
        %v807 = vmax.f32 %v775, 0.0
        %v808 = vmax.f32 %v776, 0.0
        %v809 = vmax.f32 %v777, 0.0
        %v810 = vmax.f32 %v778, 0.0
        %v811 = vmax.f32 %v779, 0.0
        %v812 = vmax.f32 %v780, 0.0
        %v813 = vmax.f32 %v781, 0.0
        %v814 = vmax.f32 %v782, 0.0
        %v815 = vmax.f32 %v783, 0.0
        %v816 = vmax.f32 %v784, 0.0
        %v817 = vmax.f32 %v785, 0.0
        %v818 = vmax.f32 %v786, 0.0
        %v819 = vmax.f32 %v787, 0.0
        %v820 = vmax.f32 %v788, 0.0
        %v821 = vpack.c.bf16 %v790, %v789
        %v822 = vpack.c.bf16 %v792, %v791
        %v823 = vpack.c.bf16 %v794, %v793
        %v824 = vpack.c.bf16 %v796, %v795
        %v825 = vpack.c.bf16 %v798, %v797
        %v826 = vpack.c.bf16 %v800, %v799
        %v827 = vpack.c.bf16 %v802, %v801
        %v828 = vpack.c.bf16 %v804, %v803
        %v829 = vpack.c.bf16 %v806, %v805
        %v830 = vpack.c.bf16 %v808, %v807
        %v831 = vpack.c.bf16 %v810, %v809
        %v832 = vpack.c.bf16 %v812, %v811
        %v833 = vpack.c.bf16 %v814, %v813
        %v834 = vpack.c.bf16 %v816, %v815
        %v835 = vpack.c.bf16 %v818, %v817
        %v836 = vpack.c.bf16 %v820, %v819
        %v837 = vlaneseq
        %v838 = vshrl.u32 %v837, 7
        %v839 = vadd.s32 %v838, 8
        %v840 = vadd.s32 %v838, 16
        %v841 = vadd.s32 %v838, 24
        %v842 = vadd.s32 %v838, 32
        %v843 = vadd.s32 %v838, 40
        %v844 = vadd.s32 %v838, 48
        %v845 = vadd.s32 %v838, 56
        %v846 = vadd.s32 %v838, 64
        %v847 = vadd.s32 %v838, 72
        %v848 = vadd.s32 %v838, 80
        %v849 = vadd.s32 %v838, 88
        %v850 = vadd.s32 %v838, 96
        %v851 = vadd.s32 %v838, 104
        %v852 = vadd.s32 %v838, 112
        %v853 = vadd.s32 %v838, 120
        %v854 = vadd.s32 %v838, 128
        %v855 = vadd.s32 %v838, 136
        %v856 = vadd.s32 %v838, 144
        %v857 = vadd.s32 %v838, 152
        %v858 = vadd.s32 %v838, 160
        %v859 = vadd.s32 %v838, 168
        %v860 = vadd.s32 %v838, 176
        %v861 = vadd.s32 %v838, 184
        %v862 = vadd.s32 %v838, 192
        %v863 = vadd.s32 %v838, 200
        %v864 = vadd.s32 %v838, 208
        %v865 = vadd.s32 %v838, 216
        %v866 = vadd.s32 %v838, 224
        %v867 = vadd.s32 %v838, 232
        %v868 = vadd.s32 %v838, 240
        %v869 = vadd.s32 %v838, 248
        %vm870 = vcmp.lt.s32.totalorder %v838, 0
        %v871 = vsub.s32 0, %v838
        %v872 = vsel %vm870, %v871, %v838
        %v873 = vshrl.u32 %v872, 4
        %v874 = vand.u32 %v872, 15
        %v875 = vsub.s32 0, %v874
        %v876 = vsel %vm870, %v875, %v874
        %vm877 = vcmp.lt.s32.totalorder %v839, 0
        %v878 = vsub.s32 0, %v839
        %v879 = vsel %vm877, %v878, %v839
        %v880 = vshrl.u32 %v879, 4
        %v881 = vand.u32 %v879, 15
        %v882 = vsub.s32 0, %v881
        %v883 = vsel %vm877, %v882, %v881
        %vm884 = vcmp.lt.s32.totalorder %v840, 0
        %v885 = vsub.s32 0, %v840
        %v886 = vsel %vm884, %v885, %v840
        %v887 = vshrl.u32 %v886, 4
        %v888 = vand.u32 %v886, 15
        %v889 = vsub.s32 0, %v888
        %v890 = vsel %vm884, %v889, %v888
        %vm891 = vcmp.lt.s32.totalorder %v841, 0
        %v892 = vsub.s32 0, %v841
        %v893 = vsel %vm891, %v892, %v841
        %v894 = vshrl.u32 %v893, 4
        %v895 = vand.u32 %v893, 15
        %v896 = vsub.s32 0, %v895
        %v897 = vsel %vm891, %v896, %v895
        %vm898 = vcmp.lt.s32.totalorder %v842, 0
        %v899 = vsub.s32 0, %v842
        %v900 = vsel %vm898, %v899, %v842
        %v901 = vshrl.u32 %v900, 4
        %v902 = vand.u32 %v900, 15
        %v903 = vsub.s32 0, %v902
        %v904 = vsel %vm898, %v903, %v902
        %vm905 = vcmp.lt.s32.totalorder %v843, 0
        %v906 = vsub.s32 0, %v843
        %v907 = vsel %vm905, %v906, %v843
        %v908 = vshrl.u32 %v907, 4
        %v909 = vand.u32 %v907, 15
        %v910 = vsub.s32 0, %v909
        %v911 = vsel %vm905, %v910, %v909
        %vm912 = vcmp.lt.s32.totalorder %v844, 0
        %v913 = vsub.s32 0, %v844
        %v914 = vsel %vm912, %v913, %v844
        %v915 = vshrl.u32 %v914, 4
        %v916 = vand.u32 %v914, 15
        %v917 = vsub.s32 0, %v916
        %v918 = vsel %vm912, %v917, %v916
        %vm919 = vcmp.lt.s32.totalorder %v845, 0
        %v920 = vsub.s32 0, %v845
        %v921 = vsel %vm919, %v920, %v845
        %v922 = vshrl.u32 %v921, 4
        %v923 = vand.u32 %v921, 15
        %v924 = vsub.s32 0, %v923
        %v925 = vsel %vm919, %v924, %v923
        %vm926 = vcmp.lt.s32.totalorder %v846, 0
        %v927 = vsub.s32 0, %v846
        %v928 = vsel %vm926, %v927, %v846
        %v929 = vshrl.u32 %v928, 4
        %v930 = vand.u32 %v928, 15
        %v931 = vsub.s32 0, %v930
        %v932 = vsel %vm926, %v931, %v930
        %vm933 = vcmp.lt.s32.totalorder %v847, 0
        %v934 = vsub.s32 0, %v847
        %v935 = vsel %vm933, %v934, %v847
        %v936 = vshrl.u32 %v935, 4
        %v937 = vand.u32 %v935, 15
        %v938 = vsub.s32 0, %v937
        %v939 = vsel %vm933, %v938, %v937
        %vm940 = vcmp.lt.s32.totalorder %v848, 0
        %v941 = vsub.s32 0, %v848
        %v942 = vsel %vm940, %v941, %v848
        %v943 = vshrl.u32 %v942, 4
        %v944 = vand.u32 %v942, 15
        %v945 = vsub.s32 0, %v944
        %v946 = vsel %vm940, %v945, %v944
        %vm947 = vcmp.lt.s32.totalorder %v849, 0
        %v948 = vsub.s32 0, %v849
        %v949 = vsel %vm947, %v948, %v849
        %v950 = vshrl.u32 %v949, 4
        %v951 = vand.u32 %v949, 15
        %v952 = vsub.s32 0, %v951
        %v953 = vsel %vm947, %v952, %v951
        %vm954 = vcmp.lt.s32.totalorder %v850, 0
        %v955 = vsub.s32 0, %v850
        %v956 = vsel %vm954, %v955, %v850
        %v957 = vshrl.u32 %v956, 4
        %v958 = vand.u32 %v956, 15
        %v959 = vsub.s32 0, %v958
        %v960 = vsel %vm954, %v959, %v958
        %vm961 = vcmp.lt.s32.totalorder %v851, 0
        %v962 = vsub.s32 0, %v851
        %v963 = vsel %vm961, %v962, %v851
        %v964 = vshrl.u32 %v963, 4
        %v965 = vand.u32 %v963, 15
        %v966 = vsub.s32 0, %v965
        %v967 = vsel %vm961, %v966, %v965
        %vm968 = vcmp.lt.s32.totalorder %v852, 0
        %v969 = vsub.s32 0, %v852
        %v970 = vsel %vm968, %v969, %v852
        %v971 = vshrl.u32 %v970, 4
        %v972 = vand.u32 %v970, 15
        %v973 = vsub.s32 0, %v972
        %v974 = vsel %vm968, %v973, %v972
        %vm975 = vcmp.lt.s32.totalorder %v853, 0
        %v976 = vsub.s32 0, %v853
        %v977 = vsel %vm975, %v976, %v853
        %v978 = vshrl.u32 %v977, 4
        %v979 = vand.u32 %v977, 15
        %v980 = vsub.s32 0, %v979
        %v981 = vsel %vm975, %v980, %v979
        %vm982 = vcmp.lt.s32.totalorder %v854, 0
        %v983 = vsub.s32 0, %v854
        %v984 = vsel %vm982, %v983, %v854
        %v985 = vshrl.u32 %v984, 4
        %v986 = vand.u32 %v984, 15
        %v987 = vsub.s32 0, %v986
        %v988 = vsel %vm982, %v987, %v986
        %vm989 = vcmp.lt.s32.totalorder %v855, 0
        %v990 = vsub.s32 0, %v855
        %v991 = vsel %vm989, %v990, %v855
        %v992 = vshrl.u32 %v991, 4
        %v993 = vand.u32 %v991, 15
        %v994 = vsub.s32 0, %v993
        %v995 = vsel %vm989, %v994, %v993
        %vm996 = vcmp.lt.s32.totalorder %v856, 0
        %v997 = vsub.s32 0, %v856
        %v998 = vsel %vm996, %v997, %v856
        %v999 = vshrl.u32 %v998, 4
        %v1000 = vand.u32 %v998, 15
        %v1001 = vsub.s32 0, %v1000
        %v1002 = vsel %vm996, %v1001, %v1000
        %vm1003 = vcmp.lt.s32.totalorder %v857, 0
        %v1004 = vsub.s32 0, %v857
        %v1005 = vsel %vm1003, %v1004, %v857
        %v1006 = vshrl.u32 %v1005, 4
        %v1007 = vand.u32 %v1005, 15
        %v1008 = vsub.s32 0, %v1007
        %v1009 = vsel %vm1003, %v1008, %v1007
        %vm1010 = vcmp.lt.s32.totalorder %v858, 0
        %v1011 = vsub.s32 0, %v858
        %v1012 = vsel %vm1010, %v1011, %v858
        %v1013 = vshrl.u32 %v1012, 4
        %v1014 = vand.u32 %v1012, 15
        %v1015 = vsub.s32 0, %v1014
        %v1016 = vsel %vm1010, %v1015, %v1014
        %vm1017 = vcmp.lt.s32.totalorder %v859, 0
        %v1018 = vsub.s32 0, %v859
        %v1019 = vsel %vm1017, %v1018, %v859
        %v1020 = vshrl.u32 %v1019, 4
        %v1021 = vand.u32 %v1019, 15
        %v1022 = vsub.s32 0, %v1021
        %v1023 = vsel %vm1017, %v1022, %v1021
        %vm1024 = vcmp.lt.s32.totalorder %v860, 0
        %v1025 = vsub.s32 0, %v860
        %v1026 = vsel %vm1024, %v1025, %v860
        %v1027 = vshrl.u32 %v1026, 4
        %v1028 = vand.u32 %v1026, 15
        %v1029 = vsub.s32 0, %v1028
        %v1030 = vsel %vm1024, %v1029, %v1028
        %vm1031 = vcmp.lt.s32.totalorder %v861, 0
        %v1032 = vsub.s32 0, %v861
        %v1033 = vsel %vm1031, %v1032, %v861
        %v1034 = vshrl.u32 %v1033, 4
        %v1035 = vand.u32 %v1033, 15
        %v1036 = vsub.s32 0, %v1035
        %v1037 = vsel %vm1031, %v1036, %v1035
        %vm1038 = vcmp.lt.s32.totalorder %v862, 0
        %v1039 = vsub.s32 0, %v862
        %v1040 = vsel %vm1038, %v1039, %v862
        %v1041 = vshrl.u32 %v1040, 4
        %v1042 = vand.u32 %v1040, 15
        %v1043 = vsub.s32 0, %v1042
        %v1044 = vsel %vm1038, %v1043, %v1042
        %vm1045 = vcmp.lt.s32.totalorder %v863, 0
        %v1046 = vsub.s32 0, %v863
        %v1047 = vsel %vm1045, %v1046, %v863
        %v1048 = vshrl.u32 %v1047, 4
        %v1049 = vand.u32 %v1047, 15
        %v1050 = vsub.s32 0, %v1049
        %v1051 = vsel %vm1045, %v1050, %v1049
        %vm1052 = vcmp.lt.s32.totalorder %v864, 0
        %v1053 = vsub.s32 0, %v864
        %v1054 = vsel %vm1052, %v1053, %v864
        %v1055 = vshrl.u32 %v1054, 4
        %v1056 = vand.u32 %v1054, 15
        %v1057 = vsub.s32 0, %v1056
        %v1058 = vsel %vm1052, %v1057, %v1056
        %vm1059 = vcmp.lt.s32.totalorder %v865, 0
        %v1060 = vsub.s32 0, %v865
        %v1061 = vsel %vm1059, %v1060, %v865
        %v1062 = vshrl.u32 %v1061, 4
        %v1063 = vand.u32 %v1061, 15
        %v1064 = vsub.s32 0, %v1063
        %v1065 = vsel %vm1059, %v1064, %v1063
        %vm1066 = vcmp.lt.s32.totalorder %v866, 0
        %v1067 = vsub.s32 0, %v866
        %v1068 = vsel %vm1066, %v1067, %v866
        %v1069 = vshrl.u32 %v1068, 4
        %v1070 = vand.u32 %v1068, 15
        %v1071 = vsub.s32 0, %v1070
        %v1072 = vsel %vm1066, %v1071, %v1070
        %vm1073 = vcmp.lt.s32.totalorder %v867, 0
        %v1074 = vsub.s32 0, %v867
        %v1075 = vsel %vm1073, %v1074, %v867
        %v1076 = vshrl.u32 %v1075, 4
        %v1077 = vand.u32 %v1075, 15
        %v1078 = vsub.s32 0, %v1077
        %v1079 = vsel %vm1073, %v1078, %v1077
        %vm1080 = vcmp.lt.s32.totalorder %v868, 0
        %v1081 = vsub.s32 0, %v868
        %v1082 = vsel %vm1080, %v1081, %v868
        %v1083 = vshrl.u32 %v1082, 4
        %v1084 = vand.u32 %v1082, 15
        %v1085 = vsub.s32 0, %v1084
        %v1086 = vsel %vm1080, %v1085, %v1084
        %vm1087 = vcmp.lt.s32.totalorder %v869, 0
        %v1088 = vsub.s32 0, %v869
        %v1089 = vsel %vm1087, %v1088, %v869
        %v1090 = vshrl.u32 %v1089, 4
        %v1091 = vand.u32 %v1089, 15
        %v1092 = vsub.s32 0, %v1091
        %v1093 = vsel %vm1087, %v1092, %v1091
        %vm1094 = vcmp.ne.s32.totalorder %v876, 0
        %vm1095 = vcmp.ne.s32.totalorder %v883, 0
        %vm1096 = vcmp.ne.s32.totalorder %v890, 0
        %vm1097 = vcmp.ne.s32.totalorder %v897, 0
        %vm1098 = vcmp.ne.s32.totalorder %v904, 0
        %vm1099 = vcmp.ne.s32.totalorder %v911, 0
        %vm1100 = vcmp.ne.s32.totalorder %v918, 0
        %vm1101 = vcmp.ne.s32.totalorder %v925, 0
        %vm1102 = vcmp.ne.s32.totalorder %v932, 0
        %vm1103 = vcmp.ne.s32.totalorder %v939, 0
        %vm1104 = vcmp.ne.s32.totalorder %v946, 0
        %vm1105 = vcmp.ne.s32.totalorder %v953, 0
        %vm1106 = vcmp.ne.s32.totalorder %v960, 0
        %vm1107 = vcmp.ne.s32.totalorder %v967, 0
        %vm1108 = vcmp.ne.s32.totalorder %v974, 0
        %vm1109 = vcmp.ne.s32.totalorder %v981, 0
        %vm1110 = vcmp.ne.s32.totalorder %v988, 0
        %vm1111 = vcmp.ne.s32.totalorder %v995, 0
        %vm1112 = vcmp.ne.s32.totalorder %v1002, 0
        %vm1113 = vcmp.ne.s32.totalorder %v1009, 0
        %vm1114 = vcmp.ne.s32.totalorder %v1016, 0
        %vm1115 = vcmp.ne.s32.totalorder %v1023, 0
        %vm1116 = vcmp.ne.s32.totalorder %v1030, 0
        %vm1117 = vcmp.ne.s32.totalorder %v1037, 0
        %vm1118 = vcmp.ne.s32.totalorder %v1044, 0
        %vm1119 = vcmp.ne.s32.totalorder %v1051, 0
        %vm1120 = vcmp.ne.s32.totalorder %v1058, 0
        %vm1121 = vcmp.ne.s32.totalorder %v1065, 0
        %vm1122 = vcmp.ne.s32.totalorder %v1072, 0
        %vm1123 = vcmp.ne.s32.totalorder %v1079, 0
        %vm1124 = vcmp.ne.s32.totalorder %v1086, 0
        %vm1125 = vcmp.ne.s32.totalorder %v1093, 0
        %vm1126 = vcmp.lt.s32.totalorder %v876, 0
        %vm1127 = vcmp.lt.s32.totalorder %v883, 0
        %vm1128 = vcmp.lt.s32.totalorder %v890, 0
        %vm1129 = vcmp.lt.s32.totalorder %v897, 0
        %vm1130 = vcmp.lt.s32.totalorder %v904, 0
        %vm1131 = vcmp.lt.s32.totalorder %v911, 0
        %vm1132 = vcmp.lt.s32.totalorder %v918, 0
        %vm1133 = vcmp.lt.s32.totalorder %v925, 0
        %vm1134 = vcmp.lt.s32.totalorder %v932, 0
        %vm1135 = vcmp.lt.s32.totalorder %v939, 0
        %vm1136 = vcmp.lt.s32.totalorder %v946, 0
        %vm1137 = vcmp.lt.s32.totalorder %v953, 0
        %vm1138 = vcmp.lt.s32.totalorder %v960, 0
        %vm1139 = vcmp.lt.s32.totalorder %v967, 0
        %vm1140 = vcmp.lt.s32.totalorder %v974, 0
        %vm1141 = vcmp.lt.s32.totalorder %v981, 0
        %vm1142 = vcmp.lt.s32.totalorder %v988, 0
        %vm1143 = vcmp.lt.s32.totalorder %v995, 0
        %vm1144 = vcmp.lt.s32.totalorder %v1002, 0
        %vm1145 = vcmp.lt.s32.totalorder %v1009, 0
        %vm1146 = vcmp.lt.s32.totalorder %v1016, 0
        %vm1147 = vcmp.lt.s32.totalorder %v1023, 0
        %vm1148 = vcmp.lt.s32.totalorder %v1030, 0
        %vm1149 = vcmp.lt.s32.totalorder %v1037, 0
        %vm1150 = vcmp.lt.s32.totalorder %v1044, 0
        %vm1151 = vcmp.lt.s32.totalorder %v1051, 0
        %vm1152 = vcmp.lt.s32.totalorder %v1058, 0
        %vm1153 = vcmp.lt.s32.totalorder %v1065, 0
        %vm1154 = vcmp.lt.s32.totalorder %v1072, 0
        %vm1155 = vcmp.lt.s32.totalorder %v1079, 0
        %vm1156 = vcmp.lt.s32.totalorder %v1086, 0
        %vm1157 = vcmp.lt.s32.totalorder %v1093, 0
        %vm1158 = vmand %vm1126, %vm1094
        %vm1159 = vmand %vm1127, %vm1095
        %vm1160 = vmand %vm1128, %vm1096
        %vm1161 = vmand %vm1129, %vm1097
        %vm1162 = vmand %vm1130, %vm1098
        %vm1163 = vmand %vm1131, %vm1099
        %vm1164 = vmand %vm1132, %vm1100
        %vm1165 = vmand %vm1133, %vm1101
        %vm1166 = vmand %vm1134, %vm1102
        %vm1167 = vmand %vm1135, %vm1103
        %vm1168 = vmand %vm1136, %vm1104
        %vm1169 = vmand %vm1137, %vm1105
        %vm1170 = vmand %vm1138, %vm1106
        %vm1171 = vmand %vm1139, %vm1107
        %vm1172 = vmand %vm1140, %vm1108
        %vm1173 = vmand %vm1141, %vm1109
        %vm1174 = vmand %vm1142, %vm1110
        %vm1175 = vmand %vm1143, %vm1111
        %vm1176 = vmand %vm1144, %vm1112
        %vm1177 = vmand %vm1145, %vm1113
        %vm1178 = vmand %vm1146, %vm1114
        %vm1179 = vmand %vm1147, %vm1115
        %vm1180 = vmand %vm1148, %vm1116
        %vm1181 = vmand %vm1149, %vm1117
        %vm1182 = vmand %vm1150, %vm1118
        %vm1183 = vmand %vm1151, %vm1119
        %vm1184 = vmand %vm1152, %vm1120
        %vm1185 = vmand %vm1153, %vm1121
        %vm1186 = vmand %vm1154, %vm1122
        %vm1187 = vmand %vm1155, %vm1123
        %vm1188 = vmand %vm1156, %vm1124
        %vm1189 = vmand %vm1157, %vm1125
        %v1190 = vadd.s32 %v876, 16
        %v1191 = vadd.s32 %v883, 16
        %v1192 = vadd.s32 %v890, 16
        %v1193 = vadd.s32 %v897, 16
        %v1194 = vadd.s32 %v904, 16
        %v1195 = vadd.s32 %v911, 16
        %v1196 = vadd.s32 %v918, 16
        %v1197 = vadd.s32 %v925, 16
        %v1198 = vadd.s32 %v932, 16
        %v1199 = vadd.s32 %v939, 16
        %v1200 = vadd.s32 %v946, 16
        %v1201 = vadd.s32 %v953, 16
        %v1202 = vadd.s32 %v960, 16
        %v1203 = vadd.s32 %v967, 16
        %v1204 = vadd.s32 %v974, 16
        %v1205 = vadd.s32 %v981, 16
        %v1206 = vadd.s32 %v988, 16
        %v1207 = vadd.s32 %v995, 16
        %v1208 = vadd.s32 %v1002, 16
        %v1209 = vadd.s32 %v1009, 16
        %v1210 = vadd.s32 %v1016, 16
        %v1211 = vadd.s32 %v1023, 16
        %v1212 = vadd.s32 %v1030, 16
        %v1213 = vadd.s32 %v1037, 16
        %v1214 = vadd.s32 %v1044, 16
        %v1215 = vadd.s32 %v1051, 16
        %v1216 = vadd.s32 %v1058, 16
        %v1217 = vadd.s32 %v1065, 16
        %v1218 = vadd.s32 %v1072, 16
        %v1219 = vadd.s32 %v1079, 16
        %v1220 = vadd.s32 %v1086, 16
        %v1221 = vadd.s32 %v1093, 16
        %v1222 = vsel %vm1158, %v1190, %v876
        %v1223 = vsel %vm1159, %v1191, %v883
        %v1224 = vsel %vm1160, %v1192, %v890
        %v1225 = vsel %vm1161, %v1193, %v897
        %v1226 = vsel %vm1162, %v1194, %v904
        %v1227 = vsel %vm1163, %v1195, %v911
        %v1228 = vsel %vm1164, %v1196, %v918
        %v1229 = vsel %vm1165, %v1197, %v925
        %v1230 = vsel %vm1166, %v1198, %v932
        %v1231 = vsel %vm1167, %v1199, %v939
        %v1232 = vsel %vm1168, %v1200, %v946
        %v1233 = vsel %vm1169, %v1201, %v953
        %v1234 = vsel %vm1170, %v1202, %v960
        %v1235 = vsel %vm1171, %v1203, %v967
        %v1236 = vsel %vm1172, %v1204, %v974
        %v1237 = vsel %vm1173, %v1205, %v981
        %v1238 = vsel %vm1174, %v1206, %v988
        %v1239 = vsel %vm1175, %v1207, %v995
        %v1240 = vsel %vm1176, %v1208, %v1002
        %v1241 = vsel %vm1177, %v1209, %v1009
        %v1242 = vsel %vm1178, %v1210, %v1016
        %v1243 = vsel %vm1179, %v1211, %v1023
        %v1244 = vsel %vm1180, %v1212, %v1030
        %v1245 = vsel %vm1181, %v1213, %v1037
        %v1246 = vsel %vm1182, %v1214, %v1044
        %v1247 = vsel %vm1183, %v1215, %v1051
        %v1248 = vsel %vm1184, %v1216, %v1058
        %v1249 = vsel %vm1185, %v1217, %v1065
        %v1250 = vsel %vm1186, %v1218, %v1072
        %v1251 = vsel %vm1187, %v1219, %v1079
        %v1252 = vsel %vm1188, %v1220, %v1086
        %v1253 = vsel %vm1189, %v1221, %v1093
        %vm1254 = vsmask.f32 256
        %v1256 = vshrl.u32 %v821, 16
        %v1258 = vrot.slane %v1256, 7
        %v1259 = vshll.u32 %v821, 16
        %v1261 = vor.u32 %v1258, %v1259
        %v1263 = vshrl.u32 %v822, 16
        %v1265 = vrot.slane %v1263, 7
        %v1266 = vshll.u32 %v822, 16
        %v1268 = vor.u32 %v1265, %v1266
        %v1269 = vsel %vm1254, %v1258, %v1268
        %v1271 = vshrl.u32 %v823, 16
        %v1273 = vrot.slane %v1271, 7
        %v1274 = vshll.u32 %v823, 16
        %v1276 = vor.u32 %v1273, %v1274
        %v1277 = vsel %vm1254, %v1265, %v1276
        %v1279 = vshrl.u32 %v824, 16
        %v1281 = vrot.slane %v1279, 7
        %v1282 = vshll.u32 %v824, 16
        %v1284 = vor.u32 %v1281, %v1282
        %v1285 = vsel %vm1254, %v1273, %v1284
        %v1287 = vshrl.u32 %v825, 16
        %v1289 = vrot.slane %v1287, 7
        %v1290 = vshll.u32 %v825, 16
        %v1292 = vor.u32 %v1289, %v1290
        %v1293 = vsel %vm1254, %v1281, %v1292
        %v1295 = vshrl.u32 %v826, 16
        %v1297 = vrot.slane %v1295, 7
        %v1298 = vshll.u32 %v826, 16
        %v1300 = vor.u32 %v1297, %v1298
        %v1301 = vsel %vm1254, %v1289, %v1300
        %v1303 = vshrl.u32 %v827, 16
        %v1305 = vrot.slane %v1303, 7
        %v1306 = vshll.u32 %v827, 16
        %v1308 = vor.u32 %v1305, %v1306
        %v1309 = vsel %vm1254, %v1297, %v1308
        %v1311 = vshrl.u32 %v828, 16
        %v1313 = vrot.slane %v1311, 7
        %v1314 = vshll.u32 %v828, 16
        %v1316 = vor.u32 %v1313, %v1314
        %v1317 = vsel %vm1254, %v1305, %v1316
        %v1319 = vshrl.u32 %v829, 16
        %v1321 = vrot.slane %v1319, 7
        %v1322 = vshll.u32 %v829, 16
        %v1324 = vor.u32 %v1321, %v1322
        %v1325 = vsel %vm1254, %v1313, %v1324
        %v1327 = vshrl.u32 %v830, 16
        %v1329 = vrot.slane %v1327, 7
        %v1330 = vshll.u32 %v830, 16
        %v1332 = vor.u32 %v1329, %v1330
        %v1333 = vsel %vm1254, %v1321, %v1332
        %v1335 = vshrl.u32 %v831, 16
        %v1337 = vrot.slane %v1335, 7
        %v1338 = vshll.u32 %v831, 16
        %v1340 = vor.u32 %v1337, %v1338
        %v1341 = vsel %vm1254, %v1329, %v1340
        %v1343 = vshrl.u32 %v832, 16
        %v1345 = vrot.slane %v1343, 7
        %v1346 = vshll.u32 %v832, 16
        %v1348 = vor.u32 %v1345, %v1346
        %v1349 = vsel %vm1254, %v1337, %v1348
        %v1351 = vshrl.u32 %v833, 16
        %v1353 = vrot.slane %v1351, 7
        %v1354 = vshll.u32 %v833, 16
        %v1356 = vor.u32 %v1353, %v1354
        %v1357 = vsel %vm1254, %v1345, %v1356
        %v1359 = vshrl.u32 %v834, 16
        %v1361 = vrot.slane %v1359, 7
        %v1362 = vshll.u32 %v834, 16
        %v1364 = vor.u32 %v1361, %v1362
        %v1365 = vsel %vm1254, %v1353, %v1364
        %v1367 = vshrl.u32 %v835, 16
        %v1369 = vrot.slane %v1367, 7
        %v1370 = vshll.u32 %v835, 16
        %v1372 = vor.u32 %v1369, %v1370
        %v1373 = vsel %vm1254, %v1361, %v1372
        %v1375 = vshrl.u32 %v836, 16
        %v1377 = vrot.slane %v1375, 7
        %v1378 = vshll.u32 %v836, 16
        %v1380 = vor.u32 %v1377, %v1378
        %v1381 = vsel %vm1254, %v1369, %v1380
        %vm1398 = vcmask 1040384
        %vm1399 = vmand %vm1398, %vm1254
        %v1400 = vsel %vm1399, 0, %v1261
        %vm1401 = vcmp.gt.s32.totalorder %v1222, 0
        %vm1402 = vcmp.gt.s32.totalorder %v1223, 0
        %vm1403 = vcmp.gt.s32.totalorder %v1224, 0
        %vm1404 = vcmp.gt.s32.totalorder %v1225, 0
        %vm1405 = vcmp.gt.s32.totalorder %v1226, 0
        %vm1406 = vcmp.gt.s32.totalorder %v1227, 0
        %vm1407 = vcmp.gt.s32.totalorder %v1228, 0
        %vm1408 = vcmp.gt.s32.totalorder %v1229, 0
        %vm1409 = vcmp.gt.s32.totalorder %v1230, 0
        %vm1410 = vcmp.gt.s32.totalorder %v1231, 0
        %vm1411 = vcmp.gt.s32.totalorder %v1232, 0
        %vm1412 = vcmp.gt.s32.totalorder %v1233, 0
        %vm1413 = vcmp.gt.s32.totalorder %v1234, 0
        %vm1414 = vcmp.gt.s32.totalorder %v1235, 0
        %vm1415 = vcmp.gt.s32.totalorder %v1236, 0
        %vm1416 = vcmp.gt.s32.totalorder %v1237, 0
        %vm1417 = vcmp.gt.s32.totalorder %v1238, 0
        %vm1418 = vcmp.gt.s32.totalorder %v1239, 0
        %vm1419 = vcmp.gt.s32.totalorder %v1240, 0
        %vm1420 = vcmp.gt.s32.totalorder %v1241, 0
        %vm1421 = vcmp.gt.s32.totalorder %v1242, 0
        %vm1422 = vcmp.gt.s32.totalorder %v1243, 0
        %vm1423 = vcmp.gt.s32.totalorder %v1244, 0
        %vm1424 = vcmp.gt.s32.totalorder %v1245, 0
        %vm1425 = vcmp.gt.s32.totalorder %v1246, 0
        %vm1426 = vcmp.gt.s32.totalorder %v1247, 0
        %vm1427 = vcmp.gt.s32.totalorder %v1248, 0
        %vm1428 = vcmp.gt.s32.totalorder %v1249, 0
        %vm1429 = vcmp.gt.s32.totalorder %v1250, 0
        %vm1430 = vcmp.gt.s32.totalorder %v1251, 0
        %vm1431 = vcmp.gt.s32.totalorder %v1252, 0
        %vm1432 = vcmp.gt.s32.totalorder %v1253, 0
        %v1433 = vsel %vm1401, 1, 0
        %v1434 = vsel %vm1402, 1, 0
        %v1435 = vsel %vm1403, 1, 0
        %v1436 = vsel %vm1404, 1, 0
        %v1437 = vsel %vm1405, 1, 0
        %v1438 = vsel %vm1406, 1, 0
        %v1439 = vsel %vm1407, 1, 0
        %v1440 = vsel %vm1408, 1, 0
        %v1441 = vsel %vm1409, 1, 0
        %v1442 = vsel %vm1410, 1, 0
        %v1443 = vsel %vm1411, 1, 0
        %v1444 = vsel %vm1412, 1, 0
        %v1445 = vsel %vm1413, 1, 0
        %v1446 = vsel %vm1414, 1, 0
        %v1447 = vsel %vm1415, 1, 0
        %v1448 = vsel %vm1416, 1, 0
        %v1449 = vsel %vm1417, 1, 0
        %v1450 = vsel %vm1418, 1, 0
        %v1451 = vsel %vm1419, 1, 0
        %v1452 = vsel %vm1420, 1, 0
        %v1453 = vsel %vm1421, 1, 0
        %v1454 = vsel %vm1422, 1, 0
        %v1455 = vsel %vm1423, 1, 0
        %v1456 = vsel %vm1424, 1, 0
        %v1457 = vsel %vm1425, 1, 0
        %v1458 = vsel %vm1426, 1, 0
        %v1459 = vsel %vm1427, 1, 0
        %v1460 = vsel %vm1428, 1, 0
        %v1461 = vsel %vm1429, 1, 0
        %v1462 = vsel %vm1430, 1, 0
        %v1463 = vsel %vm1431, 1, 0
        %v1464 = vsel %vm1432, 1, 0
        %vm1465 = vcmp.eq.s32.totalorder %v1433, 1
        %vm1466 = vcmp.eq.s32.totalorder %v1434, 1
        %vm1467 = vcmp.eq.s32.totalorder %v1435, 1
        %vm1468 = vcmp.eq.s32.totalorder %v1436, 1
        %vm1469 = vcmp.eq.s32.totalorder %v1437, 1
        %vm1470 = vcmp.eq.s32.totalorder %v1438, 1
        %vm1471 = vcmp.eq.s32.totalorder %v1439, 1
        %vm1472 = vcmp.eq.s32.totalorder %v1440, 1
        %vm1473 = vcmp.eq.s32.totalorder %v1441, 1
        %vm1474 = vcmp.eq.s32.totalorder %v1442, 1
        %vm1475 = vcmp.eq.s32.totalorder %v1443, 1
        %vm1476 = vcmp.eq.s32.totalorder %v1444, 1
        %vm1477 = vcmp.eq.s32.totalorder %v1445, 1
        %vm1478 = vcmp.eq.s32.totalorder %v1446, 1
        %vm1479 = vcmp.eq.s32.totalorder %v1447, 1
        %vm1480 = vcmp.eq.s32.totalorder %v1448, 1
        %vm1481 = vcmp.eq.s32.totalorder %v1449, 1
        %vm1482 = vcmp.eq.s32.totalorder %v1450, 1
        %vm1483 = vcmp.eq.s32.totalorder %v1451, 1
        %vm1484 = vcmp.eq.s32.totalorder %v1452, 1
        %vm1485 = vcmp.eq.s32.totalorder %v1453, 1
        %vm1486 = vcmp.eq.s32.totalorder %v1454, 1
        %vm1487 = vcmp.eq.s32.totalorder %v1455, 1
        %vm1488 = vcmp.eq.s32.totalorder %v1456, 1
        %vm1489 = vcmp.eq.s32.totalorder %v1457, 1
        %vm1490 = vcmp.eq.s32.totalorder %v1458, 1
        %vm1491 = vcmp.eq.s32.totalorder %v1459, 1
        %vm1492 = vcmp.eq.s32.totalorder %v1460, 1
        %vm1493 = vcmp.eq.s32.totalorder %v1461, 1
        %vm1494 = vcmp.eq.s32.totalorder %v1462, 1
        %vm1495 = vcmp.eq.s32.totalorder %v1463, 1
        %vm1496 = vcmp.eq.s32.totalorder %v1464, 1
        %vm1497 = vmpackc.low %vm1465, %vm1465
        %vm1498 = vmpackc.low %vm1466, %vm1466
        %vm1499 = vmpackc.low %vm1467, %vm1467
        %vm1500 = vmpackc.low %vm1468, %vm1468
        %vm1501 = vmpackc.low %vm1469, %vm1469
        %vm1502 = vmpackc.low %vm1470, %vm1470
        %vm1503 = vmpackc.low %vm1471, %vm1471
        %vm1504 = vmpackc.low %vm1472, %vm1472
        %vm1505 = vmpackc.low %vm1473, %vm1473
        %vm1506 = vmpackc.low %vm1474, %vm1474
        %vm1507 = vmpackc.low %vm1475, %vm1475
        %vm1508 = vmpackc.low %vm1476, %vm1476
        %vm1509 = vmpackc.low %vm1477, %vm1477
        %vm1510 = vmpackc.low %vm1478, %vm1478
        %vm1511 = vmpackc.low %vm1479, %vm1479
        %vm1512 = vmpackc.low %vm1480, %vm1480
        %vm1513 = vmpackc.low %vm1481, %vm1481
        %vm1514 = vmpackc.low %vm1482, %vm1482
        %vm1515 = vmpackc.low %vm1483, %vm1483
        %vm1516 = vmpackc.low %vm1484, %vm1484
        %vm1517 = vmpackc.low %vm1485, %vm1485
        %vm1518 = vmpackc.low %vm1486, %vm1486
        %vm1519 = vmpackc.low %vm1487, %vm1487
        %vm1520 = vmpackc.low %vm1488, %vm1488
        %vm1521 = vmpackc.low %vm1489, %vm1489
        %vm1522 = vmpackc.low %vm1490, %vm1490
        %vm1523 = vmpackc.low %vm1491, %vm1491
        %vm1524 = vmpackc.low %vm1492, %vm1492
        %vm1525 = vmpackc.low %vm1493, %vm1493
        %vm1526 = vmpackc.low %vm1494, %vm1494
        %vm1527 = vmpackc.low %vm1495, %vm1495
        %vm1528 = vmpackc.low %vm1496, %vm1496
        %v1529 = vsel %vm1497, 65537, 0
        %v1530 = vsel %vm1498, 65537, 0
        %v1531 = vsel %vm1499, 65537, 0
        %v1532 = vsel %vm1500, 65537, 0
        %v1533 = vsel %vm1501, 65537, 0
        %v1534 = vsel %vm1502, 65537, 0
        %v1535 = vsel %vm1503, 65537, 0
        %v1536 = vsel %vm1504, 65537, 0
        %v1537 = vsel %vm1505, 65537, 0
        %v1538 = vsel %vm1506, 65537, 0
        %v1539 = vsel %vm1507, 65537, 0
        %v1540 = vsel %vm1508, 65537, 0
        %v1541 = vsel %vm1509, 65537, 0
        %v1542 = vsel %vm1510, 65537, 0
        %v1543 = vsel %vm1511, 65537, 0
        %v1544 = vsel %vm1512, 65537, 0
        %v1545 = vsel %vm1513, 65537, 0
        %v1546 = vsel %vm1514, 65537, 0
        %v1547 = vsel %vm1515, 65537, 0
        %v1548 = vsel %vm1516, 65537, 0
        %v1549 = vsel %vm1517, 65537, 0
        %v1550 = vsel %vm1518, 65537, 0
        %v1551 = vsel %vm1519, 65537, 0
        %v1552 = vsel %vm1520, 65537, 0
        %v1553 = vsel %vm1521, 65537, 0
        %v1554 = vsel %vm1522, 65537, 0
        %v1555 = vsel %vm1523, 65537, 0
        %v1556 = vsel %vm1524, 65537, 0
        %v1557 = vsel %vm1525, 65537, 0
        %v1558 = vsel %vm1526, 65537, 0
        %v1559 = vsel %vm1527, 65537, 0
        %v1560 = vsel %vm1528, 65537, 0
        %v1561 = vunpack.c.l.b16 %v1529
        %v1562 = vunpack.c.l.b16 %v1530
        %v1563 = vunpack.c.l.b16 %v1531
        %v1564 = vunpack.c.l.b16 %v1532
        %v1565 = vunpack.c.l.b16 %v1533
        %v1566 = vunpack.c.l.b16 %v1534
        %v1567 = vunpack.c.l.b16 %v1535
        %v1568 = vunpack.c.l.b16 %v1536
        %v1569 = vunpack.c.l.b16 %v1537
        %v1570 = vunpack.c.l.b16 %v1538
        %v1571 = vunpack.c.l.b16 %v1539
        %v1572 = vunpack.c.l.b16 %v1540
        %v1573 = vunpack.c.l.b16 %v1541
        %v1574 = vunpack.c.l.b16 %v1542
        %v1575 = vunpack.c.l.b16 %v1543
        %v1576 = vunpack.c.l.b16 %v1544
        %v1577 = vunpack.c.l.b16 %v1545
        %v1578 = vunpack.c.l.b16 %v1546
        %v1579 = vunpack.c.l.b16 %v1547
        %v1580 = vunpack.c.l.b16 %v1548
        %v1581 = vunpack.c.l.b16 %v1549
        %v1582 = vunpack.c.l.b16 %v1550
        %v1583 = vunpack.c.l.b16 %v1551
        %v1584 = vunpack.c.l.b16 %v1552
        %v1585 = vunpack.c.l.b16 %v1553
        %v1586 = vunpack.c.l.b16 %v1554
        %v1587 = vunpack.c.l.b16 %v1555
        %v1588 = vunpack.c.l.b16 %v1556
        %v1589 = vunpack.c.l.b16 %v1557
        %v1590 = vunpack.c.l.b16 %v1558
        %v1591 = vunpack.c.l.b16 %v1559
        %v1592 = vunpack.c.l.b16 %v1560
        %v1593 = vpack.c.b16 %v1562, %v1561
        %v1594 = vpack.c.b16 %v1564, %v1563
        %v1595 = vpack.c.b16 %v1566, %v1565
        %v1596 = vpack.c.b16 %v1568, %v1567
        %v1597 = vpack.c.b16 %v1570, %v1569
        %v1598 = vpack.c.b16 %v1572, %v1571
        %v1599 = vpack.c.b16 %v1574, %v1573
        %v1600 = vpack.c.b16 %v1576, %v1575
        %v1601 = vpack.c.b16 %v1578, %v1577
        %v1602 = vpack.c.b16 %v1580, %v1579
        %v1603 = vpack.c.b16 %v1582, %v1581
        %v1604 = vpack.c.b16 %v1584, %v1583
        %v1605 = vpack.c.b16 %v1586, %v1585
        %v1606 = vpack.c.b16 %v1588, %v1587
        %v1607 = vpack.c.b16 %v1590, %v1589
        %v1608 = vpack.c.b16 %v1592, %v1591
        %vm1609 = vcmp.ne.s16.totalorder %v1593, 0
        %vm1610 = vcmp.ne.s16.totalorder %v1594, 0
        %vm1611 = vcmp.ne.s16.totalorder %v1595, 0
        %vm1612 = vcmp.ne.s16.totalorder %v1596, 0
        %vm1613 = vcmp.ne.s16.totalorder %v1597, 0
        %vm1614 = vcmp.ne.s16.totalorder %v1598, 0
        %vm1615 = vcmp.ne.s16.totalorder %v1599, 0
        %vm1616 = vcmp.ne.s16.totalorder %v1600, 0
        %vm1617 = vcmp.ne.s16.totalorder %v1601, 0
        %vm1618 = vcmp.ne.s16.totalorder %v1602, 0
        %vm1619 = vcmp.ne.s16.totalorder %v1603, 0
        %vm1620 = vcmp.ne.s16.totalorder %v1604, 0
        %vm1621 = vcmp.ne.s16.totalorder %v1605, 0
        %vm1622 = vcmp.ne.s16.totalorder %v1606, 0
        %vm1623 = vcmp.ne.s16.totalorder %v1607, 0
        %vm1624 = vcmp.ne.s16.totalorder %v1608, 0
        %v1625 = vsel %vm1609, %v1400, 0
        %v1626 = vsel %vm1610, %v1269, 0
        %v1627 = vsel %vm1611, %v1277, 0
        %v1628 = vsel %vm1612, %v1285, 0
        %v1629 = vsel %vm1613, %v1293, 0
        %v1630 = vsel %vm1614, %v1301, 0
        %v1631 = vsel %vm1615, %v1309, 0
        %v1632 = vsel %vm1616, %v1317, 0
        %v1633 = vsel %vm1617, %v1325, 0
        %v1634 = vsel %vm1618, %v1333, 0
        %v1635 = vsel %vm1619, %v1341, 0
        %v1636 = vsel %vm1620, %v1349, 0
        %v1637 = vsel %vm1621, %v1357, 0
        %v1638 = vsel %vm1622, %v1365, 0
        %v1639 = vsel %vm1623, %v1373, 0
        %v1640 = vsel %vm1624, %v1381, 0
        %vm1641 = vsmask.f32 7424
        %v1642 = vrot.slane %v1259, 1
        %v1643 = vor.u32 %v1256, %v1642
        %v1644 = vrot.slane %v1266, 1
        %v1645 = vsel %vm1641, %v1643, %v1644
        %v1646 = vor.u32 %v1263, %v1644
        %v1647 = vrot.slane %v1274, 1
        %v1648 = vsel %vm1641, %v1646, %v1647
        %v1649 = vor.u32 %v1271, %v1647
        %v1650 = vrot.slane %v1282, 1
        %v1651 = vsel %vm1641, %v1649, %v1650
        %v1652 = vor.u32 %v1279, %v1650
        %v1653 = vrot.slane %v1290, 1
        %v1654 = vsel %vm1641, %v1652, %v1653
        %v1655 = vor.u32 %v1287, %v1653
        %v1656 = vrot.slane %v1298, 1
        %v1657 = vsel %vm1641, %v1655, %v1656
        %v1658 = vor.u32 %v1295, %v1656
        %v1659 = vrot.slane %v1306, 1
        %v1660 = vsel %vm1641, %v1658, %v1659
        %v1661 = vor.u32 %v1303, %v1659
        %v1662 = vrot.slane %v1314, 1
        %v1663 = vsel %vm1641, %v1661, %v1662
        %v1664 = vor.u32 %v1311, %v1662
        %v1665 = vrot.slane %v1322, 1
        %v1666 = vsel %vm1641, %v1664, %v1665
        %v1667 = vor.u32 %v1319, %v1665
        %v1668 = vrot.slane %v1330, 1
        %v1669 = vsel %vm1641, %v1667, %v1668
        %v1670 = vor.u32 %v1327, %v1668
        %v1671 = vrot.slane %v1338, 1
        %v1672 = vsel %vm1641, %v1670, %v1671
        %v1673 = vor.u32 %v1335, %v1671
        %v1674 = vrot.slane %v1346, 1
        %v1675 = vsel %vm1641, %v1673, %v1674
        %v1676 = vor.u32 %v1343, %v1674
        %v1677 = vrot.slane %v1354, 1
        %v1678 = vsel %vm1641, %v1676, %v1677
        %v1679 = vor.u32 %v1351, %v1677
        %v1680 = vrot.slane %v1362, 1
        %v1681 = vsel %vm1641, %v1679, %v1680
        %v1682 = vor.u32 %v1359, %v1680
        %v1683 = vrot.slane %v1370, 1
        %v1684 = vsel %vm1641, %v1682, %v1683
        %v1685 = vor.u32 %v1367, %v1683
        %v1686 = vrot.slane %v1378, 1
        %v1687 = vsel %vm1641, %v1685, %v1686
        %v1688 = vor.u32 %v1375, %v1686
        %vm1705 = vcmask 1047552
        %vm1706 = vmand %vm1705, %vm1641
        %v1707 = vsel %vm1706, %v1688, 0
        %vm1708 = vcmp.lt.s32.totalorder %v1222, 15
        %vm1709 = vcmp.lt.s32.totalorder %v1223, 15
        %vm1710 = vcmp.lt.s32.totalorder %v1224, 15
        %vm1711 = vcmp.lt.s32.totalorder %v1225, 15
        %vm1712 = vcmp.lt.s32.totalorder %v1226, 15
        %vm1713 = vcmp.lt.s32.totalorder %v1227, 15
        %vm1714 = vcmp.lt.s32.totalorder %v1228, 15
        %vm1715 = vcmp.lt.s32.totalorder %v1229, 15
        %vm1716 = vcmp.lt.s32.totalorder %v1230, 15
        %vm1717 = vcmp.lt.s32.totalorder %v1231, 15
        %vm1718 = vcmp.lt.s32.totalorder %v1232, 15
        %vm1719 = vcmp.lt.s32.totalorder %v1233, 15
        %vm1720 = vcmp.lt.s32.totalorder %v1234, 15
        %vm1721 = vcmp.lt.s32.totalorder %v1235, 15
        %vm1722 = vcmp.lt.s32.totalorder %v1236, 15
        %vm1723 = vcmp.lt.s32.totalorder %v1237, 15
        %vm1724 = vcmp.lt.s32.totalorder %v1238, 15
        %vm1725 = vcmp.lt.s32.totalorder %v1239, 15
        %vm1726 = vcmp.lt.s32.totalorder %v1240, 15
        %vm1727 = vcmp.lt.s32.totalorder %v1241, 15
        %vm1728 = vcmp.lt.s32.totalorder %v1242, 15
        %vm1729 = vcmp.lt.s32.totalorder %v1243, 15
        %vm1730 = vcmp.lt.s32.totalorder %v1244, 15
        %vm1731 = vcmp.lt.s32.totalorder %v1245, 15
        %vm1732 = vcmp.lt.s32.totalorder %v1246, 15
        %vm1733 = vcmp.lt.s32.totalorder %v1247, 15
        %vm1734 = vcmp.lt.s32.totalorder %v1248, 15
        %vm1735 = vcmp.lt.s32.totalorder %v1249, 15
        %vm1736 = vcmp.lt.s32.totalorder %v1250, 15
        %vm1737 = vcmp.lt.s32.totalorder %v1251, 15
        %vm1738 = vcmp.lt.s32.totalorder %v1252, 15
        %vm1739 = vcmp.lt.s32.totalorder %v1253, 15
        %v1740 = vsel %vm1708, 1, 0
        %v1741 = vsel %vm1709, 1, 0
        %v1742 = vsel %vm1710, 1, 0
        %v1743 = vsel %vm1711, 1, 0
        %v1744 = vsel %vm1712, 1, 0
        %v1745 = vsel %vm1713, 1, 0
        %v1746 = vsel %vm1714, 1, 0
        %v1747 = vsel %vm1715, 1, 0
        %v1748 = vsel %vm1716, 1, 0
        %v1749 = vsel %vm1717, 1, 0
        %v1750 = vsel %vm1718, 1, 0
        %v1751 = vsel %vm1719, 1, 0
        %v1752 = vsel %vm1720, 1, 0
        %v1753 = vsel %vm1721, 1, 0
        %v1754 = vsel %vm1722, 1, 0
        %v1755 = vsel %vm1723, 1, 0
        %v1756 = vsel %vm1724, 1, 0
        %v1757 = vsel %vm1725, 1, 0
        %v1758 = vsel %vm1726, 1, 0
        %v1759 = vsel %vm1727, 1, 0
        %v1760 = vsel %vm1728, 1, 0
        %v1761 = vsel %vm1729, 1, 0
        %v1762 = vsel %vm1730, 1, 0
        %v1763 = vsel %vm1731, 1, 0
        %v1764 = vsel %vm1732, 1, 0
        %v1765 = vsel %vm1733, 1, 0
        %v1766 = vsel %vm1734, 1, 0
        %v1767 = vsel %vm1735, 1, 0
        %v1768 = vsel %vm1736, 1, 0
        %v1769 = vsel %vm1737, 1, 0
        %v1770 = vsel %vm1738, 1, 0
        %v1771 = vsel %vm1739, 1, 0
        %vm1772 = vcmp.eq.s32.totalorder %v1740, 1
        %vm1773 = vcmp.eq.s32.totalorder %v1741, 1
        %vm1774 = vcmp.eq.s32.totalorder %v1742, 1
        %vm1775 = vcmp.eq.s32.totalorder %v1743, 1
        %vm1776 = vcmp.eq.s32.totalorder %v1744, 1
        %vm1777 = vcmp.eq.s32.totalorder %v1745, 1
        %vm1778 = vcmp.eq.s32.totalorder %v1746, 1
        %vm1779 = vcmp.eq.s32.totalorder %v1747, 1
        %vm1780 = vcmp.eq.s32.totalorder %v1748, 1
        %vm1781 = vcmp.eq.s32.totalorder %v1749, 1
        %vm1782 = vcmp.eq.s32.totalorder %v1750, 1
        %vm1783 = vcmp.eq.s32.totalorder %v1751, 1
        %vm1784 = vcmp.eq.s32.totalorder %v1752, 1
        %vm1785 = vcmp.eq.s32.totalorder %v1753, 1
        %vm1786 = vcmp.eq.s32.totalorder %v1754, 1
        %vm1787 = vcmp.eq.s32.totalorder %v1755, 1
        %vm1788 = vcmp.eq.s32.totalorder %v1756, 1
        %vm1789 = vcmp.eq.s32.totalorder %v1757, 1
        %vm1790 = vcmp.eq.s32.totalorder %v1758, 1
        %vm1791 = vcmp.eq.s32.totalorder %v1759, 1
        %vm1792 = vcmp.eq.s32.totalorder %v1760, 1
        %vm1793 = vcmp.eq.s32.totalorder %v1761, 1
        %vm1794 = vcmp.eq.s32.totalorder %v1762, 1
        %vm1795 = vcmp.eq.s32.totalorder %v1763, 1
        %vm1796 = vcmp.eq.s32.totalorder %v1764, 1
        %vm1797 = vcmp.eq.s32.totalorder %v1765, 1
        %vm1798 = vcmp.eq.s32.totalorder %v1766, 1
        %vm1799 = vcmp.eq.s32.totalorder %v1767, 1
        %vm1800 = vcmp.eq.s32.totalorder %v1768, 1
        %vm1801 = vcmp.eq.s32.totalorder %v1769, 1
        %vm1802 = vcmp.eq.s32.totalorder %v1770, 1
        %vm1803 = vcmp.eq.s32.totalorder %v1771, 1
        %vm1804 = vmpackc.low %vm1772, %vm1772
        %vm1805 = vmpackc.low %vm1773, %vm1773
        %vm1806 = vmpackc.low %vm1774, %vm1774
        %vm1807 = vmpackc.low %vm1775, %vm1775
        %vm1808 = vmpackc.low %vm1776, %vm1776
        %vm1809 = vmpackc.low %vm1777, %vm1777
        %vm1810 = vmpackc.low %vm1778, %vm1778
        %vm1811 = vmpackc.low %vm1779, %vm1779
        %vm1812 = vmpackc.low %vm1780, %vm1780
        %vm1813 = vmpackc.low %vm1781, %vm1781
        %vm1814 = vmpackc.low %vm1782, %vm1782
        %vm1815 = vmpackc.low %vm1783, %vm1783
        %vm1816 = vmpackc.low %vm1784, %vm1784
        %vm1817 = vmpackc.low %vm1785, %vm1785
        %vm1818 = vmpackc.low %vm1786, %vm1786
        %vm1819 = vmpackc.low %vm1787, %vm1787
        %vm1820 = vmpackc.low %vm1788, %vm1788
        %vm1821 = vmpackc.low %vm1789, %vm1789
        %vm1822 = vmpackc.low %vm1790, %vm1790
        %vm1823 = vmpackc.low %vm1791, %vm1791
        %vm1824 = vmpackc.low %vm1792, %vm1792
        %vm1825 = vmpackc.low %vm1793, %vm1793
        %vm1826 = vmpackc.low %vm1794, %vm1794
        %vm1827 = vmpackc.low %vm1795, %vm1795
        %vm1828 = vmpackc.low %vm1796, %vm1796
        %vm1829 = vmpackc.low %vm1797, %vm1797
        %vm1830 = vmpackc.low %vm1798, %vm1798
        %vm1831 = vmpackc.low %vm1799, %vm1799
        %vm1832 = vmpackc.low %vm1800, %vm1800
        %vm1833 = vmpackc.low %vm1801, %vm1801
        %vm1834 = vmpackc.low %vm1802, %vm1802
        %vm1835 = vmpackc.low %vm1803, %vm1803
        %v1836 = vsel %vm1804, 65537, 0
        %v1837 = vsel %vm1805, 65537, 0
        %v1838 = vsel %vm1806, 65537, 0
        %v1839 = vsel %vm1807, 65537, 0
        %v1840 = vsel %vm1808, 65537, 0
        %v1841 = vsel %vm1809, 65537, 0
        %v1842 = vsel %vm1810, 65537, 0
        %v1843 = vsel %vm1811, 65537, 0
        %v1844 = vsel %vm1812, 65537, 0
        %v1845 = vsel %vm1813, 65537, 0
        %v1846 = vsel %vm1814, 65537, 0
        %v1847 = vsel %vm1815, 65537, 0
        %v1848 = vsel %vm1816, 65537, 0
        %v1849 = vsel %vm1817, 65537, 0
        %v1850 = vsel %vm1818, 65537, 0
        %v1851 = vsel %vm1819, 65537, 0
        %v1852 = vsel %vm1820, 65537, 0
        %v1853 = vsel %vm1821, 65537, 0
        %v1854 = vsel %vm1822, 65537, 0
        %v1855 = vsel %vm1823, 65537, 0
        %v1856 = vsel %vm1824, 65537, 0
        %v1857 = vsel %vm1825, 65537, 0
        %v1858 = vsel %vm1826, 65537, 0
        %v1859 = vsel %vm1827, 65537, 0
        %v1860 = vsel %vm1828, 65537, 0
        %v1861 = vsel %vm1829, 65537, 0
        %v1862 = vsel %vm1830, 65537, 0
        %v1863 = vsel %vm1831, 65537, 0
        %v1864 = vsel %vm1832, 65537, 0
        %v1865 = vsel %vm1833, 65537, 0
        %v1866 = vsel %vm1834, 65537, 0
        %v1867 = vsel %vm1835, 65537, 0
        %v1868 = vunpack.c.l.b16 %v1836
        %v1869 = vunpack.c.l.b16 %v1837
        %v1870 = vunpack.c.l.b16 %v1838
        %v1871 = vunpack.c.l.b16 %v1839
        %v1872 = vunpack.c.l.b16 %v1840
        %v1873 = vunpack.c.l.b16 %v1841
        %v1874 = vunpack.c.l.b16 %v1842
        %v1875 = vunpack.c.l.b16 %v1843
        %v1876 = vunpack.c.l.b16 %v1844
        %v1877 = vunpack.c.l.b16 %v1845
        %v1878 = vunpack.c.l.b16 %v1846
        %v1879 = vunpack.c.l.b16 %v1847
        %v1880 = vunpack.c.l.b16 %v1848
        %v1881 = vunpack.c.l.b16 %v1849
        %v1882 = vunpack.c.l.b16 %v1850
        %v1883 = vunpack.c.l.b16 %v1851
        %v1884 = vunpack.c.l.b16 %v1852
        %v1885 = vunpack.c.l.b16 %v1853
        %v1886 = vunpack.c.l.b16 %v1854
        %v1887 = vunpack.c.l.b16 %v1855
        %v1888 = vunpack.c.l.b16 %v1856
        %v1889 = vunpack.c.l.b16 %v1857
        %v1890 = vunpack.c.l.b16 %v1858
        %v1891 = vunpack.c.l.b16 %v1859
        %v1892 = vunpack.c.l.b16 %v1860
        %v1893 = vunpack.c.l.b16 %v1861
        %v1894 = vunpack.c.l.b16 %v1862
        %v1895 = vunpack.c.l.b16 %v1863
        %v1896 = vunpack.c.l.b16 %v1864
        %v1897 = vunpack.c.l.b16 %v1865
        %v1898 = vunpack.c.l.b16 %v1866
        %v1899 = vunpack.c.l.b16 %v1867
        %v1900 = vpack.c.b16 %v1869, %v1868
        %v1901 = vpack.c.b16 %v1871, %v1870
        %v1902 = vpack.c.b16 %v1873, %v1872
        %v1903 = vpack.c.b16 %v1875, %v1874
        %v1904 = vpack.c.b16 %v1877, %v1876
        %v1905 = vpack.c.b16 %v1879, %v1878
        %v1906 = vpack.c.b16 %v1881, %v1880
        %v1907 = vpack.c.b16 %v1883, %v1882
        %v1908 = vpack.c.b16 %v1885, %v1884
        %v1909 = vpack.c.b16 %v1887, %v1886
        %v1910 = vpack.c.b16 %v1889, %v1888
        %v1911 = vpack.c.b16 %v1891, %v1890
        %v1912 = vpack.c.b16 %v1893, %v1892
        %v1913 = vpack.c.b16 %v1895, %v1894
        %v1914 = vpack.c.b16 %v1897, %v1896
        %v1915 = vpack.c.b16 %v1899, %v1898
        %vm1916 = vcmp.ne.s16.totalorder %v1900, 0
        %vm1917 = vcmp.ne.s16.totalorder %v1901, 0
        %vm1918 = vcmp.ne.s16.totalorder %v1902, 0
        %vm1919 = vcmp.ne.s16.totalorder %v1903, 0
        %vm1920 = vcmp.ne.s16.totalorder %v1904, 0
        %vm1921 = vcmp.ne.s16.totalorder %v1905, 0
        %vm1922 = vcmp.ne.s16.totalorder %v1906, 0
        %vm1923 = vcmp.ne.s16.totalorder %v1907, 0
        %vm1924 = vcmp.ne.s16.totalorder %v1908, 0
        %vm1925 = vcmp.ne.s16.totalorder %v1909, 0
        %vm1926 = vcmp.ne.s16.totalorder %v1910, 0
        %vm1927 = vcmp.ne.s16.totalorder %v1911, 0
        %vm1928 = vcmp.ne.s16.totalorder %v1912, 0
        %vm1929 = vcmp.ne.s16.totalorder %v1913, 0
        %vm1930 = vcmp.ne.s16.totalorder %v1914, 0
        %vm1931 = vcmp.ne.s16.totalorder %v1915, 0
        %v1932 = vsel %vm1916, %v1645, 0
        %v1933 = vsel %vm1917, %v1648, 0
        %v1934 = vsel %vm1918, %v1651, 0
        %v1935 = vsel %vm1919, %v1654, 0
        %v1936 = vsel %vm1920, %v1657, 0
        %v1937 = vsel %vm1921, %v1660, 0
        %v1938 = vsel %vm1922, %v1663, 0
        %v1939 = vsel %vm1923, %v1666, 0
        %v1940 = vsel %vm1924, %v1669, 0
        %v1941 = vsel %vm1925, %v1672, 0
        %v1942 = vsel %vm1926, %v1675, 0
        %v1943 = vsel %vm1927, %v1678, 0
        %v1944 = vsel %vm1928, %v1681, 0
        %v1945 = vsel %vm1929, %v1684, 0
        %v1946 = vsel %vm1930, %v1687, 0
        %v1947 = vsel %vm1931, %v1707, 0
        %1964 = vrot.lane.b32.xlu0 %v821, 4
        %v1965 = vpop.permute.xlu0 %1964
        %1966 = vrot.lane.b32.xlu0 %v822, 4
        %v1967 = vpop.permute.xlu0 %1966
        %1968 = vrot.lane.b32.xlu0 %v823, 4
        %v1969 = vpop.permute.xlu0 %1968
        %1970 = vrot.lane.b32.xlu0 %v824, 4
        %v1971 = vpop.permute.xlu0 %1970
        %1972 = vrot.lane.b32.xlu0 %v825, 4
        %v1973 = vpop.permute.xlu0 %1972
        %1974 = vrot.lane.b32.xlu0 %v826, 4
        %v1975 = vpop.permute.xlu0 %1974
        %1976 = vrot.lane.b32.xlu0 %v827, 4
        %v1977 = vpop.permute.xlu0 %1976
        %1978 = vrot.lane.b32.xlu0 %v828, 4
        %v1979 = vpop.permute.xlu0 %1978
        %1980 = vrot.lane.b32.xlu0 %v829, 4
        %v1981 = vpop.permute.xlu0 %1980
        %1982 = vrot.lane.b32.xlu0 %v830, 4
        %v1983 = vpop.permute.xlu0 %1982
        %1984 = vrot.lane.b32.xlu0 %v831, 4
        %v1985 = vpop.permute.xlu0 %1984
        %1986 = vrot.lane.b32.xlu0 %v832, 4
        %v1987 = vpop.permute.xlu0 %1986
        %1988 = vrot.lane.b32.xlu0 %v833, 4
        %v1989 = vpop.permute.xlu0 %1988
        %1990 = vrot.lane.b32.xlu0 %v834, 4
        %v1991 = vpop.permute.xlu0 %1990
        %1992 = vrot.lane.b32.xlu0 %v835, 4
        %v1993 = vpop.permute.xlu0 %1992
        %1994 = vrot.lane.b32.xlu0 %v836, 4
        %v1995 = vpop.permute.xlu0 %1994
        %2012 = vrot.lane.b32.xlu0 %v1932, 8
        %v2013 = vpop.permute.xlu0 %2012
        %2014 = vrot.lane.b32.xlu0 %v1933, 8
        %v2015 = vpop.permute.xlu0 %2014
        %2016 = vrot.lane.b32.xlu0 %v1934, 8
        %v2017 = vpop.permute.xlu0 %2016
        %2018 = vrot.lane.b32.xlu0 %v1935, 8
        %v2019 = vpop.permute.xlu0 %2018
        %2020 = vrot.lane.b32.xlu0 %v1936, 8
        %v2021 = vpop.permute.xlu0 %2020
        %2022 = vrot.lane.b32.xlu0 %v1937, 8
        %v2023 = vpop.permute.xlu0 %2022
        %2024 = vrot.lane.b32.xlu0 %v1938, 8
        %v2025 = vpop.permute.xlu0 %2024
        %2026 = vrot.lane.b32.xlu0 %v1939, 8
        %v2027 = vpop.permute.xlu0 %2026
        %2028 = vrot.lane.b32.xlu0 %v1940, 8
        %v2029 = vpop.permute.xlu0 %2028
        %2030 = vrot.lane.b32.xlu0 %v1941, 8
        %v2031 = vpop.permute.xlu0 %2030
        %2032 = vrot.lane.b32.xlu0 %v1942, 8
        %v2033 = vpop.permute.xlu0 %2032
        %2034 = vrot.lane.b32.xlu0 %v1943, 8
        %v2035 = vpop.permute.xlu0 %2034
        %2036 = vrot.lane.b32.xlu0 %v1944, 8
        %v2037 = vpop.permute.xlu0 %2036
        %2038 = vrot.lane.b32.xlu0 %v1945, 8
        %v2039 = vpop.permute.xlu0 %2038
        %2040 = vrot.lane.b32.xlu0 %v1946, 8
        %v2041 = vpop.permute.xlu0 %2040
        %2042 = vrot.lane.b32.xlu0 %v1947, 8
        %v2043 = vpop.permute.xlu0 %2042
        %vm2044 = vcmask 31744
        %v2047 = vsel %vm2044, %v1625, %v1965
        %v2050 = vsel %vm2044, %v1626, %v1967
        %v2053 = vsel %vm2044, %v1627, %v1969
        %v2056 = vsel %vm2044, %v1628, %v1971
        %v2059 = vsel %vm2044, %v1629, %v1973
        %v2062 = vsel %vm2044, %v1630, %v1975
        %v2065 = vsel %vm2044, %v1631, %v1977
        %v2068 = vsel %vm2044, %v1632, %v1979
        %v2071 = vsel %vm2044, %v1633, %v1981
        %v2074 = vsel %vm2044, %v1634, %v1983
        %v2077 = vsel %vm2044, %v1635, %v1985
        %v2080 = vsel %vm2044, %v1636, %v1987
        %v2083 = vsel %vm2044, %v1637, %v1989
        %v2086 = vsel %vm2044, %v1638, %v1991
        %v2089 = vsel %vm2044, %v1639, %v1993
        %v2092 = vsel %vm2044, %v1640, %v1995
        %vm2093 = vcmask 64512
        %v2095 = vsel %vm2093, %v2047, %v2013
        %v2097 = vsel %vm2093, %v2050, %v2015
        %v2099 = vsel %vm2093, %v2053, %v2017
        %v2101 = vsel %vm2093, %v2056, %v2019
        %v2103 = vsel %vm2093, %v2059, %v2021
        %v2105 = vsel %vm2093, %v2062, %v2023
        %v2107 = vsel %vm2093, %v2065, %v2025
        %v2109 = vsel %vm2093, %v2068, %v2027
        %v2111 = vsel %vm2093, %v2071, %v2029
        %v2113 = vsel %vm2093, %v2074, %v2031
        %v2115 = vsel %vm2093, %v2077, %v2033
        %v2117 = vsel %vm2093, %v2080, %v2035
        %v2119 = vsel %vm2093, %v2083, %v2037
        %v2121 = vsel %vm2093, %v2086, %v2039
        %v2123 = vsel %vm2093, %v2089, %v2041
        %v2125 = vsel %vm2093, %v2092, %v2043
        %v2126 = vld [vmem:[%s4] sm:$0xf]
        %v2127 = vld [vmem:[%s4 + $0x4] sm:$0x3]
        %v2130 = vunpack.c.l.b16 %v2126
        %v2131 = vunpack.c.l.b16 %v2127
        %v2132 = vpack.c.b16 %v2131, %v2130
        %vm2133 = vcmask 97280
        %v2134 = vsel %vm2133, %v2095, 0
        %v2136 = vsel %vm2133, %v2097, 0
        %v2138 = vsel %vm2133, %v2099, 0
        %v2140 = vsel %vm2133, %v2101, 0
        %v2142 = vsel %vm2133, %v2103, 0
        %v2144 = vsel %vm2133, %v2105, 0
        %v2146 = vsel %vm2133, %v2107, 0
        %v2148 = vsel %vm2133, %v2109, 0
        %v2150 = vsel %vm2133, %v2111, 0
        %v2152 = vsel %vm2133, %v2113, 0
        %v2154 = vsel %vm2133, %v2115, 0
        %v2156 = vsel %vm2133, %v2117, 0
        %v2158 = vsel %vm2133, %v2119, 0
        %v2160 = vsel %vm2133, %v2121, 0
        %v2162 = vsel %vm2133, %v2123, 0
        %v2164 = vsel %vm2133, %v2125, 0
        %vm2166 = vcmask 1045504
        %v2168 = vsel %vm2166, %v2132, 0
        %2170 = vmatprep.subr.bf16.mxu0 0
        %2171 = vmatpush1.bf16.msra.mxu0 %v2168
        %2172 = vmatprep.subr.bf16.mxu0 0
        %2173 = vmatpush1.bf16.msra.mxu0 0
        %2174 = vmatprep.subr.bf16.mxu0 0
        %2175 = vmatpush1.bf16.msra.mxu0 0
        %2176 = vmatprep.subr.bf16.mxu0 0
        %2177 = vmatpush1.bf16.msra.mxu0 0
        %2178 = vmatprep.subr.bf16.mxu0 0
        %2179 = vmatpush1.bf16.msra.mxu0 0
        %2180 = vmatprep.subr.bf16.mxu0 0
        %2181 = vmatpush1.bf16.msra.mxu0 0
        %2182 = vmatprep.subr.bf16.mxu0 0
        %2183 = vmatpush1.bf16.msra.mxu0 0
        %2184 = vmatprep.subr.bf16.mxu0 0
        %2185 = vmatpush1.bf16.msra.mxu0 0
        %2186 = vmatprep.subr.bf16.mxu0 0
        %2187 = vmatpush1.bf16.msra.mxu0 0
        %2188 = vmatprep.subr.bf16.mxu0 0
        %2189 = vmatpush1.bf16.msra.mxu0 0
        %2190 = vmatprep.subr.bf16.mxu0 0
        %2191 = vmatpush1.bf16.msra.mxu0 0
        %2192 = vmatprep.subr.bf16.mxu0 0
        %2193 = vmatpush1.bf16.msra.mxu0 0
        %2194 = vmatprep.subr.bf16.mxu0 0
        %2195 = vmatpush1.bf16.msra.mxu0 0
        %2196 = vmatprep.subr.bf16.mxu0 0
        %2197 = vmatpush1.bf16.msra.mxu0 0
        %2198 = vmatprep.subr.bf16.mxu0 0
        %2199 = vmatpush1.bf16.msra.mxu0 0
        %2200 = vmatprep.subr.bf16.mxu0 0
        %2201 = vmatpush1.bf16.msra.mxu0 0
        %2202 = vmatprep.mubr.bf16.mxu0 0
        %2203 = vmatmul.mubr.bf16.gmra.mrb[0].mxu0 %v2134
        %v2204 = vpop.f32.mrb[0].mxu0
        %v2205 = vadd.f32 0.0, %v2204
        %v2206 = vpop.f32.mrb[0].mxu0
        %v2207 = vpop.f32.mrb[0].mxu0
        %v2208 = vadd.f32 0.0, %v2207
        %v2209 = vpop.f32.mrb[0].mxu0
        %2210 = vmatprep.mubr.bf16.mxu0 0
        %2211 = vmatmul.mubr.bf16.gmra.mrb[0].mxu0 %v2136
        %v2212 = vpop.f32.mrb[0].mxu0
        %v2213 = vadd.f32 0.0, %v2212
        %v2214 = vpop.f32.mrb[0].mxu0
        %v2215 = vpop.f32.mrb[0].mxu0
        %v2216 = vadd.f32 0.0, %v2215
        %v2217 = vpop.f32.mrb[0].mxu0
        %2218 = vmatprep.mubr.bf16.mxu0 0
        %2219 = vmatmul.mubr.bf16.gmra.mrb[0].mxu0 %v2138
        %v2220 = vpop.f32.mrb[0].mxu0
        %v2221 = vadd.f32 0.0, %v2220
        %v2222 = vpop.f32.mrb[0].mxu0
        %v2223 = vpop.f32.mrb[0].mxu0
        %v2224 = vadd.f32 0.0, %v2223
        %v2225 = vpop.f32.mrb[0].mxu0
        %2226 = vmatprep.mubr.bf16.mxu0 0
        %2227 = vmatmul.mubr.bf16.gmra.mrb[0].mxu0 %v2140
        %v2228 = vpop.f32.mrb[0].mxu0
        %v2229 = vadd.f32 0.0, %v2228
        %v2230 = vpop.f32.mrb[0].mxu0
        %v2231 = vpop.f32.mrb[0].mxu0
        %v2232 = vadd.f32 0.0, %v2231
        %v2233 = vpop.f32.mrb[0].mxu0
        %2234 = vmatprep.mubr.bf16.mxu0 0
        %2235 = vmatmul.mubr.bf16.gmra.mrb[0].mxu0 %v2142
        %v2236 = vpop.f32.mrb[0].mxu0
        %v2237 = vadd.f32 0.0, %v2236
        %v2238 = vpop.f32.mrb[0].mxu0
        %v2239 = vpop.f32.mrb[0].mxu0
        %v2240 = vadd.f32 0.0, %v2239
        %v2241 = vpop.f32.mrb[0].mxu0
        %2242 = vmatprep.mubr.bf16.mxu0 0
        %2243 = vmatmul.mubr.bf16.gmra.mrb[0].mxu0 %v2144
        %v2244 = vpop.f32.mrb[0].mxu0
        %v2245 = vadd.f32 0.0, %v2244
        %v2246 = vpop.f32.mrb[0].mxu0
        %v2247 = vpop.f32.mrb[0].mxu0
        %v2248 = vadd.f32 0.0, %v2247
        %v2249 = vpop.f32.mrb[0].mxu0
        %2250 = vmatprep.mubr.bf16.mxu0 0
        %2251 = vmatmul.mubr.bf16.gmra.mrb[0].mxu0 %v2146
        %v2252 = vpop.f32.mrb[0].mxu0
        %v2253 = vadd.f32 0.0, %v2252
        %v2254 = vpop.f32.mrb[0].mxu0
        %v2255 = vpop.f32.mrb[0].mxu0
        %v2256 = vadd.f32 0.0, %v2255
        %v2257 = vpop.f32.mrb[0].mxu0
        %2258 = vmatprep.mubr.bf16.mxu0 0
        %2259 = vmatmul.mubr.bf16.gmra.mrb[0].mxu0 %v2148
        %v2260 = vpop.f32.mrb[0].mxu0
        %v2261 = vadd.f32 0.0, %v2260
        %v2262 = vpop.f32.mrb[0].mxu0
        %v2263 = vpop.f32.mrb[0].mxu0
        %v2264 = vadd.f32 0.0, %v2263
        %v2265 = vpop.f32.mrb[0].mxu0
        %2266 = vmatprep.mubr.bf16.mxu0 0
        %2267 = vmatmul.mubr.bf16.gmra.mrb[0].mxu0 %v2150
        %v2268 = vpop.f32.mrb[0].mxu0
        %v2269 = vadd.f32 0.0, %v2268
        %v2270 = vpop.f32.mrb[0].mxu0
        %v2271 = vpop.f32.mrb[0].mxu0
        %v2272 = vadd.f32 0.0, %v2271
        %v2273 = vpop.f32.mrb[0].mxu0
        %2274 = vmatprep.mubr.bf16.mxu0 0
        %2275 = vmatmul.mubr.bf16.gmra.mrb[0].mxu0 %v2152
        %v2276 = vpop.f32.mrb[0].mxu0
        %v2277 = vadd.f32 0.0, %v2276
        %v2278 = vpop.f32.mrb[0].mxu0
        %v2279 = vpop.f32.mrb[0].mxu0
        %v2280 = vadd.f32 0.0, %v2279
        %v2281 = vpop.f32.mrb[0].mxu0
        %2282 = vmatprep.mubr.bf16.mxu0 0
        %2283 = vmatmul.mubr.bf16.gmra.mrb[0].mxu0 %v2154
        %v2284 = vpop.f32.mrb[0].mxu0
        %v2285 = vadd.f32 0.0, %v2284
        %v2286 = vpop.f32.mrb[0].mxu0
        %v2287 = vpop.f32.mrb[0].mxu0
        %v2288 = vadd.f32 0.0, %v2287
        %v2289 = vpop.f32.mrb[0].mxu0
        %2290 = vmatprep.mubr.bf16.mxu0 0
        %2291 = vmatmul.mubr.bf16.gmra.mrb[0].mxu0 %v2156
        %v2292 = vpop.f32.mrb[0].mxu0
        %v2293 = vadd.f32 0.0, %v2292
        %v2294 = vpop.f32.mrb[0].mxu0
        %v2295 = vpop.f32.mrb[0].mxu0
        %v2296 = vadd.f32 0.0, %v2295
        %v2297 = vpop.f32.mrb[0].mxu0
        %2298 = vmatprep.mubr.bf16.mxu0 0
        %2299 = vmatmul.mubr.bf16.gmra.mrb[0].mxu0 %v2158
        %v2300 = vpop.f32.mrb[0].mxu0
        %v2301 = vadd.f32 0.0, %v2300
        %v2302 = vpop.f32.mrb[0].mxu0
        %v2303 = vpop.f32.mrb[0].mxu0
        %v2304 = vadd.f32 0.0, %v2303
        %v2305 = vpop.f32.mrb[0].mxu0
        %2306 = vmatprep.mubr.bf16.mxu0 0
        %2307 = vmatmul.mubr.bf16.gmra.mrb[0].mxu0 %v2160
        %v2308 = vpop.f32.mrb[0].mxu0
        %v2309 = vadd.f32 0.0, %v2308
        %v2310 = vpop.f32.mrb[0].mxu0
        %v2311 = vpop.f32.mrb[0].mxu0
        %v2312 = vadd.f32 0.0, %v2311
        %v2313 = vpop.f32.mrb[0].mxu0
        %2314 = vmatprep.mubr.bf16.mxu0 0
        %2315 = vmatmul.mubr.bf16.gmra.mrb[0].mxu0 %v2162
        %v2316 = vpop.f32.mrb[0].mxu0
        %v2317 = vadd.f32 0.0, %v2316
        %v2318 = vpop.f32.mrb[0].mxu0
        %v2319 = vpop.f32.mrb[0].mxu0
        %v2320 = vadd.f32 0.0, %v2319
        %v2321 = vpop.f32.mrb[0].mxu0
        %2322 = vmatprep.mubr.bf16.mxu0 0
        %2323 = vmatmul.mubr.bf16.gmra.mrb[0].mxu0 %v2164
        %v2324 = vpop.f32.mrb[0].mxu0
        %v2325 = vadd.f32 0.0, %v2324
        %v2326 = vpop.f32.mrb[0].mxu0
        %v2327 = vpop.f32.mrb[0].mxu0
        %v2328 = vadd.f32 0.0, %v2327
        %v2329 = vpop.f32.mrb[0].mxu0
        %2330 = vdwg.mxu0
        %2363 = vrot.lane.b32.xlu0 %v2205, 124
        %v2364 = vpop.permute.xlu0 %2363
        %2365 = vrot.lane.b32.xlu0 %v2208, 124
        %v2366 = vpop.permute.xlu0 %2365
        %2367 = vrot.lane.b32.xlu0 %v2213, 124
        %v2368 = vpop.permute.xlu0 %2367
        %2369 = vrot.lane.b32.xlu0 %v2216, 124
        %v2370 = vpop.permute.xlu0 %2369
        %2371 = vrot.lane.b32.xlu0 %v2221, 124
        %v2372 = vpop.permute.xlu0 %2371
        %2373 = vrot.lane.b32.xlu0 %v2224, 124
        %v2374 = vpop.permute.xlu0 %2373
        %2375 = vrot.lane.b32.xlu0 %v2229, 124
        %v2376 = vpop.permute.xlu0 %2375
        %2377 = vrot.lane.b32.xlu0 %v2232, 124
        %v2378 = vpop.permute.xlu0 %2377
        %2379 = vrot.lane.b32.xlu0 %v2237, 124
        %v2380 = vpop.permute.xlu0 %2379
        %2381 = vrot.lane.b32.xlu0 %v2240, 124
        %v2382 = vpop.permute.xlu0 %2381
        %2383 = vrot.lane.b32.xlu0 %v2245, 124
        %v2384 = vpop.permute.xlu0 %2383
        %2385 = vrot.lane.b32.xlu0 %v2248, 124
        %v2386 = vpop.permute.xlu0 %2385
        %2387 = vrot.lane.b32.xlu0 %v2253, 124
        %v2388 = vpop.permute.xlu0 %2387
        %2389 = vrot.lane.b32.xlu0 %v2256, 124
        %v2390 = vpop.permute.xlu0 %2389
        %2391 = vrot.lane.b32.xlu0 %v2261, 124
        %v2392 = vpop.permute.xlu0 %2391
        %2393 = vrot.lane.b32.xlu0 %v2264, 124
        %v2394 = vpop.permute.xlu0 %2393
        %2395 = vrot.lane.b32.xlu0 %v2269, 124
        %v2396 = vpop.permute.xlu0 %2395
        %2397 = vrot.lane.b32.xlu0 %v2272, 124
        %v2398 = vpop.permute.xlu0 %2397
        %2399 = vrot.lane.b32.xlu0 %v2277, 124
        %v2400 = vpop.permute.xlu0 %2399
        %2401 = vrot.lane.b32.xlu0 %v2280, 124
        %v2402 = vpop.permute.xlu0 %2401
        %2403 = vrot.lane.b32.xlu0 %v2285, 124
        %v2404 = vpop.permute.xlu0 %2403
        %2405 = vrot.lane.b32.xlu0 %v2288, 124
        %v2406 = vpop.permute.xlu0 %2405
        %2407 = vrot.lane.b32.xlu0 %v2293, 124
        %v2408 = vpop.permute.xlu0 %2407
        %2409 = vrot.lane.b32.xlu0 %v2296, 124
        %v2410 = vpop.permute.xlu0 %2409
        %2411 = vrot.lane.b32.xlu0 %v2301, 124
        %v2412 = vpop.permute.xlu0 %2411
        %2413 = vrot.lane.b32.xlu0 %v2304, 124
        %v2414 = vpop.permute.xlu0 %2413
        %2415 = vrot.lane.b32.xlu0 %v2309, 124
        %v2416 = vpop.permute.xlu0 %2415
        %2417 = vrot.lane.b32.xlu0 %v2312, 124
        %v2418 = vpop.permute.xlu0 %2417
        %2419 = vrot.lane.b32.xlu0 %v2317, 124
        %v2420 = vpop.permute.xlu0 %2419
        %2421 = vrot.lane.b32.xlu0 %v2320, 124
        %v2422 = vpop.permute.xlu0 %2421
        %2423 = vrot.lane.b32.xlu0 %v2325, 124
        %v2424 = vpop.permute.xlu0 %2423
        %2425 = vrot.lane.b32.xlu0 %v2328, 124
        %v2426 = vpop.permute.xlu0 %2425
        %2459 = vst.msk [vmem:[#allocation2] sm:$0xff] %vm2044, %v2364
        %2460 = vst.msk [vmem:[#allocation2 + $0x8] sm:$0xff] %vm2044, %v2366
        %2461 = vst.msk [vmem:[#allocation2 + $0x10] sm:$0xff] %vm2044, %v2368
        %2462 = vst.msk [vmem:[#allocation2 + $0x18] sm:$0xff] %vm2044, %v2370
        %2463 = vst.msk [vmem:[#allocation2 + $0x20] sm:$0xff] %vm2044, %v2372
        %2464 = vst.msk [vmem:[#allocation2 + $0x28] sm:$0xff] %vm2044, %v2374
        %2465 = vst.msk [vmem:[#allocation2 + $0x30] sm:$0xff] %vm2044, %v2376
        %2466 = vst.msk [vmem:[#allocation2 + $0x38] sm:$0xff] %vm2044, %v2378
        %2467 = vst.msk [vmem:[#allocation2 + $0x40] sm:$0xff] %vm2044, %v2380
        %2468 = vst.msk [vmem:[#allocation2 + $0x48] sm:$0xff] %vm2044, %v2382
        %2469 = vst.msk [vmem:[#allocation2 + $0x50] sm:$0xff] %vm2044, %v2384
        %2470 = vst.msk [vmem:[#allocation2 + $0x58] sm:$0xff] %vm2044, %v2386
        %2471 = vst.msk [vmem:[#allocation2 + $0x60] sm:$0xff] %vm2044, %v2388
        %2472 = vst.msk [vmem:[#allocation2 + $0x68] sm:$0xff] %vm2044, %v2390
        %2473 = vst.msk [vmem:[#allocation2 + $0x70] sm:$0xff] %vm2044, %v2392
        %2474 = vst.msk [vmem:[#allocation2 + $0x78] sm:$0xff] %vm2044, %v2394
        %2475 = vst.msk [vmem:[#allocation2 + $0x80] sm:$0xff] %vm2044, %v2396
        %2476 = vst.msk [vmem:[#allocation2 + $0x88] sm:$0xff] %vm2044, %v2398
        %2477 = vst.msk [vmem:[#allocation2 + $0x90] sm:$0xff] %vm2044, %v2400
        %2478 = vst.msk [vmem:[#allocation2 + $0x98] sm:$0xff] %vm2044, %v2402
        %2479 = vst.msk [vmem:[#allocation2 + $0xa0] sm:$0xff] %vm2044, %v2404
        %2480 = vst.msk [vmem:[#allocation2 + $0xa8] sm:$0xff] %vm2044, %v2406
        %2481 = vst.msk [vmem:[#allocation2 + $0xb0] sm:$0xff] %vm2044, %v2408
        %2482 = vst.msk [vmem:[#allocation2 + $0xb8] sm:$0xff] %vm2044, %v2410
        %2483 = vst.msk [vmem:[#allocation2 + $0xc0] sm:$0xff] %vm2044, %v2412
        %2484 = vst.msk [vmem:[#allocation2 + $0xc8] sm:$0xff] %vm2044, %v2414
        %2485 = vst.msk [vmem:[#allocation2 + $0xd0] sm:$0xff] %vm2044, %v2416
        %2486 = vst.msk [vmem:[#allocation2 + $0xd8] sm:$0xff] %vm2044, %v2418
        %2487 = vst.msk [vmem:[#allocation2 + $0xe0] sm:$0xff] %vm2044, %v2420
        %2488 = vst.msk [vmem:[#allocation2 + $0xe8] sm:$0xff] %vm2044, %v2422
        %2489 = vst.msk [vmem:[#allocation2 + $0xf0] sm:$0xff] %vm2044, %v2424
        %2490 = vst.msk [vmem:[#allocation2 + $0xf8] sm:$0xff] %vm2044, %v2426
        %v2491 = vld [vmem:[#allocation2 + $0x10] sm:$0xff]
        %v2492 = vld [vmem:[#allocation2 + $0x18] sm:$0xff]
        %v2493 = vld [vmem:[#allocation2 + $0x20] sm:$0xff]
        %v2494 = vld [vmem:[#allocation2 + $0x28] sm:$0xff]
        %v2495 = vld [vmem:[#allocation2 + $0x30] sm:$0xff]
        %v2496 = vld [vmem:[#allocation2 + $0x38] sm:$0xff]
        %v2497 = vld [vmem:[#allocation2 + $0x40] sm:$0xff]
        %v2498 = vld [vmem:[#allocation2 + $0x48] sm:$0xff]
        %v2499 = vld [vmem:[#allocation2 + $0x50] sm:$0xff]
        %v2500 = vld [vmem:[#allocation2 + $0x58] sm:$0xff]
        %v2501 = vld [vmem:[#allocation2 + $0x60] sm:$0xff]
        %v2502 = vld [vmem:[#allocation2 + $0x68] sm:$0xff]
        %v2503 = vld [vmem:[#allocation2 + $0x70] sm:$0xff]
        %v2504 = vld [vmem:[#allocation2 + $0x78] sm:$0xff]
        %v2505 = vld [vmem:[#allocation2 + $0x80] sm:$0xff]
        %v2506 = vld [vmem:[#allocation2 + $0x88] sm:$0xff]
        %v2507 = vld [vmem:[#allocation2 + $0x90] sm:$0xff]
        %v2508 = vld [vmem:[#allocation2 + $0x98] sm:$0xff]
        %v2509 = vld [vmem:[#allocation2 + $0xa0] sm:$0xff]
        %v2510 = vld [vmem:[#allocation2 + $0xa8] sm:$0xff]
        %v2511 = vld [vmem:[#allocation2 + $0xb0] sm:$0xff]
        %v2512 = vld [vmem:[#allocation2 + $0xb8] sm:$0xff]
        %v2513 = vld [vmem:[#allocation2 + $0xc0] sm:$0xff]
        %v2514 = vld [vmem:[#allocation2 + $0xc8] sm:$0xff]
        %v2515 = vld [vmem:[#allocation2 + $0xd0] sm:$0xff]
        %v2516 = vld [vmem:[#allocation2 + $0xd8] sm:$0xff]
        %v2517 = vld [vmem:[#allocation2 + $0xe0] sm:$0xff]
        %v2518 = vld [vmem:[#allocation2 + $0xe8] sm:$0xff]
        %v2519 = vld [vmem:[#allocation2 + $0xf0] sm:$0xff]
        %v2520 = vld [vmem:[#allocation2 + $0xf8] sm:$0xff]
        %v2521 = vadd.f32 %v2491, %v2205
        %v2522 = vadd.f32 %v2492, %v2208
        %v2523 = vadd.f32 %v2493, %v2213
        %v2524 = vadd.f32 %v2494, %v2216
        %v2525 = vadd.f32 %v2495, %v2221
        %v2526 = vadd.f32 %v2496, %v2224
        %v2527 = vadd.f32 %v2497, %v2229
        %v2528 = vadd.f32 %v2498, %v2232
        %v2529 = vadd.f32 %v2499, %v2237
        %v2530 = vadd.f32 %v2500, %v2240
        %v2531 = vadd.f32 %v2501, %v2245
        %v2532 = vadd.f32 %v2502, %v2248
        %v2533 = vadd.f32 %v2503, %v2253
        %v2534 = vadd.f32 %v2504, %v2256
        %v2535 = vadd.f32 %v2505, %v2261
        %v2536 = vadd.f32 %v2506, %v2264
        %v2537 = vadd.f32 %v2507, %v2269
        %v2538 = vadd.f32 %v2508, %v2272
        %v2539 = vadd.f32 %v2509, %v2277
        %v2540 = vadd.f32 %v2510, %v2280
        %v2541 = vadd.f32 %v2511, %v2285
        %v2542 = vadd.f32 %v2512, %v2288
        %v2543 = vadd.f32 %v2513, %v2293
        %v2544 = vadd.f32 %v2514, %v2296
        %v2545 = vadd.f32 %v2515, %v2301
        %v2546 = vadd.f32 %v2516, %v2304
        %v2547 = vadd.f32 %v2517, %v2309
        %v2548 = vadd.f32 %v2518, %v2312
        %v2549 = vadd.f32 %v2519, %v2317
        %v2550 = vadd.f32 %v2520, %v2320
        %2551 = vst.msk [vmem:[#allocation2 + $0x10] sm:$0xff] %vm2044, %v2521
        %2552 = vst.msk [vmem:[#allocation2 + $0x18] sm:$0xff] %vm2044, %v2522
        %2553 = vst.msk [vmem:[#allocation2 + $0x20] sm:$0xff] %vm2044, %v2523
        %2554 = vst.msk [vmem:[#allocation2 + $0x28] sm:$0xff] %vm2044, %v2524
        %2555 = vst.msk [vmem:[#allocation2 + $0x30] sm:$0xff] %vm2044, %v2525
        %2556 = vst.msk [vmem:[#allocation2 + $0x38] sm:$0xff] %vm2044, %v2526
        %2557 = vst.msk [vmem:[#allocation2 + $0x40] sm:$0xff] %vm2044, %v2527
        %2558 = vst.msk [vmem:[#allocation2 + $0x48] sm:$0xff] %vm2044, %v2528
        %2559 = vst.msk [vmem:[#allocation2 + $0x50] sm:$0xff] %vm2044, %v2529
        %2560 = vst.msk [vmem:[#allocation2 + $0x58] sm:$0xff] %vm2044, %v2530
        %2561 = vst.msk [vmem:[#allocation2 + $0x60] sm:$0xff] %vm2044, %v2531
        %2562 = vst.msk [vmem:[#allocation2 + $0x68] sm:$0xff] %vm2044, %v2532
        %2563 = vst.msk [vmem:[#allocation2 + $0x70] sm:$0xff] %vm2044, %v2533
        %2564 = vst.msk [vmem:[#allocation2 + $0x78] sm:$0xff] %vm2044, %v2534
        %2565 = vst.msk [vmem:[#allocation2 + $0x80] sm:$0xff] %vm2044, %v2535
        %2566 = vst.msk [vmem:[#allocation2 + $0x88] sm:$0xff] %vm2044, %v2536
        %2567 = vst.msk [vmem:[#allocation2 + $0x90] sm:$0xff] %vm2044, %v2537
        %2568 = vst.msk [vmem:[#allocation2 + $0x98] sm:$0xff] %vm2044, %v2538
        %2569 = vst.msk [vmem:[#allocation2 + $0xa0] sm:$0xff] %vm2044, %v2539
        %2570 = vst.msk [vmem:[#allocation2 + $0xa8] sm:$0xff] %vm2044, %v2540
        %2571 = vst.msk [vmem:[#allocation2 + $0xb0] sm:$0xff] %vm2044, %v2541
        %2572 = vst.msk [vmem:[#allocation2 + $0xb8] sm:$0xff] %vm2044, %v2542
        %2573 = vst.msk [vmem:[#allocation2 + $0xc0] sm:$0xff] %vm2044, %v2543
        %2574 = vst.msk [vmem:[#allocation2 + $0xc8] sm:$0xff] %vm2044, %v2544
        %2575 = vst.msk [vmem:[#allocation2 + $0xd0] sm:$0xff] %vm2044, %v2545
        %2576 = vst.msk [vmem:[#allocation2 + $0xd8] sm:$0xff] %vm2044, %v2546
        %2577 = vst.msk [vmem:[#allocation2 + $0xe0] sm:$0xff] %vm2044, %v2547
        %2578 = vst.msk [vmem:[#allocation2 + $0xe8] sm:$0xff] %vm2044, %v2548
        %2579 = vst.msk [vmem:[#allocation2 + $0xf0] sm:$0xff] %vm2044, %v2549
        %2580 = vst.msk [vmem:[#allocation2 + $0xf8] sm:$0xff] %vm2044, %v2550
        %v2581 = vld [vmem:[#allocation2] sm:$0xff]
        %v2582 = vld [vmem:[#allocation2 + $0x8] sm:$0xff]
        %v2583 = vld [vmem:[#allocation2 + $0x10] sm:$0xff]
        %v2584 = vld [vmem:[#allocation2 + $0x18] sm:$0xff]
        %v2585 = vld [vmem:[#allocation2 + $0x20] sm:$0xff]
        %v2586 = vld [vmem:[#allocation2 + $0x28] sm:$0xff]
        %v2587 = vld [vmem:[#allocation2 + $0x30] sm:$0xff]
        %v2588 = vld [vmem:[#allocation2 + $0x38] sm:$0xff]
        %v2589 = vld [vmem:[#allocation2 + $0x40] sm:$0xff]
        %v2590 = vld [vmem:[#allocation2 + $0x48] sm:$0xff]
        %v2591 = vld [vmem:[#allocation2 + $0x50] sm:$0xff]
        %v2592 = vld [vmem:[#allocation2 + $0x58] sm:$0xff]
        %v2593 = vld [vmem:[#allocation2 + $0x60] sm:$0xff]
        %v2594 = vld [vmem:[#allocation2 + $0x68] sm:$0xff]
        %v2595 = vld [vmem:[#allocation2 + $0x70] sm:$0xff]
        %v2596 = vld [vmem:[#allocation2 + $0x78] sm:$0xff]
        %v2597 = vld [vmem:[#allocation2 + $0x80] sm:$0xff]
        %v2598 = vld [vmem:[#allocation2 + $0x88] sm:$0xff]
        %v2599 = vld [vmem:[#allocation2 + $0x90] sm:$0xff]
        %v2600 = vld [vmem:[#allocation2 + $0x98] sm:$0xff]
        %v2601 = vld [vmem:[#allocation2 + $0xa0] sm:$0xff]
        %v2602 = vld [vmem:[#allocation2 + $0xa8] sm:$0xff]
        %v2603 = vld [vmem:[#allocation2 + $0xb0] sm:$0xff]
        %v2604 = vld [vmem:[#allocation2 + $0xb8] sm:$0xff]
        %v2605 = vld [vmem:[#allocation2 + $0xc0] sm:$0xff]
        %v2606 = vld [vmem:[#allocation2 + $0xc8] sm:$0xff]
        %v2607 = vld [vmem:[#allocation2 + $0xd0] sm:$0xff]
        %v2608 = vld [vmem:[#allocation2 + $0xd8] sm:$0xff]
        %v2609 = vld [vmem:[#allocation2 + $0xe0] sm:$0xff]
        %v2610 = vld [vmem:[#allocation2 + $0xe8] sm:$0xff]
        %2611 = vrot.lane.b32.xlu0 %v2213, 120
        %v2612 = vpop.permute.xlu0 %2611
        %2613 = vrot.lane.b32.xlu0 %v2216, 120
        %v2614 = vpop.permute.xlu0 %2613
        %2615 = vrot.lane.b32.xlu0 %v2221, 120
        %v2616 = vpop.permute.xlu0 %2615
        %2617 = vrot.lane.b32.xlu0 %v2224, 120
        %v2618 = vpop.permute.xlu0 %2617
        %2619 = vrot.lane.b32.xlu0 %v2229, 120
        %v2620 = vpop.permute.xlu0 %2619
        %2621 = vrot.lane.b32.xlu0 %v2232, 120
        %v2622 = vpop.permute.xlu0 %2621
        %2623 = vrot.lane.b32.xlu0 %v2237, 120
        %v2624 = vpop.permute.xlu0 %2623
        %2625 = vrot.lane.b32.xlu0 %v2240, 120
        %v2626 = vpop.permute.xlu0 %2625
        %2627 = vrot.lane.b32.xlu0 %v2245, 120
        %v2628 = vpop.permute.xlu0 %2627
        %2629 = vrot.lane.b32.xlu0 %v2248, 120
        %v2630 = vpop.permute.xlu0 %2629
        %2631 = vrot.lane.b32.xlu0 %v2253, 120
        %v2632 = vpop.permute.xlu0 %2631
        %2633 = vrot.lane.b32.xlu0 %v2256, 120
        %v2634 = vpop.permute.xlu0 %2633
        %2635 = vrot.lane.b32.xlu0 %v2261, 120
        %v2636 = vpop.permute.xlu0 %2635
        %2637 = vrot.lane.b32.xlu0 %v2264, 120
        %v2638 = vpop.permute.xlu0 %2637
        %2639 = vrot.lane.b32.xlu0 %v2269, 120
        %v2640 = vpop.permute.xlu0 %2639
        %2641 = vrot.lane.b32.xlu0 %v2272, 120
        %v2642 = vpop.permute.xlu0 %2641
        %2643 = vrot.lane.b32.xlu0 %v2277, 120
        %v2644 = vpop.permute.xlu0 %2643
        %2645 = vrot.lane.b32.xlu0 %v2280, 120
        %v2646 = vpop.permute.xlu0 %2645
        %2647 = vrot.lane.b32.xlu0 %v2285, 120
        %v2648 = vpop.permute.xlu0 %2647
        %2649 = vrot.lane.b32.xlu0 %v2288, 120
        %v2650 = vpop.permute.xlu0 %2649
        %2651 = vrot.lane.b32.xlu0 %v2293, 120
        %v2652 = vpop.permute.xlu0 %2651
        %2653 = vrot.lane.b32.xlu0 %v2296, 120
        %v2654 = vpop.permute.xlu0 %2653
        %2655 = vrot.lane.b32.xlu0 %v2301, 120
        %v2656 = vpop.permute.xlu0 %2655
        %2657 = vrot.lane.b32.xlu0 %v2304, 120
        %v2658 = vpop.permute.xlu0 %2657
        %2659 = vrot.lane.b32.xlu0 %v2309, 120
        %v2660 = vpop.permute.xlu0 %2659
        %2661 = vrot.lane.b32.xlu0 %v2312, 120
        %v2662 = vpop.permute.xlu0 %2661
        %2663 = vrot.lane.b32.xlu0 %v2317, 120
        %v2664 = vpop.permute.xlu0 %2663
        %2665 = vrot.lane.b32.xlu0 %v2320, 120
        %v2666 = vpop.permute.xlu0 %2665
        %2667 = vrot.lane.b32.xlu0 %v2325, 120
        %v2668 = vpop.permute.xlu0 %2667
        %2669 = vrot.lane.b32.xlu0 %v2328, 120
        %v2670 = vpop.permute.xlu0 %2669
        %v2701 = vadd.f32 %v2581, %v2612
        %v2702 = vadd.f32 %v2582, %v2614
        %v2703 = vadd.f32 %v2583, %v2616
        %v2704 = vadd.f32 %v2584, %v2618
        %v2705 = vadd.f32 %v2585, %v2620
        %v2706 = vadd.f32 %v2586, %v2622
        %v2707 = vadd.f32 %v2587, %v2624
        %v2708 = vadd.f32 %v2588, %v2626
        %v2709 = vadd.f32 %v2589, %v2628
        %v2710 = vadd.f32 %v2590, %v2630
        %v2711 = vadd.f32 %v2591, %v2632
        %v2712 = vadd.f32 %v2592, %v2634
        %v2713 = vadd.f32 %v2593, %v2636
        %v2714 = vadd.f32 %v2594, %v2638
        %v2715 = vadd.f32 %v2595, %v2640
        %v2716 = vadd.f32 %v2596, %v2642
        %v2717 = vadd.f32 %v2597, %v2644
        %v2718 = vadd.f32 %v2598, %v2646
        %v2719 = vadd.f32 %v2599, %v2648
        %v2720 = vadd.f32 %v2600, %v2650
        %v2721 = vadd.f32 %v2601, %v2652
        %v2722 = vadd.f32 %v2602, %v2654
        %v2723 = vadd.f32 %v2603, %v2656
        %v2724 = vadd.f32 %v2604, %v2658
        %v2725 = vadd.f32 %v2605, %v2660
        %v2726 = vadd.f32 %v2606, %v2662
        %v2727 = vadd.f32 %v2607, %v2664
        %v2728 = vadd.f32 %v2608, %v2666
        %v2729 = vadd.f32 %v2609, %v2668
        %v2730 = vadd.f32 %v2610, %v2670
        %2731 = vst.msk [vmem:[#allocation2] sm:$0xff] %vm2044, %v2701
        %2732 = vst.msk [vmem:[#allocation2 + $0x8] sm:$0xff] %vm2044, %v2702
        %2733 = vst.msk [vmem:[#allocation2 + $0x10] sm:$0xff] %vm2044, %v2703
        %2734 = vst.msk [vmem:[#allocation2 + $0x18] sm:$0xff] %vm2044, %v2704
        %2735 = vst.msk [vmem:[#allocation2 + $0x20] sm:$0xff] %vm2044, %v2705
        %2736 = vst.msk [vmem:[#allocation2 + $0x28] sm:$0xff] %vm2044, %v2706
        %2737 = vst.msk [vmem:[#allocation2 + $0x30] sm:$0xff] %vm2044, %v2707
        %2738 = vst.msk [vmem:[#allocation2 + $0x38] sm:$0xff] %vm2044, %v2708
        %2739 = vst.msk [vmem:[#allocation2 + $0x40] sm:$0xff] %vm2044, %v2709
        %2740 = vst.msk [vmem:[#allocation2 + $0x48] sm:$0xff] %vm2044, %v2710
        %2741 = vst.msk [vmem:[#allocation2 + $0x50] sm:$0xff] %vm2044, %v2711
        %2742 = vst.msk [vmem:[#allocation2 + $0x58] sm:$0xff] %vm2044, %v2712
        %2743 = vst.msk [vmem:[#allocation2 + $0x60] sm:$0xff] %vm2044, %v2713
        %2744 = vst.msk [vmem:[#allocation2 + $0x68] sm:$0xff] %vm2044, %v2714
        %2745 = vst.msk [vmem:[#allocation2 + $0x70] sm:$0xff] %vm2044, %v2715
        %2746 = vst.msk [vmem:[#allocation2 + $0x78] sm:$0xff] %vm2044, %v2716
        %2747 = vst.msk [vmem:[#allocation2 + $0x80] sm:$0xff] %vm2044, %v2717
        %2748 = vst.msk [vmem:[#allocation2 + $0x88] sm:$0xff] %vm2044, %v2718
        %2749 = vst.msk [vmem:[#allocation2 + $0x90] sm:$0xff] %vm2044, %v2719
        %2750 = vst.msk [vmem:[#allocation2 + $0x98] sm:$0xff] %vm2044, %v2720
        %2751 = vst.msk [vmem:[#allocation2 + $0xa0] sm:$0xff] %vm2044, %v2721
        %2752 = vst.msk [vmem:[#allocation2 + $0xa8] sm:$0xff] %vm2044, %v2722
        %2753 = vst.msk [vmem:[#allocation2 + $0xb0] sm:$0xff] %vm2044, %v2723
        %2754 = vst.msk [vmem:[#allocation2 + $0xb8] sm:$0xff] %vm2044, %v2724
        %2755 = vst.msk [vmem:[#allocation2 + $0xc0] sm:$0xff] %vm2044, %v2725
        %2756 = vst.msk [vmem:[#allocation2 + $0xc8] sm:$0xff] %vm2044, %v2726
        %2757 = vst.msk [vmem:[#allocation2 + $0xd0] sm:$0xff] %vm2044, %v2727
        %2758 = vst.msk [vmem:[#allocation2 + $0xd8] sm:$0xff] %vm2044, %v2728
        %2759 = vst.msk [vmem:[#allocation2 + $0xe0] sm:$0xff] %vm2044, %v2729
        %2760 = vst.msk [vmem:[#allocation2 + $0xe8] sm:$0xff] %vm2044, %v2730
        %v2761 = vld [vmem:[#allocation2] sm:$0xff]
        %v2762 = vld [vmem:[#allocation2 + $0x8] sm:$0xff]
        %v2763 = vld [vmem:[#allocation2 + $0x10] sm:$0xff]
        %v2764 = vld [vmem:[#allocation2 + $0x18] sm:$0xff]
        %v2765 = vld [vmem:[#allocation2 + $0x20] sm:$0xff]
        %v2766 = vld [vmem:[#allocation2 + $0x28] sm:$0xff]
        %v2767 = vld [vmem:[#allocation2 + $0x30] sm:$0xff]
        %v2768 = vld [vmem:[#allocation2 + $0x38] sm:$0xff]
        %v2769 = vld [vmem:[#allocation2 + $0x40] sm:$0xff]
        %v2770 = vld [vmem:[#allocation2 + $0x48] sm:$0xff]
        %v2771 = vld [vmem:[#allocation2 + $0x50] sm:$0xff]
        %v2772 = vld [vmem:[#allocation2 + $0x58] sm:$0xff]
        %v2773 = vld [vmem:[#allocation2 + $0x60] sm:$0xff]
        %v2774 = vld [vmem:[#allocation2 + $0x68] sm:$0xff]
        %v2775 = vld [vmem:[#allocation2 + $0x70] sm:$0xff]
        %v2776 = vld [vmem:[#allocation2 + $0x78] sm:$0xff]
        %v2777 = vld [vmem:[#allocation2 + $0x80] sm:$0xff]
        %v2778 = vld [vmem:[#allocation2 + $0x88] sm:$0xff]
        %v2779 = vld [vmem:[#allocation2 + $0x90] sm:$0xff]
        %v2780 = vld [vmem:[#allocation2 + $0x98] sm:$0xff]
        %v2781 = vld [vmem:[#allocation2 + $0xa0] sm:$0xff]
        %v2782 = vld [vmem:[#allocation2 + $0xa8] sm:$0xff]
        %v2783 = vld [vmem:[#allocation2 + $0xb0] sm:$0xff]
        %v2784 = vld [vmem:[#allocation2 + $0xb8] sm:$0xff]
        %v2785 = vld [vmem:[#allocation2 + $0xc0] sm:$0xff]
        %v2786 = vld [vmem:[#allocation2 + $0xc8] sm:$0xff]
        %v2787 = vld [vmem:[#allocation2 + $0xd0] sm:$0xff]
        %v2788 = vld [vmem:[#allocation2 + $0xd8] sm:$0xff]
        %v2789 = vld [vmem:[#allocation2 + $0xe0] sm:$0xff]
        %v2790 = vld [vmem:[#allocation2 + $0xe8] sm:$0xff]
        %v2791 = vld [vmem:[#allocation2 + $0xf0] sm:$0xff]
        %v2792 = vld [vmem:[#allocation2 + $0xf8] sm:$0xff]
        %v2793 = vld [vmem:[%s5] sm:$0x1]
        %v2795 = vlaneseq
        %v2796 = vshrl.u32 %v2795, 7
        %v2797 = vsub.s32 0, %v2796
        %v2798 = vrot.slane %v2793, %v2797
        %v2800 = vmul.f32 %v2761, %v2798
        %v2801 = vmul.f32 %v2762, %v2798
        %v2802 = vmul.f32 %v2763, %v2798
        %v2803 = vmul.f32 %v2764, %v2798
        %v2804 = vmul.f32 %v2765, %v2798
        %v2805 = vmul.f32 %v2766, %v2798
        %v2806 = vmul.f32 %v2767, %v2798
        %v2807 = vmul.f32 %v2768, %v2798
        %v2808 = vmul.f32 %v2769, %v2798
        %v2809 = vmul.f32 %v2770, %v2798
        %v2810 = vmul.f32 %v2771, %v2798
        %v2811 = vmul.f32 %v2772, %v2798
        %v2812 = vmul.f32 %v2773, %v2798
        %v2813 = vmul.f32 %v2774, %v2798
        %v2814 = vmul.f32 %v2775, %v2798
        %v2815 = vmul.f32 %v2776, %v2798
        %v2816 = vmul.f32 %v2777, %v2798
        %v2817 = vmul.f32 %v2778, %v2798
        %v2818 = vmul.f32 %v2779, %v2798
        %v2819 = vmul.f32 %v2780, %v2798
        %v2820 = vmul.f32 %v2781, %v2798
        %v2821 = vmul.f32 %v2782, %v2798
        %v2822 = vmul.f32 %v2783, %v2798
        %v2823 = vmul.f32 %v2784, %v2798
        %v2824 = vmul.f32 %v2785, %v2798
        %v2825 = vmul.f32 %v2786, %v2798
        %v2826 = vmul.f32 %v2787, %v2798
        %v2827 = vmul.f32 %v2788, %v2798
        %v2828 = vmul.f32 %v2789, %v2798
        %v2829 = vmul.f32 %v2790, %v2798
        %v2830 = vmul.f32 %v2791, %v2798
        %v2831 = vmul.f32 %v2792, %v2798
        %v2832 = vld [vmem:[%s6] sm:$0x1]
        %v2834 = vlaneseq
        %v2835 = vshrl.u32 %v2834, 7
        %v2836 = vsub.s32 0, %v2835
        %v2837 = vrot.slane %v2832, %v2836
        %v2839 = vadd.f32 %v2800, %v2837
        %v2840 = vadd.f32 %v2801, %v2837
        %v2841 = vadd.f32 %v2802, %v2837
        %v2842 = vadd.f32 %v2803, %v2837
        %v2843 = vadd.f32 %v2804, %v2837
        %v2844 = vadd.f32 %v2805, %v2837
        %v2845 = vadd.f32 %v2806, %v2837
        %v2846 = vadd.f32 %v2807, %v2837
        %v2847 = vadd.f32 %v2808, %v2837
        %v2848 = vadd.f32 %v2809, %v2837
        %v2849 = vadd.f32 %v2810, %v2837
        %v2850 = vadd.f32 %v2811, %v2837
        %v2851 = vadd.f32 %v2812, %v2837
        %v2852 = vadd.f32 %v2813, %v2837
        %v2853 = vadd.f32 %v2814, %v2837
        %v2854 = vadd.f32 %v2815, %v2837
        %v2855 = vadd.f32 %v2816, %v2837
        %v2856 = vadd.f32 %v2817, %v2837
        %v2857 = vadd.f32 %v2818, %v2837
        %v2858 = vadd.f32 %v2819, %v2837
        %v2859 = vadd.f32 %v2820, %v2837
        %v2860 = vadd.f32 %v2821, %v2837
        %v2861 = vadd.f32 %v2822, %v2837
        %v2862 = vadd.f32 %v2823, %v2837
        %v2863 = vadd.f32 %v2824, %v2837
        %v2864 = vadd.f32 %v2825, %v2837
        %v2865 = vadd.f32 %v2826, %v2837
        %v2866 = vadd.f32 %v2827, %v2837
        %v2867 = vadd.f32 %v2828, %v2837
        %v2868 = vadd.f32 %v2829, %v2837
        %v2869 = vadd.f32 %v2830, %v2837
        %v2870 = vadd.f32 %v2831, %v2837
        %v2871 = vmax.f32 %v2839, 0.0
        %v2872 = vmax.f32 %v2840, 0.0
        %v2873 = vmax.f32 %v2841, 0.0
        %v2874 = vmax.f32 %v2842, 0.0
        %v2875 = vmax.f32 %v2843, 0.0
        %v2876 = vmax.f32 %v2844, 0.0
        %v2877 = vmax.f32 %v2845, 0.0
        %v2878 = vmax.f32 %v2846, 0.0
        %v2879 = vmax.f32 %v2847, 0.0
        %v2880 = vmax.f32 %v2848, 0.0
        %v2881 = vmax.f32 %v2849, 0.0
        %v2882 = vmax.f32 %v2850, 0.0
        %v2883 = vmax.f32 %v2851, 0.0
        %v2884 = vmax.f32 %v2852, 0.0
        %v2885 = vmax.f32 %v2853, 0.0
        %v2886 = vmax.f32 %v2854, 0.0
        %v2887 = vmax.f32 %v2855, 0.0
        %v2888 = vmax.f32 %v2856, 0.0
        %v2889 = vmax.f32 %v2857, 0.0
        %v2890 = vmax.f32 %v2858, 0.0
        %v2891 = vmax.f32 %v2859, 0.0
        %v2892 = vmax.f32 %v2860, 0.0
        %v2893 = vmax.f32 %v2861, 0.0
        %v2894 = vmax.f32 %v2862, 0.0
        %v2895 = vmax.f32 %v2863, 0.0
        %v2896 = vmax.f32 %v2864, 0.0
        %v2897 = vmax.f32 %v2865, 0.0
        %v2898 = vmax.f32 %v2866, 0.0
        %v2899 = vmax.f32 %v2867, 0.0
        %v2900 = vmax.f32 %v2868, 0.0
        %v2901 = vmax.f32 %v2869, 0.0
        %v2902 = vmax.f32 %v2870, 0.0
        %v2903 = vpack.c.bf16 %v2872, %v2871
        %v2904 = vpack.c.bf16 %v2874, %v2873
        %v2905 = vpack.c.bf16 %v2876, %v2875
        %v2906 = vpack.c.bf16 %v2878, %v2877
        %v2907 = vpack.c.bf16 %v2880, %v2879
        %v2908 = vpack.c.bf16 %v2882, %v2881
        %v2909 = vpack.c.bf16 %v2884, %v2883
        %v2910 = vpack.c.bf16 %v2886, %v2885
        %v2911 = vpack.c.bf16 %v2888, %v2887
        %v2912 = vpack.c.bf16 %v2890, %v2889
        %v2913 = vpack.c.bf16 %v2892, %v2891
        %v2914 = vpack.c.bf16 %v2894, %v2893
        %v2915 = vpack.c.bf16 %v2896, %v2895
        %v2916 = vpack.c.bf16 %v2898, %v2897
        %v2917 = vpack.c.bf16 %v2900, %v2899
        %v2918 = vpack.c.bf16 %v2902, %v2901
        %v2919 = vld [vmem:[%s7] sm:$0x3]
        %v2921 = vsel %vm2044, %v2903, 0
        %v2924 = vsel %vm2044, %v2904, 0
        %v2927 = vsel %vm2044, %v2905, 0
        %v2930 = vsel %vm2044, %v2906, 0
        %v2933 = vsel %vm2044, %v2907, 0
        %v2936 = vsel %vm2044, %v2908, 0
        %v2939 = vsel %vm2044, %v2909, 0
        %v2942 = vsel %vm2044, %v2910, 0
        %v2945 = vsel %vm2044, %v2911, 0
        %v2948 = vsel %vm2044, %v2912, 0
        %v2951 = vsel %vm2044, %v2913, 0
        %v2954 = vsel %vm2044, %v2914, 0
        %v2957 = vsel %vm2044, %v2915, 0
        %v2960 = vsel %vm2044, %v2916, 0
        %v2963 = vsel %vm2044, %v2917, 0
        %v2966 = vsel %vm2044, %v2918, 0
        %vm2968 = vcmask 1041408
        %v2970 = vsel %vm2968, %v2919, 0
        %2972 = vmatprep.subr.bf16.mxu0 0
        %2973 = vmatpush1.bf16.msra.mxu0 %v2970
        %2974 = vmatprep.subr.bf16.mxu0 0
        %2975 = vmatpush1.bf16.msra.mxu0 0
        %2976 = vmatprep.subr.bf16.mxu0 0
        %2977 = vmatpush1.bf16.msra.mxu0 0
        %2978 = vmatprep.subr.bf16.mxu0 0
        %2979 = vmatpush1.bf16.msra.mxu0 0
        %2980 = vmatprep.subr.bf16.mxu0 0
        %2981 = vmatpush1.bf16.msra.mxu0 0
        %2982 = vmatprep.subr.bf16.mxu0 0
        %2983 = vmatpush1.bf16.msra.mxu0 0
        %2984 = vmatprep.subr.bf16.mxu0 0
        %2985 = vmatpush1.bf16.msra.mxu0 0
        %2986 = vmatprep.subr.bf16.mxu0 0
        %2987 = vmatpush1.bf16.msra.mxu0 0
        %2988 = vmatprep.subr.bf16.mxu0 0
        %2989 = vmatpush1.bf16.msra.mxu0 0
        %2990 = vmatprep.subr.bf16.mxu0 0
        %2991 = vmatpush1.bf16.msra.mxu0 0
        %2992 = vmatprep.subr.bf16.mxu0 0
        %2993 = vmatpush1.bf16.msra.mxu0 0
        %2994 = vmatprep.subr.bf16.mxu0 0
        %2995 = vmatpush1.bf16.msra.mxu0 0
        %2996 = vmatprep.subr.bf16.mxu0 0
        %2997 = vmatpush1.bf16.msra.mxu0 0
        %2998 = vmatprep.subr.bf16.mxu0 0
        %2999 = vmatpush1.bf16.msra.mxu0 0
        %3000 = vmatprep.subr.bf16.mxu0 0
        %3001 = vmatpush1.bf16.msra.mxu0 0
        %3002 = vmatprep.subr.bf16.mxu0 0
        %3003 = vmatpush1.bf16.msra.mxu0 0
        %3004 = vmatprep.mubr.bf16.mxu0 0
        %3005 = vmatmul.mubr.bf16.gmra.mrb[0].mxu0 %v2921
        %v3006 = vpop.f32.mrb[0].mxu0
        %v3007 = vadd.f32 0.0, %v3006
        %v3008 = vpop.f32.mrb[0].mxu0
        %v3009 = vpop.f32.mrb[0].mxu0
        %v3010 = vadd.f32 0.0, %v3009
        %v3011 = vpop.f32.mrb[0].mxu0
        %3012 = vmatprep.mubr.bf16.mxu0 0
        %3013 = vmatmul.mubr.bf16.gmra.mrb[0].mxu0 %v2924
        %v3014 = vpop.f32.mrb[0].mxu0
        %v3015 = vadd.f32 0.0, %v3014
        %v3016 = vpop.f32.mrb[0].mxu0
        %v3017 = vpop.f32.mrb[0].mxu0
        %v3018 = vadd.f32 0.0, %v3017
        %v3019 = vpop.f32.mrb[0].mxu0
        %3020 = vmatprep.mubr.bf16.mxu0 0
        %3021 = vmatmul.mubr.bf16.gmra.mrb[0].mxu0 %v2927
        %v3022 = vpop.f32.mrb[0].mxu0
        %v3023 = vadd.f32 0.0, %v3022
        %v3024 = vpop.f32.mrb[0].mxu0
        %v3025 = vpop.f32.mrb[0].mxu0
        %v3026 = vadd.f32 0.0, %v3025
        %v3027 = vpop.f32.mrb[0].mxu0
        %3028 = vmatprep.mubr.bf16.mxu0 0
        %3029 = vmatmul.mubr.bf16.gmra.mrb[0].mxu0 %v2930
        %v3030 = vpop.f32.mrb[0].mxu0
        %v3031 = vadd.f32 0.0, %v3030
        %v3032 = vpop.f32.mrb[0].mxu0
        %v3033 = vpop.f32.mrb[0].mxu0
        %v3034 = vadd.f32 0.0, %v3033
        %v3035 = vpop.f32.mrb[0].mxu0
        %3036 = vmatprep.mubr.bf16.mxu0 0
        %3037 = vmatmul.mubr.bf16.gmra.mrb[0].mxu0 %v2933
        %v3038 = vpop.f32.mrb[0].mxu0
        %v3039 = vadd.f32 0.0, %v3038
        %v3040 = vpop.f32.mrb[0].mxu0
        %v3041 = vpop.f32.mrb[0].mxu0
        %v3042 = vadd.f32 0.0, %v3041
        %v3043 = vpop.f32.mrb[0].mxu0
        %3044 = vmatprep.mubr.bf16.mxu0 0
        %3045 = vmatmul.mubr.bf16.gmra.mrb[0].mxu0 %v2936
        %v3046 = vpop.f32.mrb[0].mxu0
        %v3047 = vadd.f32 0.0, %v3046
        %v3048 = vpop.f32.mrb[0].mxu0
        %v3049 = vpop.f32.mrb[0].mxu0
        %v3050 = vadd.f32 0.0, %v3049
        %v3051 = vpop.f32.mrb[0].mxu0
        %3052 = vmatprep.mubr.bf16.mxu0 0
        %3053 = vmatmul.mubr.bf16.gmra.mrb[0].mxu0 %v2939
        %v3054 = vpop.f32.mrb[0].mxu0
        %v3055 = vadd.f32 0.0, %v3054
        %v3056 = vpop.f32.mrb[0].mxu0
        %v3057 = vpop.f32.mrb[0].mxu0
        %v3058 = vadd.f32 0.0, %v3057
        %v3059 = vpop.f32.mrb[0].mxu0
        %3060 = vmatprep.mubr.bf16.mxu0 0
        %3061 = vmatmul.mubr.bf16.gmra.mrb[0].mxu0 %v2942
        %v3062 = vpop.f32.mrb[0].mxu0
        %v3063 = vadd.f32 0.0, %v3062
        %v3064 = vpop.f32.mrb[0].mxu0
        %v3065 = vpop.f32.mrb[0].mxu0
        %v3066 = vadd.f32 0.0, %v3065
        %v3067 = vpop.f32.mrb[0].mxu0
        %3068 = vmatprep.mubr.bf16.mxu0 0
        %3069 = vmatmul.mubr.bf16.gmra.mrb[0].mxu0 %v2945
        %v3070 = vpop.f32.mrb[0].mxu0
        %v3071 = vadd.f32 0.0, %v3070
        %v3072 = vpop.f32.mrb[0].mxu0
        %v3073 = vpop.f32.mrb[0].mxu0
        %v3074 = vadd.f32 0.0, %v3073
        %v3075 = vpop.f32.mrb[0].mxu0
        %3076 = vmatprep.mubr.bf16.mxu0 0
        %3077 = vmatmul.mubr.bf16.gmra.mrb[0].mxu0 %v2948
        %v3078 = vpop.f32.mrb[0].mxu0
        %v3079 = vadd.f32 0.0, %v3078
        %v3080 = vpop.f32.mrb[0].mxu0
        %v3081 = vpop.f32.mrb[0].mxu0
        %v3082 = vadd.f32 0.0, %v3081
        %v3083 = vpop.f32.mrb[0].mxu0
        %3084 = vmatprep.mubr.bf16.mxu0 0
        %3085 = vmatmul.mubr.bf16.gmra.mrb[0].mxu0 %v2951
        %v3086 = vpop.f32.mrb[0].mxu0
        %v3087 = vadd.f32 0.0, %v3086
        %v3088 = vpop.f32.mrb[0].mxu0
        %v3089 = vpop.f32.mrb[0].mxu0
        %v3090 = vadd.f32 0.0, %v3089
        %v3091 = vpop.f32.mrb[0].mxu0
        %3092 = vmatprep.mubr.bf16.mxu0 0
        %3093 = vmatmul.mubr.bf16.gmra.mrb[0].mxu0 %v2954
        %v3094 = vpop.f32.mrb[0].mxu0
        %v3095 = vadd.f32 0.0, %v3094
        %v3096 = vpop.f32.mrb[0].mxu0
        %v3097 = vpop.f32.mrb[0].mxu0
        %v3098 = vadd.f32 0.0, %v3097
        %v3099 = vpop.f32.mrb[0].mxu0
        %3100 = vmatprep.mubr.bf16.mxu0 0
        %3101 = vmatmul.mubr.bf16.gmra.mrb[0].mxu0 %v2957
        %v3102 = vpop.f32.mrb[0].mxu0
        %v3103 = vadd.f32 0.0, %v3102
        %v3104 = vpop.f32.mrb[0].mxu0
        %v3105 = vpop.f32.mrb[0].mxu0
        %v3106 = vadd.f32 0.0, %v3105
        %v3107 = vpop.f32.mrb[0].mxu0
        %3108 = vmatprep.mubr.bf16.mxu0 0
        %3109 = vmatmul.mubr.bf16.gmra.mrb[0].mxu0 %v2960
        %v3110 = vpop.f32.mrb[0].mxu0
        %v3111 = vadd.f32 0.0, %v3110
        %v3112 = vpop.f32.mrb[0].mxu0
        %v3113 = vpop.f32.mrb[0].mxu0
        %v3114 = vadd.f32 0.0, %v3113
        %v3115 = vpop.f32.mrb[0].mxu0
        %3116 = vmatprep.mubr.bf16.mxu0 0
        %3117 = vmatmul.mubr.bf16.gmra.mrb[0].mxu0 %v2963
        %v3118 = vpop.f32.mrb[0].mxu0
        %v3119 = vadd.f32 0.0, %v3118
        %v3120 = vpop.f32.mrb[0].mxu0
        %v3121 = vpop.f32.mrb[0].mxu0
        %v3122 = vadd.f32 0.0, %v3121
        %v3123 = vpop.f32.mrb[0].mxu0
        %3124 = vmatprep.mubr.bf16.mxu0 0
        %3125 = vmatmul.mubr.bf16.gmra.mrb[0].mxu0 %v2966
        %v3126 = vpop.f32.mrb[0].mxu0
        %v3127 = vadd.f32 0.0, %v3126
        %v3128 = vpop.f32.mrb[0].mxu0
        %v3129 = vpop.f32.mrb[0].mxu0
        %v3130 = vadd.f32 0.0, %v3129
        %v3131 = vpop.f32.mrb[0].mxu0
        %3132 = vdwg.mxu0
        %v3133 = vld [vmem:[%s8] sm:$0x1]
        %v3135 = vlaneseq
        %v3136 = vshrl.u32 %v3135, 7
        %v3137 = vsub.s32 0, %v3136
        %v3138 = vrot.slane %v3133, %v3137
        %v3140 = vmul.f32 %v3007, %v3138
        %v3141 = vmul.f32 %v3010, %v3138
        %v3142 = vmul.f32 %v3015, %v3138
        %v3143 = vmul.f32 %v3018, %v3138
        %v3144 = vmul.f32 %v3023, %v3138
        %v3145 = vmul.f32 %v3026, %v3138
        %v3146 = vmul.f32 %v3031, %v3138
        %v3147 = vmul.f32 %v3034, %v3138
        %v3148 = vmul.f32 %v3039, %v3138
        %v3149 = vmul.f32 %v3042, %v3138
        %v3150 = vmul.f32 %v3047, %v3138
        %v3151 = vmul.f32 %v3050, %v3138
        %v3152 = vmul.f32 %v3055, %v3138
        %v3153 = vmul.f32 %v3058, %v3138
        %v3154 = vmul.f32 %v3063, %v3138
        %v3155 = vmul.f32 %v3066, %v3138
        %v3156 = vmul.f32 %v3071, %v3138
        %v3157 = vmul.f32 %v3074, %v3138
        %v3158 = vmul.f32 %v3079, %v3138
        %v3159 = vmul.f32 %v3082, %v3138
        %v3160 = vmul.f32 %v3087, %v3138
        %v3161 = vmul.f32 %v3090, %v3138
        %v3162 = vmul.f32 %v3095, %v3138
        %v3163 = vmul.f32 %v3098, %v3138
        %v3164 = vmul.f32 %v3103, %v3138
        %v3165 = vmul.f32 %v3106, %v3138
        %v3166 = vmul.f32 %v3111, %v3138
        %v3167 = vmul.f32 %v3114, %v3138
        %v3168 = vmul.f32 %v3119, %v3138
        %v3169 = vmul.f32 %v3122, %v3138
        %v3170 = vmul.f32 %v3127, %v3138
        %v3171 = vmul.f32 %v3130, %v3138
        %v3172 = vld [vmem:[%s9] sm:$0x1]
        %v3174 = vlaneseq
        %v3175 = vshrl.u32 %v3174, 7
        %v3176 = vsub.s32 0, %v3175
        %v3177 = vrot.slane %v3172, %v3176
        %v3179 = vadd.f32 %v3140, %v3177
        %v3180 = vadd.f32 %v3141, %v3177
        %v3181 = vadd.f32 %v3142, %v3177
        %v3182 = vadd.f32 %v3143, %v3177
        %v3183 = vadd.f32 %v3144, %v3177
        %v3184 = vadd.f32 %v3145, %v3177
        %v3185 = vadd.f32 %v3146, %v3177
        %v3186 = vadd.f32 %v3147, %v3177
        %v3187 = vadd.f32 %v3148, %v3177
        %v3188 = vadd.f32 %v3149, %v3177
        %v3189 = vadd.f32 %v3150, %v3177
        %v3190 = vadd.f32 %v3151, %v3177
        %v3191 = vadd.f32 %v3152, %v3177
        %v3192 = vadd.f32 %v3153, %v3177
        %v3193 = vadd.f32 %v3154, %v3177
        %v3194 = vadd.f32 %v3155, %v3177
        %v3195 = vadd.f32 %v3156, %v3177
        %v3196 = vadd.f32 %v3157, %v3177
        %v3197 = vadd.f32 %v3158, %v3177
        %v3198 = vadd.f32 %v3159, %v3177
        %v3199 = vadd.f32 %v3160, %v3177
        %v3200 = vadd.f32 %v3161, %v3177
        %v3201 = vadd.f32 %v3162, %v3177
        %v3202 = vadd.f32 %v3163, %v3177
        %v3203 = vadd.f32 %v3164, %v3177
        %v3204 = vadd.f32 %v3165, %v3177
        %v3205 = vadd.f32 %v3166, %v3177
        %v3206 = vadd.f32 %v3167, %v3177
        %v3207 = vadd.f32 %v3168, %v3177
        %v3208 = vadd.f32 %v3169, %v3177
        %v3209 = vadd.f32 %v3170, %v3177
        %v3210 = vadd.f32 %v3171, %v3177
        %v3211 = vld [vmem:[%s341] sm:$0xf]
        %v3212 = vld [vmem:[%s341 + $0x4] sm:$0xf]
        %v3213 = vld [vmem:[%s341 + $0x8] sm:$0xf]
        %v3214 = vld [vmem:[%s341 + $0xc] sm:$0xf]
        %v3215 = vld [vmem:[%s341 + $0x10] sm:$0xf]
        %v3216 = vld [vmem:[%s341 + $0x14] sm:$0xf]
        %v3217 = vld [vmem:[%s341 + $0x18] sm:$0xf]
        %v3218 = vld [vmem:[%s341 + $0x1c] sm:$0xf]
        %v3219 = vld [vmem:[%s341 + $0x20] sm:$0xf]
        %v3220 = vld [vmem:[%s341 + $0x24] sm:$0xf]
        %v3221 = vld [vmem:[%s341 + $0x28] sm:$0xf]
        %v3222 = vld [vmem:[%s341 + $0x2c] sm:$0xf]
        %v3223 = vld [vmem:[%s341 + $0x30] sm:$0xf]
        %v3224 = vld [vmem:[%s341 + $0x34] sm:$0xf]
        %v3225 = vld [vmem:[%s341 + $0x38] sm:$0xf]
        %v3226 = vld [vmem:[%s341 + $0x3c] sm:$0xf]
        %v3227 = vld [vmem:[%s341 + $0x40] sm:$0xf]
        %v3228 = vld [vmem:[%s341 + $0x44] sm:$0xf]
        %v3229 = vld [vmem:[%s341 + $0x48] sm:$0xf]
        %v3230 = vld [vmem:[%s341 + $0x4c] sm:$0xf]
        %v3231 = vld [vmem:[%s341 + $0x50] sm:$0xf]
        %v3232 = vld [vmem:[%s341 + $0x54] sm:$0xf]
        %v3233 = vld [vmem:[%s341 + $0x58] sm:$0xf]
        %v3234 = vld [vmem:[%s341 + $0x5c] sm:$0xf]
        %v3235 = vld [vmem:[%s341 + $0x60] sm:$0xf]
        %v3236 = vld [vmem:[%s341 + $0x64] sm:$0xf]
        %v3237 = vld [vmem:[%s341 + $0x68] sm:$0xf]
        %v3238 = vld [vmem:[%s341 + $0x6c] sm:$0xf]
        %v3239 = vld [vmem:[%s341 + $0x70] sm:$0xf]
        %v3240 = vld [vmem:[%s341 + $0x74] sm:$0xf]
        %v3241 = vld [vmem:[%s341 + $0x78] sm:$0xf]
        %v3242 = vld [vmem:[%s341 + $0x7c] sm:$0xf]
        %v3243 = vunpack.c.l.bf16 %v3211
        %v3244 = vunpack.c.l.bf16 %v3212
        %v3245 = vunpack.c.l.bf16 %v3213
        %v3246 = vunpack.c.l.bf16 %v3214
        %v3247 = vunpack.c.l.bf16 %v3215
        %v3248 = vunpack.c.l.bf16 %v3216
        %v3249 = vunpack.c.l.bf16 %v3217
        %v3250 = vunpack.c.l.bf16 %v3218
        %v3251 = vunpack.c.l.bf16 %v3219
        %v3252 = vunpack.c.l.bf16 %v3220
        %v3253 = vunpack.c.l.bf16 %v3221
        %v3254 = vunpack.c.l.bf16 %v3222
        %v3255 = vunpack.c.l.bf16 %v3223
        %v3256 = vunpack.c.l.bf16 %v3224
        %v3257 = vunpack.c.l.bf16 %v3225
        %v3258 = vunpack.c.l.bf16 %v3226
        %v3259 = vunpack.c.l.bf16 %v3227
        %v3260 = vunpack.c.l.bf16 %v3228
        %v3261 = vunpack.c.l.bf16 %v3229
        %v3262 = vunpack.c.l.bf16 %v3230
        %v3263 = vunpack.c.l.bf16 %v3231
        %v3264 = vunpack.c.l.bf16 %v3232
        %v3265 = vunpack.c.l.bf16 %v3233
        %v3266 = vunpack.c.l.bf16 %v3234
        %v3267 = vunpack.c.l.bf16 %v3235
        %v3268 = vunpack.c.l.bf16 %v3236
        %v3269 = vunpack.c.l.bf16 %v3237
        %v3270 = vunpack.c.l.bf16 %v3238
        %v3271 = vunpack.c.l.bf16 %v3239
        %v3272 = vunpack.c.l.bf16 %v3240
        %v3273 = vunpack.c.l.bf16 %v3241
        %v3274 = vunpack.c.l.bf16 %v3242
        %v3275 = vadd.f32 %v3179, %v3243
        %v3276 = vadd.f32 %v3180, %v3244
        %v3277 = vadd.f32 %v3181, %v3245
        %v3278 = vadd.f32 %v3182, %v3246
        %v3279 = vadd.f32 %v3183, %v3247
        %v3280 = vadd.f32 %v3184, %v3248
        %v3281 = vadd.f32 %v3185, %v3249
        %v3282 = vadd.f32 %v3186, %v3250
        %v3283 = vadd.f32 %v3187, %v3251
        %v3284 = vadd.f32 %v3188, %v3252
        %v3285 = vadd.f32 %v3189, %v3253
        %v3286 = vadd.f32 %v3190, %v3254
        %v3287 = vadd.f32 %v3191, %v3255
        %v3288 = vadd.f32 %v3192, %v3256
        %v3289 = vadd.f32 %v3193, %v3257
        %v3290 = vadd.f32 %v3194, %v3258
        %v3291 = vadd.f32 %v3195, %v3259
        %v3292 = vadd.f32 %v3196, %v3260
        %v3293 = vadd.f32 %v3197, %v3261
        %v3294 = vadd.f32 %v3198, %v3262
        %v3295 = vadd.f32 %v3199, %v3263
        %v3296 = vadd.f32 %v3200, %v3264
        %v3297 = vadd.f32 %v3201, %v3265
        %v3298 = vadd.f32 %v3202, %v3266
        %v3299 = vadd.f32 %v3203, %v3267
        %v3300 = vadd.f32 %v3204, %v3268
        %v3301 = vadd.f32 %v3205, %v3269
        %v3302 = vadd.f32 %v3206, %v3270
        %v3303 = vadd.f32 %v3207, %v3271
        %v3304 = vadd.f32 %v3208, %v3272
        %v3305 = vadd.f32 %v3209, %v3273
        %v3306 = vadd.f32 %v3210, %v3274
        %v3307 = vmax.f32 %v3275, 0.0
        %v3308 = vmax.f32 %v3276, 0.0
        %v3309 = vmax.f32 %v3277, 0.0
        %v3310 = vmax.f32 %v3278, 0.0
        %v3311 = vmax.f32 %v3279, 0.0
        %v3312 = vmax.f32 %v3280, 0.0
        %v3313 = vmax.f32 %v3281, 0.0
        %v3314 = vmax.f32 %v3282, 0.0
        %v3315 = vmax.f32 %v3283, 0.0
        %v3316 = vmax.f32 %v3284, 0.0
        %v3317 = vmax.f32 %v3285, 0.0
        %v3318 = vmax.f32 %v3286, 0.0
        %v3319 = vmax.f32 %v3287, 0.0
        %v3320 = vmax.f32 %v3288, 0.0
        %v3321 = vmax.f32 %v3289, 0.0
        %v3322 = vmax.f32 %v3290, 0.0
        %v3323 = vmax.f32 %v3291, 0.0
        %v3324 = vmax.f32 %v3292, 0.0
        %v3325 = vmax.f32 %v3293, 0.0
        %v3326 = vmax.f32 %v3294, 0.0
        %v3327 = vmax.f32 %v3295, 0.0
        %v3328 = vmax.f32 %v3296, 0.0
        %v3329 = vmax.f32 %v3297, 0.0
        %v3330 = vmax.f32 %v3298, 0.0
        %v3331 = vmax.f32 %v3299, 0.0
        %v3332 = vmax.f32 %v3300, 0.0
        %v3333 = vmax.f32 %v3301, 0.0
        %v3334 = vmax.f32 %v3302, 0.0
        %v3335 = vmax.f32 %v3303, 0.0
        %v3336 = vmax.f32 %v3304, 0.0
        %v3337 = vmax.f32 %v3305, 0.0
        %v3338 = vmax.f32 %v3306, 0.0
        %v3339 = vpack.c.bf16 %v3308, %v3307
        %v3340 = vpack.c.bf16 %v3310, %v3309
        %v3341 = vpack.c.bf16 %v3312, %v3311
        %v3342 = vpack.c.bf16 %v3314, %v3313
        %v3343 = vpack.c.bf16 %v3316, %v3315
        %v3344 = vpack.c.bf16 %v3318, %v3317
        %v3345 = vpack.c.bf16 %v3320, %v3319
        %v3346 = vpack.c.bf16 %v3322, %v3321
        %v3347 = vpack.c.bf16 %v3324, %v3323
        %v3348 = vpack.c.bf16 %v3326, %v3325
        %v3349 = vpack.c.bf16 %v3328, %v3327
        %v3350 = vpack.c.bf16 %v3330, %v3329
        %v3351 = vpack.c.bf16 %v3332, %v3331
        %v3352 = vpack.c.bf16 %v3334, %v3333
        %v3353 = vpack.c.bf16 %v3336, %v3335
        %v3354 = vpack.c.bf16 %v3338, %v3337
        %v3371 = vunpack.c.l.b16 %v3339
        %v3372 = vunpack.c.h.b16 %v3339
        %v3373 = vunpack.c.l.b16 %v3340
        %v3374 = vunpack.c.h.b16 %v3340
        %v3375 = vunpack.c.l.b16 %v3341
        %v3376 = vunpack.c.h.b16 %v3341
        %v3377 = vunpack.c.l.b16 %v3342
        %v3378 = vunpack.c.h.b16 %v3342
        %v3379 = vunpack.c.l.b16 %v3343
        %v3380 = vunpack.c.h.b16 %v3343
        %v3381 = vunpack.c.l.b16 %v3344
        %v3382 = vunpack.c.h.b16 %v3344
        %v3383 = vunpack.c.l.b16 %v3345
        %v3384 = vunpack.c.h.b16 %v3345
        %v3385 = vunpack.c.l.b16 %v3346
        %v3386 = vunpack.c.h.b16 %v3346
        %v3387 = vunpack.c.l.b16 %v3347
        %v3388 = vunpack.c.h.b16 %v3347
        %v3389 = vunpack.c.l.b16 %v3348
        %v3390 = vunpack.c.h.b16 %v3348
        %v3391 = vunpack.c.l.b16 %v3349
        %v3392 = vunpack.c.h.b16 %v3349
        %v3393 = vunpack.c.l.b16 %v3350
        %v3394 = vunpack.c.h.b16 %v3350
        %v3395 = vunpack.c.l.b16 %v3351
        %v3396 = vunpack.c.h.b16 %v3351
        %v3397 = vunpack.c.l.b16 %v3352
        %v3398 = vunpack.c.h.b16 %v3352
        %v3399 = vunpack.c.l.b16 %v3353
        %v3400 = vunpack.c.h.b16 %v3353
        %v3401 = vunpack.c.l.b16 %v3354
        %v3402 = vunpack.c.h.b16 %v3354
        %v3403 = vpack.c.b16 %v3371, %v3371
        %v3404 = vpack.c.b16 %v3372, %v3372
        %v3405 = vpack.c.b16 %v3373, %v3373
        %v3406 = vpack.c.b16 %v3374, %v3374
        %v3407 = vpack.c.b16 %v3375, %v3375
        %v3408 = vpack.c.b16 %v3376, %v3376
        %v3409 = vpack.c.b16 %v3377, %v3377
        %v3410 = vpack.c.b16 %v3378, %v3378
        %v3411 = vpack.c.b16 %v3379, %v3379
        %v3412 = vpack.c.b16 %v3380, %v3380
        %v3413 = vpack.c.b16 %v3381, %v3381
        %v3414 = vpack.c.b16 %v3382, %v3382
        %v3415 = vpack.c.b16 %v3383, %v3383
        %v3416 = vpack.c.b16 %v3384, %v3384
        %v3417 = vpack.c.b16 %v3385, %v3385
        %v3418 = vpack.c.b16 %v3386, %v3386
        %v3419 = vpack.c.b16 %v3387, %v3387
        %v3420 = vpack.c.b16 %v3388, %v3388
        %v3421 = vpack.c.b16 %v3389, %v3389
        %v3422 = vpack.c.b16 %v3390, %v3390
        %v3423 = vpack.c.b16 %v3391, %v3391
        %v3424 = vpack.c.b16 %v3392, %v3392
        %v3425 = vpack.c.b16 %v3393, %v3393
        %v3426 = vpack.c.b16 %v3394, %v3394
        %v3427 = vpack.c.b16 %v3395, %v3395
        %v3428 = vpack.c.b16 %v3396, %v3396
        %v3429 = vpack.c.b16 %v3397, %v3397
        %v3430 = vpack.c.b16 %v3398, %v3398
        %v3431 = vpack.c.b16 %v3399, %v3399
        %v3432 = vpack.c.b16 %v3400, %v3400
        %v3433 = vpack.c.b16 %v3401, %v3401
        %v3434 = vpack.c.b16 %v3402, %v3402
        %vm3467 = vcmask 125952
        %3468 = vst.msk [vmem:[%s377] sm:$0xf] %vm3467, %v3403
        %3469 = vst.msk [vmem:[%s377 + $0x4] sm:$0xf] %vm3467, %v3404
        %3470 = vst.msk [vmem:[%s377 + $0x8] sm:$0xf] %vm3467, %v3405
        %3471 = vst.msk [vmem:[%s377 + $0xc] sm:$0xf] %vm3467, %v3406
        %3472 = vst.msk [vmem:[%s377 + $0x10] sm:$0xf] %vm3467, %v3407
        %3473 = vst.msk [vmem:[%s377 + $0x14] sm:$0xf] %vm3467, %v3408
        %3474 = vst.msk [vmem:[%s377 + $0x18] sm:$0xf] %vm3467, %v3409
        %3475 = vst.msk [vmem:[%s377 + $0x1c] sm:$0xf] %vm3467, %v3410
        %3476 = vst.msk [vmem:[%s377 + $0x20] sm:$0xf] %vm3467, %v3411
        %3477 = vst.msk [vmem:[%s377 + $0x24] sm:$0xf] %vm3467, %v3412
        %3478 = vst.msk [vmem:[%s377 + $0x28] sm:$0xf] %vm3467, %v3413
        %3479 = vst.msk [vmem:[%s377 + $0x2c] sm:$0xf] %vm3467, %v3414
        %3480 = vst.msk [vmem:[%s377 + $0x30] sm:$0xf] %vm3467, %v3415
        %3481 = vst.msk [vmem:[%s377 + $0x34] sm:$0xf] %vm3467, %v3416
        %3482 = vst.msk [vmem:[%s377 + $0x38] sm:$0xf] %vm3467, %v3417
        %3483 = vst.msk [vmem:[%s377 + $0x3c] sm:$0xf] %vm3467, %v3418
        %3484 = vst.msk [vmem:[%s377 + $0x40] sm:$0xf] %vm3467, %v3419
        %3485 = vst.msk [vmem:[%s377 + $0x44] sm:$0xf] %vm3467, %v3420
        %3486 = vst.msk [vmem:[%s377 + $0x48] sm:$0xf] %vm3467, %v3421
        %3487 = vst.msk [vmem:[%s377 + $0x4c] sm:$0xf] %vm3467, %v3422
        %3488 = vst.msk [vmem:[%s377 + $0x50] sm:$0xf] %vm3467, %v3423
        %3489 = vst.msk [vmem:[%s377 + $0x54] sm:$0xf] %vm3467, %v3424
        %3490 = vst.msk [vmem:[%s377 + $0x58] sm:$0xf] %vm3467, %v3425
        %3491 = vst.msk [vmem:[%s377 + $0x5c] sm:$0xf] %vm3467, %v3426
        %3492 = vst.msk [vmem:[%s377 + $0x60] sm:$0xf] %vm3467, %v3427
        %3493 = vst.msk [vmem:[%s377 + $0x64] sm:$0xf] %vm3467, %v3428
        %3494 = vst.msk [vmem:[%s377 + $0x68] sm:$0xf] %vm3467, %v3429
        %3495 = vst.msk [vmem:[%s377 + $0x6c] sm:$0xf] %vm3467, %v3430
        %3496 = vst.msk [vmem:[%s377 + $0x70] sm:$0xf] %vm3467, %v3431
        %3497 = vst.msk [vmem:[%s377 + $0x74] sm:$0xf] %vm3467, %v3432
        %3498 = vst.msk [vmem:[%s377 + $0x78] sm:$0xf] %vm3467, %v3433
        %3499 = vst.msk [vmem:[%s377 + $0x7c] sm:$0xf] %vm3467, %v3434
        %s3500 = sand.u32 %s250, 1
        %s3501 = scalar_lea.sflag [#allocation5], %s3500
        %s3502 = sand.u32 %s250, 1
        %s3503 = smul.addr %s3502, 128
        %s3504 = scalar_lea.vmem [#allocation6], %s3503
        // Predicated region
        $region65: #{tpu_custom_call.1} parent=59 // pred_check
          %p3505 = pneg %p260
        $region66: #{tpu_custom_call.1} parent=59 // pred_check_branch
          %3507 = sbr.rel (%p3505) target = $region68
        $region67: #{tpu_custom_call.1} parent=59 // pred_region
          %s3509 = ssub.s32 2048, 2048
          %3510 = vsyncadd %s3501, %s3509
          %s3511 = smul.addr %s27, 32
          %s3512 = smul.addr %s3511, 64
          %s3513 = scalar_lea.hbm %s10, %s3512
          %s3514 = sshll.u32 %s3504, 4
          %s3515 = int_to_ptr.vmem [resolvable:$true] %s3514
          %3520 = dma.vmem_to_hbm [thread:$0]  %s3515, 2048, %s3513, %s3501, 64, 64, 4
        $region68: #{tpu_custom_call.1} parent=59 // pred_fallthru
          _
      $region60: #{tpu_custom_call.1} parent=5 // pred_fallthru
        _
      %p3521 = scmp.le.s32.totalorder 2, %s22
      // Predicated region
      $region69: #{tpu_custom_call.1} parent=5 // pred_check
        %p3522 = pneg %p3521
      $region70: #{tpu_custom_call.1} parent=5 // pred_check_branch
        %3524 = sbr.rel (%p3522) target = $region72
      $region71: #{tpu_custom_call.1} parent=5 // pred_region
        %s3525 = ssub.s32 %s22, 2
        // Predicated region
        $region73: #{tpu_custom_call.1} parent=71 // pred_check
          %p3526 = pneg %p266
        $region74: #{tpu_custom_call.1} parent=71 // pred_check_branch
          %3528 = sbr.rel (%p3526) target = $region76
        $region75: #{tpu_custom_call.1} parent=71 // pred_region
          %s3529 = sand.u32 %s251, 1
          %s3530 = scalar_lea.sflag [#allocation5], %s3529
          %s3531 = sand.u32 %s251, 1
          %s3532 = smul.addr %s3531, 128
          %s3533 = scalar_lea.vmem [#allocation6], %s3532
          %3534 = dma.done %s3530, 2048
        $region76: #{tpu_custom_call.1} parent=71 // pred_fallthru
          _
      $region72: #{tpu_custom_call.1} parent=5 // pred_fallthru
        _
    $region6: #{tpu_custom_call.1} parent=1 // loop_footer
      %s26 = sadd.s32 1, %s22
    $region7: #{tpu_custom_call.1} parent=1 // loop_footer_branch
      %21 = sbr.rel target = $region3
    $region8: #{tpu_custom_call.1} parent=1 // loop_exit
      _
    %3535 = vsyncpa [#allocation4], 1
    %s3536 = scalar_lea.sflag [#allocation4], 1
    %3537 = vsyncpa %s3536, 1
    %3538 = vsyncpa [#allocation5], 1
    %s3539 = scalar_lea.sflag [#allocation5], 1
    %3540 = vsyncpa %s3539, 1

</llo_original>
